<compile_context>
chip_gen: v7x
topology: tpu7x:2x2x1
jax: 0.10.0
libtpu: 0.0.40
codegen_flags: <defaults>
</compile_context>

<pallas_src>
import functools

import jax
import jax.numpy as jnp
from jax.experimental import pallas as pl
from jax.experimental.pallas import tpu as pltpu

HIDDEN = 4096          # fixed by the PyTorch module: nn.Linear(4096, C)
NUM_WK = 18            # module builds 18 Wk heads; only the first seq_len are used


def _round_up(x, m):
    return ((x + m - 1) // m) * m


def _td_fused_kernel(z1_ref, encbig_ref, dmask_ref, we_ref, wbig_ref, bbig_ref,
                     g_ref, be_ref, w2_ref, b2_ref,
                     nce_ref, proj_ref, *, C, lc):
    # ---- encoder stand-in: flattened context (B, L*C) -> c_t (B, 4096)
    # TODO(synk): CrossformerV3(128, 18, 1, 3, ...) has no provided definition /
    # clean Pallas equivalent; a deterministic linear stand-in produces the
    # (B, 4096) c_t the rest of the forward expects.
    ct = jnp.dot(z1_ref[...], we_ref[...],
                 preferred_element_type=jnp.float32)                       # (B, H) f32

    # ---- single merged GEMM: [Wk_0..Wk_{L-1} | W1 | pad] packed along N.
    # c_t is truncated to bf16 for the MXU (fp32 accumulation) — documented
    # deviation from the fp32 PyTorch chain.
    full = (jnp.dot(ct.astype(jnp.bfloat16), wbig_ref[...],
                    preferred_element_type=jnp.float32)
            + bbig_ref[...])                                               # (B, Npad)

    # ---- NCE: all L (B, B) logit matrices stacked as (L*B, B) via one GEMM
    # against the block-diagonal encode-sample matrix built in the wrapper.
    logits = jax.lax.dot_general(
        encbig_ref[...], full,
        dimension_numbers=(((1,), (1,)), ((), ())),
        preferred_element_type=jnp.float32)                                # (L*B, B)
    m = jnp.max(logits, axis=1, keepdims=True)
    lse = m + jnp.log(jnp.sum(jnp.exp(logits - m), axis=1, keepdims=True)) # (L*B, 1)
    # diag(enc_i @ pred_i.T)[b] picked out with a precomputed 0/1 mask
    diag = jnp.sum(logits * dmask_ref[...], axis=1, keepdims=True)         # (L*B, 1)
    nce_ref[...] = jnp.sum(diag - lse, axis=0, keepdims=True)              # (1, 1)

    # ---- projection head: Linear -> BatchNorm1d (training batch stats) ->
    #      LeakyReLU -> Linear.  The first Linear's output lives in `full`.
    h = full[:, lc:lc + C]                                                 # (B, C)
    mean = jnp.mean(h, axis=0, keepdims=True)
    var = jnp.mean((h - mean) ** 2, axis=0, keepdims=True)                 # biased (train BN)
    xhat = (h - mean) * jax.lax.rsqrt(var + 1e-5)
    y = g_ref[...] * xhat + be_ref[...]
    y = jnp.where(y >= 0.0, y, 0.01 * y)                                   # LeakyReLU(0.01)
    proj_ref[...] = (jnp.dot(y, w2_ref[...], preferred_element_type=jnp.float32)
                     + b2_ref[...])


def pack_td_params(params, seq_len):
    """One-time (outside jit) weight packing: merge the first `seq_len` Wk heads
    and the projection head's first Linear into a single lane-dense, 128-padded
    weight + bias."""
    C = params["W1"].shape[1]
    lc = seq_len * C
    n_pad = _round_up(lc + C, 128)

    w_big = jnp.zeros((HIDDEN, n_pad), jnp.bfloat16)
    w_big = w_big.at[:, :lc].set(params["Wk_all"][:, :lc].astype(jnp.bfloat16))
    w_big = w_big.at[:, lc:lc + C].set(params["W1"].astype(jnp.bfloat16))

    b_big = jnp.zeros((1, n_pad), jnp.float32)
    b_big = b_big.at[0, :lc].set(params["Wk_b"][:seq_len].reshape(lc))
    b_big = b_big.at[0, lc:lc + C].set(params["b1"])

    return {
        "W_enc": params["W_enc"].astype(jnp.bfloat16),   # (L*C, HIDDEN)
        "W_big": w_big,                                  # (HIDDEN, Npad)
        "b_big": b_big,                                  # (1, Npad)
        "gamma": params["gamma"].reshape(1, C),
        "beta": params["beta"].reshape(1, C),
        "W2": params["W2"],                              # (C, C//4)
        "b2": params["b2"].reshape(1, -1),
    }


def td_forward(z_aug1, z_aug_comp, packed):
    B, C, L = z_aug1.shape
    lc = L * C
    w_big = packed["W_big"]
    n_pad = w_big.shape[1]
    Cq = packed["W2"].shape[1]

    # context for the encoder stand-in, pre-cast to bf16 (hoisted out of kernel)
    z1_flat = jnp.transpose(z_aug1, (0, 2, 1)).reshape(B, lc).astype(jnp.bfloat16)

    # encode_samples (L, B, C) laid out block-diagonally as (L*B, Npad) so the
    # per-head logit matmuls collapse into one 2-D GEMM inside the kernel.
    enc = jnp.transpose(z_aug_comp, (2, 0, 1))                        # (L, B, C) f32
    eye_l = jnp.eye(L, dtype=enc.dtype)
    enc_big = (enc[:, :, None, :] * eye_l[:, None, :, None]).reshape(L * B, lc)
    enc_big = jnp.pad(enc_big, ((0, 0), (0, n_pad - lc)))             # (L*B, Npad)

    # 0/1 mask selecting logits[l*B + b, b] (the log-softmax diagonal terms);
    # constant-folded by XLA.
    dmask = (jnp.arange(B)[None, :] ==
             (jnp.arange(L * B)[:, None] % B)).astype(jnp.float32)    # (L*B, B)

    kernel = functools.partial(_td_fused_kernel, C=C, lc=lc)

    nce_sum, proj = pl.pallas_call(
        kernel,
        out_shape=(jax.ShapeDtypeStruct((1, 1), jnp.float32),
                   jax.ShapeDtypeStruct((B, Cq), jnp.float32)),
        grid_spec=pltpu.PrefetchScalarGridSpec(
            num_scalar_prefetch=0,
            grid=(1,),
            in_specs=[
                pl.BlockSpec((B, lc), lambda k: (0, 0)),              # z1_flat (bf16)
                pl.BlockSpec((L * B, n_pad), lambda k: (0, 0)),       # block-diag enc
                pl.BlockSpec((L * B, B), lambda k: (0, 0)),           # diag mask
                pl.BlockSpec((lc, HIDDEN), lambda k: (0, 0)),         # W_enc
                pl.BlockSpec((HIDDEN, n_pad), lambda k: (0, 0)),      # packed [Wk|W1]
                pl.BlockSpec((1, n_pad), lambda k: (0, 0)),           # packed bias
                pl.BlockSpec((1, C), lambda k: (0, 0)),               # gamma
                pl.BlockSpec((1, C), lambda k: (0, 0)),               # beta
                pl.BlockSpec((C, Cq), lambda k: (0, 0)),              # W2
                pl.BlockSpec((1, Cq), lambda k: (0, 0)),              # b2
            ],
            out_specs=[
                pl.BlockSpec((1, 1), lambda k: (0, 0)),
                pl.BlockSpec((B, Cq), lambda k: (0, 0)),
            ],
        ),
        compiler_params=pltpu.CompilerParams(
            dimension_semantics=("arbitrary",),
            vmem_limit_bytes=32 * 1024 * 1024),
    )(z1_flat, enc_big, dmask, packed["W_enc"], w_big, packed["b_big"],
      packed["gamma"], packed["beta"], packed["W2"], packed["b2"])

    nce = nce_sum[0, 0] / (-1.0 * B * L)
    return nce, proj


if __name__ == "__main__":
    B, C, L = 8, 32, 8            # batch, final_out_channels, seq_len (<= 18)

    key = jax.random.PRNGKey(0)
    ks = jax.random.split(key, 10)

    z_aug1 = jax.random.normal(ks[0], (B, C, L), jnp.float32)
    z_aug_comp = jax.random.normal(ks[1], (B, C, L), jnp.float32)

    raw_params = {
        # TODO(synk): CrossformerV3 encoder has no provided definition; this
        # deterministic linear stand-in maps the flattened context (B, L*C) to
        # the (B, 4096) c_t vector the rest of the forward expects.
        "W_enc": (jax.random.normal(ks[2], (L * C, HIDDEN), jnp.float32) * 0.02
                  ).astype(jnp.bfloat16),
        # 18 Wk heads (Linear(4096, C)) packed lane-dense as (4096, 18*C); columns
        # [i*C:(i+1)*C] hold head i's transposed weight.
        "Wk_all": (jax.random.normal(ks[3], (HIDDEN, NUM_WK * C), jnp.float32) * 0.02
                   ).astype(jnp.bfloat16),
        "Wk_b": jax.random.normal(ks[4], (NUM_WK, C), jnp.float32) * 0.02,
        # projection head
        "W1": (jax.random.normal(ks[5], (HIDDEN, C), jnp.float32) * 0.02
               ).astype(jnp.bfloat16),
        "b1": jax.random.normal(ks[6], (C,), jnp.float32) * 0.02,
        "gamma": jnp.ones((C,), jnp.float32),
        "beta": jnp.zeros((C,), jnp.float32),
        "W2": jax.random.normal(ks[7], (C, C // 4), jnp.float32) * 0.02,
        "b2": jax.random.normal(ks[8], (C // 4,), jnp.float32) * 0.02,
    }

    packed = pack_td_params(raw_params, L)     # one-time packing, outside jit

    nce, proj = jax.jit(td_forward)(z_aug1, z_aug_comp, packed)
    jax.block_until_ready((nce, proj))
    assert proj.shape == (B, C // 4)
    assert bool(jnp.isfinite(nce)) and bool(jnp.all(jnp.isfinite(proj)))
    print("KERNEL_OK")
</pallas_src>

<mosaic_0001>
module attributes {stable_mosaic.version = 11 : i64} {
  func.func @_td_fused_kernel(%arg0: i32, %arg1: memref<8x256xbf16, #tpu.memory_space<vmem>>, %arg2: memref<64x384xf32, #tpu.memory_space<vmem>>, %arg3: memref<64x8xf32, #tpu.memory_space<vmem>>, %arg4: memref<256x4096xbf16, #tpu.memory_space<vmem>>, %arg5: memref<4096x384xbf16, #tpu.memory_space<vmem>>, %arg6: memref<1x384xf32, #tpu.memory_space<vmem>>, %arg7: memref<1x32xf32, #tpu.memory_space<vmem>>, %arg8: memref<1x32xf32, #tpu.memory_space<vmem>>, %arg9: memref<32x8xf32, #tpu.memory_space<vmem>>, %arg10: memref<1x8xf32, #tpu.memory_space<vmem>>, %arg11: memref<1x1xf32, #tpu.memory_space<vmem>>, %arg12: memref<8x8xf32, #tpu.memory_space<vmem>>) attributes {dimension_semantics = [#tpu.dimension_semantics<arbitrary>], iteration_bounds = array<i64: 1>, scalar_prefetch = 0 : i64, scratch_operands = 0 : i64, tpu.core_type = #tpu.core_type<tc>, window_params = [{pipeline_mode = #tpu.pipeline_mode<synchronous>, transform_indices = @transform_0, window_bounds = array<i64: 8, 256>}, {pipeline_mode = #tpu.pipeline_mode<synchronous>, transform_indices = @transform_1, window_bounds = array<i64: 64, 384>}, {pipeline_mode = #tpu.pipeline_mode<synchronous>, transform_indices = @transform_2, window_bounds = array<i64: 64, 8>}, {pipeline_mode = #tpu.pipeline_mode<synchronous>, transform_indices = @transform_3, window_bounds = array<i64: 256, 4096>}, {pipeline_mode = #tpu.pipeline_mode<synchronous>, transform_indices = @transform_4, window_bounds = array<i64: 4096, 384>}, {pipeline_mode = #tpu.pipeline_mode<synchronous>, transform_indices = @transform_5, window_bounds = array<i64: 1, 384>}, {pipeline_mode = #tpu.pipeline_mode<synchronous>, transform_indices = @transform_6, window_bounds = array<i64: 1, 32>}, {pipeline_mode = #tpu.pipeline_mode<synchronous>, transform_indices = @transform_7, window_bounds = array<i64: 1, 32>}, {pipeline_mode = #tpu.pipeline_mode<synchronous>, transform_indices = @transform_8, window_bounds = array<i64: 32, 8>}, {pipeline_mode = #tpu.pipeline_mode<synchronous>, transform_indices = @transform_9, window_bounds = array<i64: 1, 8>}, {pipeline_mode = #tpu.pipeline_mode<synchronous>, transform_indices = @transform_10, window_bounds = array<i64: 1, 1>}, {pipeline_mode = #tpu.pipeline_mode<synchronous>, transform_indices = @transform_11, window_bounds = array<i64: 8, 8>}]} {
    %c0 = arith.constant 0 : index
    %c0_0 = arith.constant 0 : index
    %0 = vector.load %arg1[%c0, %c0_0] : memref<8x256xbf16, #tpu.memory_space<vmem>>, vector<8x256xbf16>
    %c0_1 = arith.constant 0 : index
    %c0_2 = arith.constant 0 : index
    %1 = vector.load %arg4[%c0_1, %c0_2] : memref<256x4096xbf16, #tpu.memory_space<vmem>>, vector<256x4096xbf16>
    %cst = arith.constant dense<0.000000e+00> : vector<8x4096xf32>
    %2 = tpu.matmul %0, %1, %cst {dimension_numbers = #tpu.dot_dimension_numbers<[1], [0], [0], [1], [0, 0, 1, 1], [], []>} : vector<8x256xbf16>, vector<256x4096xbf16>, vector<8x4096xf32> -> vector<8x4096xf32>
    %3 = arith.truncf %2 : vector<8x4096xf32> to vector<8x4096xbf16>
    %c0_3 = arith.constant 0 : index
    %c0_4 = arith.constant 0 : index
    %4 = vector.load %arg5[%c0_3, %c0_4] : memref<4096x384xbf16, #tpu.memory_space<vmem>>, vector<4096x384xbf16>
    %cst_5 = arith.constant dense<0.000000e+00> : vector<8x384xf32>
    %5 = tpu.matmul %3, %4, %cst_5 {dimension_numbers = #tpu.dot_dimension_numbers<[1], [0], [0], [1], [0, 0, 1, 1], [], []>} : vector<8x4096xbf16>, vector<4096x384xbf16>, vector<8x384xf32> -> vector<8x384xf32>
    %c0_6 = arith.constant 0 : index
    %c0_7 = arith.constant 0 : index
    %6 = vector.load %arg6[%c0_6, %c0_7] : memref<1x384xf32, #tpu.memory_space<vmem>>, vector<1x384xf32>
    %7 = vector.broadcast %6 : vector<1x384xf32> to vector<8x384xf32>
    %8 = arith.addf %5, %7 : vector<8x384xf32>
    %c0_8 = arith.constant 0 : index
    %c0_9 = arith.constant 0 : index
    %9 = vector.load %arg2[%c0_8, %c0_9] : memref<64x384xf32, #tpu.memory_space<vmem>>, vector<64x384xf32>
    %cst_10 = arith.constant dense<0.000000e+00> : vector<64x8xf32>
    %10 = tpu.matmul %9, %8, %cst_10 {dimension_numbers = #tpu.dot_dimension_numbers<[1], [1], [0], [0], [0, 0, 1, 0], [], []>} : vector<64x384xf32>, vector<8x384xf32>, vector<64x8xf32> -> vector<64x8xf32>
    %cst_11 = arith.constant dense<0xFF800000> : vector<64xf32>
    %11 = vector.multi_reduction <maximumf>, %10, %cst_11 [1] : vector<64x8xf32> to vector<64xf32>
    %12 = vector.shape_cast %11 : vector<64xf32> to vector<64x1xf32>
    %13 = vector.broadcast %12 : vector<64x1xf32> to vector<64x8xf32>
    %14 = arith.subf %10, %13 : vector<64x8xf32>
    %15 = math.exp %14 : vector<64x8xf32>
    %cst_12 = arith.constant dense<0.000000e+00> : vector<64xf32>
    %16 = vector.multi_reduction <add>, %15, %cst_12 [1] : vector<64x8xf32> to vector<64xf32>
    %17 = vector.shape_cast %16 : vector<64xf32> to vector<64x1xf32>
    %18 = math.log %17 : vector<64x1xf32>
    %19 = arith.addf %12, %18 : vector<64x1xf32>
    %c0_13 = arith.constant 0 : index
    %c0_14 = arith.constant 0 : index
    %20 = vector.load %arg3[%c0_13, %c0_14] : memref<64x8xf32, #tpu.memory_space<vmem>>, vector<64x8xf32>
    %21 = arith.mulf %10, %20 : vector<64x8xf32>
    %cst_15 = arith.constant dense<0.000000e+00> : vector<64xf32>
    %22 = vector.multi_reduction <add>, %21, %cst_15 [1] : vector<64x8xf32> to vector<64xf32>
    %23 = vector.shape_cast %22 : vector<64xf32> to vector<64x1xf32>
    %24 = arith.subf %23, %19 : vector<64x1xf32>
    %cst_16 = arith.constant dense<0.000000e+00> : vector<1xf32>
    %25 = vector.multi_reduction <add>, %24, %cst_16 [0] : vector<64x1xf32> to vector<1xf32>
    %26 = vector.shape_cast %25 : vector<1xf32> to vector<1x1xf32>
    %c0_17 = arith.constant 0 : index
    %c0_18 = arith.constant 0 : index
    %27 = vector.load %arg11[%c0_17, %c0_18] : memref<1x1xf32, #tpu.memory_space<vmem>>, vector<1x1xf32>
    tpu.vector_store %arg11[%c0_17, %c0_18], %26 {strides = array<i32>} : memref<1x1xf32, #tpu.memory_space<vmem>>, vector<1x1xf32>,
    %28 = vector.extract_strided_slice %8 {offsets = [0, 256], sizes = [8, 32], strides = [1, 1]} : vector<8x384xf32> to vector<8x32xf32>
    %cst_19 = arith.constant dense<0.000000e+00> : vector<32xf32>
    %29 = vector.multi_reduction <add>, %28, %cst_19 [0] : vector<8x32xf32> to vector<32xf32>
    %30 = vector.shape_cast %29 : vector<32xf32> to vector<1x32xf32>
    %cst_20 = arith.constant 8.000000e+00 : f32
    %31 = vector.broadcast %cst_20 : f32 to vector<1x32xf32>
    %32 = arith.divf %30, %31 : vector<1x32xf32>
    %33 = vector.broadcast %32 : vector<1x32xf32> to vector<8x32xf32>
    %34 = arith.subf %28, %33 : vector<8x32xf32>
    %35 = arith.mulf %34, %34 : vector<8x32xf32>
    %cst_21 = arith.constant dense<0.000000e+00> : vector<32xf32>
    %36 = vector.multi_reduction <add>, %35, %cst_21 [0] : vector<8x32xf32> to vector<32xf32>
    %37 = vector.shape_cast %36 : vector<32xf32> to vector<1x32xf32>
    %cst_22 = arith.constant 8.000000e+00 : f32
    %38 = vector.broadcast %cst_22 : f32 to vector<1x32xf32>
    %39 = arith.divf %37, %38 : vector<1x32xf32>
    %40 = vector.broadcast %32 : vector<1x32xf32> to vector<8x32xf32>
    %41 = arith.subf %28, %40 : vector<8x32xf32>
    %cst_23 = arith.constant 9.99999974E-6 : f32
    %42 = vector.broadcast %cst_23 : f32 to vector<1x32xf32>
    %43 = arith.addf %39, %42 : vector<1x32xf32>
    %44 = math.rsqrt %43 : vector<1x32xf32>
    %45 = vector.broadcast %44 : vector<1x32xf32> to vector<8x32xf32>
    %46 = arith.mulf %41, %45 : vector<8x32xf32>
    %c0_24 = arith.constant 0 : index
    %c0_25 = arith.constant 0 : index
    %47 = vector.load %arg7[%c0_24, %c0_25] : memref<1x32xf32, #tpu.memory_space<vmem>>, vector<1x32xf32>
    %48 = vector.broadcast %47 : vector<1x32xf32> to vector<8x32xf32>
    %49 = arith.mulf %48, %46 : vector<8x32xf32>
    %c0_26 = arith.constant 0 : index
    %c0_27 = arith.constant 0 : index
    %50 = vector.load %arg8[%c0_26, %c0_27] : memref<1x32xf32, #tpu.memory_space<vmem>>, vector<1x32xf32>
    %51 = vector.broadcast %50 : vector<1x32xf32> to vector<8x32xf32>
    %52 = arith.addf %49, %51 : vector<8x32xf32>
    %cst_28 = arith.constant 0.000000e+00 : f32
    %53 = vector.broadcast %cst_28 : f32 to vector<8x32xf32>
    %54 = arith.cmpf oge, %52, %53 : vector<8x32xf32>
    %cst_29 = arith.constant 0.00999999977 : f32
    %55 = vector.broadcast %cst_29 : f32 to vector<8x32xf32>
    %56 = arith.mulf %55, %52 : vector<8x32xf32>
    %57 = arith.select %54, %52, %56 : vector<8x32xi1>, vector<8x32xf32>
    %c0_30 = arith.constant 0 : index
    %c0_31 = arith.constant 0 : index
    %58 = vector.load %arg9[%c0_30, %c0_31] : memref<32x8xf32, #tpu.memory_space<vmem>>, vector<32x8xf32>
    %cst_32 = arith.constant dense<0.000000e+00> : vector<8x8xf32>
    %59 = tpu.matmul %57, %58, %cst_32 {dimension_numbers = #tpu.dot_dimension_numbers<[1], [0], [0], [1], [0, 0, 1, 1], [], []>} : vector<8x32xf32>, vector<32x8xf32>, vector<8x8xf32> -> vector<8x8xf32>
    %c0_33 = arith.constant 0 : index
    %c0_34 = arith.constant 0 : index
    %60 = vector.load %arg10[%c0_33, %c0_34] : memref<1x8xf32, #tpu.memory_space<vmem>>, vector<1x8xf32>
    %61 = vector.broadcast %60 : vector<1x8xf32> to vector<8x8xf32>
    %62 = arith.addf %59, %61 : vector<8x8xf32>
    %c0_35 = arith.constant 0 : index
    %c0_36 = arith.constant 0 : index
    %63 = vector.load %arg12[%c0_35, %c0_36] : memref<8x8xf32, #tpu.memory_space<vmem>>, vector<8x8xf32>
    tpu.vector_store %arg12[%c0_35, %c0_36], %62 {strides = array<i32>} : memref<8x8xf32, #tpu.memory_space<vmem>>, vector<8x8xf32>,
    return
  }
  func.func @transform_0(%arg0: i32) -> (i32, i32) {
    %c0_i32 = arith.constant 0 : i32
    %c0_i32_0 = arith.constant 0 : i32
    %c0_i32_1 = arith.constant 0 : i32
    return %c0_i32, %c0_i32_0 : i32, i32
  }
  func.func @transform_1(%arg0: i32) -> (i32, i32) {
    %c0_i32 = arith.constant 0 : i32
    %c0_i32_0 = arith.constant 0 : i32
    %c0_i32_1 = arith.constant 0 : i32
    return %c0_i32, %c0_i32_0 : i32, i32
  }
  func.func @transform_2(%arg0: i32) -> (i32, i32) {
    %c0_i32 = arith.constant 0 : i32
    %c0_i32_0 = arith.constant 0 : i32
    %c0_i32_1 = arith.constant 0 : i32
    return %c0_i32, %c0_i32_0 : i32, i32
  }
  func.func @transform_3(%arg0: i32) -> (i32, i32) {
    %c0_i32 = arith.constant 0 : i32
    %c0_i32_0 = arith.constant 0 : i32
    %c0_i32_1 = arith.constant 0 : i32
    return %c0_i32, %c0_i32_0 : i32, i32
  }
  func.func @transform_4(%arg0: i32) -> (i32, i32) {
    %c0_i32 = arith.constant 0 : i32
    %c0_i32_0 = arith.constant 0 : i32
    %c0_i32_1 = arith.constant 0 : i32
    return %c0_i32, %c0_i32_0 : i32, i32
  }
  func.func @transform_5(%arg0: i32) -> (i32, i32) {
    %c0_i32 = arith.constant 0 : i32
    %c0_i32_0 = arith.constant 0 : i32
    %c0_i32_1 = arith.constant 0 : i32
    return %c0_i32, %c0_i32_0 : i32, i32
  }
  func.func @transform_6(%arg0: i32) -> (i32, i32) {
    %c0_i32 = arith.constant 0 : i32
    %c0_i32_0 = arith.constant 0 : i32
    %c0_i32_1 = arith.constant 0 : i32
    return %c0_i32, %c0_i32_0 : i32, i32
  }
  func.func @transform_7(%arg0: i32) -> (i32, i32) {
    %c0_i32 = arith.constant 0 : i32
    %c0_i32_0 = arith.constant 0 : i32
    %c0_i32_1 = arith.constant 0 : i32
    return %c0_i32, %c0_i32_0 : i32, i32
  }
  func.func @transform_8(%arg0: i32) -> (i32, i32) {
    %c0_i32 = arith.constant 0 : i32
    %c0_i32_0 = arith.constant 0 : i32
    %c0_i32_1 = arith.constant 0 : i32
    return %c0_i32, %c0_i32_0 : i32, i32
  }
  func.func @transform_9(%arg0: i32) -> (i32, i32) {
    %c0_i32 = arith.constant 0 : i32
    %c0_i32_0 = arith.constant 0 : i32
    %c0_i32_1 = arith.constant 0 : i32
    return %c0_i32, %c0_i32_0 : i32, i32
  }
  func.func @transform_10(%arg0: i32) -> (i32, i32) {
    %c0_i32 = arith.constant 0 : i32
    %c0_i32_0 = arith.constant 0 : i32
    %c0_i32_1 = arith.constant 0 : i32
    return %c0_i32, %c0_i32_0 : i32, i32
  }
  func.func @transform_11(%arg0: i32) -> (i32, i32) {
    %c0_i32 = arith.constant 0 : i32
    %c0_i32_0 = arith.constant 0 : i32
    %c0_i32_1 = arith.constant 0 : i32
    return %c0_i32, %c0_i32_0 : i32, i32
  }
}

</mosaic_0001>

<llo_original>
// kernel: td_forward.1
$region0: #{td_forward.1}
  #allocation0 [shape = 'u32[]', space=smem, size = 0x4, offset = 0x4, fixed_abs, tag = 'smem constant byte address 0x4 - core index']
  #allocation1 [shape = 'u32[144,128]{1,0:T(1,128)}', space=vmem, size = 0x12000, scoped, tag = 'internal scratch']
  %s0 = inlined_call_operand.vmem [shape: bf16[8,256], index: 0, kind: input, shape index: {}]
  %s1 = inlined_call_operand.vmem [shape: f32[64,384], index: 1, kind: input, shape index: {}]
  %s2 = inlined_call_operand.vmem [shape: f32[64,8], index: 2, kind: input, shape index: {}]
  %s3 = inlined_call_operand.hbm [shape: bf16[256,4096], index: 3, kind: input, shape index: {}]
  %s4 = inlined_call_operand.hbm [shape: bf16[4096,384], index: 4, kind: input, shape index: {}]
  %s5 = inlined_call_operand.hbm [shape: f32[1,384], index: 5, kind: input, shape index: {}]
  %s6 = inlined_call_operand.hbm [shape: f32[1,32], index: 6, kind: input, shape index: {}]
  %s7 = inlined_call_operand.hbm [shape: f32[1,32], index: 7, kind: input, shape index: {}]
  %s8 = inlined_call_operand.vmem [shape: f32[32,8], index: 8, kind: input, shape index: {}]
  %s9 = inlined_call_operand.hbm [shape: f32[1,8], index: 9, kind: input, shape index: {}]
  %s10 = inlined_call_operand.hbm [shape: f32[1,1], index: 10, kind: output, shape index: {0}]
  %s11 = inlined_call_operand.hbm [shape: f32[8,8], index: 11, kind: output, shape index: {1}]
  %12 = xla_tuple %s10, %s11
  %s13 = sld [smem:[#allocation0]]
  $region82: #{td_forward.1} parent=0
    _
  %s15 = ssub.s32 1, %s13
  %s16 = scalar_select 0, %s15, %s13
  $region1: #{td_forward.1} parent=0
    #allocation2 [shape = 'u8[2097152]{0}', space=vmem, size = 0x200000, scoped, tag = 'input window, operand 3, single buffered']
    #allocation3 [shape = 's32[1]{0}', space=sflag, size = 0x4, scoped, tag = 'scoped memory for td_forward.1']
    #allocation4 [shape = 's32[1]{0}', space=sflag, size = 0x4, scoped, tag = 'scoped memory for td_forward.1']
    #allocation5 [shape = 'u8[3145728]{0}', space=vmem, size = 0x300000, scoped, tag = 'input window, operand 4, single buffered']
    #allocation6 [shape = 's32[1]{0}', space=sflag, size = 0x4, scoped, tag = 'scoped memory for td_forward.1']
    #allocation7 [shape = 'u8[1536]{0}', space=vmem, size = 0x800, scoped, tag = 'input window, operand 5, single buffered']
    #allocation8 [shape = 'u8[512]{0}', space=vmem, size = 0x400, scoped, tag = 'input window, operand 6, single buffered']
    #allocation9 [shape = 's32[1]{0}', space=sflag, size = 0x4, scoped, tag = 'scoped memory for td_forward.1']
    #allocation10 [shape = 'u8[512]{0}', space=vmem, size = 0x400, scoped, tag = 'input window, operand 7, single buffered']
    #allocation11 [shape = 'u8[512]{0}', space=vmem, size = 0x400, scoped, tag = 'input window, operand 9, single buffered']
    #allocation12 [shape = 's32[1]{0}', space=sflag, size = 0x4, scoped, tag = 'scoped memory for td_forward.1']
    #allocation13 [shape = 'u8[512]{0}', space=vmem, size = 0x400, scoped, tag = 'output window, operand 0, single buffered']
    #allocation14 [shape = 'u8[4096]{0}', space=vmem, size = 0x1000, scoped, tag = 'output window, operand 1, single buffered']
    #allocation15 [shape = 's32[1]{0}', space=sflag, size = 0x4, scoped, tag = 'scoped memory for td_forward.1']
    %17 = vsyncpa [#allocation3], 0
    %18 = vsyncpa [#allocation6], 0
    %19 = vsyncpa [#allocation9], 0
    %20 = vsyncpa [#allocation12], 0
    %21 = vsyncpa [#allocation4], 0
    %22 = vsyncpa [#allocation15], 0
    // Predicated region
    $region2: #{td_forward.1} parent=1 // pred_check
      _
    $region3: #{td_forward.1} parent=1 // pred_check_branch
      %24 = sbr.rel (0) target = $region5
    $region4: #{td_forward.1} parent=1 // pred_region
      _
    $region5: #{td_forward.1} parent=1 // pred_fallthru
      _
    // Predicated region
    $region6: #{td_forward.1} parent=1 // pred_check
      _
    $region7: #{td_forward.1} parent=1 // pred_check_branch
      %26 = sbr.rel (0) target = $region9
    $region8: #{td_forward.1} parent=1 // pred_region
      _
    $region9: #{td_forward.1} parent=1 // pred_fallthru
      _
    // Predicated region
    $region10: #{td_forward.1} parent=1 // pred_check
      _
    $region11: #{td_forward.1} parent=1 // pred_check_branch
      %28 = sbr.rel (0) target = $region13
    $region12: #{td_forward.1} parent=1 // pred_region
      _
    $region13: #{td_forward.1} parent=1 // pred_fallthru
      _
    // Predicated region
    $region14: #{td_forward.1} parent=1 // pred_check
      _
    $region15: #{td_forward.1} parent=1 // pred_check_branch
      %30 = sbr.rel (0) target = $region17
    $region16: #{td_forward.1} parent=1 // pred_region
      %s32 = ssub.s32 65536, 65536
      %33 = vsyncadd [#allocation3], %s32
      %s34 = sshll.u32 [#allocation2], 4
      %s35 = int_to_ptr.vmem [resolvable:$true] %s34
      %40 = dma.hbm_to_vmem [thread:$0]  %s3, 65536, %s35, [#allocation3], 2048, 2048, 128
    $region17: #{td_forward.1} parent=1 // pred_fallthru
      _
    // Predicated region
    $region18: #{td_forward.1} parent=1 // pred_check
      _
    $region19: #{td_forward.1} parent=1 // pred_check_branch
      %42 = sbr.rel (0) target = $region21
    $region20: #{td_forward.1} parent=1 // pred_region
      %s44 = ssub.s32 98304, 98304
      %45 = vsyncadd [#allocation6], %s44
      %s46 = sshll.u32 [#allocation5], 4
      %s47 = int_to_ptr.vmem [resolvable:$true] %s46
      %52 = dma.hbm_to_vmem [thread:$0]  %s4, 98304, %s47, [#allocation6], 192, 192, 12
    $region21: #{td_forward.1} parent=1 // pred_fallthru
      _
    // Predicated region
    $region22: #{td_forward.1} parent=1 // pred_check
      _
    $region23: #{td_forward.1} parent=1 // pred_check_branch
      %54 = sbr.rel (0) target = $region25
    $region24: #{td_forward.1} parent=1 // pred_region
      %s56 = ssub.s32 48, 48
      %57 = vsyncadd [#allocation6], %s56
      %s59 = sshll.u32 [#allocation7], 4
      %s60 = int_to_ptr.vmem [resolvable:$true] %s59
      %62 = dma.hbm_to_vmem [thread:$0]  %s5, 48, %s60, [#allocation6]
    $region25: #{td_forward.1} parent=1 // pred_fallthru
      _
    // Predicated region
    $region26: #{td_forward.1} parent=1 // pred_check
      _
    $region27: #{td_forward.1} parent=1 // pred_check_branch
      %64 = sbr.rel (0) target = $region29
    $region28: #{td_forward.1} parent=1 // pred_region
      %s66 = ssub.s32 16, 16
      %67 = vsyncadd [#allocation9], %s66
      %s69 = sshll.u32 [#allocation8], 4
      %s70 = int_to_ptr.vmem [resolvable:$true] %s69
      %72 = dma.hbm_to_vmem [thread:$0]  %s6, 16, %s70, [#allocation9]
    $region29: #{td_forward.1} parent=1 // pred_fallthru
      _
    // Predicated region
    $region30: #{td_forward.1} parent=1 // pred_check
      _
    $region31: #{td_forward.1} parent=1 // pred_check_branch
      %74 = sbr.rel (0) target = $region33
    $region32: #{td_forward.1} parent=1 // pred_region
      %s76 = ssub.s32 16, 16
      %77 = vsyncadd [#allocation9], %s76
      %s79 = sshll.u32 [#allocation10], 4
      %s80 = int_to_ptr.vmem [resolvable:$true] %s79
      %82 = dma.hbm_to_vmem [thread:$0]  %s7, 16, %s80, [#allocation9]
    $region33: #{td_forward.1} parent=1 // pred_fallthru
      _
    // Predicated region
    $region34: #{td_forward.1} parent=1 // pred_check
      _
    $region35: #{td_forward.1} parent=1 // pred_check_branch
      %84 = sbr.rel (0) target = $region37
    $region36: #{td_forward.1} parent=1 // pred_region
      _
    $region37: #{td_forward.1} parent=1 // pred_fallthru
      _
    // Predicated region
    $region38: #{td_forward.1} parent=1 // pred_check
      _
    $region39: #{td_forward.1} parent=1 // pred_check_branch
      %86 = sbr.rel (0) target = $region41
    $region40: #{td_forward.1} parent=1 // pred_region
      %s88 = ssub.s32 16, 16
      %89 = vsyncadd [#allocation12], %s88
      %s91 = sshll.u32 [#allocation11], 4
      %s92 = int_to_ptr.vmem [resolvable:$true] %s91
      %94 = dma.hbm_to_vmem [thread:$0]  %s9, 16, %s92, [#allocation12]
    $region41: #{td_forward.1} parent=1 // pred_fallthru
      _
    // Predicated region
    $region42: #{td_forward.1} parent=1 // pred_check
      _
    $region43: #{td_forward.1} parent=1 // pred_check_branch
      %96 = sbr.rel (0) target = $region45
    $region44: #{td_forward.1} parent=1 // pred_region
      %97 = dma.done [#allocation3], 65536
    $region45: #{td_forward.1} parent=1 // pred_fallthru
      _
    // Predicated region
    $region46: #{td_forward.1} parent=1 // pred_check
      _
    $region47: #{td_forward.1} parent=1 // pred_check_branch
      %99 = sbr.rel (0) target = $region49
    $region48: #{td_forward.1} parent=1 // pred_region
      %100 = dma.done [#allocation6], 98304
    $region49: #{td_forward.1} parent=1 // pred_fallthru
      _
    // Predicated region
    $region50: #{td_forward.1} parent=1 // pred_check
      _
    $region51: #{td_forward.1} parent=1 // pred_check_branch
      %102 = sbr.rel (0) target = $region53
    $region52: #{td_forward.1} parent=1 // pred_region
      %103 = dma.done [#allocation6], 48
    $region53: #{td_forward.1} parent=1 // pred_fallthru
      _
    // Predicated region
    $region54: #{td_forward.1} parent=1 // pred_check
      _
    $region55: #{td_forward.1} parent=1 // pred_check_branch
      %105 = sbr.rel (0) target = $region57
    $region56: #{td_forward.1} parent=1 // pred_region
      %106 = dma.done [#allocation9], 16
    $region57: #{td_forward.1} parent=1 // pred_fallthru
      _
    // Predicated region
    $region58: #{td_forward.1} parent=1 // pred_check
      _
    $region59: #{td_forward.1} parent=1 // pred_check_branch
      %108 = sbr.rel (0) target = $region61
    $region60: #{td_forward.1} parent=1 // pred_region
      %109 = dma.done [#allocation9], 16
    $region61: #{td_forward.1} parent=1 // pred_fallthru
      _
    // Predicated region
    $region62: #{td_forward.1} parent=1 // pred_check
      _
    $region63: #{td_forward.1} parent=1 // pred_check_branch
      %111 = sbr.rel (0) target = $region65
    $region64: #{td_forward.1} parent=1 // pred_region
      %112 = dma.done [#allocation12], 16
    $region65: #{td_forward.1} parent=1 // pred_fallthru
      _
    %v114 = vld [vmem:[%s0] sm:$0xff]
    %v115 = vld [vmem:[#allocation2] sm:$0xff]
    %v116 = vld [vmem:[#allocation2 + $0x8] sm:$0xff]
    %v117 = vld [vmem:[#allocation2 + $0x10] sm:$0xff]
    %v118 = vld [vmem:[#allocation2 + $0x18] sm:$0xff]
    %v119 = vld [vmem:[#allocation2 + $0x20] sm:$0xff]
    %v120 = vld [vmem:[#allocation2 + $0x28] sm:$0xff]
    %v121 = vld [vmem:[#allocation2 + $0x30] sm:$0xff]
    %v122 = vld [vmem:[#allocation2 + $0x38] sm:$0xff]
    %v123 = vld [vmem:[#allocation2 + $0x40] sm:$0xff]
    %v124 = vld [vmem:[#allocation2 + $0x48] sm:$0xff]
    %v125 = vld [vmem:[#allocation2 + $0x50] sm:$0xff]
    %v126 = vld [vmem:[#allocation2 + $0x58] sm:$0xff]
    %v127 = vld [vmem:[#allocation2 + $0x60] sm:$0xff]
    %v128 = vld [vmem:[#allocation2 + $0x68] sm:$0xff]
    %v129 = vld [vmem:[#allocation2 + $0x70] sm:$0xff]
    %v130 = vld [vmem:[#allocation2 + $0x78] sm:$0xff]
    %v131 = vld [vmem:[#allocation2 + $0x80] sm:$0xff]
    %v132 = vld [vmem:[#allocation2 + $0x88] sm:$0xff]
    %v133 = vld [vmem:[#allocation2 + $0x90] sm:$0xff]
    %v134 = vld [vmem:[#allocation2 + $0x98] sm:$0xff]
    %v135 = vld [vmem:[#allocation2 + $0xa0] sm:$0xff]
    %v136 = vld [vmem:[#allocation2 + $0xa8] sm:$0xff]
    %v137 = vld [vmem:[#allocation2 + $0xb0] sm:$0xff]
    %v138 = vld [vmem:[#allocation2 + $0xb8] sm:$0xff]
    %v139 = vld [vmem:[#allocation2 + $0xc0] sm:$0xff]
    %v140 = vld [vmem:[#allocation2 + $0xc8] sm:$0xff]
    %v141 = vld [vmem:[#allocation2 + $0xd0] sm:$0xff]
    %v142 = vld [vmem:[#allocation2 + $0xd8] sm:$0xff]
    %v143 = vld [vmem:[#allocation2 + $0xe0] sm:$0xff]
    %v144 = vld [vmem:[#allocation2 + $0xe8] sm:$0xff]
    %v145 = vld [vmem:[#allocation2 + $0xf0] sm:$0xff]
    %v146 = vld [vmem:[#allocation2 + $0xf8] sm:$0xff]
    %v147 = vld [vmem:[#allocation2 + $0x100] sm:$0xff]
    %v148 = vld [vmem:[#allocation2 + $0x108] sm:$0xff]
    %v149 = vld [vmem:[#allocation2 + $0x110] sm:$0xff]
    %v150 = vld [vmem:[#allocation2 + $0x118] sm:$0xff]
    %v151 = vld [vmem:[#allocation2 + $0x120] sm:$0xff]
    %v152 = vld [vmem:[#allocation2 + $0x128] sm:$0xff]
    %v153 = vld [vmem:[#allocation2 + $0x130] sm:$0xff]
    %v154 = vld [vmem:[#allocation2 + $0x138] sm:$0xff]
    %v155 = vld [vmem:[#allocation2 + $0x140] sm:$0xff]
    %v156 = vld [vmem:[#allocation2 + $0x148] sm:$0xff]
    %v157 = vld [vmem:[#allocation2 + $0x150] sm:$0xff]
    %v158 = vld [vmem:[#allocation2 + $0x158] sm:$0xff]
    %v159 = vld [vmem:[#allocation2 + $0x160] sm:$0xff]
    %v160 = vld [vmem:[#allocation2 + $0x168] sm:$0xff]
    %v161 = vld [vmem:[#allocation2 + $0x170] sm:$0xff]
    %v162 = vld [vmem:[#allocation2 + $0x178] sm:$0xff]
    %v163 = vld [vmem:[#allocation2 + $0x180] sm:$0xff]
    %v164 = vld [vmem:[#allocation2 + $0x188] sm:$0xff]
    %v165 = vld [vmem:[#allocation2 + $0x190] sm:$0xff]
    %v166 = vld [vmem:[#allocation2 + $0x198] sm:$0xff]
    %v167 = vld [vmem:[#allocation2 + $0x1a0] sm:$0xff]
    %v168 = vld [vmem:[#allocation2 + $0x1a8] sm:$0xff]
    %v169 = vld [vmem:[#allocation2 + $0x1b0] sm:$0xff]
    %v170 = vld [vmem:[#allocation2 + $0x1b8] sm:$0xff]
    %v171 = vld [vmem:[#allocation2 + $0x1c0] sm:$0xff]
    %v172 = vld [vmem:[#allocation2 + $0x1c8] sm:$0xff]
    %v173 = vld [vmem:[#allocation2 + $0x1d0] sm:$0xff]
    %v174 = vld [vmem:[#allocation2 + $0x1d8] sm:$0xff]
    %v175 = vld [vmem:[#allocation2 + $0x1e0] sm:$0xff]
    %v176 = vld [vmem:[#allocation2 + $0x1e8] sm:$0xff]
    %v177 = vld [vmem:[#allocation2 + $0x1f0] sm:$0xff]
    %v178 = vld [vmem:[#allocation2 + $0x1f8] sm:$0xff]
    %v179 = vld [vmem:[#allocation2 + $0x200] sm:$0xff]
    %v180 = vld [vmem:[#allocation2 + $0x208] sm:$0xff]
    %v181 = vld [vmem:[#allocation2 + $0x210] sm:$0xff]
    %v182 = vld [vmem:[#allocation2 + $0x218] sm:$0xff]
    %v183 = vld [vmem:[#allocation2 + $0x220] sm:$0xff]
    %v184 = vld [vmem:[#allocation2 + $0x228] sm:$0xff]
    %v185 = vld [vmem:[#allocation2 + $0x230] sm:$0xff]
    %v186 = vld [vmem:[#allocation2 + $0x238] sm:$0xff]
    %v187 = vld [vmem:[#allocation2 + $0x240] sm:$0xff]
    %v188 = vld [vmem:[#allocation2 + $0x248] sm:$0xff]
    %v189 = vld [vmem:[#allocation2 + $0x250] sm:$0xff]
    %v190 = vld [vmem:[#allocation2 + $0x258] sm:$0xff]
    %v191 = vld [vmem:[#allocation2 + $0x260] sm:$0xff]
    %v192 = vld [vmem:[#allocation2 + $0x268] sm:$0xff]
    %v193 = vld [vmem:[#allocation2 + $0x270] sm:$0xff]
    %v194 = vld [vmem:[#allocation2 + $0x278] sm:$0xff]
    %v195 = vld [vmem:[#allocation2 + $0x280] sm:$0xff]
    %v196 = vld [vmem:[#allocation2 + $0x288] sm:$0xff]
    %v197 = vld [vmem:[#allocation2 + $0x290] sm:$0xff]
    %v198 = vld [vmem:[#allocation2 + $0x298] sm:$0xff]
    %v199 = vld [vmem:[#allocation2 + $0x2a0] sm:$0xff]
    %v200 = vld [vmem:[#allocation2 + $0x2a8] sm:$0xff]
    %v201 = vld [vmem:[#allocation2 + $0x2b0] sm:$0xff]
    %v202 = vld [vmem:[#allocation2 + $0x2b8] sm:$0xff]
    %v203 = vld [vmem:[#allocation2 + $0x2c0] sm:$0xff]
    %v204 = vld [vmem:[#allocation2 + $0x2c8] sm:$0xff]
    %v205 = vld [vmem:[#allocation2 + $0x2d0] sm:$0xff]
    %v206 = vld [vmem:[#allocation2 + $0x2d8] sm:$0xff]
    %v207 = vld [vmem:[#allocation2 + $0x2e0] sm:$0xff]
    %v208 = vld [vmem:[#allocation2 + $0x2e8] sm:$0xff]
    %v209 = vld [vmem:[#allocation2 + $0x2f0] sm:$0xff]
    %v210 = vld [vmem:[#allocation2 + $0x2f8] sm:$0xff]
    %v211 = vld [vmem:[#allocation2 + $0x300] sm:$0xff]
    %v212 = vld [vmem:[#allocation2 + $0x308] sm:$0xff]
    %v213 = vld [vmem:[#allocation2 + $0x310] sm:$0xff]
    %v214 = vld [vmem:[#allocation2 + $0x318] sm:$0xff]
    %v215 = vld [vmem:[#allocation2 + $0x320] sm:$0xff]
    %v216 = vld [vmem:[#allocation2 + $0x328] sm:$0xff]
    %v217 = vld [vmem:[#allocation2 + $0x330] sm:$0xff]
    %v218 = vld [vmem:[#allocation2 + $0x338] sm:$0xff]
    %v219 = vld [vmem:[#allocation2 + $0x340] sm:$0xff]
    %v220 = vld [vmem:[#allocation2 + $0x348] sm:$0xff]
    %v221 = vld [vmem:[#allocation2 + $0x350] sm:$0xff]
    %v222 = vld [vmem:[#allocation2 + $0x358] sm:$0xff]
    %v223 = vld [vmem:[#allocation2 + $0x360] sm:$0xff]
    %v224 = vld [vmem:[#allocation2 + $0x368] sm:$0xff]
    %v225 = vld [vmem:[#allocation2 + $0x370] sm:$0xff]
    %v226 = vld [vmem:[#allocation2 + $0x378] sm:$0xff]
    %v227 = vld [vmem:[#allocation2 + $0x380] sm:$0xff]
    %v228 = vld [vmem:[#allocation2 + $0x388] sm:$0xff]
    %v229 = vld [vmem:[#allocation2 + $0x390] sm:$0xff]
    %v230 = vld [vmem:[#allocation2 + $0x398] sm:$0xff]
    %v231 = vld [vmem:[#allocation2 + $0x3a0] sm:$0xff]
    %v232 = vld [vmem:[#allocation2 + $0x3a8] sm:$0xff]
    %v233 = vld [vmem:[#allocation2 + $0x3b0] sm:$0xff]
    %v234 = vld [vmem:[#allocation2 + $0x3b8] sm:$0xff]
    %v235 = vld [vmem:[#allocation2 + $0x3c0] sm:$0xff]
    %v236 = vld [vmem:[#allocation2 + $0x3c8] sm:$0xff]
    %v237 = vld [vmem:[#allocation2 + $0x3d0] sm:$0xff]
    %v238 = vld [vmem:[#allocation2 + $0x3d8] sm:$0xff]
    %v239 = vld [vmem:[#allocation2 + $0x3e0] sm:$0xff]
    %v240 = vld [vmem:[#allocation2 + $0x3e8] sm:$0xff]
    %v241 = vld [vmem:[#allocation2 + $0x3f0] sm:$0xff]
    %v242 = vld [vmem:[#allocation2 + $0x3f8] sm:$0xff]
    %v243 = vld [vmem:[#allocation2 + $0x400] sm:$0xff]
    %v244 = vld [vmem:[#allocation2 + $0x408] sm:$0xff]
    %v245 = vld [vmem:[#allocation2 + $0x410] sm:$0xff]
    %v246 = vld [vmem:[#allocation2 + $0x418] sm:$0xff]
    %v247 = vld [vmem:[#allocation2 + $0x420] sm:$0xff]
    %v248 = vld [vmem:[#allocation2 + $0x428] sm:$0xff]
    %v249 = vld [vmem:[#allocation2 + $0x430] sm:$0xff]
    %v250 = vld [vmem:[#allocation2 + $0x438] sm:$0xff]
    %v251 = vld [vmem:[#allocation2 + $0x440] sm:$0xff]
    %v252 = vld [vmem:[#allocation2 + $0x448] sm:$0xff]
    %v253 = vld [vmem:[#allocation2 + $0x450] sm:$0xff]
    %v254 = vld [vmem:[#allocation2 + $0x458] sm:$0xff]
    %v255 = vld [vmem:[#allocation2 + $0x460] sm:$0xff]
    %v256 = vld [vmem:[#allocation2 + $0x468] sm:$0xff]
    %v257 = vld [vmem:[#allocation2 + $0x470] sm:$0xff]
    %v258 = vld [vmem:[#allocation2 + $0x478] sm:$0xff]
    %v259 = vld [vmem:[#allocation2 + $0x480] sm:$0xff]
    %v260 = vld [vmem:[#allocation2 + $0x488] sm:$0xff]
    %v261 = vld [vmem:[#allocation2 + $0x490] sm:$0xff]
    %v262 = vld [vmem:[#allocation2 + $0x498] sm:$0xff]
    %v263 = vld [vmem:[#allocation2 + $0x4a0] sm:$0xff]
    %v264 = vld [vmem:[#allocation2 + $0x4a8] sm:$0xff]
    %v265 = vld [vmem:[#allocation2 + $0x4b0] sm:$0xff]
    %v266 = vld [vmem:[#allocation2 + $0x4b8] sm:$0xff]
    %v267 = vld [vmem:[#allocation2 + $0x4c0] sm:$0xff]
    %v268 = vld [vmem:[#allocation2 + $0x4c8] sm:$0xff]
    %v269 = vld [vmem:[#allocation2 + $0x4d0] sm:$0xff]
    %v270 = vld [vmem:[#allocation2 + $0x4d8] sm:$0xff]
    %v271 = vld [vmem:[#allocation2 + $0x4e0] sm:$0xff]
    %v272 = vld [vmem:[#allocation2 + $0x4e8] sm:$0xff]
    %v273 = vld [vmem:[#allocation2 + $0x4f0] sm:$0xff]
    %v274 = vld [vmem:[#allocation2 + $0x4f8] sm:$0xff]
    %v275 = vld [vmem:[#allocation2 + $0x500] sm:$0xff]
    %v276 = vld [vmem:[#allocation2 + $0x508] sm:$0xff]
    %v277 = vld [vmem:[#allocation2 + $0x510] sm:$0xff]
    %v278 = vld [vmem:[#allocation2 + $0x518] sm:$0xff]
    %v279 = vld [vmem:[#allocation2 + $0x520] sm:$0xff]
    %v280 = vld [vmem:[#allocation2 + $0x528] sm:$0xff]
    %v281 = vld [vmem:[#allocation2 + $0x530] sm:$0xff]
    %v282 = vld [vmem:[#allocation2 + $0x538] sm:$0xff]
    %v283 = vld [vmem:[#allocation2 + $0x540] sm:$0xff]
    %v284 = vld [vmem:[#allocation2 + $0x548] sm:$0xff]
    %v285 = vld [vmem:[#allocation2 + $0x550] sm:$0xff]
    %v286 = vld [vmem:[#allocation2 + $0x558] sm:$0xff]
    %v287 = vld [vmem:[#allocation2 + $0x560] sm:$0xff]
    %v288 = vld [vmem:[#allocation2 + $0x568] sm:$0xff]
    %v289 = vld [vmem:[#allocation2 + $0x570] sm:$0xff]
    %v290 = vld [vmem:[#allocation2 + $0x578] sm:$0xff]
    %v291 = vld [vmem:[#allocation2 + $0x580] sm:$0xff]
    %v292 = vld [vmem:[#allocation2 + $0x588] sm:$0xff]
    %v293 = vld [vmem:[#allocation2 + $0x590] sm:$0xff]
    %v294 = vld [vmem:[#allocation2 + $0x598] sm:$0xff]
    %v295 = vld [vmem:[#allocation2 + $0x5a0] sm:$0xff]
    %v296 = vld [vmem:[#allocation2 + $0x5a8] sm:$0xff]
    %v297 = vld [vmem:[#allocation2 + $0x5b0] sm:$0xff]
    %v298 = vld [vmem:[#allocation2 + $0x5b8] sm:$0xff]
    %v299 = vld [vmem:[#allocation2 + $0x5c0] sm:$0xff]
    %v300 = vld [vmem:[#allocation2 + $0x5c8] sm:$0xff]
    %v301 = vld [vmem:[#allocation2 + $0x5d0] sm:$0xff]
    %v302 = vld [vmem:[#allocation2 + $0x5d8] sm:$0xff]
    %v303 = vld [vmem:[#allocation2 + $0x5e0] sm:$0xff]
    %v304 = vld [vmem:[#allocation2 + $0x5e8] sm:$0xff]
    %v305 = vld [vmem:[#allocation2 + $0x5f0] sm:$0xff]
    %v306 = vld [vmem:[#allocation2 + $0x5f8] sm:$0xff]
    %v307 = vld [vmem:[#allocation2 + $0x600] sm:$0xff]
    %v308 = vld [vmem:[#allocation2 + $0x608] sm:$0xff]
    %v309 = vld [vmem:[#allocation2 + $0x610] sm:$0xff]
    %v310 = vld [vmem:[#allocation2 + $0x618] sm:$0xff]
    %v311 = vld [vmem:[#allocation2 + $0x620] sm:$0xff]
    %v312 = vld [vmem:[#allocation2 + $0x628] sm:$0xff]
    %v313 = vld [vmem:[#allocation2 + $0x630] sm:$0xff]
    %v314 = vld [vmem:[#allocation2 + $0x638] sm:$0xff]
    %v315 = vld [vmem:[#allocation2 + $0x640] sm:$0xff]
    %v316 = vld [vmem:[#allocation2 + $0x648] sm:$0xff]
    %v317 = vld [vmem:[#allocation2 + $0x650] sm:$0xff]
    %v318 = vld [vmem:[#allocation2 + $0x658] sm:$0xff]
    %v319 = vld [vmem:[#allocation2 + $0x660] sm:$0xff]
    %v320 = vld [vmem:[#allocation2 + $0x668] sm:$0xff]
    %v321 = vld [vmem:[#allocation2 + $0x670] sm:$0xff]
    %v322 = vld [vmem:[#allocation2 + $0x678] sm:$0xff]
    %v323 = vld [vmem:[#allocation2 + $0x680] sm:$0xff]
    %v324 = vld [vmem:[#allocation2 + $0x688] sm:$0xff]
    %v325 = vld [vmem:[#allocation2 + $0x690] sm:$0xff]
    %v326 = vld [vmem:[#allocation2 + $0x698] sm:$0xff]
    %v327 = vld [vmem:[#allocation2 + $0x6a0] sm:$0xff]
    %v328 = vld [vmem:[#allocation2 + $0x6a8] sm:$0xff]
    %v329 = vld [vmem:[#allocation2 + $0x6b0] sm:$0xff]
    %v330 = vld [vmem:[#allocation2 + $0x6b8] sm:$0xff]
    %v331 = vld [vmem:[#allocation2 + $0x6c0] sm:$0xff]
    %v332 = vld [vmem:[#allocation2 + $0x6c8] sm:$0xff]
    %v333 = vld [vmem:[#allocation2 + $0x6d0] sm:$0xff]
    %v334 = vld [vmem:[#allocation2 + $0x6d8] sm:$0xff]
    %v335 = vld [vmem:[#allocation2 + $0x6e0] sm:$0xff]
    %v336 = vld [vmem:[#allocation2 + $0x6e8] sm:$0xff]
    %v337 = vld [vmem:[#allocation2 + $0x6f0] sm:$0xff]
    %v338 = vld [vmem:[#allocation2 + $0x6f8] sm:$0xff]
    %v339 = vld [vmem:[#allocation2 + $0x700] sm:$0xff]
    %v340 = vld [vmem:[#allocation2 + $0x708] sm:$0xff]
    %v341 = vld [vmem:[#allocation2 + $0x710] sm:$0xff]
    %v342 = vld [vmem:[#allocation2 + $0x718] sm:$0xff]
    %v343 = vld [vmem:[#allocation2 + $0x720] sm:$0xff]
    %v344 = vld [vmem:[#allocation2 + $0x728] sm:$0xff]
    %v345 = vld [vmem:[#allocation2 + $0x730] sm:$0xff]
    %v346 = vld [vmem:[#allocation2 + $0x738] sm:$0xff]
    %v347 = vld [vmem:[#allocation2 + $0x740] sm:$0xff]
    %v348 = vld [vmem:[#allocation2 + $0x748] sm:$0xff]
    %v349 = vld [vmem:[#allocation2 + $0x750] sm:$0xff]
    %v350 = vld [vmem:[#allocation2 + $0x758] sm:$0xff]
    %v351 = vld [vmem:[#allocation2 + $0x760] sm:$0xff]
    %v352 = vld [vmem:[#allocation2 + $0x768] sm:$0xff]
    %v353 = vld [vmem:[#allocation2 + $0x770] sm:$0xff]
    %v354 = vld [vmem:[#allocation2 + $0x778] sm:$0xff]
    %v355 = vld [vmem:[#allocation2 + $0x780] sm:$0xff]
    %v356 = vld [vmem:[#allocation2 + $0x788] sm:$0xff]
    %v357 = vld [vmem:[#allocation2 + $0x790] sm:$0xff]
    %v358 = vld [vmem:[#allocation2 + $0x798] sm:$0xff]
    %v359 = vld [vmem:[#allocation2 + $0x7a0] sm:$0xff]
    %v360 = vld [vmem:[#allocation2 + $0x7a8] sm:$0xff]
    %v361 = vld [vmem:[#allocation2 + $0x7b0] sm:$0xff]
    %v362 = vld [vmem:[#allocation2 + $0x7b8] sm:$0xff]
    %v363 = vld [vmem:[#allocation2 + $0x7c0] sm:$0xff]
    %v364 = vld [vmem:[#allocation2 + $0x7c8] sm:$0xff]
    %v365 = vld [vmem:[#allocation2 + $0x7d0] sm:$0xff]
    %v366 = vld [vmem:[#allocation2 + $0x7d8] sm:$0xff]
    %v367 = vld [vmem:[#allocation2 + $0x7e0] sm:$0xff]
    %v368 = vld [vmem:[#allocation2 + $0x7e8] sm:$0xff]
    %v369 = vld [vmem:[#allocation2 + $0x7f0] sm:$0xff]
    %v370 = vld [vmem:[#allocation2 + $0x7f8] sm:$0xff]
    %v371 = vld [vmem:[#allocation2 + $0x800] sm:$0xff]
    %v372 = vld [vmem:[#allocation2 + $0x808] sm:$0xff]
    %v373 = vld [vmem:[#allocation2 + $0x810] sm:$0xff]
    %v374 = vld [vmem:[#allocation2 + $0x818] sm:$0xff]
    %v375 = vld [vmem:[#allocation2 + $0x820] sm:$0xff]
    %v376 = vld [vmem:[#allocation2 + $0x828] sm:$0xff]
    %v377 = vld [vmem:[#allocation2 + $0x830] sm:$0xff]
    %v378 = vld [vmem:[#allocation2 + $0x838] sm:$0xff]
    %v379 = vld [vmem:[#allocation2 + $0x840] sm:$0xff]
    %v380 = vld [vmem:[#allocation2 + $0x848] sm:$0xff]
    %v381 = vld [vmem:[#allocation2 + $0x850] sm:$0xff]
    %v382 = vld [vmem:[#allocation2 + $0x858] sm:$0xff]
    %v383 = vld [vmem:[#allocation2 + $0x860] sm:$0xff]
    %v384 = vld [vmem:[#allocation2 + $0x868] sm:$0xff]
    %v385 = vld [vmem:[#allocation2 + $0x870] sm:$0xff]
    %v386 = vld [vmem:[#allocation2 + $0x878] sm:$0xff]
    %v387 = vld [vmem:[#allocation2 + $0x880] sm:$0xff]
    %v388 = vld [vmem:[#allocation2 + $0x888] sm:$0xff]
    %v389 = vld [vmem:[#allocation2 + $0x890] sm:$0xff]
    %v390 = vld [vmem:[#allocation2 + $0x898] sm:$0xff]
    %v391 = vld [vmem:[#allocation2 + $0x8a0] sm:$0xff]
    %v392 = vld [vmem:[#allocation2 + $0x8a8] sm:$0xff]
    %v393 = vld [vmem:[#allocation2 + $0x8b0] sm:$0xff]
    %v394 = vld [vmem:[#allocation2 + $0x8b8] sm:$0xff]
    %v395 = vld [vmem:[#allocation2 + $0x8c0] sm:$0xff]
    %v396 = vld [vmem:[#allocation2 + $0x8c8] sm:$0xff]
    %v397 = vld [vmem:[#allocation2 + $0x8d0] sm:$0xff]
    %v398 = vld [vmem:[#allocation2 + $0x8d8] sm:$0xff]
    %v399 = vld [vmem:[#allocation2 + $0x8e0] sm:$0xff]
    %v400 = vld [vmem:[#allocation2 + $0x8e8] sm:$0xff]
    %v401 = vld [vmem:[#allocation2 + $0x8f0] sm:$0xff]
    %v402 = vld [vmem:[#allocation2 + $0x8f8] sm:$0xff]
    %v403 = vld [vmem:[#allocation2 + $0x900] sm:$0xff]
    %v404 = vld [vmem:[#allocation2 + $0x908] sm:$0xff]
    %v405 = vld [vmem:[#allocation2 + $0x910] sm:$0xff]
    %v406 = vld [vmem:[#allocation2 + $0x918] sm:$0xff]
    %v407 = vld [vmem:[#allocation2 + $0x920] sm:$0xff]
    %v408 = vld [vmem:[#allocation2 + $0x928] sm:$0xff]
    %v409 = vld [vmem:[#allocation2 + $0x930] sm:$0xff]
    %v410 = vld [vmem:[#allocation2 + $0x938] sm:$0xff]
    %v411 = vld [vmem:[#allocation2 + $0x940] sm:$0xff]
    %v412 = vld [vmem:[#allocation2 + $0x948] sm:$0xff]
    %v413 = vld [vmem:[#allocation2 + $0x950] sm:$0xff]
    %v414 = vld [vmem:[#allocation2 + $0x958] sm:$0xff]
    %v415 = vld [vmem:[#allocation2 + $0x960] sm:$0xff]
    %v416 = vld [vmem:[#allocation2 + $0x968] sm:$0xff]
    %v417 = vld [vmem:[#allocation2 + $0x970] sm:$0xff]
    %v418 = vld [vmem:[#allocation2 + $0x978] sm:$0xff]
    %v419 = vld [vmem:[#allocation2 + $0x980] sm:$0xff]
    %v420 = vld [vmem:[#allocation2 + $0x988] sm:$0xff]
    %v421 = vld [vmem:[#allocation2 + $0x990] sm:$0xff]
    %v422 = vld [vmem:[#allocation2 + $0x998] sm:$0xff]
    %v423 = vld [vmem:[#allocation2 + $0x9a0] sm:$0xff]
    %v424 = vld [vmem:[#allocation2 + $0x9a8] sm:$0xff]
    %v425 = vld [vmem:[#allocation2 + $0x9b0] sm:$0xff]
    %v426 = vld [vmem:[#allocation2 + $0x9b8] sm:$0xff]
    %v427 = vld [vmem:[#allocation2 + $0x9c0] sm:$0xff]
    %v428 = vld [vmem:[#allocation2 + $0x9c8] sm:$0xff]
    %v429 = vld [vmem:[#allocation2 + $0x9d0] sm:$0xff]
    %v430 = vld [vmem:[#allocation2 + $0x9d8] sm:$0xff]
    %v431 = vld [vmem:[#allocation2 + $0x9e0] sm:$0xff]
    %v432 = vld [vmem:[#allocation2 + $0x9e8] sm:$0xff]
    %v433 = vld [vmem:[#allocation2 + $0x9f0] sm:$0xff]
    %v434 = vld [vmem:[#allocation2 + $0x9f8] sm:$0xff]
    %v435 = vld [vmem:[#allocation2 + $0xa00] sm:$0xff]
    %v436 = vld [vmem:[#allocation2 + $0xa08] sm:$0xff]
    %v437 = vld [vmem:[#allocation2 + $0xa10] sm:$0xff]
    %v438 = vld [vmem:[#allocation2 + $0xa18] sm:$0xff]
    %v439 = vld [vmem:[#allocation2 + $0xa20] sm:$0xff]
    %v440 = vld [vmem:[#allocation2 + $0xa28] sm:$0xff]
    %v441 = vld [vmem:[#allocation2 + $0xa30] sm:$0xff]
    %v442 = vld [vmem:[#allocation2 + $0xa38] sm:$0xff]
    %v443 = vld [vmem:[#allocation2 + $0xa40] sm:$0xff]
    %v444 = vld [vmem:[#allocation2 + $0xa48] sm:$0xff]
    %v445 = vld [vmem:[#allocation2 + $0xa50] sm:$0xff]
    %v446 = vld [vmem:[#allocation2 + $0xa58] sm:$0xff]
    %v447 = vld [vmem:[#allocation2 + $0xa60] sm:$0xff]
    %v448 = vld [vmem:[#allocation2 + $0xa68] sm:$0xff]
    %v449 = vld [vmem:[#allocation2 + $0xa70] sm:$0xff]
    %v450 = vld [vmem:[#allocation2 + $0xa78] sm:$0xff]
    %v451 = vld [vmem:[#allocation2 + $0xa80] sm:$0xff]
    %v452 = vld [vmem:[#allocation2 + $0xa88] sm:$0xff]
    %v453 = vld [vmem:[#allocation2 + $0xa90] sm:$0xff]
    %v454 = vld [vmem:[#allocation2 + $0xa98] sm:$0xff]
    %v455 = vld [vmem:[#allocation2 + $0xaa0] sm:$0xff]
    %v456 = vld [vmem:[#allocation2 + $0xaa8] sm:$0xff]
    %v457 = vld [vmem:[#allocation2 + $0xab0] sm:$0xff]
    %v458 = vld [vmem:[#allocation2 + $0xab8] sm:$0xff]
    %v459 = vld [vmem:[#allocation2 + $0xac0] sm:$0xff]
    %v460 = vld [vmem:[#allocation2 + $0xac8] sm:$0xff]
    %v461 = vld [vmem:[#allocation2 + $0xad0] sm:$0xff]
    %v462 = vld [vmem:[#allocation2 + $0xad8] sm:$0xff]
    %v463 = vld [vmem:[#allocation2 + $0xae0] sm:$0xff]
    %v464 = vld [vmem:[#allocation2 + $0xae8] sm:$0xff]
    %v465 = vld [vmem:[#allocation2 + $0xaf0] sm:$0xff]
    %v466 = vld [vmem:[#allocation2 + $0xaf8] sm:$0xff]
    %v467 = vld [vmem:[#allocation2 + $0xb00] sm:$0xff]
    %v468 = vld [vmem:[#allocation2 + $0xb08] sm:$0xff]
    %v469 = vld [vmem:[#allocation2 + $0xb10] sm:$0xff]
    %v470 = vld [vmem:[#allocation2 + $0xb18] sm:$0xff]
    %v471 = vld [vmem:[#allocation2 + $0xb20] sm:$0xff]
    %v472 = vld [vmem:[#allocation2 + $0xb28] sm:$0xff]
    %v473 = vld [vmem:[#allocation2 + $0xb30] sm:$0xff]
    %v474 = vld [vmem:[#allocation2 + $0xb38] sm:$0xff]
    %v475 = vld [vmem:[#allocation2 + $0xb40] sm:$0xff]
    %v476 = vld [vmem:[#allocation2 + $0xb48] sm:$0xff]
    %v477 = vld [vmem:[#allocation2 + $0xb50] sm:$0xff]
    %v478 = vld [vmem:[#allocation2 + $0xb58] sm:$0xff]
    %v479 = vld [vmem:[#allocation2 + $0xb60] sm:$0xff]
    %v480 = vld [vmem:[#allocation2 + $0xb68] sm:$0xff]
    %v481 = vld [vmem:[#allocation2 + $0xb70] sm:$0xff]
    %v482 = vld [vmem:[#allocation2 + $0xb78] sm:$0xff]
    %v483 = vld [vmem:[#allocation2 + $0xb80] sm:$0xff]
    %v484 = vld [vmem:[#allocation2 + $0xb88] sm:$0xff]
    %v485 = vld [vmem:[#allocation2 + $0xb90] sm:$0xff]
    %v486 = vld [vmem:[#allocation2 + $0xb98] sm:$0xff]
    %v487 = vld [vmem:[#allocation2 + $0xba0] sm:$0xff]
    %v488 = vld [vmem:[#allocation2 + $0xba8] sm:$0xff]
    %v489 = vld [vmem:[#allocation2 + $0xbb0] sm:$0xff]
    %v490 = vld [vmem:[#allocation2 + $0xbb8] sm:$0xff]
    %v491 = vld [vmem:[#allocation2 + $0xbc0] sm:$0xff]
    %v492 = vld [vmem:[#allocation2 + $0xbc8] sm:$0xff]
    %v493 = vld [vmem:[#allocation2 + $0xbd0] sm:$0xff]
    %v494 = vld [vmem:[#allocation2 + $0xbd8] sm:$0xff]
    %v495 = vld [vmem:[#allocation2 + $0xbe0] sm:$0xff]
    %v496 = vld [vmem:[#allocation2 + $0xbe8] sm:$0xff]
    %v497 = vld [vmem:[#allocation2 + $0xbf0] sm:$0xff]
    %v498 = vld [vmem:[#allocation2 + $0xbf8] sm:$0xff]
    %v499 = vld [vmem:[#allocation2 + $0xc00] sm:$0xff]
    %v500 = vld [vmem:[#allocation2 + $0xc08] sm:$0xff]
    %v501 = vld [vmem:[#allocation2 + $0xc10] sm:$0xff]
    %v502 = vld [vmem:[#allocation2 + $0xc18] sm:$0xff]
    %v503 = vld [vmem:[#allocation2 + $0xc20] sm:$0xff]
    %v504 = vld [vmem:[#allocation2 + $0xc28] sm:$0xff]
    %v505 = vld [vmem:[#allocation2 + $0xc30] sm:$0xff]
    %v506 = vld [vmem:[#allocation2 + $0xc38] sm:$0xff]
    %v507 = vld [vmem:[#allocation2 + $0xc40] sm:$0xff]
    %v508 = vld [vmem:[#allocation2 + $0xc48] sm:$0xff]
    %v509 = vld [vmem:[#allocation2 + $0xc50] sm:$0xff]
    %v510 = vld [vmem:[#allocation2 + $0xc58] sm:$0xff]
    %v511 = vld [vmem:[#allocation2 + $0xc60] sm:$0xff]
    %v512 = vld [vmem:[#allocation2 + $0xc68] sm:$0xff]
    %v513 = vld [vmem:[#allocation2 + $0xc70] sm:$0xff]
    %v514 = vld [vmem:[#allocation2 + $0xc78] sm:$0xff]
    %v515 = vld [vmem:[#allocation2 + $0xc80] sm:$0xff]
    %v516 = vld [vmem:[#allocation2 + $0xc88] sm:$0xff]
    %v517 = vld [vmem:[#allocation2 + $0xc90] sm:$0xff]
    %v518 = vld [vmem:[#allocation2 + $0xc98] sm:$0xff]
    %v519 = vld [vmem:[#allocation2 + $0xca0] sm:$0xff]
    %v520 = vld [vmem:[#allocation2 + $0xca8] sm:$0xff]
    %v521 = vld [vmem:[#allocation2 + $0xcb0] sm:$0xff]
    %v522 = vld [vmem:[#allocation2 + $0xcb8] sm:$0xff]
    %v523 = vld [vmem:[#allocation2 + $0xcc0] sm:$0xff]
    %v524 = vld [vmem:[#allocation2 + $0xcc8] sm:$0xff]
    %v525 = vld [vmem:[#allocation2 + $0xcd0] sm:$0xff]
    %v526 = vld [vmem:[#allocation2 + $0xcd8] sm:$0xff]
    %v527 = vld [vmem:[#allocation2 + $0xce0] sm:$0xff]
    %v528 = vld [vmem:[#allocation2 + $0xce8] sm:$0xff]
    %v529 = vld [vmem:[#allocation2 + $0xcf0] sm:$0xff]
    %v530 = vld [vmem:[#allocation2 + $0xcf8] sm:$0xff]
    %v531 = vld [vmem:[#allocation2 + $0xd00] sm:$0xff]
    %v532 = vld [vmem:[#allocation2 + $0xd08] sm:$0xff]
    %v533 = vld [vmem:[#allocation2 + $0xd10] sm:$0xff]
    %v534 = vld [vmem:[#allocation2 + $0xd18] sm:$0xff]
    %v535 = vld [vmem:[#allocation2 + $0xd20] sm:$0xff]
    %v536 = vld [vmem:[#allocation2 + $0xd28] sm:$0xff]
    %v537 = vld [vmem:[#allocation2 + $0xd30] sm:$0xff]
    %v538 = vld [vmem:[#allocation2 + $0xd38] sm:$0xff]
    %v539 = vld [vmem:[#allocation2 + $0xd40] sm:$0xff]
    %v540 = vld [vmem:[#allocation2 + $0xd48] sm:$0xff]
    %v541 = vld [vmem:[#allocation2 + $0xd50] sm:$0xff]
    %v542 = vld [vmem:[#allocation2 + $0xd58] sm:$0xff]
    %v543 = vld [vmem:[#allocation2 + $0xd60] sm:$0xff]
    %v544 = vld [vmem:[#allocation2 + $0xd68] sm:$0xff]
    %v545 = vld [vmem:[#allocation2 + $0xd70] sm:$0xff]
    %v546 = vld [vmem:[#allocation2 + $0xd78] sm:$0xff]
    %v547 = vld [vmem:[#allocation2 + $0xd80] sm:$0xff]
    %v548 = vld [vmem:[#allocation2 + $0xd88] sm:$0xff]
    %v549 = vld [vmem:[#allocation2 + $0xd90] sm:$0xff]
    %v550 = vld [vmem:[#allocation2 + $0xd98] sm:$0xff]
    %v551 = vld [vmem:[#allocation2 + $0xda0] sm:$0xff]
    %v552 = vld [vmem:[#allocation2 + $0xda8] sm:$0xff]
    %v553 = vld [vmem:[#allocation2 + $0xdb0] sm:$0xff]
    %v554 = vld [vmem:[#allocation2 + $0xdb8] sm:$0xff]
    %v555 = vld [vmem:[#allocation2 + $0xdc0] sm:$0xff]
    %v556 = vld [vmem:[#allocation2 + $0xdc8] sm:$0xff]
    %v557 = vld [vmem:[#allocation2 + $0xdd0] sm:$0xff]
    %v558 = vld [vmem:[#allocation2 + $0xdd8] sm:$0xff]
    %v559 = vld [vmem:[#allocation2 + $0xde0] sm:$0xff]
    %v560 = vld [vmem:[#allocation2 + $0xde8] sm:$0xff]
    %v561 = vld [vmem:[#allocation2 + $0xdf0] sm:$0xff]
    %v562 = vld [vmem:[#allocation2 + $0xdf8] sm:$0xff]
    %v563 = vld [vmem:[#allocation2 + $0xe00] sm:$0xff]
    %v564 = vld [vmem:[#allocation2 + $0xe08] sm:$0xff]
    %v565 = vld [vmem:[#allocation2 + $0xe10] sm:$0xff]
    %v566 = vld [vmem:[#allocation2 + $0xe18] sm:$0xff]
    %v567 = vld [vmem:[#allocation2 + $0xe20] sm:$0xff]
    %v568 = vld [vmem:[#allocation2 + $0xe28] sm:$0xff]
    %v569 = vld [vmem:[#allocation2 + $0xe30] sm:$0xff]
    %v570 = vld [vmem:[#allocation2 + $0xe38] sm:$0xff]
    %v571 = vld [vmem:[#allocation2 + $0xe40] sm:$0xff]
    %v572 = vld [vmem:[#allocation2 + $0xe48] sm:$0xff]
    %v573 = vld [vmem:[#allocation2 + $0xe50] sm:$0xff]
    %v574 = vld [vmem:[#allocation2 + $0xe58] sm:$0xff]
    %v575 = vld [vmem:[#allocation2 + $0xe60] sm:$0xff]
    %v576 = vld [vmem:[#allocation2 + $0xe68] sm:$0xff]
    %v577 = vld [vmem:[#allocation2 + $0xe70] sm:$0xff]
    %v578 = vld [vmem:[#allocation2 + $0xe78] sm:$0xff]
    %v579 = vld [vmem:[#allocation2 + $0xe80] sm:$0xff]
    %v580 = vld [vmem:[#allocation2 + $0xe88] sm:$0xff]
    %v581 = vld [vmem:[#allocation2 + $0xe90] sm:$0xff]
    %v582 = vld [vmem:[#allocation2 + $0xe98] sm:$0xff]
    %v583 = vld [vmem:[#allocation2 + $0xea0] sm:$0xff]
    %v584 = vld [vmem:[#allocation2 + $0xea8] sm:$0xff]
    %v585 = vld [vmem:[#allocation2 + $0xeb0] sm:$0xff]
    %v586 = vld [vmem:[#allocation2 + $0xeb8] sm:$0xff]
    %v587 = vld [vmem:[#allocation2 + $0xec0] sm:$0xff]
    %v588 = vld [vmem:[#allocation2 + $0xec8] sm:$0xff]
    %v589 = vld [vmem:[#allocation2 + $0xed0] sm:$0xff]
    %v590 = vld [vmem:[#allocation2 + $0xed8] sm:$0xff]
    %v591 = vld [vmem:[#allocation2 + $0xee0] sm:$0xff]
    %v592 = vld [vmem:[#allocation2 + $0xee8] sm:$0xff]
    %v593 = vld [vmem:[#allocation2 + $0xef0] sm:$0xff]
    %v594 = vld [vmem:[#allocation2 + $0xef8] sm:$0xff]
    %v595 = vld [vmem:[#allocation2 + $0xf00] sm:$0xff]
    %v596 = vld [vmem:[#allocation2 + $0xf08] sm:$0xff]
    %v597 = vld [vmem:[#allocation2 + $0xf10] sm:$0xff]
    %v598 = vld [vmem:[#allocation2 + $0xf18] sm:$0xff]
    %v599 = vld [vmem:[#allocation2 + $0xf20] sm:$0xff]
    %v600 = vld [vmem:[#allocation2 + $0xf28] sm:$0xff]
    %v601 = vld [vmem:[#allocation2 + $0xf30] sm:$0xff]
    %v602 = vld [vmem:[#allocation2 + $0xf38] sm:$0xff]
    %v603 = vld [vmem:[#allocation2 + $0xf40] sm:$0xff]
    %v604 = vld [vmem:[#allocation2 + $0xf48] sm:$0xff]
    %v605 = vld [vmem:[#allocation2 + $0xf50] sm:$0xff]
    %v606 = vld [vmem:[#allocation2 + $0xf58] sm:$0xff]
    %v607 = vld [vmem:[#allocation2 + $0xf60] sm:$0xff]
    %v608 = vld [vmem:[#allocation2 + $0xf68] sm:$0xff]
    %v609 = vld [vmem:[#allocation2 + $0xf70] sm:$0xff]
    %v610 = vld [vmem:[#allocation2 + $0xf78] sm:$0xff]
    %v611 = vld [vmem:[#allocation2 + $0xf80] sm:$0xff]
    %v612 = vld [vmem:[#allocation2 + $0xf88] sm:$0xff]
    %v613 = vld [vmem:[#allocation2 + $0xf90] sm:$0xff]
    %v614 = vld [vmem:[#allocation2 + $0xf98] sm:$0xff]
    %v615 = vld [vmem:[#allocation2 + $0xfa0] sm:$0xff]
    %v616 = vld [vmem:[#allocation2 + $0xfa8] sm:$0xff]
    %v617 = vld [vmem:[#allocation2 + $0xfb0] sm:$0xff]
    %v618 = vld [vmem:[#allocation2 + $0xfb8] sm:$0xff]
    %v619 = vld [vmem:[#allocation2 + $0xfc0] sm:$0xff]
    %v620 = vld [vmem:[#allocation2 + $0xfc8] sm:$0xff]
    %v621 = vld [vmem:[#allocation2 + $0xfd0] sm:$0xff]
    %v622 = vld [vmem:[#allocation2 + $0xfd8] sm:$0xff]
    %v623 = vld [vmem:[#allocation2 + $0xfe0] sm:$0xff]
    %v624 = vld [vmem:[#allocation2 + $0xfe8] sm:$0xff]
    %v625 = vld [vmem:[#allocation2 + $0xff0] sm:$0xff]
    %v626 = vld [vmem:[#allocation2 + $0xff8] sm:$0xff]
    %v628 = vunpack.c.l.b16 %v114
    %v629 = vunpack.c.h.b16 %v114
    %v630 = vpack.c.b16 %v628, %v628
    %v631 = vpack.c.b16 %v629, %v629
    %v1146 = vunpack.c.l.b16 %v115
    %v1147 = vunpack.c.h.b16 %v115
    %v1148 = vunpack.c.l.b16 %v116
    %v1149 = vunpack.c.h.b16 %v116
    %v1150 = vunpack.c.l.b16 %v117
    %v1151 = vunpack.c.h.b16 %v117
    %v1152 = vunpack.c.l.b16 %v118
    %v1153 = vunpack.c.h.b16 %v118
    %v1154 = vunpack.c.l.b16 %v119
    %v1155 = vunpack.c.h.b16 %v119
    %v1156 = vunpack.c.l.b16 %v120
    %v1157 = vunpack.c.h.b16 %v120
    %v1158 = vunpack.c.l.b16 %v121
    %v1159 = vunpack.c.h.b16 %v121
    %v1160 = vunpack.c.l.b16 %v122
    %v1161 = vunpack.c.h.b16 %v122
    %v1162 = vunpack.c.l.b16 %v123
    %v1163 = vunpack.c.h.b16 %v123
    %v1164 = vunpack.c.l.b16 %v124
    %v1165 = vunpack.c.h.b16 %v124
    %v1166 = vunpack.c.l.b16 %v125
    %v1167 = vunpack.c.h.b16 %v125
    %v1168 = vunpack.c.l.b16 %v126
    %v1169 = vunpack.c.h.b16 %v126
    %v1170 = vunpack.c.l.b16 %v127
    %v1171 = vunpack.c.h.b16 %v127
    %v1172 = vunpack.c.l.b16 %v128
    %v1173 = vunpack.c.h.b16 %v128
    %v1174 = vunpack.c.l.b16 %v129
    %v1175 = vunpack.c.h.b16 %v129
    %v1176 = vunpack.c.l.b16 %v130
    %v1177 = vunpack.c.h.b16 %v130
    %v1178 = vunpack.c.l.b16 %v131
    %v1179 = vunpack.c.h.b16 %v131
    %v1180 = vunpack.c.l.b16 %v132
    %v1181 = vunpack.c.h.b16 %v132
    %v1182 = vunpack.c.l.b16 %v133
    %v1183 = vunpack.c.h.b16 %v133
    %v1184 = vunpack.c.l.b16 %v134
    %v1185 = vunpack.c.h.b16 %v134
    %v1186 = vunpack.c.l.b16 %v135
    %v1187 = vunpack.c.h.b16 %v135
    %v1188 = vunpack.c.l.b16 %v136
    %v1189 = vunpack.c.h.b16 %v136
    %v1190 = vunpack.c.l.b16 %v137
    %v1191 = vunpack.c.h.b16 %v137
    %v1192 = vunpack.c.l.b16 %v138
    %v1193 = vunpack.c.h.b16 %v138
    %v1194 = vunpack.c.l.b16 %v139
    %v1195 = vunpack.c.h.b16 %v139
    %v1196 = vunpack.c.l.b16 %v140
    %v1197 = vunpack.c.h.b16 %v140
    %v1198 = vunpack.c.l.b16 %v141
    %v1199 = vunpack.c.h.b16 %v141
    %v1200 = vunpack.c.l.b16 %v142
    %v1201 = vunpack.c.h.b16 %v142
    %v1202 = vunpack.c.l.b16 %v143
    %v1203 = vunpack.c.h.b16 %v143
    %v1204 = vunpack.c.l.b16 %v144
    %v1205 = vunpack.c.h.b16 %v144
    %v1206 = vunpack.c.l.b16 %v145
    %v1207 = vunpack.c.h.b16 %v145
    %v1208 = vunpack.c.l.b16 %v146
    %v1209 = vunpack.c.h.b16 %v146
    %v1210 = vunpack.c.l.b16 %v147
    %v1211 = vunpack.c.h.b16 %v147
    %v1212 = vunpack.c.l.b16 %v148
    %v1213 = vunpack.c.h.b16 %v148
    %v1214 = vunpack.c.l.b16 %v149
    %v1215 = vunpack.c.h.b16 %v149
    %v1216 = vunpack.c.l.b16 %v150
    %v1217 = vunpack.c.h.b16 %v150
    %v1218 = vunpack.c.l.b16 %v151
    %v1219 = vunpack.c.h.b16 %v151
    %v1220 = vunpack.c.l.b16 %v152
    %v1221 = vunpack.c.h.b16 %v152
    %v1222 = vunpack.c.l.b16 %v153
    %v1223 = vunpack.c.h.b16 %v153
    %v1224 = vunpack.c.l.b16 %v154
    %v1225 = vunpack.c.h.b16 %v154
    %v1226 = vunpack.c.l.b16 %v155
    %v1227 = vunpack.c.h.b16 %v155
    %v1228 = vunpack.c.l.b16 %v156
    %v1229 = vunpack.c.h.b16 %v156
    %v1230 = vunpack.c.l.b16 %v157
    %v1231 = vunpack.c.h.b16 %v157
    %v1232 = vunpack.c.l.b16 %v158
    %v1233 = vunpack.c.h.b16 %v158
    %v1234 = vunpack.c.l.b16 %v159
    %v1235 = vunpack.c.h.b16 %v159
    %v1236 = vunpack.c.l.b16 %v160
    %v1237 = vunpack.c.h.b16 %v160
    %v1238 = vunpack.c.l.b16 %v161
    %v1239 = vunpack.c.h.b16 %v161
    %v1240 = vunpack.c.l.b16 %v162
    %v1241 = vunpack.c.h.b16 %v162
    %v1242 = vunpack.c.l.b16 %v163
    %v1243 = vunpack.c.h.b16 %v163
    %v1244 = vunpack.c.l.b16 %v164
    %v1245 = vunpack.c.h.b16 %v164
    %v1246 = vunpack.c.l.b16 %v165
    %v1247 = vunpack.c.h.b16 %v165
    %v1248 = vunpack.c.l.b16 %v166
    %v1249 = vunpack.c.h.b16 %v166
    %v1250 = vunpack.c.l.b16 %v167
    %v1251 = vunpack.c.h.b16 %v167
    %v1252 = vunpack.c.l.b16 %v168
    %v1253 = vunpack.c.h.b16 %v168
    %v1254 = vunpack.c.l.b16 %v169
    %v1255 = vunpack.c.h.b16 %v169
    %v1256 = vunpack.c.l.b16 %v170
    %v1257 = vunpack.c.h.b16 %v170
    %v1258 = vunpack.c.l.b16 %v171
    %v1259 = vunpack.c.h.b16 %v171
    %v1260 = vunpack.c.l.b16 %v172
    %v1261 = vunpack.c.h.b16 %v172
    %v1262 = vunpack.c.l.b16 %v173
    %v1263 = vunpack.c.h.b16 %v173
    %v1264 = vunpack.c.l.b16 %v174
    %v1265 = vunpack.c.h.b16 %v174
    %v1266 = vunpack.c.l.b16 %v175
    %v1267 = vunpack.c.h.b16 %v175
    %v1268 = vunpack.c.l.b16 %v176
    %v1269 = vunpack.c.h.b16 %v176
    %v1270 = vunpack.c.l.b16 %v177
    %v1271 = vunpack.c.h.b16 %v177
    %v1272 = vunpack.c.l.b16 %v178
    %v1273 = vunpack.c.h.b16 %v178
    %v1274 = vunpack.c.l.b16 %v179
    %v1275 = vunpack.c.h.b16 %v179
    %v1276 = vunpack.c.l.b16 %v180
    %v1277 = vunpack.c.h.b16 %v180
    %v1278 = vunpack.c.l.b16 %v181
    %v1279 = vunpack.c.h.b16 %v181
    %v1280 = vunpack.c.l.b16 %v182
    %v1281 = vunpack.c.h.b16 %v182
    %v1282 = vunpack.c.l.b16 %v183
    %v1283 = vunpack.c.h.b16 %v183
    %v1284 = vunpack.c.l.b16 %v184
    %v1285 = vunpack.c.h.b16 %v184
    %v1286 = vunpack.c.l.b16 %v185
    %v1287 = vunpack.c.h.b16 %v185
    %v1288 = vunpack.c.l.b16 %v186
    %v1289 = vunpack.c.h.b16 %v186
    %v1290 = vunpack.c.l.b16 %v187
    %v1291 = vunpack.c.h.b16 %v187
    %v1292 = vunpack.c.l.b16 %v188
    %v1293 = vunpack.c.h.b16 %v188
    %v1294 = vunpack.c.l.b16 %v189
    %v1295 = vunpack.c.h.b16 %v189
    %v1296 = vunpack.c.l.b16 %v190
    %v1297 = vunpack.c.h.b16 %v190
    %v1298 = vunpack.c.l.b16 %v191
    %v1299 = vunpack.c.h.b16 %v191
    %v1300 = vunpack.c.l.b16 %v192
    %v1301 = vunpack.c.h.b16 %v192
    %v1302 = vunpack.c.l.b16 %v193
    %v1303 = vunpack.c.h.b16 %v193
    %v1304 = vunpack.c.l.b16 %v194
    %v1305 = vunpack.c.h.b16 %v194
    %v1306 = vunpack.c.l.b16 %v195
    %v1307 = vunpack.c.h.b16 %v195
    %v1308 = vunpack.c.l.b16 %v196
    %v1309 = vunpack.c.h.b16 %v196
    %v1310 = vunpack.c.l.b16 %v197
    %v1311 = vunpack.c.h.b16 %v197
    %v1312 = vunpack.c.l.b16 %v198
    %v1313 = vunpack.c.h.b16 %v198
    %v1314 = vunpack.c.l.b16 %v199
    %v1315 = vunpack.c.h.b16 %v199
    %v1316 = vunpack.c.l.b16 %v200
    %v1317 = vunpack.c.h.b16 %v200
    %v1318 = vunpack.c.l.b16 %v201
    %v1319 = vunpack.c.h.b16 %v201
    %v1320 = vunpack.c.l.b16 %v202
    %v1321 = vunpack.c.h.b16 %v202
    %v1322 = vunpack.c.l.b16 %v203
    %v1323 = vunpack.c.h.b16 %v203
    %v1324 = vunpack.c.l.b16 %v204
    %v1325 = vunpack.c.h.b16 %v204
    %v1326 = vunpack.c.l.b16 %v205
    %v1327 = vunpack.c.h.b16 %v205
    %v1328 = vunpack.c.l.b16 %v206
    %v1329 = vunpack.c.h.b16 %v206
    %v1330 = vunpack.c.l.b16 %v207
    %v1331 = vunpack.c.h.b16 %v207
    %v1332 = vunpack.c.l.b16 %v208
    %v1333 = vunpack.c.h.b16 %v208
    %v1334 = vunpack.c.l.b16 %v209
    %v1335 = vunpack.c.h.b16 %v209
    %v1336 = vunpack.c.l.b16 %v210
    %v1337 = vunpack.c.h.b16 %v210
    %v1338 = vunpack.c.l.b16 %v211
    %v1339 = vunpack.c.h.b16 %v211
    %v1340 = vunpack.c.l.b16 %v212
    %v1341 = vunpack.c.h.b16 %v212
    %v1342 = vunpack.c.l.b16 %v213
    %v1343 = vunpack.c.h.b16 %v213
    %v1344 = vunpack.c.l.b16 %v214
    %v1345 = vunpack.c.h.b16 %v214
    %v1346 = vunpack.c.l.b16 %v215
    %v1347 = vunpack.c.h.b16 %v215
    %v1348 = vunpack.c.l.b16 %v216
    %v1349 = vunpack.c.h.b16 %v216
    %v1350 = vunpack.c.l.b16 %v217
    %v1351 = vunpack.c.h.b16 %v217
    %v1352 = vunpack.c.l.b16 %v218
    %v1353 = vunpack.c.h.b16 %v218
    %v1354 = vunpack.c.l.b16 %v219
    %v1355 = vunpack.c.h.b16 %v219
    %v1356 = vunpack.c.l.b16 %v220
    %v1357 = vunpack.c.h.b16 %v220
    %v1358 = vunpack.c.l.b16 %v221
    %v1359 = vunpack.c.h.b16 %v221
    %v1360 = vunpack.c.l.b16 %v222
    %v1361 = vunpack.c.h.b16 %v222
    %v1362 = vunpack.c.l.b16 %v223
    %v1363 = vunpack.c.h.b16 %v223
    %v1364 = vunpack.c.l.b16 %v224
    %v1365 = vunpack.c.h.b16 %v224
    %v1366 = vunpack.c.l.b16 %v225
    %v1367 = vunpack.c.h.b16 %v225
    %v1368 = vunpack.c.l.b16 %v226
    %v1369 = vunpack.c.h.b16 %v226
    %v1370 = vunpack.c.l.b16 %v227
    %v1371 = vunpack.c.h.b16 %v227
    %v1372 = vunpack.c.l.b16 %v228
    %v1373 = vunpack.c.h.b16 %v228
    %v1374 = vunpack.c.l.b16 %v229
    %v1375 = vunpack.c.h.b16 %v229
    %v1376 = vunpack.c.l.b16 %v230
    %v1377 = vunpack.c.h.b16 %v230
    %v1378 = vunpack.c.l.b16 %v231
    %v1379 = vunpack.c.h.b16 %v231
    %v1380 = vunpack.c.l.b16 %v232
    %v1381 = vunpack.c.h.b16 %v232
    %v1382 = vunpack.c.l.b16 %v233
    %v1383 = vunpack.c.h.b16 %v233
    %v1384 = vunpack.c.l.b16 %v234
    %v1385 = vunpack.c.h.b16 %v234
    %v1386 = vunpack.c.l.b16 %v235
    %v1387 = vunpack.c.h.b16 %v235
    %v1388 = vunpack.c.l.b16 %v236
    %v1389 = vunpack.c.h.b16 %v236
    %v1390 = vunpack.c.l.b16 %v237
    %v1391 = vunpack.c.h.b16 %v237
    %v1392 = vunpack.c.l.b16 %v238
    %v1393 = vunpack.c.h.b16 %v238
    %v1394 = vunpack.c.l.b16 %v239
    %v1395 = vunpack.c.h.b16 %v239
    %v1396 = vunpack.c.l.b16 %v240
    %v1397 = vunpack.c.h.b16 %v240
    %v1398 = vunpack.c.l.b16 %v241
    %v1399 = vunpack.c.h.b16 %v241
    %v1400 = vunpack.c.l.b16 %v242
    %v1401 = vunpack.c.h.b16 %v242
    %v1402 = vunpack.c.l.b16 %v243
    %v1403 = vunpack.c.h.b16 %v243
    %v1404 = vunpack.c.l.b16 %v244
    %v1405 = vunpack.c.h.b16 %v244
    %v1406 = vunpack.c.l.b16 %v245
    %v1407 = vunpack.c.h.b16 %v245
    %v1408 = vunpack.c.l.b16 %v246
    %v1409 = vunpack.c.h.b16 %v246
    %v1410 = vunpack.c.l.b16 %v247
    %v1411 = vunpack.c.h.b16 %v247
    %v1412 = vunpack.c.l.b16 %v248
    %v1413 = vunpack.c.h.b16 %v248
    %v1414 = vunpack.c.l.b16 %v249
    %v1415 = vunpack.c.h.b16 %v249
    %v1416 = vunpack.c.l.b16 %v250
    %v1417 = vunpack.c.h.b16 %v250
    %v1418 = vunpack.c.l.b16 %v251
    %v1419 = vunpack.c.h.b16 %v251
    %v1420 = vunpack.c.l.b16 %v252
    %v1421 = vunpack.c.h.b16 %v252
    %v1422 = vunpack.c.l.b16 %v253
    %v1423 = vunpack.c.h.b16 %v253
    %v1424 = vunpack.c.l.b16 %v254
    %v1425 = vunpack.c.h.b16 %v254
    %v1426 = vunpack.c.l.b16 %v255
    %v1427 = vunpack.c.h.b16 %v255
    %v1428 = vunpack.c.l.b16 %v256
    %v1429 = vunpack.c.h.b16 %v256
    %v1430 = vunpack.c.l.b16 %v257
    %v1431 = vunpack.c.h.b16 %v257
    %v1432 = vunpack.c.l.b16 %v258
    %v1433 = vunpack.c.h.b16 %v258
    %v1434 = vunpack.c.l.b16 %v259
    %v1435 = vunpack.c.h.b16 %v259
    %v1436 = vunpack.c.l.b16 %v260
    %v1437 = vunpack.c.h.b16 %v260
    %v1438 = vunpack.c.l.b16 %v261
    %v1439 = vunpack.c.h.b16 %v261
    %v1440 = vunpack.c.l.b16 %v262
    %v1441 = vunpack.c.h.b16 %v262
    %v1442 = vunpack.c.l.b16 %v263
    %v1443 = vunpack.c.h.b16 %v263
    %v1444 = vunpack.c.l.b16 %v264
    %v1445 = vunpack.c.h.b16 %v264
    %v1446 = vunpack.c.l.b16 %v265
    %v1447 = vunpack.c.h.b16 %v265
    %v1448 = vunpack.c.l.b16 %v266
    %v1449 = vunpack.c.h.b16 %v266
    %v1450 = vunpack.c.l.b16 %v267
    %v1451 = vunpack.c.h.b16 %v267
    %v1452 = vunpack.c.l.b16 %v268
    %v1453 = vunpack.c.h.b16 %v268
    %v1454 = vunpack.c.l.b16 %v269
    %v1455 = vunpack.c.h.b16 %v269
    %v1456 = vunpack.c.l.b16 %v270
    %v1457 = vunpack.c.h.b16 %v270
    %v1458 = vunpack.c.l.b16 %v271
    %v1459 = vunpack.c.h.b16 %v271
    %v1460 = vunpack.c.l.b16 %v272
    %v1461 = vunpack.c.h.b16 %v272
    %v1462 = vunpack.c.l.b16 %v273
    %v1463 = vunpack.c.h.b16 %v273
    %v1464 = vunpack.c.l.b16 %v274
    %v1465 = vunpack.c.h.b16 %v274
    %v1466 = vunpack.c.l.b16 %v275
    %v1467 = vunpack.c.h.b16 %v275
    %v1468 = vunpack.c.l.b16 %v276
    %v1469 = vunpack.c.h.b16 %v276
    %v1470 = vunpack.c.l.b16 %v277
    %v1471 = vunpack.c.h.b16 %v277
    %v1472 = vunpack.c.l.b16 %v278
    %v1473 = vunpack.c.h.b16 %v278
    %v1474 = vunpack.c.l.b16 %v279
    %v1475 = vunpack.c.h.b16 %v279
    %v1476 = vunpack.c.l.b16 %v280
    %v1477 = vunpack.c.h.b16 %v280
    %v1478 = vunpack.c.l.b16 %v281
    %v1479 = vunpack.c.h.b16 %v281
    %v1480 = vunpack.c.l.b16 %v282
    %v1481 = vunpack.c.h.b16 %v282
    %v1482 = vunpack.c.l.b16 %v283
    %v1483 = vunpack.c.h.b16 %v283
    %v1484 = vunpack.c.l.b16 %v284
    %v1485 = vunpack.c.h.b16 %v284
    %v1486 = vunpack.c.l.b16 %v285
    %v1487 = vunpack.c.h.b16 %v285
    %v1488 = vunpack.c.l.b16 %v286
    %v1489 = vunpack.c.h.b16 %v286
    %v1490 = vunpack.c.l.b16 %v287
    %v1491 = vunpack.c.h.b16 %v287
    %v1492 = vunpack.c.l.b16 %v288
    %v1493 = vunpack.c.h.b16 %v288
    %v1494 = vunpack.c.l.b16 %v289
    %v1495 = vunpack.c.h.b16 %v289
    %v1496 = vunpack.c.l.b16 %v290
    %v1497 = vunpack.c.h.b16 %v290
    %v1498 = vunpack.c.l.b16 %v291
    %v1499 = vunpack.c.h.b16 %v291
    %v1500 = vunpack.c.l.b16 %v292
    %v1501 = vunpack.c.h.b16 %v292
    %v1502 = vunpack.c.l.b16 %v293
    %v1503 = vunpack.c.h.b16 %v293
    %v1504 = vunpack.c.l.b16 %v294
    %v1505 = vunpack.c.h.b16 %v294
    %v1506 = vunpack.c.l.b16 %v295
    %v1507 = vunpack.c.h.b16 %v295
    %v1508 = vunpack.c.l.b16 %v296
    %v1509 = vunpack.c.h.b16 %v296
    %v1510 = vunpack.c.l.b16 %v297
    %v1511 = vunpack.c.h.b16 %v297
    %v1512 = vunpack.c.l.b16 %v298
    %v1513 = vunpack.c.h.b16 %v298
    %v1514 = vunpack.c.l.b16 %v299
    %v1515 = vunpack.c.h.b16 %v299
    %v1516 = vunpack.c.l.b16 %v300
    %v1517 = vunpack.c.h.b16 %v300
    %v1518 = vunpack.c.l.b16 %v301
    %v1519 = vunpack.c.h.b16 %v301
    %v1520 = vunpack.c.l.b16 %v302
    %v1521 = vunpack.c.h.b16 %v302
    %v1522 = vunpack.c.l.b16 %v303
    %v1523 = vunpack.c.h.b16 %v303
    %v1524 = vunpack.c.l.b16 %v304
    %v1525 = vunpack.c.h.b16 %v304
    %v1526 = vunpack.c.l.b16 %v305
    %v1527 = vunpack.c.h.b16 %v305
    %v1528 = vunpack.c.l.b16 %v306
    %v1529 = vunpack.c.h.b16 %v306
    %v1530 = vunpack.c.l.b16 %v307
    %v1531 = vunpack.c.h.b16 %v307
    %v1532 = vunpack.c.l.b16 %v308
    %v1533 = vunpack.c.h.b16 %v308
    %v1534 = vunpack.c.l.b16 %v309
    %v1535 = vunpack.c.h.b16 %v309
    %v1536 = vunpack.c.l.b16 %v310
    %v1537 = vunpack.c.h.b16 %v310
    %v1538 = vunpack.c.l.b16 %v311
    %v1539 = vunpack.c.h.b16 %v311
    %v1540 = vunpack.c.l.b16 %v312
    %v1541 = vunpack.c.h.b16 %v312
    %v1542 = vunpack.c.l.b16 %v313
    %v1543 = vunpack.c.h.b16 %v313
    %v1544 = vunpack.c.l.b16 %v314
    %v1545 = vunpack.c.h.b16 %v314
    %v1546 = vunpack.c.l.b16 %v315
    %v1547 = vunpack.c.h.b16 %v315
    %v1548 = vunpack.c.l.b16 %v316
    %v1549 = vunpack.c.h.b16 %v316
    %v1550 = vunpack.c.l.b16 %v317
    %v1551 = vunpack.c.h.b16 %v317
    %v1552 = vunpack.c.l.b16 %v318
    %v1553 = vunpack.c.h.b16 %v318
    %v1554 = vunpack.c.l.b16 %v319
    %v1555 = vunpack.c.h.b16 %v319
    %v1556 = vunpack.c.l.b16 %v320
    %v1557 = vunpack.c.h.b16 %v320
    %v1558 = vunpack.c.l.b16 %v321
    %v1559 = vunpack.c.h.b16 %v321
    %v1560 = vunpack.c.l.b16 %v322
    %v1561 = vunpack.c.h.b16 %v322
    %v1562 = vunpack.c.l.b16 %v323
    %v1563 = vunpack.c.h.b16 %v323
    %v1564 = vunpack.c.l.b16 %v324
    %v1565 = vunpack.c.h.b16 %v324
    %v1566 = vunpack.c.l.b16 %v325
    %v1567 = vunpack.c.h.b16 %v325
    %v1568 = vunpack.c.l.b16 %v326
    %v1569 = vunpack.c.h.b16 %v326
    %v1570 = vunpack.c.l.b16 %v327
    %v1571 = vunpack.c.h.b16 %v327
    %v1572 = vunpack.c.l.b16 %v328
    %v1573 = vunpack.c.h.b16 %v328
    %v1574 = vunpack.c.l.b16 %v329
    %v1575 = vunpack.c.h.b16 %v329
    %v1576 = vunpack.c.l.b16 %v330
    %v1577 = vunpack.c.h.b16 %v330
    %v1578 = vunpack.c.l.b16 %v331
    %v1579 = vunpack.c.h.b16 %v331
    %v1580 = vunpack.c.l.b16 %v332
    %v1581 = vunpack.c.h.b16 %v332
    %v1582 = vunpack.c.l.b16 %v333
    %v1583 = vunpack.c.h.b16 %v333
    %v1584 = vunpack.c.l.b16 %v334
    %v1585 = vunpack.c.h.b16 %v334
    %v1586 = vunpack.c.l.b16 %v335
    %v1587 = vunpack.c.h.b16 %v335
    %v1588 = vunpack.c.l.b16 %v336
    %v1589 = vunpack.c.h.b16 %v336
    %v1590 = vunpack.c.l.b16 %v337
    %v1591 = vunpack.c.h.b16 %v337
    %v1592 = vunpack.c.l.b16 %v338
    %v1593 = vunpack.c.h.b16 %v338
    %v1594 = vunpack.c.l.b16 %v339
    %v1595 = vunpack.c.h.b16 %v339
    %v1596 = vunpack.c.l.b16 %v340
    %v1597 = vunpack.c.h.b16 %v340
    %v1598 = vunpack.c.l.b16 %v341
    %v1599 = vunpack.c.h.b16 %v341
    %v1600 = vunpack.c.l.b16 %v342
    %v1601 = vunpack.c.h.b16 %v342
    %v1602 = vunpack.c.l.b16 %v343
    %v1603 = vunpack.c.h.b16 %v343
    %v1604 = vunpack.c.l.b16 %v344
    %v1605 = vunpack.c.h.b16 %v344
    %v1606 = vunpack.c.l.b16 %v345
    %v1607 = vunpack.c.h.b16 %v345
    %v1608 = vunpack.c.l.b16 %v346
    %v1609 = vunpack.c.h.b16 %v346
    %v1610 = vunpack.c.l.b16 %v347
    %v1611 = vunpack.c.h.b16 %v347
    %v1612 = vunpack.c.l.b16 %v348
    %v1613 = vunpack.c.h.b16 %v348
    %v1614 = vunpack.c.l.b16 %v349
    %v1615 = vunpack.c.h.b16 %v349
    %v1616 = vunpack.c.l.b16 %v350
    %v1617 = vunpack.c.h.b16 %v350
    %v1618 = vunpack.c.l.b16 %v351
    %v1619 = vunpack.c.h.b16 %v351
    %v1620 = vunpack.c.l.b16 %v352
    %v1621 = vunpack.c.h.b16 %v352
    %v1622 = vunpack.c.l.b16 %v353
    %v1623 = vunpack.c.h.b16 %v353
    %v1624 = vunpack.c.l.b16 %v354
    %v1625 = vunpack.c.h.b16 %v354
    %v1626 = vunpack.c.l.b16 %v355
    %v1627 = vunpack.c.h.b16 %v355
    %v1628 = vunpack.c.l.b16 %v356
    %v1629 = vunpack.c.h.b16 %v356
    %v1630 = vunpack.c.l.b16 %v357
    %v1631 = vunpack.c.h.b16 %v357
    %v1632 = vunpack.c.l.b16 %v358
    %v1633 = vunpack.c.h.b16 %v358
    %v1634 = vunpack.c.l.b16 %v359
    %v1635 = vunpack.c.h.b16 %v359
    %v1636 = vunpack.c.l.b16 %v360
    %v1637 = vunpack.c.h.b16 %v360
    %v1638 = vunpack.c.l.b16 %v361
    %v1639 = vunpack.c.h.b16 %v361
    %v1640 = vunpack.c.l.b16 %v362
    %v1641 = vunpack.c.h.b16 %v362
    %v1642 = vunpack.c.l.b16 %v363
    %v1643 = vunpack.c.h.b16 %v363
    %v1644 = vunpack.c.l.b16 %v364
    %v1645 = vunpack.c.h.b16 %v364
    %v1646 = vunpack.c.l.b16 %v365
    %v1647 = vunpack.c.h.b16 %v365
    %v1648 = vunpack.c.l.b16 %v366
    %v1649 = vunpack.c.h.b16 %v366
    %v1650 = vunpack.c.l.b16 %v367
    %v1651 = vunpack.c.h.b16 %v367
    %v1652 = vunpack.c.l.b16 %v368
    %v1653 = vunpack.c.h.b16 %v368
    %v1654 = vunpack.c.l.b16 %v369
    %v1655 = vunpack.c.h.b16 %v369
    %v1656 = vunpack.c.l.b16 %v370
    %v1657 = vunpack.c.h.b16 %v370
    %v1658 = vunpack.c.l.b16 %v371
    %v1659 = vunpack.c.h.b16 %v371
    %v1660 = vunpack.c.l.b16 %v372
    %v1661 = vunpack.c.h.b16 %v372
    %v1662 = vunpack.c.l.b16 %v373
    %v1663 = vunpack.c.h.b16 %v373
    %v1664 = vunpack.c.l.b16 %v374
    %v1665 = vunpack.c.h.b16 %v374
    %v1666 = vunpack.c.l.b16 %v375
    %v1667 = vunpack.c.h.b16 %v375
    %v1668 = vunpack.c.l.b16 %v376
    %v1669 = vunpack.c.h.b16 %v376
    %v1670 = vunpack.c.l.b16 %v377
    %v1671 = vunpack.c.h.b16 %v377
    %v1672 = vunpack.c.l.b16 %v378
    %v1673 = vunpack.c.h.b16 %v378
    %v1674 = vunpack.c.l.b16 %v379
    %v1675 = vunpack.c.h.b16 %v379
    %v1676 = vunpack.c.l.b16 %v380
    %v1677 = vunpack.c.h.b16 %v380
    %v1678 = vunpack.c.l.b16 %v381
    %v1679 = vunpack.c.h.b16 %v381
    %v1680 = vunpack.c.l.b16 %v382
    %v1681 = vunpack.c.h.b16 %v382
    %v1682 = vunpack.c.l.b16 %v383
    %v1683 = vunpack.c.h.b16 %v383
    %v1684 = vunpack.c.l.b16 %v384
    %v1685 = vunpack.c.h.b16 %v384
    %v1686 = vunpack.c.l.b16 %v385
    %v1687 = vunpack.c.h.b16 %v385
    %v1688 = vunpack.c.l.b16 %v386
    %v1689 = vunpack.c.h.b16 %v386
    %v1690 = vunpack.c.l.b16 %v387
    %v1691 = vunpack.c.h.b16 %v387
    %v1692 = vunpack.c.l.b16 %v388
    %v1693 = vunpack.c.h.b16 %v388
    %v1694 = vunpack.c.l.b16 %v389
    %v1695 = vunpack.c.h.b16 %v389
    %v1696 = vunpack.c.l.b16 %v390
    %v1697 = vunpack.c.h.b16 %v390
    %v1698 = vunpack.c.l.b16 %v391
    %v1699 = vunpack.c.h.b16 %v391
    %v1700 = vunpack.c.l.b16 %v392
    %v1701 = vunpack.c.h.b16 %v392
    %v1702 = vunpack.c.l.b16 %v393
    %v1703 = vunpack.c.h.b16 %v393
    %v1704 = vunpack.c.l.b16 %v394
    %v1705 = vunpack.c.h.b16 %v394
    %v1706 = vunpack.c.l.b16 %v395
    %v1707 = vunpack.c.h.b16 %v395
    %v1708 = vunpack.c.l.b16 %v396
    %v1709 = vunpack.c.h.b16 %v396
    %v1710 = vunpack.c.l.b16 %v397
    %v1711 = vunpack.c.h.b16 %v397
    %v1712 = vunpack.c.l.b16 %v398
    %v1713 = vunpack.c.h.b16 %v398
    %v1714 = vunpack.c.l.b16 %v399
    %v1715 = vunpack.c.h.b16 %v399
    %v1716 = vunpack.c.l.b16 %v400
    %v1717 = vunpack.c.h.b16 %v400
    %v1718 = vunpack.c.l.b16 %v401
    %v1719 = vunpack.c.h.b16 %v401
    %v1720 = vunpack.c.l.b16 %v402
    %v1721 = vunpack.c.h.b16 %v402
    %v1722 = vunpack.c.l.b16 %v403
    %v1723 = vunpack.c.h.b16 %v403
    %v1724 = vunpack.c.l.b16 %v404
    %v1725 = vunpack.c.h.b16 %v404
    %v1726 = vunpack.c.l.b16 %v405
    %v1727 = vunpack.c.h.b16 %v405
    %v1728 = vunpack.c.l.b16 %v406
    %v1729 = vunpack.c.h.b16 %v406
    %v1730 = vunpack.c.l.b16 %v407
    %v1731 = vunpack.c.h.b16 %v407
    %v1732 = vunpack.c.l.b16 %v408
    %v1733 = vunpack.c.h.b16 %v408
    %v1734 = vunpack.c.l.b16 %v409
    %v1735 = vunpack.c.h.b16 %v409
    %v1736 = vunpack.c.l.b16 %v410
    %v1737 = vunpack.c.h.b16 %v410
    %v1738 = vunpack.c.l.b16 %v411
    %v1739 = vunpack.c.h.b16 %v411
    %v1740 = vunpack.c.l.b16 %v412
    %v1741 = vunpack.c.h.b16 %v412
    %v1742 = vunpack.c.l.b16 %v413
    %v1743 = vunpack.c.h.b16 %v413
    %v1744 = vunpack.c.l.b16 %v414
    %v1745 = vunpack.c.h.b16 %v414
    %v1746 = vunpack.c.l.b16 %v415
    %v1747 = vunpack.c.h.b16 %v415
    %v1748 = vunpack.c.l.b16 %v416
    %v1749 = vunpack.c.h.b16 %v416
    %v1750 = vunpack.c.l.b16 %v417
    %v1751 = vunpack.c.h.b16 %v417
    %v1752 = vunpack.c.l.b16 %v418
    %v1753 = vunpack.c.h.b16 %v418
    %v1754 = vunpack.c.l.b16 %v419
    %v1755 = vunpack.c.h.b16 %v419
    %v1756 = vunpack.c.l.b16 %v420
    %v1757 = vunpack.c.h.b16 %v420
    %v1758 = vunpack.c.l.b16 %v421
    %v1759 = vunpack.c.h.b16 %v421
    %v1760 = vunpack.c.l.b16 %v422
    %v1761 = vunpack.c.h.b16 %v422
    %v1762 = vunpack.c.l.b16 %v423
    %v1763 = vunpack.c.h.b16 %v423
    %v1764 = vunpack.c.l.b16 %v424
    %v1765 = vunpack.c.h.b16 %v424
    %v1766 = vunpack.c.l.b16 %v425
    %v1767 = vunpack.c.h.b16 %v425
    %v1768 = vunpack.c.l.b16 %v426
    %v1769 = vunpack.c.h.b16 %v426
    %v1770 = vunpack.c.l.b16 %v427
    %v1771 = vunpack.c.h.b16 %v427
    %v1772 = vunpack.c.l.b16 %v428
    %v1773 = vunpack.c.h.b16 %v428
    %v1774 = vunpack.c.l.b16 %v429
    %v1775 = vunpack.c.h.b16 %v429
    %v1776 = vunpack.c.l.b16 %v430
    %v1777 = vunpack.c.h.b16 %v430
    %v1778 = vunpack.c.l.b16 %v431
    %v1779 = vunpack.c.h.b16 %v431
    %v1780 = vunpack.c.l.b16 %v432
    %v1781 = vunpack.c.h.b16 %v432
    %v1782 = vunpack.c.l.b16 %v433
    %v1783 = vunpack.c.h.b16 %v433
    %v1784 = vunpack.c.l.b16 %v434
    %v1785 = vunpack.c.h.b16 %v434
    %v1786 = vunpack.c.l.b16 %v435
    %v1787 = vunpack.c.h.b16 %v435
    %v1788 = vunpack.c.l.b16 %v436
    %v1789 = vunpack.c.h.b16 %v436
    %v1790 = vunpack.c.l.b16 %v437
    %v1791 = vunpack.c.h.b16 %v437
    %v1792 = vunpack.c.l.b16 %v438
    %v1793 = vunpack.c.h.b16 %v438
    %v1794 = vunpack.c.l.b16 %v439
    %v1795 = vunpack.c.h.b16 %v439
    %v1796 = vunpack.c.l.b16 %v440
    %v1797 = vunpack.c.h.b16 %v440
    %v1798 = vunpack.c.l.b16 %v441
    %v1799 = vunpack.c.h.b16 %v441
    %v1800 = vunpack.c.l.b16 %v442
    %v1801 = vunpack.c.h.b16 %v442
    %v1802 = vunpack.c.l.b16 %v443
    %v1803 = vunpack.c.h.b16 %v443
    %v1804 = vunpack.c.l.b16 %v444
    %v1805 = vunpack.c.h.b16 %v444
    %v1806 = vunpack.c.l.b16 %v445
    %v1807 = vunpack.c.h.b16 %v445
    %v1808 = vunpack.c.l.b16 %v446
    %v1809 = vunpack.c.h.b16 %v446
    %v1810 = vunpack.c.l.b16 %v447
    %v1811 = vunpack.c.h.b16 %v447
    %v1812 = vunpack.c.l.b16 %v448
    %v1813 = vunpack.c.h.b16 %v448
    %v1814 = vunpack.c.l.b16 %v449
    %v1815 = vunpack.c.h.b16 %v449
    %v1816 = vunpack.c.l.b16 %v450
    %v1817 = vunpack.c.h.b16 %v450
    %v1818 = vunpack.c.l.b16 %v451
    %v1819 = vunpack.c.h.b16 %v451
    %v1820 = vunpack.c.l.b16 %v452
    %v1821 = vunpack.c.h.b16 %v452
    %v1822 = vunpack.c.l.b16 %v453
    %v1823 = vunpack.c.h.b16 %v453
    %v1824 = vunpack.c.l.b16 %v454
    %v1825 = vunpack.c.h.b16 %v454
    %v1826 = vunpack.c.l.b16 %v455
    %v1827 = vunpack.c.h.b16 %v455
    %v1828 = vunpack.c.l.b16 %v456
    %v1829 = vunpack.c.h.b16 %v456
    %v1830 = vunpack.c.l.b16 %v457
    %v1831 = vunpack.c.h.b16 %v457
    %v1832 = vunpack.c.l.b16 %v458
    %v1833 = vunpack.c.h.b16 %v458
    %v1834 = vunpack.c.l.b16 %v459
    %v1835 = vunpack.c.h.b16 %v459
    %v1836 = vunpack.c.l.b16 %v460
    %v1837 = vunpack.c.h.b16 %v460
    %v1838 = vunpack.c.l.b16 %v461
    %v1839 = vunpack.c.h.b16 %v461
    %v1840 = vunpack.c.l.b16 %v462
    %v1841 = vunpack.c.h.b16 %v462
    %v1842 = vunpack.c.l.b16 %v463
    %v1843 = vunpack.c.h.b16 %v463
    %v1844 = vunpack.c.l.b16 %v464
    %v1845 = vunpack.c.h.b16 %v464
    %v1846 = vunpack.c.l.b16 %v465
    %v1847 = vunpack.c.h.b16 %v465
    %v1848 = vunpack.c.l.b16 %v466
    %v1849 = vunpack.c.h.b16 %v466
    %v1850 = vunpack.c.l.b16 %v467
    %v1851 = vunpack.c.h.b16 %v467
    %v1852 = vunpack.c.l.b16 %v468
    %v1853 = vunpack.c.h.b16 %v468
    %v1854 = vunpack.c.l.b16 %v469
    %v1855 = vunpack.c.h.b16 %v469
    %v1856 = vunpack.c.l.b16 %v470
    %v1857 = vunpack.c.h.b16 %v470
    %v1858 = vunpack.c.l.b16 %v471
    %v1859 = vunpack.c.h.b16 %v471
    %v1860 = vunpack.c.l.b16 %v472
    %v1861 = vunpack.c.h.b16 %v472
    %v1862 = vunpack.c.l.b16 %v473
    %v1863 = vunpack.c.h.b16 %v473
    %v1864 = vunpack.c.l.b16 %v474
    %v1865 = vunpack.c.h.b16 %v474
    %v1866 = vunpack.c.l.b16 %v475
    %v1867 = vunpack.c.h.b16 %v475
    %v1868 = vunpack.c.l.b16 %v476
    %v1869 = vunpack.c.h.b16 %v476
    %v1870 = vunpack.c.l.b16 %v477
    %v1871 = vunpack.c.h.b16 %v477
    %v1872 = vunpack.c.l.b16 %v478
    %v1873 = vunpack.c.h.b16 %v478
    %v1874 = vunpack.c.l.b16 %v479
    %v1875 = vunpack.c.h.b16 %v479
    %v1876 = vunpack.c.l.b16 %v480
    %v1877 = vunpack.c.h.b16 %v480
    %v1878 = vunpack.c.l.b16 %v481
    %v1879 = vunpack.c.h.b16 %v481
    %v1880 = vunpack.c.l.b16 %v482
    %v1881 = vunpack.c.h.b16 %v482
    %v1882 = vunpack.c.l.b16 %v483
    %v1883 = vunpack.c.h.b16 %v483
    %v1884 = vunpack.c.l.b16 %v484
    %v1885 = vunpack.c.h.b16 %v484
    %v1886 = vunpack.c.l.b16 %v485
    %v1887 = vunpack.c.h.b16 %v485
    %v1888 = vunpack.c.l.b16 %v486
    %v1889 = vunpack.c.h.b16 %v486
    %v1890 = vunpack.c.l.b16 %v487
    %v1891 = vunpack.c.h.b16 %v487
    %v1892 = vunpack.c.l.b16 %v488
    %v1893 = vunpack.c.h.b16 %v488
    %v1894 = vunpack.c.l.b16 %v489
    %v1895 = vunpack.c.h.b16 %v489
    %v1896 = vunpack.c.l.b16 %v490
    %v1897 = vunpack.c.h.b16 %v490
    %v1898 = vunpack.c.l.b16 %v491
    %v1899 = vunpack.c.h.b16 %v491
    %v1900 = vunpack.c.l.b16 %v492
    %v1901 = vunpack.c.h.b16 %v492
    %v1902 = vunpack.c.l.b16 %v493
    %v1903 = vunpack.c.h.b16 %v493
    %v1904 = vunpack.c.l.b16 %v494
    %v1905 = vunpack.c.h.b16 %v494
    %v1906 = vunpack.c.l.b16 %v495
    %v1907 = vunpack.c.h.b16 %v495
    %v1908 = vunpack.c.l.b16 %v496
    %v1909 = vunpack.c.h.b16 %v496
    %v1910 = vunpack.c.l.b16 %v497
    %v1911 = vunpack.c.h.b16 %v497
    %v1912 = vunpack.c.l.b16 %v498
    %v1913 = vunpack.c.h.b16 %v498
    %v1914 = vunpack.c.l.b16 %v499
    %v1915 = vunpack.c.h.b16 %v499
    %v1916 = vunpack.c.l.b16 %v500
    %v1917 = vunpack.c.h.b16 %v500
    %v1918 = vunpack.c.l.b16 %v501
    %v1919 = vunpack.c.h.b16 %v501
    %v1920 = vunpack.c.l.b16 %v502
    %v1921 = vunpack.c.h.b16 %v502
    %v1922 = vunpack.c.l.b16 %v503
    %v1923 = vunpack.c.h.b16 %v503
    %v1924 = vunpack.c.l.b16 %v504
    %v1925 = vunpack.c.h.b16 %v504
    %v1926 = vunpack.c.l.b16 %v505
    %v1927 = vunpack.c.h.b16 %v505
    %v1928 = vunpack.c.l.b16 %v506
    %v1929 = vunpack.c.h.b16 %v506
    %v1930 = vunpack.c.l.b16 %v507
    %v1931 = vunpack.c.h.b16 %v507
    %v1932 = vunpack.c.l.b16 %v508
    %v1933 = vunpack.c.h.b16 %v508
    %v1934 = vunpack.c.l.b16 %v509
    %v1935 = vunpack.c.h.b16 %v509
    %v1936 = vunpack.c.l.b16 %v510
    %v1937 = vunpack.c.h.b16 %v510
    %v1938 = vunpack.c.l.b16 %v511
    %v1939 = vunpack.c.h.b16 %v511
    %v1940 = vunpack.c.l.b16 %v512
    %v1941 = vunpack.c.h.b16 %v512
    %v1942 = vunpack.c.l.b16 %v513
    %v1943 = vunpack.c.h.b16 %v513
    %v1944 = vunpack.c.l.b16 %v514
    %v1945 = vunpack.c.h.b16 %v514
    %v1946 = vunpack.c.l.b16 %v515
    %v1947 = vunpack.c.h.b16 %v515
    %v1948 = vunpack.c.l.b16 %v516
    %v1949 = vunpack.c.h.b16 %v516
    %v1950 = vunpack.c.l.b16 %v517
    %v1951 = vunpack.c.h.b16 %v517
    %v1952 = vunpack.c.l.b16 %v518
    %v1953 = vunpack.c.h.b16 %v518
    %v1954 = vunpack.c.l.b16 %v519
    %v1955 = vunpack.c.h.b16 %v519
    %v1956 = vunpack.c.l.b16 %v520
    %v1957 = vunpack.c.h.b16 %v520
    %v1958 = vunpack.c.l.b16 %v521
    %v1959 = vunpack.c.h.b16 %v521
    %v1960 = vunpack.c.l.b16 %v522
    %v1961 = vunpack.c.h.b16 %v522
    %v1962 = vunpack.c.l.b16 %v523
    %v1963 = vunpack.c.h.b16 %v523
    %v1964 = vunpack.c.l.b16 %v524
    %v1965 = vunpack.c.h.b16 %v524
    %v1966 = vunpack.c.l.b16 %v525
    %v1967 = vunpack.c.h.b16 %v525
    %v1968 = vunpack.c.l.b16 %v526
    %v1969 = vunpack.c.h.b16 %v526
    %v1970 = vunpack.c.l.b16 %v527
    %v1971 = vunpack.c.h.b16 %v527
    %v1972 = vunpack.c.l.b16 %v528
    %v1973 = vunpack.c.h.b16 %v528
    %v1974 = vunpack.c.l.b16 %v529
    %v1975 = vunpack.c.h.b16 %v529
    %v1976 = vunpack.c.l.b16 %v530
    %v1977 = vunpack.c.h.b16 %v530
    %v1978 = vunpack.c.l.b16 %v531
    %v1979 = vunpack.c.h.b16 %v531
    %v1980 = vunpack.c.l.b16 %v532
    %v1981 = vunpack.c.h.b16 %v532
    %v1982 = vunpack.c.l.b16 %v533
    %v1983 = vunpack.c.h.b16 %v533
    %v1984 = vunpack.c.l.b16 %v534
    %v1985 = vunpack.c.h.b16 %v534
    %v1986 = vunpack.c.l.b16 %v535
    %v1987 = vunpack.c.h.b16 %v535
    %v1988 = vunpack.c.l.b16 %v536
    %v1989 = vunpack.c.h.b16 %v536
    %v1990 = vunpack.c.l.b16 %v537
    %v1991 = vunpack.c.h.b16 %v537
    %v1992 = vunpack.c.l.b16 %v538
    %v1993 = vunpack.c.h.b16 %v538
    %v1994 = vunpack.c.l.b16 %v539
    %v1995 = vunpack.c.h.b16 %v539
    %v1996 = vunpack.c.l.b16 %v540
    %v1997 = vunpack.c.h.b16 %v540
    %v1998 = vunpack.c.l.b16 %v541
    %v1999 = vunpack.c.h.b16 %v541
    %v2000 = vunpack.c.l.b16 %v542
    %v2001 = vunpack.c.h.b16 %v542
    %v2002 = vunpack.c.l.b16 %v543
    %v2003 = vunpack.c.h.b16 %v543
    %v2004 = vunpack.c.l.b16 %v544
    %v2005 = vunpack.c.h.b16 %v544
    %v2006 = vunpack.c.l.b16 %v545
    %v2007 = vunpack.c.h.b16 %v545
    %v2008 = vunpack.c.l.b16 %v546
    %v2009 = vunpack.c.h.b16 %v546
    %v2010 = vunpack.c.l.b16 %v547
    %v2011 = vunpack.c.h.b16 %v547
    %v2012 = vunpack.c.l.b16 %v548
    %v2013 = vunpack.c.h.b16 %v548
    %v2014 = vunpack.c.l.b16 %v549
    %v2015 = vunpack.c.h.b16 %v549
    %v2016 = vunpack.c.l.b16 %v550
    %v2017 = vunpack.c.h.b16 %v550
    %v2018 = vunpack.c.l.b16 %v551
    %v2019 = vunpack.c.h.b16 %v551
    %v2020 = vunpack.c.l.b16 %v552
    %v2021 = vunpack.c.h.b16 %v552
    %v2022 = vunpack.c.l.b16 %v553
    %v2023 = vunpack.c.h.b16 %v553
    %v2024 = vunpack.c.l.b16 %v554
    %v2025 = vunpack.c.h.b16 %v554
    %v2026 = vunpack.c.l.b16 %v555
    %v2027 = vunpack.c.h.b16 %v555
    %v2028 = vunpack.c.l.b16 %v556
    %v2029 = vunpack.c.h.b16 %v556
    %v2030 = vunpack.c.l.b16 %v557
    %v2031 = vunpack.c.h.b16 %v557
    %v2032 = vunpack.c.l.b16 %v558
    %v2033 = vunpack.c.h.b16 %v558
    %v2034 = vunpack.c.l.b16 %v559
    %v2035 = vunpack.c.h.b16 %v559
    %v2036 = vunpack.c.l.b16 %v560
    %v2037 = vunpack.c.h.b16 %v560
    %v2038 = vunpack.c.l.b16 %v561
    %v2039 = vunpack.c.h.b16 %v561
    %v2040 = vunpack.c.l.b16 %v562
    %v2041 = vunpack.c.h.b16 %v562
    %v2042 = vunpack.c.l.b16 %v563
    %v2043 = vunpack.c.h.b16 %v563
    %v2044 = vunpack.c.l.b16 %v564
    %v2045 = vunpack.c.h.b16 %v564
    %v2046 = vunpack.c.l.b16 %v565
    %v2047 = vunpack.c.h.b16 %v565
    %v2048 = vunpack.c.l.b16 %v566
    %v2049 = vunpack.c.h.b16 %v566
    %v2050 = vunpack.c.l.b16 %v567
    %v2051 = vunpack.c.h.b16 %v567
    %v2052 = vunpack.c.l.b16 %v568
    %v2053 = vunpack.c.h.b16 %v568
    %v2054 = vunpack.c.l.b16 %v569
    %v2055 = vunpack.c.h.b16 %v569
    %v2056 = vunpack.c.l.b16 %v570
    %v2057 = vunpack.c.h.b16 %v570
    %v2058 = vunpack.c.l.b16 %v571
    %v2059 = vunpack.c.h.b16 %v571
    %v2060 = vunpack.c.l.b16 %v572
    %v2061 = vunpack.c.h.b16 %v572
    %v2062 = vunpack.c.l.b16 %v573
    %v2063 = vunpack.c.h.b16 %v573
    %v2064 = vunpack.c.l.b16 %v574
    %v2065 = vunpack.c.h.b16 %v574
    %v2066 = vunpack.c.l.b16 %v575
    %v2067 = vunpack.c.h.b16 %v575
    %v2068 = vunpack.c.l.b16 %v576
    %v2069 = vunpack.c.h.b16 %v576
    %v2070 = vunpack.c.l.b16 %v577
    %v2071 = vunpack.c.h.b16 %v577
    %v2072 = vunpack.c.l.b16 %v578
    %v2073 = vunpack.c.h.b16 %v578
    %v2074 = vunpack.c.l.b16 %v579
    %v2075 = vunpack.c.h.b16 %v579
    %v2076 = vunpack.c.l.b16 %v580
    %v2077 = vunpack.c.h.b16 %v580
    %v2078 = vunpack.c.l.b16 %v581
    %v2079 = vunpack.c.h.b16 %v581
    %v2080 = vunpack.c.l.b16 %v582
    %v2081 = vunpack.c.h.b16 %v582
    %v2082 = vunpack.c.l.b16 %v583
    %v2083 = vunpack.c.h.b16 %v583
    %v2084 = vunpack.c.l.b16 %v584
    %v2085 = vunpack.c.h.b16 %v584
    %v2086 = vunpack.c.l.b16 %v585
    %v2087 = vunpack.c.h.b16 %v585
    %v2088 = vunpack.c.l.b16 %v586
    %v2089 = vunpack.c.h.b16 %v586
    %v2090 = vunpack.c.l.b16 %v587
    %v2091 = vunpack.c.h.b16 %v587
    %v2092 = vunpack.c.l.b16 %v588
    %v2093 = vunpack.c.h.b16 %v588
    %v2094 = vunpack.c.l.b16 %v589
    %v2095 = vunpack.c.h.b16 %v589
    %v2096 = vunpack.c.l.b16 %v590
    %v2097 = vunpack.c.h.b16 %v590
    %v2098 = vunpack.c.l.b16 %v591
    %v2099 = vunpack.c.h.b16 %v591
    %v2100 = vunpack.c.l.b16 %v592
    %v2101 = vunpack.c.h.b16 %v592
    %v2102 = vunpack.c.l.b16 %v593
    %v2103 = vunpack.c.h.b16 %v593
    %v2104 = vunpack.c.l.b16 %v594
    %v2105 = vunpack.c.h.b16 %v594
    %v2106 = vunpack.c.l.b16 %v595
    %v2107 = vunpack.c.h.b16 %v595
    %v2108 = vunpack.c.l.b16 %v596
    %v2109 = vunpack.c.h.b16 %v596
    %v2110 = vunpack.c.l.b16 %v597
    %v2111 = vunpack.c.h.b16 %v597
    %v2112 = vunpack.c.l.b16 %v598
    %v2113 = vunpack.c.h.b16 %v598
    %v2114 = vunpack.c.l.b16 %v599
    %v2115 = vunpack.c.h.b16 %v599
    %v2116 = vunpack.c.l.b16 %v600
    %v2117 = vunpack.c.h.b16 %v600
    %v2118 = vunpack.c.l.b16 %v601
    %v2119 = vunpack.c.h.b16 %v601
    %v2120 = vunpack.c.l.b16 %v602
    %v2121 = vunpack.c.h.b16 %v602
    %v2122 = vunpack.c.l.b16 %v603
    %v2123 = vunpack.c.h.b16 %v603
    %v2124 = vunpack.c.l.b16 %v604
    %v2125 = vunpack.c.h.b16 %v604
    %v2126 = vunpack.c.l.b16 %v605
    %v2127 = vunpack.c.h.b16 %v605
    %v2128 = vunpack.c.l.b16 %v606
    %v2129 = vunpack.c.h.b16 %v606
    %v2130 = vunpack.c.l.b16 %v607
    %v2131 = vunpack.c.h.b16 %v607
    %v2132 = vunpack.c.l.b16 %v608
    %v2133 = vunpack.c.h.b16 %v608
    %v2134 = vunpack.c.l.b16 %v609
    %v2135 = vunpack.c.h.b16 %v609
    %v2136 = vunpack.c.l.b16 %v610
    %v2137 = vunpack.c.h.b16 %v610
    %v2138 = vunpack.c.l.b16 %v611
    %v2139 = vunpack.c.h.b16 %v611
    %v2140 = vunpack.c.l.b16 %v612
    %v2141 = vunpack.c.h.b16 %v612
    %v2142 = vunpack.c.l.b16 %v613
    %v2143 = vunpack.c.h.b16 %v613
    %v2144 = vunpack.c.l.b16 %v614
    %v2145 = vunpack.c.h.b16 %v614
    %v2146 = vunpack.c.l.b16 %v615
    %v2147 = vunpack.c.h.b16 %v615
    %v2148 = vunpack.c.l.b16 %v616
    %v2149 = vunpack.c.h.b16 %v616
    %v2150 = vunpack.c.l.b16 %v617
    %v2151 = vunpack.c.h.b16 %v617
    %v2152 = vunpack.c.l.b16 %v618
    %v2153 = vunpack.c.h.b16 %v618
    %v2154 = vunpack.c.l.b16 %v619
    %v2155 = vunpack.c.h.b16 %v619
    %v2156 = vunpack.c.l.b16 %v620
    %v2157 = vunpack.c.h.b16 %v620
    %v2158 = vunpack.c.l.b16 %v621
    %v2159 = vunpack.c.h.b16 %v621
    %v2160 = vunpack.c.l.b16 %v622
    %v2161 = vunpack.c.h.b16 %v622
    %v2162 = vunpack.c.l.b16 %v623
    %v2163 = vunpack.c.h.b16 %v623
    %v2164 = vunpack.c.l.b16 %v624
    %v2165 = vunpack.c.h.b16 %v624
    %v2166 = vunpack.c.l.b16 %v625
    %v2167 = vunpack.c.h.b16 %v625
    %v2168 = vunpack.c.l.b16 %v626
    %v2169 = vunpack.c.h.b16 %v626
    %v2170 = vpack.c.b16 %v1178, %v1146
    %v2171 = vpack.c.b16 %v1179, %v1147
    %v2172 = vpack.c.b16 %v1180, %v1148
    %v2173 = vpack.c.b16 %v1181, %v1149
    %v2174 = vpack.c.b16 %v1182, %v1150
    %v2175 = vpack.c.b16 %v1183, %v1151
    %v2176 = vpack.c.b16 %v1184, %v1152
    %v2177 = vpack.c.b16 %v1185, %v1153
    %v2178 = vpack.c.b16 %v1186, %v1154
    %v2179 = vpack.c.b16 %v1187, %v1155
    %v2180 = vpack.c.b16 %v1188, %v1156
    %v2181 = vpack.c.b16 %v1189, %v1157
    %v2182 = vpack.c.b16 %v1190, %v1158
    %v2183 = vpack.c.b16 %v1191, %v1159
    %v2184 = vpack.c.b16 %v1192, %v1160
    %v2185 = vpack.c.b16 %v1193, %v1161
    %v2186 = vpack.c.b16 %v1194, %v1162
    %v2187 = vpack.c.b16 %v1195, %v1163
    %v2188 = vpack.c.b16 %v1196, %v1164
    %v2189 = vpack.c.b16 %v1197, %v1165
    %v2190 = vpack.c.b16 %v1198, %v1166
    %v2191 = vpack.c.b16 %v1199, %v1167
    %v2192 = vpack.c.b16 %v1200, %v1168
    %v2193 = vpack.c.b16 %v1201, %v1169
    %v2194 = vpack.c.b16 %v1202, %v1170
    %v2195 = vpack.c.b16 %v1203, %v1171
    %v2196 = vpack.c.b16 %v1204, %v1172
    %v2197 = vpack.c.b16 %v1205, %v1173
    %v2198 = vpack.c.b16 %v1206, %v1174
    %v2199 = vpack.c.b16 %v1207, %v1175
    %v2200 = vpack.c.b16 %v1208, %v1176
    %v2201 = vpack.c.b16 %v1209, %v1177
    %v2202 = vpack.c.b16 %v1242, %v1210
    %v2203 = vpack.c.b16 %v1243, %v1211
    %v2204 = vpack.c.b16 %v1244, %v1212
    %v2205 = vpack.c.b16 %v1245, %v1213
    %v2206 = vpack.c.b16 %v1246, %v1214
    %v2207 = vpack.c.b16 %v1247, %v1215
    %v2208 = vpack.c.b16 %v1248, %v1216
    %v2209 = vpack.c.b16 %v1249, %v1217
    %v2210 = vpack.c.b16 %v1250, %v1218
    %v2211 = vpack.c.b16 %v1251, %v1219
    %v2212 = vpack.c.b16 %v1252, %v1220
    %v2213 = vpack.c.b16 %v1253, %v1221
    %v2214 = vpack.c.b16 %v1254, %v1222
    %v2215 = vpack.c.b16 %v1255, %v1223
    %v2216 = vpack.c.b16 %v1256, %v1224
    %v2217 = vpack.c.b16 %v1257, %v1225
    %v2218 = vpack.c.b16 %v1258, %v1226
    %v2219 = vpack.c.b16 %v1259, %v1227
    %v2220 = vpack.c.b16 %v1260, %v1228
    %v2221 = vpack.c.b16 %v1261, %v1229
    %v2222 = vpack.c.b16 %v1262, %v1230
    %v2223 = vpack.c.b16 %v1263, %v1231
    %v2224 = vpack.c.b16 %v1264, %v1232
    %v2225 = vpack.c.b16 %v1265, %v1233
    %v2226 = vpack.c.b16 %v1266, %v1234
    %v2227 = vpack.c.b16 %v1267, %v1235
    %v2228 = vpack.c.b16 %v1268, %v1236
    %v2229 = vpack.c.b16 %v1269, %v1237
    %v2230 = vpack.c.b16 %v1270, %v1238
    %v2231 = vpack.c.b16 %v1271, %v1239
    %v2232 = vpack.c.b16 %v1272, %v1240
    %v2233 = vpack.c.b16 %v1273, %v1241
    %v2234 = vpack.c.b16 %v1306, %v1274
    %v2235 = vpack.c.b16 %v1307, %v1275
    %v2236 = vpack.c.b16 %v1308, %v1276
    %v2237 = vpack.c.b16 %v1309, %v1277
    %v2238 = vpack.c.b16 %v1310, %v1278
    %v2239 = vpack.c.b16 %v1311, %v1279
    %v2240 = vpack.c.b16 %v1312, %v1280
    %v2241 = vpack.c.b16 %v1313, %v1281
    %v2242 = vpack.c.b16 %v1314, %v1282
    %v2243 = vpack.c.b16 %v1315, %v1283
    %v2244 = vpack.c.b16 %v1316, %v1284
    %v2245 = vpack.c.b16 %v1317, %v1285
    %v2246 = vpack.c.b16 %v1318, %v1286
    %v2247 = vpack.c.b16 %v1319, %v1287
    %v2248 = vpack.c.b16 %v1320, %v1288
    %v2249 = vpack.c.b16 %v1321, %v1289
    %v2250 = vpack.c.b16 %v1322, %v1290
    %v2251 = vpack.c.b16 %v1323, %v1291
    %v2252 = vpack.c.b16 %v1324, %v1292
    %v2253 = vpack.c.b16 %v1325, %v1293
    %v2254 = vpack.c.b16 %v1326, %v1294
    %v2255 = vpack.c.b16 %v1327, %v1295
    %v2256 = vpack.c.b16 %v1328, %v1296
    %v2257 = vpack.c.b16 %v1329, %v1297
    %v2258 = vpack.c.b16 %v1330, %v1298
    %v2259 = vpack.c.b16 %v1331, %v1299
    %v2260 = vpack.c.b16 %v1332, %v1300
    %v2261 = vpack.c.b16 %v1333, %v1301
    %v2262 = vpack.c.b16 %v1334, %v1302
    %v2263 = vpack.c.b16 %v1335, %v1303
    %v2264 = vpack.c.b16 %v1336, %v1304
    %v2265 = vpack.c.b16 %v1337, %v1305
    %v2266 = vpack.c.b16 %v1370, %v1338
    %v2267 = vpack.c.b16 %v1371, %v1339
    %v2268 = vpack.c.b16 %v1372, %v1340
    %v2269 = vpack.c.b16 %v1373, %v1341
    %v2270 = vpack.c.b16 %v1374, %v1342
    %v2271 = vpack.c.b16 %v1375, %v1343
    %v2272 = vpack.c.b16 %v1376, %v1344
    %v2273 = vpack.c.b16 %v1377, %v1345
    %v2274 = vpack.c.b16 %v1378, %v1346
    %v2275 = vpack.c.b16 %v1379, %v1347
    %v2276 = vpack.c.b16 %v1380, %v1348
    %v2277 = vpack.c.b16 %v1381, %v1349
    %v2278 = vpack.c.b16 %v1382, %v1350
    %v2279 = vpack.c.b16 %v1383, %v1351
    %v2280 = vpack.c.b16 %v1384, %v1352
    %v2281 = vpack.c.b16 %v1385, %v1353
    %v2282 = vpack.c.b16 %v1386, %v1354
    %v2283 = vpack.c.b16 %v1387, %v1355
    %v2284 = vpack.c.b16 %v1388, %v1356
    %v2285 = vpack.c.b16 %v1389, %v1357
    %v2286 = vpack.c.b16 %v1390, %v1358
    %v2287 = vpack.c.b16 %v1391, %v1359
    %v2288 = vpack.c.b16 %v1392, %v1360
    %v2289 = vpack.c.b16 %v1393, %v1361
    %v2290 = vpack.c.b16 %v1394, %v1362
    %v2291 = vpack.c.b16 %v1395, %v1363
    %v2292 = vpack.c.b16 %v1396, %v1364
    %v2293 = vpack.c.b16 %v1397, %v1365
    %v2294 = vpack.c.b16 %v1398, %v1366
    %v2295 = vpack.c.b16 %v1399, %v1367
    %v2296 = vpack.c.b16 %v1400, %v1368
    %v2297 = vpack.c.b16 %v1401, %v1369
    %v2298 = vpack.c.b16 %v1434, %v1402
    %v2299 = vpack.c.b16 %v1435, %v1403
    %v2300 = vpack.c.b16 %v1436, %v1404
    %v2301 = vpack.c.b16 %v1437, %v1405
    %v2302 = vpack.c.b16 %v1438, %v1406
    %v2303 = vpack.c.b16 %v1439, %v1407
    %v2304 = vpack.c.b16 %v1440, %v1408
    %v2305 = vpack.c.b16 %v1441, %v1409
    %v2306 = vpack.c.b16 %v1442, %v1410
    %v2307 = vpack.c.b16 %v1443, %v1411
    %v2308 = vpack.c.b16 %v1444, %v1412
    %v2309 = vpack.c.b16 %v1445, %v1413
    %v2310 = vpack.c.b16 %v1446, %v1414
    %v2311 = vpack.c.b16 %v1447, %v1415
    %v2312 = vpack.c.b16 %v1448, %v1416
    %v2313 = vpack.c.b16 %v1449, %v1417
    %v2314 = vpack.c.b16 %v1450, %v1418
    %v2315 = vpack.c.b16 %v1451, %v1419
    %v2316 = vpack.c.b16 %v1452, %v1420
    %v2317 = vpack.c.b16 %v1453, %v1421
    %v2318 = vpack.c.b16 %v1454, %v1422
    %v2319 = vpack.c.b16 %v1455, %v1423
    %v2320 = vpack.c.b16 %v1456, %v1424
    %v2321 = vpack.c.b16 %v1457, %v1425
    %v2322 = vpack.c.b16 %v1458, %v1426
    %v2323 = vpack.c.b16 %v1459, %v1427
    %v2324 = vpack.c.b16 %v1460, %v1428
    %v2325 = vpack.c.b16 %v1461, %v1429
    %v2326 = vpack.c.b16 %v1462, %v1430
    %v2327 = vpack.c.b16 %v1463, %v1431
    %v2328 = vpack.c.b16 %v1464, %v1432
    %v2329 = vpack.c.b16 %v1465, %v1433
    %v2330 = vpack.c.b16 %v1498, %v1466
    %v2331 = vpack.c.b16 %v1499, %v1467
    %v2332 = vpack.c.b16 %v1500, %v1468
    %v2333 = vpack.c.b16 %v1501, %v1469
    %v2334 = vpack.c.b16 %v1502, %v1470
    %v2335 = vpack.c.b16 %v1503, %v1471
    %v2336 = vpack.c.b16 %v1504, %v1472
    %v2337 = vpack.c.b16 %v1505, %v1473
    %v2338 = vpack.c.b16 %v1506, %v1474
    %v2339 = vpack.c.b16 %v1507, %v1475
    %v2340 = vpack.c.b16 %v1508, %v1476
    %v2341 = vpack.c.b16 %v1509, %v1477
    %v2342 = vpack.c.b16 %v1510, %v1478
    %v2343 = vpack.c.b16 %v1511, %v1479
    %v2344 = vpack.c.b16 %v1512, %v1480
    %v2345 = vpack.c.b16 %v1513, %v1481
    %v2346 = vpack.c.b16 %v1514, %v1482
    %v2347 = vpack.c.b16 %v1515, %v1483
    %v2348 = vpack.c.b16 %v1516, %v1484
    %v2349 = vpack.c.b16 %v1517, %v1485
    %v2350 = vpack.c.b16 %v1518, %v1486
    %v2351 = vpack.c.b16 %v1519, %v1487
    %v2352 = vpack.c.b16 %v1520, %v1488
    %v2353 = vpack.c.b16 %v1521, %v1489
    %v2354 = vpack.c.b16 %v1522, %v1490
    %v2355 = vpack.c.b16 %v1523, %v1491
    %v2356 = vpack.c.b16 %v1524, %v1492
    %v2357 = vpack.c.b16 %v1525, %v1493
    %v2358 = vpack.c.b16 %v1526, %v1494
    %v2359 = vpack.c.b16 %v1527, %v1495
    %v2360 = vpack.c.b16 %v1528, %v1496
    %v2361 = vpack.c.b16 %v1529, %v1497
    %v2362 = vpack.c.b16 %v1562, %v1530
    %v2363 = vpack.c.b16 %v1563, %v1531
    %v2364 = vpack.c.b16 %v1564, %v1532
    %v2365 = vpack.c.b16 %v1565, %v1533
    %v2366 = vpack.c.b16 %v1566, %v1534
    %v2367 = vpack.c.b16 %v1567, %v1535
    %v2368 = vpack.c.b16 %v1568, %v1536
    %v2369 = vpack.c.b16 %v1569, %v1537
    %v2370 = vpack.c.b16 %v1570, %v1538
    %v2371 = vpack.c.b16 %v1571, %v1539
    %v2372 = vpack.c.b16 %v1572, %v1540
    %v2373 = vpack.c.b16 %v1573, %v1541
    %v2374 = vpack.c.b16 %v1574, %v1542
    %v2375 = vpack.c.b16 %v1575, %v1543
    %v2376 = vpack.c.b16 %v1576, %v1544
    %v2377 = vpack.c.b16 %v1577, %v1545
    %v2378 = vpack.c.b16 %v1578, %v1546
    %v2379 = vpack.c.b16 %v1579, %v1547
    %v2380 = vpack.c.b16 %v1580, %v1548
    %v2381 = vpack.c.b16 %v1581, %v1549
    %v2382 = vpack.c.b16 %v1582, %v1550
    %v2383 = vpack.c.b16 %v1583, %v1551
    %v2384 = vpack.c.b16 %v1584, %v1552
    %v2385 = vpack.c.b16 %v1585, %v1553
    %v2386 = vpack.c.b16 %v1586, %v1554
    %v2387 = vpack.c.b16 %v1587, %v1555
    %v2388 = vpack.c.b16 %v1588, %v1556
    %v2389 = vpack.c.b16 %v1589, %v1557
    %v2390 = vpack.c.b16 %v1590, %v1558
    %v2391 = vpack.c.b16 %v1591, %v1559
    %v2392 = vpack.c.b16 %v1592, %v1560
    %v2393 = vpack.c.b16 %v1593, %v1561
    %v2394 = vpack.c.b16 %v1626, %v1594
    %v2395 = vpack.c.b16 %v1627, %v1595
    %v2396 = vpack.c.b16 %v1628, %v1596
    %v2397 = vpack.c.b16 %v1629, %v1597
    %v2398 = vpack.c.b16 %v1630, %v1598
    %v2399 = vpack.c.b16 %v1631, %v1599
    %v2400 = vpack.c.b16 %v1632, %v1600
    %v2401 = vpack.c.b16 %v1633, %v1601
    %v2402 = vpack.c.b16 %v1634, %v1602
    %v2403 = vpack.c.b16 %v1635, %v1603
    %v2404 = vpack.c.b16 %v1636, %v1604
    %v2405 = vpack.c.b16 %v1637, %v1605
    %v2406 = vpack.c.b16 %v1638, %v1606
    %v2407 = vpack.c.b16 %v1639, %v1607
    %v2408 = vpack.c.b16 %v1640, %v1608
    %v2409 = vpack.c.b16 %v1641, %v1609
    %v2410 = vpack.c.b16 %v1642, %v1610
    %v2411 = vpack.c.b16 %v1643, %v1611
    %v2412 = vpack.c.b16 %v1644, %v1612
    %v2413 = vpack.c.b16 %v1645, %v1613
    %v2414 = vpack.c.b16 %v1646, %v1614
    %v2415 = vpack.c.b16 %v1647, %v1615
    %v2416 = vpack.c.b16 %v1648, %v1616
    %v2417 = vpack.c.b16 %v1649, %v1617
    %v2418 = vpack.c.b16 %v1650, %v1618
    %v2419 = vpack.c.b16 %v1651, %v1619
    %v2420 = vpack.c.b16 %v1652, %v1620
    %v2421 = vpack.c.b16 %v1653, %v1621
    %v2422 = vpack.c.b16 %v1654, %v1622
    %v2423 = vpack.c.b16 %v1655, %v1623
    %v2424 = vpack.c.b16 %v1656, %v1624
    %v2425 = vpack.c.b16 %v1657, %v1625
    %v2426 = vpack.c.b16 %v1690, %v1658
    %v2427 = vpack.c.b16 %v1691, %v1659
    %v2428 = vpack.c.b16 %v1692, %v1660
    %v2429 = vpack.c.b16 %v1693, %v1661
    %v2430 = vpack.c.b16 %v1694, %v1662
    %v2431 = vpack.c.b16 %v1695, %v1663
    %v2432 = vpack.c.b16 %v1696, %v1664
    %v2433 = vpack.c.b16 %v1697, %v1665
    %v2434 = vpack.c.b16 %v1698, %v1666
    %v2435 = vpack.c.b16 %v1699, %v1667
    %v2436 = vpack.c.b16 %v1700, %v1668
    %v2437 = vpack.c.b16 %v1701, %v1669
    %v2438 = vpack.c.b16 %v1702, %v1670
    %v2439 = vpack.c.b16 %v1703, %v1671
    %v2440 = vpack.c.b16 %v1704, %v1672
    %v2441 = vpack.c.b16 %v1705, %v1673
    %v2442 = vpack.c.b16 %v1706, %v1674
    %v2443 = vpack.c.b16 %v1707, %v1675
    %v2444 = vpack.c.b16 %v1708, %v1676
    %v2445 = vpack.c.b16 %v1709, %v1677
    %v2446 = vpack.c.b16 %v1710, %v1678
    %v2447 = vpack.c.b16 %v1711, %v1679
    %v2448 = vpack.c.b16 %v1712, %v1680
    %v2449 = vpack.c.b16 %v1713, %v1681
    %v2450 = vpack.c.b16 %v1714, %v1682
    %v2451 = vpack.c.b16 %v1715, %v1683
    %v2452 = vpack.c.b16 %v1716, %v1684
    %v2453 = vpack.c.b16 %v1717, %v1685
    %v2454 = vpack.c.b16 %v1718, %v1686
    %v2455 = vpack.c.b16 %v1719, %v1687
    %v2456 = vpack.c.b16 %v1720, %v1688
    %v2457 = vpack.c.b16 %v1721, %v1689
    %v2458 = vpack.c.b16 %v1754, %v1722
    %v2459 = vpack.c.b16 %v1755, %v1723
    %v2460 = vpack.c.b16 %v1756, %v1724
    %v2461 = vpack.c.b16 %v1757, %v1725
    %v2462 = vpack.c.b16 %v1758, %v1726
    %v2463 = vpack.c.b16 %v1759, %v1727
    %v2464 = vpack.c.b16 %v1760, %v1728
    %v2465 = vpack.c.b16 %v1761, %v1729
    %v2466 = vpack.c.b16 %v1762, %v1730
    %v2467 = vpack.c.b16 %v1763, %v1731
    %v2468 = vpack.c.b16 %v1764, %v1732
    %v2469 = vpack.c.b16 %v1765, %v1733
    %v2470 = vpack.c.b16 %v1766, %v1734
    %v2471 = vpack.c.b16 %v1767, %v1735
    %v2472 = vpack.c.b16 %v1768, %v1736
    %v2473 = vpack.c.b16 %v1769, %v1737
    %v2474 = vpack.c.b16 %v1770, %v1738
    %v2475 = vpack.c.b16 %v1771, %v1739
    %v2476 = vpack.c.b16 %v1772, %v1740
    %v2477 = vpack.c.b16 %v1773, %v1741
    %v2478 = vpack.c.b16 %v1774, %v1742
    %v2479 = vpack.c.b16 %v1775, %v1743
    %v2480 = vpack.c.b16 %v1776, %v1744
    %v2481 = vpack.c.b16 %v1777, %v1745
    %v2482 = vpack.c.b16 %v1778, %v1746
    %v2483 = vpack.c.b16 %v1779, %v1747
    %v2484 = vpack.c.b16 %v1780, %v1748
    %v2485 = vpack.c.b16 %v1781, %v1749
    %v2486 = vpack.c.b16 %v1782, %v1750
    %v2487 = vpack.c.b16 %v1783, %v1751
    %v2488 = vpack.c.b16 %v1784, %v1752
    %v2489 = vpack.c.b16 %v1785, %v1753
    %v2490 = vpack.c.b16 %v1818, %v1786
    %v2491 = vpack.c.b16 %v1819, %v1787
    %v2492 = vpack.c.b16 %v1820, %v1788
    %v2493 = vpack.c.b16 %v1821, %v1789
    %v2494 = vpack.c.b16 %v1822, %v1790
    %v2495 = vpack.c.b16 %v1823, %v1791
    %v2496 = vpack.c.b16 %v1824, %v1792
    %v2497 = vpack.c.b16 %v1825, %v1793
    %v2498 = vpack.c.b16 %v1826, %v1794
    %v2499 = vpack.c.b16 %v1827, %v1795
    %v2500 = vpack.c.b16 %v1828, %v1796
    %v2501 = vpack.c.b16 %v1829, %v1797
    %v2502 = vpack.c.b16 %v1830, %v1798
    %v2503 = vpack.c.b16 %v1831, %v1799
    %v2504 = vpack.c.b16 %v1832, %v1800
    %v2505 = vpack.c.b16 %v1833, %v1801
    %v2506 = vpack.c.b16 %v1834, %v1802
    %v2507 = vpack.c.b16 %v1835, %v1803
    %v2508 = vpack.c.b16 %v1836, %v1804
    %v2509 = vpack.c.b16 %v1837, %v1805
    %v2510 = vpack.c.b16 %v1838, %v1806
    %v2511 = vpack.c.b16 %v1839, %v1807
    %v2512 = vpack.c.b16 %v1840, %v1808
    %v2513 = vpack.c.b16 %v1841, %v1809
    %v2514 = vpack.c.b16 %v1842, %v1810
    %v2515 = vpack.c.b16 %v1843, %v1811
    %v2516 = vpack.c.b16 %v1844, %v1812
    %v2517 = vpack.c.b16 %v1845, %v1813
    %v2518 = vpack.c.b16 %v1846, %v1814
    %v2519 = vpack.c.b16 %v1847, %v1815
    %v2520 = vpack.c.b16 %v1848, %v1816
    %v2521 = vpack.c.b16 %v1849, %v1817
    %v2522 = vpack.c.b16 %v1882, %v1850
    %v2523 = vpack.c.b16 %v1883, %v1851
    %v2524 = vpack.c.b16 %v1884, %v1852
    %v2525 = vpack.c.b16 %v1885, %v1853
    %v2526 = vpack.c.b16 %v1886, %v1854
    %v2527 = vpack.c.b16 %v1887, %v1855
    %v2528 = vpack.c.b16 %v1888, %v1856
    %v2529 = vpack.c.b16 %v1889, %v1857
    %v2530 = vpack.c.b16 %v1890, %v1858
    %v2531 = vpack.c.b16 %v1891, %v1859
    %v2532 = vpack.c.b16 %v1892, %v1860
    %v2533 = vpack.c.b16 %v1893, %v1861
    %v2534 = vpack.c.b16 %v1894, %v1862
    %v2535 = vpack.c.b16 %v1895, %v1863
    %v2536 = vpack.c.b16 %v1896, %v1864
    %v2537 = vpack.c.b16 %v1897, %v1865
    %v2538 = vpack.c.b16 %v1898, %v1866
    %v2539 = vpack.c.b16 %v1899, %v1867
    %v2540 = vpack.c.b16 %v1900, %v1868
    %v2541 = vpack.c.b16 %v1901, %v1869
    %v2542 = vpack.c.b16 %v1902, %v1870
    %v2543 = vpack.c.b16 %v1903, %v1871
    %v2544 = vpack.c.b16 %v1904, %v1872
    %v2545 = vpack.c.b16 %v1905, %v1873
    %v2546 = vpack.c.b16 %v1906, %v1874
    %v2547 = vpack.c.b16 %v1907, %v1875
    %v2548 = vpack.c.b16 %v1908, %v1876
    %v2549 = vpack.c.b16 %v1909, %v1877
    %v2550 = vpack.c.b16 %v1910, %v1878
    %v2551 = vpack.c.b16 %v1911, %v1879
    %v2552 = vpack.c.b16 %v1912, %v1880
    %v2553 = vpack.c.b16 %v1913, %v1881
    %v2554 = vpack.c.b16 %v1946, %v1914
    %v2555 = vpack.c.b16 %v1947, %v1915
    %v2556 = vpack.c.b16 %v1948, %v1916
    %v2557 = vpack.c.b16 %v1949, %v1917
    %v2558 = vpack.c.b16 %v1950, %v1918
    %v2559 = vpack.c.b16 %v1951, %v1919
    %v2560 = vpack.c.b16 %v1952, %v1920
    %v2561 = vpack.c.b16 %v1953, %v1921
    %v2562 = vpack.c.b16 %v1954, %v1922
    %v2563 = vpack.c.b16 %v1955, %v1923
    %v2564 = vpack.c.b16 %v1956, %v1924
    %v2565 = vpack.c.b16 %v1957, %v1925
    %v2566 = vpack.c.b16 %v1958, %v1926
    %v2567 = vpack.c.b16 %v1959, %v1927
    %v2568 = vpack.c.b16 %v1960, %v1928
    %v2569 = vpack.c.b16 %v1961, %v1929
    %v2570 = vpack.c.b16 %v1962, %v1930
    %v2571 = vpack.c.b16 %v1963, %v1931
    %v2572 = vpack.c.b16 %v1964, %v1932
    %v2573 = vpack.c.b16 %v1965, %v1933
    %v2574 = vpack.c.b16 %v1966, %v1934
    %v2575 = vpack.c.b16 %v1967, %v1935
    %v2576 = vpack.c.b16 %v1968, %v1936
    %v2577 = vpack.c.b16 %v1969, %v1937
    %v2578 = vpack.c.b16 %v1970, %v1938
    %v2579 = vpack.c.b16 %v1971, %v1939
    %v2580 = vpack.c.b16 %v1972, %v1940
    %v2581 = vpack.c.b16 %v1973, %v1941
    %v2582 = vpack.c.b16 %v1974, %v1942
    %v2583 = vpack.c.b16 %v1975, %v1943
    %v2584 = vpack.c.b16 %v1976, %v1944
    %v2585 = vpack.c.b16 %v1977, %v1945
    %v2586 = vpack.c.b16 %v2010, %v1978
    %v2587 = vpack.c.b16 %v2011, %v1979
    %v2588 = vpack.c.b16 %v2012, %v1980
    %v2589 = vpack.c.b16 %v2013, %v1981
    %v2590 = vpack.c.b16 %v2014, %v1982
    %v2591 = vpack.c.b16 %v2015, %v1983
    %v2592 = vpack.c.b16 %v2016, %v1984
    %v2593 = vpack.c.b16 %v2017, %v1985
    %v2594 = vpack.c.b16 %v2018, %v1986
    %v2595 = vpack.c.b16 %v2019, %v1987
    %v2596 = vpack.c.b16 %v2020, %v1988
    %v2597 = vpack.c.b16 %v2021, %v1989
    %v2598 = vpack.c.b16 %v2022, %v1990
    %v2599 = vpack.c.b16 %v2023, %v1991
    %v2600 = vpack.c.b16 %v2024, %v1992
    %v2601 = vpack.c.b16 %v2025, %v1993
    %v2602 = vpack.c.b16 %v2026, %v1994
    %v2603 = vpack.c.b16 %v2027, %v1995
    %v2604 = vpack.c.b16 %v2028, %v1996
    %v2605 = vpack.c.b16 %v2029, %v1997
    %v2606 = vpack.c.b16 %v2030, %v1998
    %v2607 = vpack.c.b16 %v2031, %v1999
    %v2608 = vpack.c.b16 %v2032, %v2000
    %v2609 = vpack.c.b16 %v2033, %v2001
    %v2610 = vpack.c.b16 %v2034, %v2002
    %v2611 = vpack.c.b16 %v2035, %v2003
    %v2612 = vpack.c.b16 %v2036, %v2004
    %v2613 = vpack.c.b16 %v2037, %v2005
    %v2614 = vpack.c.b16 %v2038, %v2006
    %v2615 = vpack.c.b16 %v2039, %v2007
    %v2616 = vpack.c.b16 %v2040, %v2008
    %v2617 = vpack.c.b16 %v2041, %v2009
    %v2618 = vpack.c.b16 %v2074, %v2042
    %v2619 = vpack.c.b16 %v2075, %v2043
    %v2620 = vpack.c.b16 %v2076, %v2044
    %v2621 = vpack.c.b16 %v2077, %v2045
    %v2622 = vpack.c.b16 %v2078, %v2046
    %v2623 = vpack.c.b16 %v2079, %v2047
    %v2624 = vpack.c.b16 %v2080, %v2048
    %v2625 = vpack.c.b16 %v2081, %v2049
    %v2626 = vpack.c.b16 %v2082, %v2050
    %v2627 = vpack.c.b16 %v2083, %v2051
    %v2628 = vpack.c.b16 %v2084, %v2052
    %v2629 = vpack.c.b16 %v2085, %v2053
    %v2630 = vpack.c.b16 %v2086, %v2054
    %v2631 = vpack.c.b16 %v2087, %v2055
    %v2632 = vpack.c.b16 %v2088, %v2056
    %v2633 = vpack.c.b16 %v2089, %v2057
    %v2634 = vpack.c.b16 %v2090, %v2058
    %v2635 = vpack.c.b16 %v2091, %v2059
    %v2636 = vpack.c.b16 %v2092, %v2060
    %v2637 = vpack.c.b16 %v2093, %v2061
    %v2638 = vpack.c.b16 %v2094, %v2062
    %v2639 = vpack.c.b16 %v2095, %v2063
    %v2640 = vpack.c.b16 %v2096, %v2064
    %v2641 = vpack.c.b16 %v2097, %v2065
    %v2642 = vpack.c.b16 %v2098, %v2066
    %v2643 = vpack.c.b16 %v2099, %v2067
    %v2644 = vpack.c.b16 %v2100, %v2068
    %v2645 = vpack.c.b16 %v2101, %v2069
    %v2646 = vpack.c.b16 %v2102, %v2070
    %v2647 = vpack.c.b16 %v2103, %v2071
    %v2648 = vpack.c.b16 %v2104, %v2072
    %v2649 = vpack.c.b16 %v2105, %v2073
    %v2650 = vpack.c.b16 %v2138, %v2106
    %v2651 = vpack.c.b16 %v2139, %v2107
    %v2652 = vpack.c.b16 %v2140, %v2108
    %v2653 = vpack.c.b16 %v2141, %v2109
    %v2654 = vpack.c.b16 %v2142, %v2110
    %v2655 = vpack.c.b16 %v2143, %v2111
    %v2656 = vpack.c.b16 %v2144, %v2112
    %v2657 = vpack.c.b16 %v2145, %v2113
    %v2658 = vpack.c.b16 %v2146, %v2114
    %v2659 = vpack.c.b16 %v2147, %v2115
    %v2660 = vpack.c.b16 %v2148, %v2116
    %v2661 = vpack.c.b16 %v2149, %v2117
    %v2662 = vpack.c.b16 %v2150, %v2118
    %v2663 = vpack.c.b16 %v2151, %v2119
    %v2664 = vpack.c.b16 %v2152, %v2120
    %v2665 = vpack.c.b16 %v2153, %v2121
    %v2666 = vpack.c.b16 %v2154, %v2122
    %v2667 = vpack.c.b16 %v2155, %v2123
    %v2668 = vpack.c.b16 %v2156, %v2124
    %v2669 = vpack.c.b16 %v2157, %v2125
    %v2670 = vpack.c.b16 %v2158, %v2126
    %v2671 = vpack.c.b16 %v2159, %v2127
    %v2672 = vpack.c.b16 %v2160, %v2128
    %v2673 = vpack.c.b16 %v2161, %v2129
    %v2674 = vpack.c.b16 %v2162, %v2130
    %v2675 = vpack.c.b16 %v2163, %v2131
    %v2676 = vpack.c.b16 %v2164, %v2132
    %v2677 = vpack.c.b16 %v2165, %v2133
    %v2678 = vpack.c.b16 %v2166, %v2134
    %v2679 = vpack.c.b16 %v2167, %v2135
    %v2680 = vpack.c.b16 %v2168, %v2136
    %v2681 = vpack.c.b16 %v2169, %v2137
    %3194 = vmatprep.subr.bf16.mxu0 %v2171
    %3195 = vmatpush1.bf16.msra.mxu0 %v2170
    %3196 = vmatprep.subr.bf16.mxu0 %v2203
    %3197 = vmatpush1.bf16.msra.mxu0 %v2202
    %3198 = vmatprep.subr.bf16.mxu0 %v2235
    %3199 = vmatpush1.bf16.msra.mxu0 %v2234
    %3200 = vmatprep.subr.bf16.mxu0 %v2267
    %3201 = vmatpush1.bf16.msra.mxu0 %v2266
    %3202 = vmatprep.subr.bf16.mxu0 %v2299
    %3203 = vmatpush1.bf16.msra.mxu0 %v2298
    %3204 = vmatprep.subr.bf16.mxu0 %v2331
    %3205 = vmatpush1.bf16.msra.mxu0 %v2330
    %3206 = vmatprep.subr.bf16.mxu0 %v2363
    %3207 = vmatpush1.bf16.msra.mxu0 %v2362
    %3208 = vmatprep.subr.bf16.mxu0 %v2395
    %3209 = vmatpush1.bf16.msra.mxu0 %v2394
    %3210 = vmatprep.subr.bf16.mxu0 %v2427
    %3211 = vmatpush1.bf16.msra.mxu0 %v2426
    %3212 = vmatprep.subr.bf16.mxu0 %v2459
    %3213 = vmatpush1.bf16.msra.mxu0 %v2458
    %3214 = vmatprep.subr.bf16.mxu0 %v2491
    %3215 = vmatpush1.bf16.msra.mxu0 %v2490
    %3216 = vmatprep.subr.bf16.mxu0 %v2523
    %3217 = vmatpush1.bf16.msra.mxu0 %v2522
    %3218 = vmatprep.subr.bf16.mxu0 %v2555
    %3219 = vmatpush1.bf16.msra.mxu0 %v2554
    %3220 = vmatprep.subr.bf16.mxu0 %v2587
    %3221 = vmatpush1.bf16.msra.mxu0 %v2586
    %3222 = vmatprep.subr.bf16.mxu0 %v2619
    %3223 = vmatpush1.bf16.msra.mxu0 %v2618
    %3224 = vmatprep.subr.bf16.mxu0 %v2651
    %3225 = vmatpush1.bf16.msra.mxu0 %v2650
    %3226 = vmatprep.mubr.bf16.mxu0 %v631
    %3227 = vmatmul.mubr.bf16.gmra.mrb[0].mxu0 %v630
    %v3228 = vpop.f32.mrb[0].mxu0
    %v3229 = vadd.f32 0.0, %v3228
    %v3230 = vpop.f32.mrb[0].mxu0
    %v3231 = vadd.f32 0.0, %v3230
    %v3232 = vpop.f32.mrb[0].mxu0
    %v3233 = vpop.f32.mrb[0].mxu0
    %3234 = vdwg.mxu0
    %3235 = vmatprep.subr.bf16.mxu0 %v2173
    %3236 = vmatpush1.bf16.msra.mxu0 %v2172
    %3237 = vmatprep.subr.bf16.mxu0 %v2205
    %3238 = vmatpush1.bf16.msra.mxu0 %v2204
    %3239 = vmatprep.subr.bf16.mxu0 %v2237
    %3240 = vmatpush1.bf16.msra.mxu0 %v2236
    %3241 = vmatprep.subr.bf16.mxu0 %v2269
    %3242 = vmatpush1.bf16.msra.mxu0 %v2268
    %3243 = vmatprep.subr.bf16.mxu0 %v2301
    %3244 = vmatpush1.bf16.msra.mxu0 %v2300
    %3245 = vmatprep.subr.bf16.mxu0 %v2333
    %3246 = vmatpush1.bf16.msra.mxu0 %v2332
    %3247 = vmatprep.subr.bf16.mxu0 %v2365
    %3248 = vmatpush1.bf16.msra.mxu0 %v2364
    %3249 = vmatprep.subr.bf16.mxu0 %v2397
    %3250 = vmatpush1.bf16.msra.mxu0 %v2396
    %3251 = vmatprep.subr.bf16.mxu0 %v2429
    %3252 = vmatpush1.bf16.msra.mxu0 %v2428
    %3253 = vmatprep.subr.bf16.mxu0 %v2461
    %3254 = vmatpush1.bf16.msra.mxu0 %v2460
    %3255 = vmatprep.subr.bf16.mxu0 %v2493
    %3256 = vmatpush1.bf16.msra.mxu0 %v2492
    %3257 = vmatprep.subr.bf16.mxu0 %v2525
    %3258 = vmatpush1.bf16.msra.mxu0 %v2524
    %3259 = vmatprep.subr.bf16.mxu0 %v2557
    %3260 = vmatpush1.bf16.msra.mxu0 %v2556
    %3261 = vmatprep.subr.bf16.mxu0 %v2589
    %3262 = vmatpush1.bf16.msra.mxu0 %v2588
    %3263 = vmatprep.subr.bf16.mxu0 %v2621
    %3264 = vmatpush1.bf16.msra.mxu0 %v2620
    %3265 = vmatprep.subr.bf16.mxu0 %v2653
    %3266 = vmatpush1.bf16.msra.mxu0 %v2652
    %3267 = vmatprep.mubr.bf16.mxu0 %v631
    %3268 = vmatmul.mubr.bf16.gmra.mrb[0].mxu0 %v630
    %v3269 = vpop.f32.mrb[0].mxu0
    %v3270 = vadd.f32 0.0, %v3269
    %v3271 = vpop.f32.mrb[0].mxu0
    %v3272 = vadd.f32 0.0, %v3271
    %v3273 = vpop.f32.mrb[0].mxu0
    %v3274 = vpop.f32.mrb[0].mxu0
    %3275 = vdwg.mxu0
    %3276 = vmatprep.subr.bf16.mxu0 %v2175
    %3277 = vmatpush1.bf16.msra.mxu0 %v2174
    %3278 = vmatprep.subr.bf16.mxu0 %v2207
    %3279 = vmatpush1.bf16.msra.mxu0 %v2206
    %3280 = vmatprep.subr.bf16.mxu0 %v2239
    %3281 = vmatpush1.bf16.msra.mxu0 %v2238
    %3282 = vmatprep.subr.bf16.mxu0 %v2271
    %3283 = vmatpush1.bf16.msra.mxu0 %v2270
    %3284 = vmatprep.subr.bf16.mxu0 %v2303
    %3285 = vmatpush1.bf16.msra.mxu0 %v2302
    %3286 = vmatprep.subr.bf16.mxu0 %v2335
    %3287 = vmatpush1.bf16.msra.mxu0 %v2334
    %3288 = vmatprep.subr.bf16.mxu0 %v2367
    %3289 = vmatpush1.bf16.msra.mxu0 %v2366
    %3290 = vmatprep.subr.bf16.mxu0 %v2399
    %3291 = vmatpush1.bf16.msra.mxu0 %v2398
    %3292 = vmatprep.subr.bf16.mxu0 %v2431
    %3293 = vmatpush1.bf16.msra.mxu0 %v2430
    %3294 = vmatprep.subr.bf16.mxu0 %v2463
    %3295 = vmatpush1.bf16.msra.mxu0 %v2462
    %3296 = vmatprep.subr.bf16.mxu0 %v2495
    %3297 = vmatpush1.bf16.msra.mxu0 %v2494
    %3298 = vmatprep.subr.bf16.mxu0 %v2527
    %3299 = vmatpush1.bf16.msra.mxu0 %v2526
    %3300 = vmatprep.subr.bf16.mxu0 %v2559
    %3301 = vmatpush1.bf16.msra.mxu0 %v2558
    %3302 = vmatprep.subr.bf16.mxu0 %v2591
    %3303 = vmatpush1.bf16.msra.mxu0 %v2590
    %3304 = vmatprep.subr.bf16.mxu0 %v2623
    %3305 = vmatpush1.bf16.msra.mxu0 %v2622
    %3306 = vmatprep.subr.bf16.mxu0 %v2655
    %3307 = vmatpush1.bf16.msra.mxu0 %v2654
    %3308 = vmatprep.mubr.bf16.mxu0 %v631
    %3309 = vmatmul.mubr.bf16.gmra.mrb[0].mxu0 %v630
    %v3310 = vpop.f32.mrb[0].mxu0
    %v3311 = vadd.f32 0.0, %v3310
    %v3312 = vpop.f32.mrb[0].mxu0
    %v3313 = vadd.f32 0.0, %v3312
    %v3314 = vpop.f32.mrb[0].mxu0
    %v3315 = vpop.f32.mrb[0].mxu0
    %3316 = vdwg.mxu0
    %3317 = vmatprep.subr.bf16.mxu0 %v2177
    %3318 = vmatpush1.bf16.msra.mxu0 %v2176
    %3319 = vmatprep.subr.bf16.mxu0 %v2209
    %3320 = vmatpush1.bf16.msra.mxu0 %v2208
    %3321 = vmatprep.subr.bf16.mxu0 %v2241
    %3322 = vmatpush1.bf16.msra.mxu0 %v2240
    %3323 = vmatprep.subr.bf16.mxu0 %v2273
    %3324 = vmatpush1.bf16.msra.mxu0 %v2272
    %3325 = vmatprep.subr.bf16.mxu0 %v2305
    %3326 = vmatpush1.bf16.msra.mxu0 %v2304
    %3327 = vmatprep.subr.bf16.mxu0 %v2337
    %3328 = vmatpush1.bf16.msra.mxu0 %v2336
    %3329 = vmatprep.subr.bf16.mxu0 %v2369
    %3330 = vmatpush1.bf16.msra.mxu0 %v2368
    %3331 = vmatprep.subr.bf16.mxu0 %v2401
    %3332 = vmatpush1.bf16.msra.mxu0 %v2400
    %3333 = vmatprep.subr.bf16.mxu0 %v2433
    %3334 = vmatpush1.bf16.msra.mxu0 %v2432
    %3335 = vmatprep.subr.bf16.mxu0 %v2465
    %3336 = vmatpush1.bf16.msra.mxu0 %v2464
    %3337 = vmatprep.subr.bf16.mxu0 %v2497
    %3338 = vmatpush1.bf16.msra.mxu0 %v2496
    %3339 = vmatprep.subr.bf16.mxu0 %v2529
    %3340 = vmatpush1.bf16.msra.mxu0 %v2528
    %3341 = vmatprep.subr.bf16.mxu0 %v2561
    %3342 = vmatpush1.bf16.msra.mxu0 %v2560
    %3343 = vmatprep.subr.bf16.mxu0 %v2593
    %3344 = vmatpush1.bf16.msra.mxu0 %v2592
    %3345 = vmatprep.subr.bf16.mxu0 %v2625
    %3346 = vmatpush1.bf16.msra.mxu0 %v2624
    %3347 = vmatprep.subr.bf16.mxu0 %v2657
    %3348 = vmatpush1.bf16.msra.mxu0 %v2656
    %3349 = vmatprep.mubr.bf16.mxu0 %v631
    %3350 = vmatmul.mubr.bf16.gmra.mrb[0].mxu0 %v630
    %v3351 = vpop.f32.mrb[0].mxu0
    %v3352 = vadd.f32 0.0, %v3351
    %v3353 = vpop.f32.mrb[0].mxu0
    %v3354 = vadd.f32 0.0, %v3353
    %v3355 = vpop.f32.mrb[0].mxu0
    %v3356 = vpop.f32.mrb[0].mxu0
    %3357 = vdwg.mxu0
    %3358 = vmatprep.subr.bf16.mxu0 %v2179
    %3359 = vmatpush1.bf16.msra.mxu0 %v2178
    %3360 = vmatprep.subr.bf16.mxu0 %v2211
    %3361 = vmatpush1.bf16.msra.mxu0 %v2210
    %3362 = vmatprep.subr.bf16.mxu0 %v2243
    %3363 = vmatpush1.bf16.msra.mxu0 %v2242
    %3364 = vmatprep.subr.bf16.mxu0 %v2275
    %3365 = vmatpush1.bf16.msra.mxu0 %v2274
    %3366 = vmatprep.subr.bf16.mxu0 %v2307
    %3367 = vmatpush1.bf16.msra.mxu0 %v2306
    %3368 = vmatprep.subr.bf16.mxu0 %v2339
    %3369 = vmatpush1.bf16.msra.mxu0 %v2338
    %3370 = vmatprep.subr.bf16.mxu0 %v2371
    %3371 = vmatpush1.bf16.msra.mxu0 %v2370
    %3372 = vmatprep.subr.bf16.mxu0 %v2403
    %3373 = vmatpush1.bf16.msra.mxu0 %v2402
    %3374 = vmatprep.subr.bf16.mxu0 %v2435
    %3375 = vmatpush1.bf16.msra.mxu0 %v2434
    %3376 = vmatprep.subr.bf16.mxu0 %v2467
    %3377 = vmatpush1.bf16.msra.mxu0 %v2466
    %3378 = vmatprep.subr.bf16.mxu0 %v2499
    %3379 = vmatpush1.bf16.msra.mxu0 %v2498
    %3380 = vmatprep.subr.bf16.mxu0 %v2531
    %3381 = vmatpush1.bf16.msra.mxu0 %v2530
    %3382 = vmatprep.subr.bf16.mxu0 %v2563
    %3383 = vmatpush1.bf16.msra.mxu0 %v2562
    %3384 = vmatprep.subr.bf16.mxu0 %v2595
    %3385 = vmatpush1.bf16.msra.mxu0 %v2594
    %3386 = vmatprep.subr.bf16.mxu0 %v2627
    %3387 = vmatpush1.bf16.msra.mxu0 %v2626
    %3388 = vmatprep.subr.bf16.mxu0 %v2659
    %3389 = vmatpush1.bf16.msra.mxu0 %v2658
    %3390 = vmatprep.mubr.bf16.mxu0 %v631
    %3391 = vmatmul.mubr.bf16.gmra.mrb[0].mxu0 %v630
    %v3392 = vpop.f32.mrb[0].mxu0
    %v3393 = vadd.f32 0.0, %v3392
    %v3394 = vpop.f32.mrb[0].mxu0
    %v3395 = vadd.f32 0.0, %v3394
    %v3396 = vpop.f32.mrb[0].mxu0
    %v3397 = vpop.f32.mrb[0].mxu0
    %3398 = vdwg.mxu0
    %3399 = vmatprep.subr.bf16.mxu0 %v2181
    %3400 = vmatpush1.bf16.msra.mxu0 %v2180
    %3401 = vmatprep.subr.bf16.mxu0 %v2213
    %3402 = vmatpush1.bf16.msra.mxu0 %v2212
    %3403 = vmatprep.subr.bf16.mxu0 %v2245
    %3404 = vmatpush1.bf16.msra.mxu0 %v2244
    %3405 = vmatprep.subr.bf16.mxu0 %v2277
    %3406 = vmatpush1.bf16.msra.mxu0 %v2276
    %3407 = vmatprep.subr.bf16.mxu0 %v2309
    %3408 = vmatpush1.bf16.msra.mxu0 %v2308
    %3409 = vmatprep.subr.bf16.mxu0 %v2341
    %3410 = vmatpush1.bf16.msra.mxu0 %v2340
    %3411 = vmatprep.subr.bf16.mxu0 %v2373
    %3412 = vmatpush1.bf16.msra.mxu0 %v2372
    %3413 = vmatprep.subr.bf16.mxu0 %v2405
    %3414 = vmatpush1.bf16.msra.mxu0 %v2404
    %3415 = vmatprep.subr.bf16.mxu0 %v2437
    %3416 = vmatpush1.bf16.msra.mxu0 %v2436
    %3417 = vmatprep.subr.bf16.mxu0 %v2469
    %3418 = vmatpush1.bf16.msra.mxu0 %v2468
    %3419 = vmatprep.subr.bf16.mxu0 %v2501
    %3420 = vmatpush1.bf16.msra.mxu0 %v2500
    %3421 = vmatprep.subr.bf16.mxu0 %v2533
    %3422 = vmatpush1.bf16.msra.mxu0 %v2532
    %3423 = vmatprep.subr.bf16.mxu0 %v2565
    %3424 = vmatpush1.bf16.msra.mxu0 %v2564
    %3425 = vmatprep.subr.bf16.mxu0 %v2597
    %3426 = vmatpush1.bf16.msra.mxu0 %v2596
    %3427 = vmatprep.subr.bf16.mxu0 %v2629
    %3428 = vmatpush1.bf16.msra.mxu0 %v2628
    %3429 = vmatprep.subr.bf16.mxu0 %v2661
    %3430 = vmatpush1.bf16.msra.mxu0 %v2660
    %3431 = vmatprep.mubr.bf16.mxu0 %v631
    %3432 = vmatmul.mubr.bf16.gmra.mrb[0].mxu0 %v630
    %v3433 = vpop.f32.mrb[0].mxu0
    %v3434 = vadd.f32 0.0, %v3433
    %v3435 = vpop.f32.mrb[0].mxu0
    %v3436 = vadd.f32 0.0, %v3435
    %v3437 = vpop.f32.mrb[0].mxu0
    %v3438 = vpop.f32.mrb[0].mxu0
    %3439 = vdwg.mxu0
    %3440 = vmatprep.subr.bf16.mxu0 %v2183
    %3441 = vmatpush1.bf16.msra.mxu0 %v2182
    %3442 = vmatprep.subr.bf16.mxu0 %v2215
    %3443 = vmatpush1.bf16.msra.mxu0 %v2214
    %3444 = vmatprep.subr.bf16.mxu0 %v2247
    %3445 = vmatpush1.bf16.msra.mxu0 %v2246
    %3446 = vmatprep.subr.bf16.mxu0 %v2279
    %3447 = vmatpush1.bf16.msra.mxu0 %v2278
    %3448 = vmatprep.subr.bf16.mxu0 %v2311
    %3449 = vmatpush1.bf16.msra.mxu0 %v2310
    %3450 = vmatprep.subr.bf16.mxu0 %v2343
    %3451 = vmatpush1.bf16.msra.mxu0 %v2342
    %3452 = vmatprep.subr.bf16.mxu0 %v2375
    %3453 = vmatpush1.bf16.msra.mxu0 %v2374
    %3454 = vmatprep.subr.bf16.mxu0 %v2407
    %3455 = vmatpush1.bf16.msra.mxu0 %v2406
    %3456 = vmatprep.subr.bf16.mxu0 %v2439
    %3457 = vmatpush1.bf16.msra.mxu0 %v2438
    %3458 = vmatprep.subr.bf16.mxu0 %v2471
    %3459 = vmatpush1.bf16.msra.mxu0 %v2470
    %3460 = vmatprep.subr.bf16.mxu0 %v2503
    %3461 = vmatpush1.bf16.msra.mxu0 %v2502
    %3462 = vmatprep.subr.bf16.mxu0 %v2535
    %3463 = vmatpush1.bf16.msra.mxu0 %v2534
    %3464 = vmatprep.subr.bf16.mxu0 %v2567
    %3465 = vmatpush1.bf16.msra.mxu0 %v2566
    %3466 = vmatprep.subr.bf16.mxu0 %v2599
    %3467 = vmatpush1.bf16.msra.mxu0 %v2598
    %3468 = vmatprep.subr.bf16.mxu0 %v2631
    %3469 = vmatpush1.bf16.msra.mxu0 %v2630
    %3470 = vmatprep.subr.bf16.mxu0 %v2663
    %3471 = vmatpush1.bf16.msra.mxu0 %v2662
    %3472 = vmatprep.mubr.bf16.mxu0 %v631
    %3473 = vmatmul.mubr.bf16.gmra.mrb[0].mxu0 %v630
    %v3474 = vpop.f32.mrb[0].mxu0
    %v3475 = vadd.f32 0.0, %v3474
    %v3476 = vpop.f32.mrb[0].mxu0
    %v3477 = vadd.f32 0.0, %v3476
    %v3478 = vpop.f32.mrb[0].mxu0
    %v3479 = vpop.f32.mrb[0].mxu0
    %3480 = vdwg.mxu0
    %3481 = vmatprep.subr.bf16.mxu0 %v2185
    %3482 = vmatpush1.bf16.msra.mxu0 %v2184
    %3483 = vmatprep.subr.bf16.mxu0 %v2217
    %3484 = vmatpush1.bf16.msra.mxu0 %v2216
    %3485 = vmatprep.subr.bf16.mxu0 %v2249
    %3486 = vmatpush1.bf16.msra.mxu0 %v2248
    %3487 = vmatprep.subr.bf16.mxu0 %v2281
    %3488 = vmatpush1.bf16.msra.mxu0 %v2280
    %3489 = vmatprep.subr.bf16.mxu0 %v2313
    %3490 = vmatpush1.bf16.msra.mxu0 %v2312
    %3491 = vmatprep.subr.bf16.mxu0 %v2345
    %3492 = vmatpush1.bf16.msra.mxu0 %v2344
    %3493 = vmatprep.subr.bf16.mxu0 %v2377
    %3494 = vmatpush1.bf16.msra.mxu0 %v2376
    %3495 = vmatprep.subr.bf16.mxu0 %v2409
    %3496 = vmatpush1.bf16.msra.mxu0 %v2408
    %3497 = vmatprep.subr.bf16.mxu0 %v2441
    %3498 = vmatpush1.bf16.msra.mxu0 %v2440
    %3499 = vmatprep.subr.bf16.mxu0 %v2473
    %3500 = vmatpush1.bf16.msra.mxu0 %v2472
    %3501 = vmatprep.subr.bf16.mxu0 %v2505
    %3502 = vmatpush1.bf16.msra.mxu0 %v2504
    %3503 = vmatprep.subr.bf16.mxu0 %v2537
    %3504 = vmatpush1.bf16.msra.mxu0 %v2536
    %3505 = vmatprep.subr.bf16.mxu0 %v2569
    %3506 = vmatpush1.bf16.msra.mxu0 %v2568
    %3507 = vmatprep.subr.bf16.mxu0 %v2601
    %3508 = vmatpush1.bf16.msra.mxu0 %v2600
    %3509 = vmatprep.subr.bf16.mxu0 %v2633
    %3510 = vmatpush1.bf16.msra.mxu0 %v2632
    %3511 = vmatprep.subr.bf16.mxu0 %v2665
    %3512 = vmatpush1.bf16.msra.mxu0 %v2664
    %3513 = vmatprep.mubr.bf16.mxu0 %v631
    %3514 = vmatmul.mubr.bf16.gmra.mrb[0].mxu0 %v630
    %v3515 = vpop.f32.mrb[0].mxu0
    %v3516 = vadd.f32 0.0, %v3515
    %v3517 = vpop.f32.mrb[0].mxu0
    %v3518 = vadd.f32 0.0, %v3517
    %v3519 = vpop.f32.mrb[0].mxu0
    %v3520 = vpop.f32.mrb[0].mxu0
    %3521 = vdwg.mxu0
    %3522 = vmatprep.subr.bf16.mxu0 %v2187
    %3523 = vmatpush1.bf16.msra.mxu0 %v2186
    %3524 = vmatprep.subr.bf16.mxu0 %v2219
    %3525 = vmatpush1.bf16.msra.mxu0 %v2218
    %3526 = vmatprep.subr.bf16.mxu0 %v2251
    %3527 = vmatpush1.bf16.msra.mxu0 %v2250
    %3528 = vmatprep.subr.bf16.mxu0 %v2283
    %3529 = vmatpush1.bf16.msra.mxu0 %v2282
    %3530 = vmatprep.subr.bf16.mxu0 %v2315
    %3531 = vmatpush1.bf16.msra.mxu0 %v2314
    %3532 = vmatprep.subr.bf16.mxu0 %v2347
    %3533 = vmatpush1.bf16.msra.mxu0 %v2346
    %3534 = vmatprep.subr.bf16.mxu0 %v2379
    %3535 = vmatpush1.bf16.msra.mxu0 %v2378
    %3536 = vmatprep.subr.bf16.mxu0 %v2411
    %3537 = vmatpush1.bf16.msra.mxu0 %v2410
    %3538 = vmatprep.subr.bf16.mxu0 %v2443
    %3539 = vmatpush1.bf16.msra.mxu0 %v2442
    %3540 = vmatprep.subr.bf16.mxu0 %v2475
    %3541 = vmatpush1.bf16.msra.mxu0 %v2474
    %3542 = vmatprep.subr.bf16.mxu0 %v2507
    %3543 = vmatpush1.bf16.msra.mxu0 %v2506
    %3544 = vmatprep.subr.bf16.mxu0 %v2539
    %3545 = vmatpush1.bf16.msra.mxu0 %v2538
    %3546 = vmatprep.subr.bf16.mxu0 %v2571
    %3547 = vmatpush1.bf16.msra.mxu0 %v2570
    %3548 = vmatprep.subr.bf16.mxu0 %v2603
    %3549 = vmatpush1.bf16.msra.mxu0 %v2602
    %3550 = vmatprep.subr.bf16.mxu0 %v2635
    %3551 = vmatpush1.bf16.msra.mxu0 %v2634
    %3552 = vmatprep.subr.bf16.mxu0 %v2667
    %3553 = vmatpush1.bf16.msra.mxu0 %v2666
    %3554 = vmatprep.mubr.bf16.mxu0 %v631
    %3555 = vmatmul.mubr.bf16.gmra.mrb[0].mxu0 %v630
    %v3556 = vpop.f32.mrb[0].mxu0
    %v3557 = vadd.f32 0.0, %v3556
    %v3558 = vpop.f32.mrb[0].mxu0
    %v3559 = vadd.f32 0.0, %v3558
    %v3560 = vpop.f32.mrb[0].mxu0
    %v3561 = vpop.f32.mrb[0].mxu0
    %3562 = vdwg.mxu0
    %3563 = vmatprep.subr.bf16.mxu0 %v2189
    %3564 = vmatpush1.bf16.msra.mxu0 %v2188
    %3565 = vmatprep.subr.bf16.mxu0 %v2221
    %3566 = vmatpush1.bf16.msra.mxu0 %v2220
    %3567 = vmatprep.subr.bf16.mxu0 %v2253
    %3568 = vmatpush1.bf16.msra.mxu0 %v2252
    %3569 = vmatprep.subr.bf16.mxu0 %v2285
    %3570 = vmatpush1.bf16.msra.mxu0 %v2284
    %3571 = vmatprep.subr.bf16.mxu0 %v2317
    %3572 = vmatpush1.bf16.msra.mxu0 %v2316
    %3573 = vmatprep.subr.bf16.mxu0 %v2349
    %3574 = vmatpush1.bf16.msra.mxu0 %v2348
    %3575 = vmatprep.subr.bf16.mxu0 %v2381
    %3576 = vmatpush1.bf16.msra.mxu0 %v2380
    %3577 = vmatprep.subr.bf16.mxu0 %v2413
    %3578 = vmatpush1.bf16.msra.mxu0 %v2412
    %3579 = vmatprep.subr.bf16.mxu0 %v2445
    %3580 = vmatpush1.bf16.msra.mxu0 %v2444
    %3581 = vmatprep.subr.bf16.mxu0 %v2477
    %3582 = vmatpush1.bf16.msra.mxu0 %v2476
    %3583 = vmatprep.subr.bf16.mxu0 %v2509
    %3584 = vmatpush1.bf16.msra.mxu0 %v2508
    %3585 = vmatprep.subr.bf16.mxu0 %v2541
    %3586 = vmatpush1.bf16.msra.mxu0 %v2540
    %3587 = vmatprep.subr.bf16.mxu0 %v2573
    %3588 = vmatpush1.bf16.msra.mxu0 %v2572
    %3589 = vmatprep.subr.bf16.mxu0 %v2605
    %3590 = vmatpush1.bf16.msra.mxu0 %v2604
    %3591 = vmatprep.subr.bf16.mxu0 %v2637
    %3592 = vmatpush1.bf16.msra.mxu0 %v2636
    %3593 = vmatprep.subr.bf16.mxu0 %v2669
    %3594 = vmatpush1.bf16.msra.mxu0 %v2668
    %3595 = vmatprep.mubr.bf16.mxu0 %v631
    %3596 = vmatmul.mubr.bf16.gmra.mrb[0].mxu0 %v630
    %v3597 = vpop.f32.mrb[0].mxu0
    %v3598 = vadd.f32 0.0, %v3597
    %v3599 = vpop.f32.mrb[0].mxu0
    %v3600 = vadd.f32 0.0, %v3599
    %v3601 = vpop.f32.mrb[0].mxu0
    %v3602 = vpop.f32.mrb[0].mxu0
    %3603 = vdwg.mxu0
    %3604 = vmatprep.subr.bf16.mxu0 %v2191
    %3605 = vmatpush1.bf16.msra.mxu0 %v2190
    %3606 = vmatprep.subr.bf16.mxu0 %v2223
    %3607 = vmatpush1.bf16.msra.mxu0 %v2222
    %3608 = vmatprep.subr.bf16.mxu0 %v2255
    %3609 = vmatpush1.bf16.msra.mxu0 %v2254
    %3610 = vmatprep.subr.bf16.mxu0 %v2287
    %3611 = vmatpush1.bf16.msra.mxu0 %v2286
    %3612 = vmatprep.subr.bf16.mxu0 %v2319
    %3613 = vmatpush1.bf16.msra.mxu0 %v2318
    %3614 = vmatprep.subr.bf16.mxu0 %v2351
    %3615 = vmatpush1.bf16.msra.mxu0 %v2350
    %3616 = vmatprep.subr.bf16.mxu0 %v2383
    %3617 = vmatpush1.bf16.msra.mxu0 %v2382
    %3618 = vmatprep.subr.bf16.mxu0 %v2415
    %3619 = vmatpush1.bf16.msra.mxu0 %v2414
    %3620 = vmatprep.subr.bf16.mxu0 %v2447
    %3621 = vmatpush1.bf16.msra.mxu0 %v2446
    %3622 = vmatprep.subr.bf16.mxu0 %v2479
    %3623 = vmatpush1.bf16.msra.mxu0 %v2478
    %3624 = vmatprep.subr.bf16.mxu0 %v2511
    %3625 = vmatpush1.bf16.msra.mxu0 %v2510
    %3626 = vmatprep.subr.bf16.mxu0 %v2543
    %3627 = vmatpush1.bf16.msra.mxu0 %v2542
    %3628 = vmatprep.subr.bf16.mxu0 %v2575
    %3629 = vmatpush1.bf16.msra.mxu0 %v2574
    %3630 = vmatprep.subr.bf16.mxu0 %v2607
    %3631 = vmatpush1.bf16.msra.mxu0 %v2606
    %3632 = vmatprep.subr.bf16.mxu0 %v2639
    %3633 = vmatpush1.bf16.msra.mxu0 %v2638
    %3634 = vmatprep.subr.bf16.mxu0 %v2671
    %3635 = vmatpush1.bf16.msra.mxu0 %v2670
    %3636 = vmatprep.mubr.bf16.mxu0 %v631
    %3637 = vmatmul.mubr.bf16.gmra.mrb[0].mxu0 %v630
    %v3638 = vpop.f32.mrb[0].mxu0
    %v3639 = vadd.f32 0.0, %v3638
    %v3640 = vpop.f32.mrb[0].mxu0
    %v3641 = vadd.f32 0.0, %v3640
    %v3642 = vpop.f32.mrb[0].mxu0
    %v3643 = vpop.f32.mrb[0].mxu0
    %3644 = vdwg.mxu0
    %3645 = vmatprep.subr.bf16.mxu0 %v2193
    %3646 = vmatpush1.bf16.msra.mxu0 %v2192
    %3647 = vmatprep.subr.bf16.mxu0 %v2225
    %3648 = vmatpush1.bf16.msra.mxu0 %v2224
    %3649 = vmatprep.subr.bf16.mxu0 %v2257
    %3650 = vmatpush1.bf16.msra.mxu0 %v2256
    %3651 = vmatprep.subr.bf16.mxu0 %v2289
    %3652 = vmatpush1.bf16.msra.mxu0 %v2288
    %3653 = vmatprep.subr.bf16.mxu0 %v2321
    %3654 = vmatpush1.bf16.msra.mxu0 %v2320
    %3655 = vmatprep.subr.bf16.mxu0 %v2353
    %3656 = vmatpush1.bf16.msra.mxu0 %v2352
    %3657 = vmatprep.subr.bf16.mxu0 %v2385
    %3658 = vmatpush1.bf16.msra.mxu0 %v2384
    %3659 = vmatprep.subr.bf16.mxu0 %v2417
    %3660 = vmatpush1.bf16.msra.mxu0 %v2416
    %3661 = vmatprep.subr.bf16.mxu0 %v2449
    %3662 = vmatpush1.bf16.msra.mxu0 %v2448
    %3663 = vmatprep.subr.bf16.mxu0 %v2481
    %3664 = vmatpush1.bf16.msra.mxu0 %v2480
    %3665 = vmatprep.subr.bf16.mxu0 %v2513
    %3666 = vmatpush1.bf16.msra.mxu0 %v2512
    %3667 = vmatprep.subr.bf16.mxu0 %v2545
    %3668 = vmatpush1.bf16.msra.mxu0 %v2544
    %3669 = vmatprep.subr.bf16.mxu0 %v2577
    %3670 = vmatpush1.bf16.msra.mxu0 %v2576
    %3671 = vmatprep.subr.bf16.mxu0 %v2609
    %3672 = vmatpush1.bf16.msra.mxu0 %v2608
    %3673 = vmatprep.subr.bf16.mxu0 %v2641
    %3674 = vmatpush1.bf16.msra.mxu0 %v2640
    %3675 = vmatprep.subr.bf16.mxu0 %v2673
    %3676 = vmatpush1.bf16.msra.mxu0 %v2672
    %3677 = vmatprep.mubr.bf16.mxu0 %v631
    %3678 = vmatmul.mubr.bf16.gmra.mrb[0].mxu0 %v630
    %v3679 = vpop.f32.mrb[0].mxu0
    %v3680 = vadd.f32 0.0, %v3679
    %v3681 = vpop.f32.mrb[0].mxu0
    %v3682 = vadd.f32 0.0, %v3681
    %v3683 = vpop.f32.mrb[0].mxu0
    %v3684 = vpop.f32.mrb[0].mxu0
    %3685 = vdwg.mxu0
    %3686 = vmatprep.subr.bf16.mxu0 %v2195
    %3687 = vmatpush1.bf16.msra.mxu0 %v2194
    %3688 = vmatprep.subr.bf16.mxu0 %v2227
    %3689 = vmatpush1.bf16.msra.mxu0 %v2226
    %3690 = vmatprep.subr.bf16.mxu0 %v2259
    %3691 = vmatpush1.bf16.msra.mxu0 %v2258
    %3692 = vmatprep.subr.bf16.mxu0 %v2291
    %3693 = vmatpush1.bf16.msra.mxu0 %v2290
    %3694 = vmatprep.subr.bf16.mxu0 %v2323
    %3695 = vmatpush1.bf16.msra.mxu0 %v2322
    %3696 = vmatprep.subr.bf16.mxu0 %v2355
    %3697 = vmatpush1.bf16.msra.mxu0 %v2354
    %3698 = vmatprep.subr.bf16.mxu0 %v2387
    %3699 = vmatpush1.bf16.msra.mxu0 %v2386
    %3700 = vmatprep.subr.bf16.mxu0 %v2419
    %3701 = vmatpush1.bf16.msra.mxu0 %v2418
    %3702 = vmatprep.subr.bf16.mxu0 %v2451
    %3703 = vmatpush1.bf16.msra.mxu0 %v2450
    %3704 = vmatprep.subr.bf16.mxu0 %v2483
    %3705 = vmatpush1.bf16.msra.mxu0 %v2482
    %3706 = vmatprep.subr.bf16.mxu0 %v2515
    %3707 = vmatpush1.bf16.msra.mxu0 %v2514
    %3708 = vmatprep.subr.bf16.mxu0 %v2547
    %3709 = vmatpush1.bf16.msra.mxu0 %v2546
    %3710 = vmatprep.subr.bf16.mxu0 %v2579
    %3711 = vmatpush1.bf16.msra.mxu0 %v2578
    %3712 = vmatprep.subr.bf16.mxu0 %v2611
    %3713 = vmatpush1.bf16.msra.mxu0 %v2610
    %3714 = vmatprep.subr.bf16.mxu0 %v2643
    %3715 = vmatpush1.bf16.msra.mxu0 %v2642
    %3716 = vmatprep.subr.bf16.mxu0 %v2675
    %3717 = vmatpush1.bf16.msra.mxu0 %v2674
    %3718 = vmatprep.mubr.bf16.mxu0 %v631
    %3719 = vmatmul.mubr.bf16.gmra.mrb[0].mxu0 %v630
    %v3720 = vpop.f32.mrb[0].mxu0
    %v3721 = vadd.f32 0.0, %v3720
    %v3722 = vpop.f32.mrb[0].mxu0
    %v3723 = vadd.f32 0.0, %v3722
    %v3724 = vpop.f32.mrb[0].mxu0
    %v3725 = vpop.f32.mrb[0].mxu0
    %3726 = vdwg.mxu0
    %3727 = vmatprep.subr.bf16.mxu0 %v2197
    %3728 = vmatpush1.bf16.msra.mxu0 %v2196
    %3729 = vmatprep.subr.bf16.mxu0 %v2229
    %3730 = vmatpush1.bf16.msra.mxu0 %v2228
    %3731 = vmatprep.subr.bf16.mxu0 %v2261
    %3732 = vmatpush1.bf16.msra.mxu0 %v2260
    %3733 = vmatprep.subr.bf16.mxu0 %v2293
    %3734 = vmatpush1.bf16.msra.mxu0 %v2292
    %3735 = vmatprep.subr.bf16.mxu0 %v2325
    %3736 = vmatpush1.bf16.msra.mxu0 %v2324
    %3737 = vmatprep.subr.bf16.mxu0 %v2357
    %3738 = vmatpush1.bf16.msra.mxu0 %v2356
    %3739 = vmatprep.subr.bf16.mxu0 %v2389
    %3740 = vmatpush1.bf16.msra.mxu0 %v2388
    %3741 = vmatprep.subr.bf16.mxu0 %v2421
    %3742 = vmatpush1.bf16.msra.mxu0 %v2420
    %3743 = vmatprep.subr.bf16.mxu0 %v2453
    %3744 = vmatpush1.bf16.msra.mxu0 %v2452
    %3745 = vmatprep.subr.bf16.mxu0 %v2485
    %3746 = vmatpush1.bf16.msra.mxu0 %v2484
    %3747 = vmatprep.subr.bf16.mxu0 %v2517
    %3748 = vmatpush1.bf16.msra.mxu0 %v2516
    %3749 = vmatprep.subr.bf16.mxu0 %v2549
    %3750 = vmatpush1.bf16.msra.mxu0 %v2548
    %3751 = vmatprep.subr.bf16.mxu0 %v2581
    %3752 = vmatpush1.bf16.msra.mxu0 %v2580
    %3753 = vmatprep.subr.bf16.mxu0 %v2613
    %3754 = vmatpush1.bf16.msra.mxu0 %v2612
    %3755 = vmatprep.subr.bf16.mxu0 %v2645
    %3756 = vmatpush1.bf16.msra.mxu0 %v2644
    %3757 = vmatprep.subr.bf16.mxu0 %v2677
    %3758 = vmatpush1.bf16.msra.mxu0 %v2676
    %3759 = vmatprep.mubr.bf16.mxu0 %v631
    %3760 = vmatmul.mubr.bf16.gmra.mrb[0].mxu0 %v630
    %v3761 = vpop.f32.mrb[0].mxu0
    %v3762 = vadd.f32 0.0, %v3761
    %v3763 = vpop.f32.mrb[0].mxu0
    %v3764 = vadd.f32 0.0, %v3763
    %v3765 = vpop.f32.mrb[0].mxu0
    %v3766 = vpop.f32.mrb[0].mxu0
    %3767 = vdwg.mxu0
    %3768 = vmatprep.subr.bf16.mxu0 %v2199
    %3769 = vmatpush1.bf16.msra.mxu0 %v2198
    %3770 = vmatprep.subr.bf16.mxu0 %v2231
    %3771 = vmatpush1.bf16.msra.mxu0 %v2230
    %3772 = vmatprep.subr.bf16.mxu0 %v2263
    %3773 = vmatpush1.bf16.msra.mxu0 %v2262
    %3774 = vmatprep.subr.bf16.mxu0 %v2295
    %3775 = vmatpush1.bf16.msra.mxu0 %v2294
    %3776 = vmatprep.subr.bf16.mxu0 %v2327
    %3777 = vmatpush1.bf16.msra.mxu0 %v2326
    %3778 = vmatprep.subr.bf16.mxu0 %v2359
    %3779 = vmatpush1.bf16.msra.mxu0 %v2358
    %3780 = vmatprep.subr.bf16.mxu0 %v2391
    %3781 = vmatpush1.bf16.msra.mxu0 %v2390
    %3782 = vmatprep.subr.bf16.mxu0 %v2423
    %3783 = vmatpush1.bf16.msra.mxu0 %v2422
    %3784 = vmatprep.subr.bf16.mxu0 %v2455
    %3785 = vmatpush1.bf16.msra.mxu0 %v2454
    %3786 = vmatprep.subr.bf16.mxu0 %v2487
    %3787 = vmatpush1.bf16.msra.mxu0 %v2486
    %3788 = vmatprep.subr.bf16.mxu0 %v2519
    %3789 = vmatpush1.bf16.msra.mxu0 %v2518
    %3790 = vmatprep.subr.bf16.mxu0 %v2551
    %3791 = vmatpush1.bf16.msra.mxu0 %v2550
    %3792 = vmatprep.subr.bf16.mxu0 %v2583
    %3793 = vmatpush1.bf16.msra.mxu0 %v2582
    %3794 = vmatprep.subr.bf16.mxu0 %v2615
    %3795 = vmatpush1.bf16.msra.mxu0 %v2614
    %3796 = vmatprep.subr.bf16.mxu0 %v2647
    %3797 = vmatpush1.bf16.msra.mxu0 %v2646
    %3798 = vmatprep.subr.bf16.mxu0 %v2679
    %3799 = vmatpush1.bf16.msra.mxu0 %v2678
    %3800 = vmatprep.mubr.bf16.mxu0 %v631
    %3801 = vmatmul.mubr.bf16.gmra.mrb[0].mxu0 %v630
    %v3802 = vpop.f32.mrb[0].mxu0
    %v3803 = vadd.f32 0.0, %v3802
    %v3804 = vpop.f32.mrb[0].mxu0
    %v3805 = vadd.f32 0.0, %v3804
    %v3806 = vpop.f32.mrb[0].mxu0
    %v3807 = vpop.f32.mrb[0].mxu0
    %3808 = vdwg.mxu0
    %3809 = vmatprep.subr.bf16.mxu0 %v2201
    %3810 = vmatpush1.bf16.msra.mxu0 %v2200
    %3811 = vmatprep.subr.bf16.mxu0 %v2233
    %3812 = vmatpush1.bf16.msra.mxu0 %v2232
    %3813 = vmatprep.subr.bf16.mxu0 %v2265
    %3814 = vmatpush1.bf16.msra.mxu0 %v2264
    %3815 = vmatprep.subr.bf16.mxu0 %v2297
    %3816 = vmatpush1.bf16.msra.mxu0 %v2296
    %3817 = vmatprep.subr.bf16.mxu0 %v2329
    %3818 = vmatpush1.bf16.msra.mxu0 %v2328
    %3819 = vmatprep.subr.bf16.mxu0 %v2361
    %3820 = vmatpush1.bf16.msra.mxu0 %v2360
    %3821 = vmatprep.subr.bf16.mxu0 %v2393
    %3822 = vmatpush1.bf16.msra.mxu0 %v2392
    %3823 = vmatprep.subr.bf16.mxu0 %v2425
    %3824 = vmatpush1.bf16.msra.mxu0 %v2424
    %3825 = vmatprep.subr.bf16.mxu0 %v2457
    %3826 = vmatpush1.bf16.msra.mxu0 %v2456
    %3827 = vmatprep.subr.bf16.mxu0 %v2489
    %3828 = vmatpush1.bf16.msra.mxu0 %v2488
    %3829 = vmatprep.subr.bf16.mxu0 %v2521
    %3830 = vmatpush1.bf16.msra.mxu0 %v2520
    %3831 = vmatprep.subr.bf16.mxu0 %v2553
    %3832 = vmatpush1.bf16.msra.mxu0 %v2552
    %3833 = vmatprep.subr.bf16.mxu0 %v2585
    %3834 = vmatpush1.bf16.msra.mxu0 %v2584
    %3835 = vmatprep.subr.bf16.mxu0 %v2617
    %3836 = vmatpush1.bf16.msra.mxu0 %v2616
    %3837 = vmatprep.subr.bf16.mxu0 %v2649
    %3838 = vmatpush1.bf16.msra.mxu0 %v2648
    %3839 = vmatprep.subr.bf16.mxu0 %v2681
    %3840 = vmatpush1.bf16.msra.mxu0 %v2680
    %3841 = vmatprep.mubr.bf16.mxu0 %v631
    %3842 = vmatmul.mubr.bf16.gmra.mrb[0].mxu0 %v630
    %v3843 = vpop.f32.mrb[0].mxu0
    %v3844 = vadd.f32 0.0, %v3843
    %v3845 = vpop.f32.mrb[0].mxu0
    %v3846 = vadd.f32 0.0, %v3845
    %v3847 = vpop.f32.mrb[0].mxu0
    %v3848 = vpop.f32.mrb[0].mxu0
    %3849 = vdwg.mxu0
    %v3850 = vpack.c.bf16 %v3229, %v3229
    %v3851 = vpack.c.bf16 %v3231, %v3231
    %v3852 = vpack.c.bf16 %v3270, %v3270
    %v3853 = vpack.c.bf16 %v3272, %v3272
    %v3854 = vpack.c.bf16 %v3311, %v3311
    %v3855 = vpack.c.bf16 %v3313, %v3313
    %v3856 = vpack.c.bf16 %v3352, %v3352
    %v3857 = vpack.c.bf16 %v3354, %v3354
    %v3858 = vpack.c.bf16 %v3393, %v3393
    %v3859 = vpack.c.bf16 %v3395, %v3395
    %v3860 = vpack.c.bf16 %v3434, %v3434
    %v3861 = vpack.c.bf16 %v3436, %v3436
    %v3862 = vpack.c.bf16 %v3475, %v3475
    %v3863 = vpack.c.bf16 %v3477, %v3477
    %v3864 = vpack.c.bf16 %v3516, %v3516
    %v3865 = vpack.c.bf16 %v3518, %v3518
    %v3866 = vpack.c.bf16 %v3557, %v3557
    %v3867 = vpack.c.bf16 %v3559, %v3559
    %v3868 = vpack.c.bf16 %v3598, %v3598
    %v3869 = vpack.c.bf16 %v3600, %v3600
    %v3870 = vpack.c.bf16 %v3639, %v3639
    %v3871 = vpack.c.bf16 %v3641, %v3641
    %v3872 = vpack.c.bf16 %v3680, %v3680
    %v3873 = vpack.c.bf16 %v3682, %v3682
    %v3874 = vpack.c.bf16 %v3721, %v3721
    %v3875 = vpack.c.bf16 %v3723, %v3723
    %v3876 = vpack.c.bf16 %v3762, %v3762
    %v3877 = vpack.c.bf16 %v3764, %v3764
    %v3878 = vpack.c.bf16 %v3803, %v3803
    %v3879 = vpack.c.bf16 %v3805, %v3805
    %v3880 = vpack.c.bf16 %v3844, %v3844
    %v3881 = vpack.c.bf16 %v3846, %v3846
    %v3882 = vld [vmem:[#allocation5] sm:$0xff]
    %v3883 = vld [vmem:[#allocation5 + $0x8] sm:$0xf]
    %v3884 = vld [vmem:[#allocation5 + $0xc] sm:$0xff]
    %v3885 = vld [vmem:[#allocation5 + $0x14] sm:$0xf]
    %v3886 = vld [vmem:[#allocation5 + $0x18] sm:$0xff]
    %v3887 = vld [vmem:[#allocation5 + $0x20] sm:$0xf]
    %v3888 = vld [vmem:[#allocation5 + $0x24] sm:$0xff]
    %v3889 = vld [vmem:[#allocation5 + $0x2c] sm:$0xf]
    %v3890 = vld [vmem:[#allocation5 + $0x30] sm:$0xff]
    %v3891 = vld [vmem:[#allocation5 + $0x38] sm:$0xf]
    %v3892 = vld [vmem:[#allocation5 + $0x3c] sm:$0xff]
    %v3893 = vld [vmem:[#allocation5 + $0x44] sm:$0xf]
    %v3894 = vld [vmem:[#allocation5 + $0x48] sm:$0xff]
    %v3895 = vld [vmem:[#allocation5 + $0x50] sm:$0xf]
    %v3896 = vld [vmem:[#allocation5 + $0x54] sm:$0xff]
    %v3897 = vld [vmem:[#allocation5 + $0x5c] sm:$0xf]
    %v3898 = vld [vmem:[#allocation5 + $0x60] sm:$0xff]
    %v3899 = vld [vmem:[#allocation5 + $0x68] sm:$0xf]
    %v3900 = vld [vmem:[#allocation5 + $0x6c] sm:$0xff]
    %v3901 = vld [vmem:[#allocation5 + $0x74] sm:$0xf]
    %v3902 = vld [vmem:[#allocation5 + $0x78] sm:$0xff]
    %v3903 = vld [vmem:[#allocation5 + $0x80] sm:$0xf]
    %v3904 = vld [vmem:[#allocation5 + $0x84] sm:$0xff]
    %v3905 = vld [vmem:[#allocation5 + $0x8c] sm:$0xf]
    %v3906 = vld [vmem:[#allocation5 + $0x90] sm:$0xff]
    %v3907 = vld [vmem:[#allocation5 + $0x98] sm:$0xf]
    %v3908 = vld [vmem:[#allocation5 + $0x9c] sm:$0xff]
    %v3909 = vld [vmem:[#allocation5 + $0xa4] sm:$0xf]
    %v3910 = vld [vmem:[#allocation5 + $0xa8] sm:$0xff]
    %v3911 = vld [vmem:[#allocation5 + $0xb0] sm:$0xf]
    %v3912 = vld [vmem:[#allocation5 + $0xb4] sm:$0xff]
    %v3913 = vld [vmem:[#allocation5 + $0xbc] sm:$0xf]
    %v3914 = vld [vmem:[#allocation5 + $0xc0] sm:$0xff]
    %v3915 = vld [vmem:[#allocation5 + $0xc8] sm:$0xf]
    %v3916 = vld [vmem:[#allocation5 + $0xcc] sm:$0xff]
    %v3917 = vld [vmem:[#allocation5 + $0xd4] sm:$0xf]
    %v3918 = vld [vmem:[#allocation5 + $0xd8] sm:$0xff]
    %v3919 = vld [vmem:[#allocation5 + $0xe0] sm:$0xf]
    %v3920 = vld [vmem:[#allocation5 + $0xe4] sm:$0xff]
    %v3921 = vld [vmem:[#allocation5 + $0xec] sm:$0xf]
    %v3922 = vld [vmem:[#allocation5 + $0xf0] sm:$0xff]
    %v3923 = vld [vmem:[#allocation5 + $0xf8] sm:$0xf]
    %v3924 = vld [vmem:[#allocation5 + $0xfc] sm:$0xff]
    %v3925 = vld [vmem:[#allocation5 + $0x104] sm:$0xf]
    %v3926 = vld [vmem:[#allocation5 + $0x108] sm:$0xff]
    %v3927 = vld [vmem:[#allocation5 + $0x110] sm:$0xf]
    %v3928 = vld [vmem:[#allocation5 + $0x114] sm:$0xff]
    %v3929 = vld [vmem:[#allocation5 + $0x11c] sm:$0xf]
    %v3930 = vld [vmem:[#allocation5 + $0x120] sm:$0xff]
    %v3931 = vld [vmem:[#allocation5 + $0x128] sm:$0xf]
    %v3932 = vld [vmem:[#allocation5 + $0x12c] sm:$0xff]
    %v3933 = vld [vmem:[#allocation5 + $0x134] sm:$0xf]
    %v3934 = vld [vmem:[#allocation5 + $0x138] sm:$0xff]
    %v3935 = vld [vmem:[#allocation5 + $0x140] sm:$0xf]
    %v3936 = vld [vmem:[#allocation5 + $0x144] sm:$0xff]
    %v3937 = vld [vmem:[#allocation5 + $0x14c] sm:$0xf]
    %v3938 = vld [vmem:[#allocation5 + $0x150] sm:$0xff]
    %v3939 = vld [vmem:[#allocation5 + $0x158] sm:$0xf]
    %v3940 = vld [vmem:[#allocation5 + $0x15c] sm:$0xff]
    %v3941 = vld [vmem:[#allocation5 + $0x164] sm:$0xf]
    %v3942 = vld [vmem:[#allocation5 + $0x168] sm:$0xff]
    %v3943 = vld [vmem:[#allocation5 + $0x170] sm:$0xf]
    %v3944 = vld [vmem:[#allocation5 + $0x174] sm:$0xff]
    %v3945 = vld [vmem:[#allocation5 + $0x17c] sm:$0xf]
    %v3946 = vld [vmem:[#allocation5 + $0x180] sm:$0xff]
    %v3947 = vld [vmem:[#allocation5 + $0x188] sm:$0xf]
    %v3948 = vld [vmem:[#allocation5 + $0x18c] sm:$0xff]
    %v3949 = vld [vmem:[#allocation5 + $0x194] sm:$0xf]
    %v3950 = vld [vmem:[#allocation5 + $0x198] sm:$0xff]
    %v3951 = vld [vmem:[#allocation5 + $0x1a0] sm:$0xf]
    %v3952 = vld [vmem:[#allocation5 + $0x1a4] sm:$0xff]
    %v3953 = vld [vmem:[#allocation5 + $0x1ac] sm:$0xf]
    %v3954 = vld [vmem:[#allocation5 + $0x1b0] sm:$0xff]
    %v3955 = vld [vmem:[#allocation5 + $0x1b8] sm:$0xf]
    %v3956 = vld [vmem:[#allocation5 + $0x1bc] sm:$0xff]
    %v3957 = vld [vmem:[#allocation5 + $0x1c4] sm:$0xf]
    %v3958 = vld [vmem:[#allocation5 + $0x1c8] sm:$0xff]
    %v3959 = vld [vmem:[#allocation5 + $0x1d0] sm:$0xf]
    %v3960 = vld [vmem:[#allocation5 + $0x1d4] sm:$0xff]
    %v3961 = vld [vmem:[#allocation5 + $0x1dc] sm:$0xf]
    %v3962 = vld [vmem:[#allocation5 + $0x1e0] sm:$0xff]
    %v3963 = vld [vmem:[#allocation5 + $0x1e8] sm:$0xf]
    %v3964 = vld [vmem:[#allocation5 + $0x1ec] sm:$0xff]
    %v3965 = vld [vmem:[#allocation5 + $0x1f4] sm:$0xf]
    %v3966 = vld [vmem:[#allocation5 + $0x1f8] sm:$0xff]
    %v3967 = vld [vmem:[#allocation5 + $0x200] sm:$0xf]
    %v3968 = vld [vmem:[#allocation5 + $0x204] sm:$0xff]
    %v3969 = vld [vmem:[#allocation5 + $0x20c] sm:$0xf]
    %v3970 = vld [vmem:[#allocation5 + $0x210] sm:$0xff]
    %v3971 = vld [vmem:[#allocation5 + $0x218] sm:$0xf]
    %v3972 = vld [vmem:[#allocation5 + $0x21c] sm:$0xff]
    %v3973 = vld [vmem:[#allocation5 + $0x224] sm:$0xf]
    %v3974 = vld [vmem:[#allocation5 + $0x228] sm:$0xff]
    %v3975 = vld [vmem:[#allocation5 + $0x230] sm:$0xf]
    %v3976 = vld [vmem:[#allocation5 + $0x234] sm:$0xff]
    %v3977 = vld [vmem:[#allocation5 + $0x23c] sm:$0xf]
    %v3978 = vld [vmem:[#allocation5 + $0x240] sm:$0xff]
    %v3979 = vld [vmem:[#allocation5 + $0x248] sm:$0xf]
    %v3980 = vld [vmem:[#allocation5 + $0x24c] sm:$0xff]
    %v3981 = vld [vmem:[#allocation5 + $0x254] sm:$0xf]
    %v3982 = vld [vmem:[#allocation5 + $0x258] sm:$0xff]
    %v3983 = vld [vmem:[#allocation5 + $0x260] sm:$0xf]
    %v3984 = vld [vmem:[#allocation5 + $0x264] sm:$0xff]
    %v3985 = vld [vmem:[#allocation5 + $0x26c] sm:$0xf]
    %v3986 = vld [vmem:[#allocation5 + $0x270] sm:$0xff]
    %v3987 = vld [vmem:[#allocation5 + $0x278] sm:$0xf]
    %v3988 = vld [vmem:[#allocation5 + $0x27c] sm:$0xff]
    %v3989 = vld [vmem:[#allocation5 + $0x284] sm:$0xf]
    %v3990 = vld [vmem:[#allocation5 + $0x288] sm:$0xff]
    %v3991 = vld [vmem:[#allocation5 + $0x290] sm:$0xf]
    %v3992 = vld [vmem:[#allocation5 + $0x294] sm:$0xff]
    %v3993 = vld [vmem:[#allocation5 + $0x29c] sm:$0xf]
    %v3994 = vld [vmem:[#allocation5 + $0x2a0] sm:$0xff]
    %v3995 = vld [vmem:[#allocation5 + $0x2a8] sm:$0xf]
    %v3996 = vld [vmem:[#allocation5 + $0x2ac] sm:$0xff]
    %v3997 = vld [vmem:[#allocation5 + $0x2b4] sm:$0xf]
    %v3998 = vld [vmem:[#allocation5 + $0x2b8] sm:$0xff]
    %v3999 = vld [vmem:[#allocation5 + $0x2c0] sm:$0xf]
    %v4000 = vld [vmem:[#allocation5 + $0x2c4] sm:$0xff]
    %v4001 = vld [vmem:[#allocation5 + $0x2cc] sm:$0xf]
    %v4002 = vld [vmem:[#allocation5 + $0x2d0] sm:$0xff]
    %v4003 = vld [vmem:[#allocation5 + $0x2d8] sm:$0xf]
    %v4004 = vld [vmem:[#allocation5 + $0x2dc] sm:$0xff]
    %v4005 = vld [vmem:[#allocation5 + $0x2e4] sm:$0xf]
    %v4006 = vld [vmem:[#allocation5 + $0x2e8] sm:$0xff]
    %v4007 = vld [vmem:[#allocation5 + $0x2f0] sm:$0xf]
    %v4008 = vld [vmem:[#allocation5 + $0x2f4] sm:$0xff]
    %v4009 = vld [vmem:[#allocation5 + $0x2fc] sm:$0xf]
    %v4010 = vld [vmem:[#allocation5 + $0x300] sm:$0xff]
    %v4011 = vld [vmem:[#allocation5 + $0x308] sm:$0xf]
    %v4012 = vld [vmem:[#allocation5 + $0x30c] sm:$0xff]
    %v4013 = vld [vmem:[#allocation5 + $0x314] sm:$0xf]
    %v4014 = vld [vmem:[#allocation5 + $0x318] sm:$0xff]
    %v4015 = vld [vmem:[#allocation5 + $0x320] sm:$0xf]
    %v4016 = vld [vmem:[#allocation5 + $0x324] sm:$0xff]
    %v4017 = vld [vmem:[#allocation5 + $0x32c] sm:$0xf]
    %v4018 = vld [vmem:[#allocation5 + $0x330] sm:$0xff]
    %v4019 = vld [vmem:[#allocation5 + $0x338] sm:$0xf]
    %v4020 = vld [vmem:[#allocation5 + $0x33c] sm:$0xff]
    %v4021 = vld [vmem:[#allocation5 + $0x344] sm:$0xf]
    %v4022 = vld [vmem:[#allocation5 + $0x348] sm:$0xff]
    %v4023 = vld [vmem:[#allocation5 + $0x350] sm:$0xf]
    %v4024 = vld [vmem:[#allocation5 + $0x354] sm:$0xff]
    %v4025 = vld [vmem:[#allocation5 + $0x35c] sm:$0xf]
    %v4026 = vld [vmem:[#allocation5 + $0x360] sm:$0xff]
    %v4027 = vld [vmem:[#allocation5 + $0x368] sm:$0xf]
    %v4028 = vld [vmem:[#allocation5 + $0x36c] sm:$0xff]
    %v4029 = vld [vmem:[#allocation5 + $0x374] sm:$0xf]
    %v4030 = vld [vmem:[#allocation5 + $0x378] sm:$0xff]
    %v4031 = vld [vmem:[#allocation5 + $0x380] sm:$0xf]
    %v4032 = vld [vmem:[#allocation5 + $0x384] sm:$0xff]
    %v4033 = vld [vmem:[#allocation5 + $0x38c] sm:$0xf]
    %v4034 = vld [vmem:[#allocation5 + $0x390] sm:$0xff]
    %v4035 = vld [vmem:[#allocation5 + $0x398] sm:$0xf]
    %v4036 = vld [vmem:[#allocation5 + $0x39c] sm:$0xff]
    %v4037 = vld [vmem:[#allocation5 + $0x3a4] sm:$0xf]
    %v4038 = vld [vmem:[#allocation5 + $0x3a8] sm:$0xff]
    %v4039 = vld [vmem:[#allocation5 + $0x3b0] sm:$0xf]
    %v4040 = vld [vmem:[#allocation5 + $0x3b4] sm:$0xff]
    %v4041 = vld [vmem:[#allocation5 + $0x3bc] sm:$0xf]
    %v4042 = vld [vmem:[#allocation5 + $0x3c0] sm:$0xff]
    %v4043 = vld [vmem:[#allocation5 + $0x3c8] sm:$0xf]
    %v4044 = vld [vmem:[#allocation5 + $0x3cc] sm:$0xff]
    %v4045 = vld [vmem:[#allocation5 + $0x3d4] sm:$0xf]
    %v4046 = vld [vmem:[#allocation5 + $0x3d8] sm:$0xff]
    %v4047 = vld [vmem:[#allocation5 + $0x3e0] sm:$0xf]
    %v4048 = vld [vmem:[#allocation5 + $0x3e4] sm:$0xff]
    %v4049 = vld [vmem:[#allocation5 + $0x3ec] sm:$0xf]
    %v4050 = vld [vmem:[#allocation5 + $0x3f0] sm:$0xff]
    %v4051 = vld [vmem:[#allocation5 + $0x3f8] sm:$0xf]
    %v4052 = vld [vmem:[#allocation5 + $0x3fc] sm:$0xff]
    %v4053 = vld [vmem:[#allocation5 + $0x404] sm:$0xf]
    %v4054 = vld [vmem:[#allocation5 + $0x408] sm:$0xff]
    %v4055 = vld [vmem:[#allocation5 + $0x410] sm:$0xf]
    %v4056 = vld [vmem:[#allocation5 + $0x414] sm:$0xff]
    %v4057 = vld [vmem:[#allocation5 + $0x41c] sm:$0xf]
    %v4058 = vld [vmem:[#allocation5 + $0x420] sm:$0xff]
    %v4059 = vld [vmem:[#allocation5 + $0x428] sm:$0xf]
    %v4060 = vld [vmem:[#allocation5 + $0x42c] sm:$0xff]
    %v4061 = vld [vmem:[#allocation5 + $0x434] sm:$0xf]
    %v4062 = vld [vmem:[#allocation5 + $0x438] sm:$0xff]
    %v4063 = vld [vmem:[#allocation5 + $0x440] sm:$0xf]
    %v4064 = vld [vmem:[#allocation5 + $0x444] sm:$0xff]
    %v4065 = vld [vmem:[#allocation5 + $0x44c] sm:$0xf]
    %v4066 = vld [vmem:[#allocation5 + $0x450] sm:$0xff]
    %v4067 = vld [vmem:[#allocation5 + $0x458] sm:$0xf]
    %v4068 = vld [vmem:[#allocation5 + $0x45c] sm:$0xff]
    %v4069 = vld [vmem:[#allocation5 + $0x464] sm:$0xf]
    %v4070 = vld [vmem:[#allocation5 + $0x468] sm:$0xff]
    %v4071 = vld [vmem:[#allocation5 + $0x470] sm:$0xf]
    %v4072 = vld [vmem:[#allocation5 + $0x474] sm:$0xff]
    %v4073 = vld [vmem:[#allocation5 + $0x47c] sm:$0xf]
    %v4074 = vld [vmem:[#allocation5 + $0x480] sm:$0xff]
    %v4075 = vld [vmem:[#allocation5 + $0x488] sm:$0xf]
    %v4076 = vld [vmem:[#allocation5 + $0x48c] sm:$0xff]
    %v4077 = vld [vmem:[#allocation5 + $0x494] sm:$0xf]
    %v4078 = vld [vmem:[#allocation5 + $0x498] sm:$0xff]
    %v4079 = vld [vmem:[#allocation5 + $0x4a0] sm:$0xf]
    %v4080 = vld [vmem:[#allocation5 + $0x4a4] sm:$0xff]
    %v4081 = vld [vmem:[#allocation5 + $0x4ac] sm:$0xf]
    %v4082 = vld [vmem:[#allocation5 + $0x4b0] sm:$0xff]
    %v4083 = vld [vmem:[#allocation5 + $0x4b8] sm:$0xf]
    %v4084 = vld [vmem:[#allocation5 + $0x4bc] sm:$0xff]
    %v4085 = vld [vmem:[#allocation5 + $0x4c4] sm:$0xf]
    %v4086 = vld [vmem:[#allocation5 + $0x4c8] sm:$0xff]
    %v4087 = vld [vmem:[#allocation5 + $0x4d0] sm:$0xf]
    %v4088 = vld [vmem:[#allocation5 + $0x4d4] sm:$0xff]
    %v4089 = vld [vmem:[#allocation5 + $0x4dc] sm:$0xf]
    %v4090 = vld [vmem:[#allocation5 + $0x4e0] sm:$0xff]
    %v4091 = vld [vmem:[#allocation5 + $0x4e8] sm:$0xf]
    %v4092 = vld [vmem:[#allocation5 + $0x4ec] sm:$0xff]
    %v4093 = vld [vmem:[#allocation5 + $0x4f4] sm:$0xf]
    %v4094 = vld [vmem:[#allocation5 + $0x4f8] sm:$0xff]
    %v4095 = vld [vmem:[#allocation5 + $0x500] sm:$0xf]
    %v4096 = vld [vmem:[#allocation5 + $0x504] sm:$0xff]
    %v4097 = vld [vmem:[#allocation5 + $0x50c] sm:$0xf]
    %v4098 = vld [vmem:[#allocation5 + $0x510] sm:$0xff]
    %v4099 = vld [vmem:[#allocation5 + $0x518] sm:$0xf]
    %v4100 = vld [vmem:[#allocation5 + $0x51c] sm:$0xff]
    %v4101 = vld [vmem:[#allocation5 + $0x524] sm:$0xf]
    %v4102 = vld [vmem:[#allocation5 + $0x528] sm:$0xff]
    %v4103 = vld [vmem:[#allocation5 + $0x530] sm:$0xf]
    %v4104 = vld [vmem:[#allocation5 + $0x534] sm:$0xff]
    %v4105 = vld [vmem:[#allocation5 + $0x53c] sm:$0xf]
    %v4106 = vld [vmem:[#allocation5 + $0x540] sm:$0xff]
    %v4107 = vld [vmem:[#allocation5 + $0x548] sm:$0xf]
    %v4108 = vld [vmem:[#allocation5 + $0x54c] sm:$0xff]
    %v4109 = vld [vmem:[#allocation5 + $0x554] sm:$0xf]
    %v4110 = vld [vmem:[#allocation5 + $0x558] sm:$0xff]
    %v4111 = vld [vmem:[#allocation5 + $0x560] sm:$0xf]
    %v4112 = vld [vmem:[#allocation5 + $0x564] sm:$0xff]
    %v4113 = vld [vmem:[#allocation5 + $0x56c] sm:$0xf]
    %v4114 = vld [vmem:[#allocation5 + $0x570] sm:$0xff]
    %v4115 = vld [vmem:[#allocation5 + $0x578] sm:$0xf]
    %v4116 = vld [vmem:[#allocation5 + $0x57c] sm:$0xff]
    %v4117 = vld [vmem:[#allocation5 + $0x584] sm:$0xf]
    %v4118 = vld [vmem:[#allocation5 + $0x588] sm:$0xff]
    %v4119 = vld [vmem:[#allocation5 + $0x590] sm:$0xf]
    %v4120 = vld [vmem:[#allocation5 + $0x594] sm:$0xff]
    %v4121 = vld [vmem:[#allocation5 + $0x59c] sm:$0xf]
    %v4122 = vld [vmem:[#allocation5 + $0x5a0] sm:$0xff]
    %v4123 = vld [vmem:[#allocation5 + $0x5a8] sm:$0xf]
    %v4124 = vld [vmem:[#allocation5 + $0x5ac] sm:$0xff]
    %v4125 = vld [vmem:[#allocation5 + $0x5b4] sm:$0xf]
    %v4126 = vld [vmem:[#allocation5 + $0x5b8] sm:$0xff]
    %v4127 = vld [vmem:[#allocation5 + $0x5c0] sm:$0xf]
    %v4128 = vld [vmem:[#allocation5 + $0x5c4] sm:$0xff]
    %v4129 = vld [vmem:[#allocation5 + $0x5cc] sm:$0xf]
    %v4130 = vld [vmem:[#allocation5 + $0x5d0] sm:$0xff]
    %v4131 = vld [vmem:[#allocation5 + $0x5d8] sm:$0xf]
    %v4132 = vld [vmem:[#allocation5 + $0x5dc] sm:$0xff]
    %v4133 = vld [vmem:[#allocation5 + $0x5e4] sm:$0xf]
    %v4134 = vld [vmem:[#allocation5 + $0x5e8] sm:$0xff]
    %v4135 = vld [vmem:[#allocation5 + $0x5f0] sm:$0xf]
    %v4136 = vld [vmem:[#allocation5 + $0x5f4] sm:$0xff]
    %v4137 = vld [vmem:[#allocation5 + $0x5fc] sm:$0xf]
    %v4138 = vld [vmem:[#allocation5 + $0x600] sm:$0xff]
    %v4139 = vld [vmem:[#allocation5 + $0x608] sm:$0xf]
    %v4140 = vld [vmem:[#allocation5 + $0x60c] sm:$0xff]
    %v4141 = vld [vmem:[#allocation5 + $0x614] sm:$0xf]
    %v4142 = vld [vmem:[#allocation5 + $0x618] sm:$0xff]
    %v4143 = vld [vmem:[#allocation5 + $0x620] sm:$0xf]
    %v4144 = vld [vmem:[#allocation5 + $0x624] sm:$0xff]
    %v4145 = vld [vmem:[#allocation5 + $0x62c] sm:$0xf]
    %v4146 = vld [vmem:[#allocation5 + $0x630] sm:$0xff]
    %v4147 = vld [vmem:[#allocation5 + $0x638] sm:$0xf]
    %v4148 = vld [vmem:[#allocation5 + $0x63c] sm:$0xff]
    %v4149 = vld [vmem:[#allocation5 + $0x644] sm:$0xf]
    %v4150 = vld [vmem:[#allocation5 + $0x648] sm:$0xff]
    %v4151 = vld [vmem:[#allocation5 + $0x650] sm:$0xf]
    %v4152 = vld [vmem:[#allocation5 + $0x654] sm:$0xff]
    %v4153 = vld [vmem:[#allocation5 + $0x65c] sm:$0xf]
    %v4154 = vld [vmem:[#allocation5 + $0x660] sm:$0xff]
    %v4155 = vld [vmem:[#allocation5 + $0x668] sm:$0xf]
    %v4156 = vld [vmem:[#allocation5 + $0x66c] sm:$0xff]
    %v4157 = vld [vmem:[#allocation5 + $0x674] sm:$0xf]
    %v4158 = vld [vmem:[#allocation5 + $0x678] sm:$0xff]
    %v4159 = vld [vmem:[#allocation5 + $0x680] sm:$0xf]
    %v4160 = vld [vmem:[#allocation5 + $0x684] sm:$0xff]
    %v4161 = vld [vmem:[#allocation5 + $0x68c] sm:$0xf]
    %v4162 = vld [vmem:[#allocation5 + $0x690] sm:$0xff]
    %v4163 = vld [vmem:[#allocation5 + $0x698] sm:$0xf]
    %v4164 = vld [vmem:[#allocation5 + $0x69c] sm:$0xff]
    %v4165 = vld [vmem:[#allocation5 + $0x6a4] sm:$0xf]
    %v4166 = vld [vmem:[#allocation5 + $0x6a8] sm:$0xff]
    %v4167 = vld [vmem:[#allocation5 + $0x6b0] sm:$0xf]
    %v4168 = vld [vmem:[#allocation5 + $0x6b4] sm:$0xff]
    %v4169 = vld [vmem:[#allocation5 + $0x6bc] sm:$0xf]
    %v4170 = vld [vmem:[#allocation5 + $0x6c0] sm:$0xff]
    %v4171 = vld [vmem:[#allocation5 + $0x6c8] sm:$0xf]
    %v4172 = vld [vmem:[#allocation5 + $0x6cc] sm:$0xff]
    %v4173 = vld [vmem:[#allocation5 + $0x6d4] sm:$0xf]
    %v4174 = vld [vmem:[#allocation5 + $0x6d8] sm:$0xff]
    %v4175 = vld [vmem:[#allocation5 + $0x6e0] sm:$0xf]
    %v4176 = vld [vmem:[#allocation5 + $0x6e4] sm:$0xff]
    %v4177 = vld [vmem:[#allocation5 + $0x6ec] sm:$0xf]
    %v4178 = vld [vmem:[#allocation5 + $0x6f0] sm:$0xff]
    %v4179 = vld [vmem:[#allocation5 + $0x6f8] sm:$0xf]
    %v4180 = vld [vmem:[#allocation5 + $0x6fc] sm:$0xff]
    %v4181 = vld [vmem:[#allocation5 + $0x704] sm:$0xf]
    %v4182 = vld [vmem:[#allocation5 + $0x708] sm:$0xff]
    %v4183 = vld [vmem:[#allocation5 + $0x710] sm:$0xf]
    %v4184 = vld [vmem:[#allocation5 + $0x714] sm:$0xff]
    %v4185 = vld [vmem:[#allocation5 + $0x71c] sm:$0xf]
    %v4186 = vld [vmem:[#allocation5 + $0x720] sm:$0xff]
    %v4187 = vld [vmem:[#allocation5 + $0x728] sm:$0xf]
    %v4188 = vld [vmem:[#allocation5 + $0x72c] sm:$0xff]
    %v4189 = vld [vmem:[#allocation5 + $0x734] sm:$0xf]
    %v4190 = vld [vmem:[#allocation5 + $0x738] sm:$0xff]
    %v4191 = vld [vmem:[#allocation5 + $0x740] sm:$0xf]
    %v4192 = vld [vmem:[#allocation5 + $0x744] sm:$0xff]
    %v4193 = vld [vmem:[#allocation5 + $0x74c] sm:$0xf]
    %v4194 = vld [vmem:[#allocation5 + $0x750] sm:$0xff]
    %v4195 = vld [vmem:[#allocation5 + $0x758] sm:$0xf]
    %v4196 = vld [vmem:[#allocation5 + $0x75c] sm:$0xff]
    %v4197 = vld [vmem:[#allocation5 + $0x764] sm:$0xf]
    %v4198 = vld [vmem:[#allocation5 + $0x768] sm:$0xff]
    %v4199 = vld [vmem:[#allocation5 + $0x770] sm:$0xf]
    %v4200 = vld [vmem:[#allocation5 + $0x774] sm:$0xff]
    %v4201 = vld [vmem:[#allocation5 + $0x77c] sm:$0xf]
    %v4202 = vld [vmem:[#allocation5 + $0x780] sm:$0xff]
    %v4203 = vld [vmem:[#allocation5 + $0x788] sm:$0xf]
    %v4204 = vld [vmem:[#allocation5 + $0x78c] sm:$0xff]
    %v4205 = vld [vmem:[#allocation5 + $0x794] sm:$0xf]
    %v4206 = vld [vmem:[#allocation5 + $0x798] sm:$0xff]
    %v4207 = vld [vmem:[#allocation5 + $0x7a0] sm:$0xf]
    %v4208 = vld [vmem:[#allocation5 + $0x7a4] sm:$0xff]
    %v4209 = vld [vmem:[#allocation5 + $0x7ac] sm:$0xf]
    %v4210 = vld [vmem:[#allocation5 + $0x7b0] sm:$0xff]
    %v4211 = vld [vmem:[#allocation5 + $0x7b8] sm:$0xf]
    %v4212 = vld [vmem:[#allocation5 + $0x7bc] sm:$0xff]
    %v4213 = vld [vmem:[#allocation5 + $0x7c4] sm:$0xf]
    %v4214 = vld [vmem:[#allocation5 + $0x7c8] sm:$0xff]
    %v4215 = vld [vmem:[#allocation5 + $0x7d0] sm:$0xf]
    %v4216 = vld [vmem:[#allocation5 + $0x7d4] sm:$0xff]
    %v4217 = vld [vmem:[#allocation5 + $0x7dc] sm:$0xf]
    %v4218 = vld [vmem:[#allocation5 + $0x7e0] sm:$0xff]
    %v4219 = vld [vmem:[#allocation5 + $0x7e8] sm:$0xf]
    %v4220 = vld [vmem:[#allocation5 + $0x7ec] sm:$0xff]
    %v4221 = vld [vmem:[#allocation5 + $0x7f4] sm:$0xf]
    %v4222 = vld [vmem:[#allocation5 + $0x7f8] sm:$0xff]
    %v4223 = vld [vmem:[#allocation5 + $0x800] sm:$0xf]
    %v4224 = vld [vmem:[#allocation5 + $0x804] sm:$0xff]
    %v4225 = vld [vmem:[#allocation5 + $0x80c] sm:$0xf]
    %v4226 = vld [vmem:[#allocation5 + $0x810] sm:$0xff]
    %v4227 = vld [vmem:[#allocation5 + $0x818] sm:$0xf]
    %v4228 = vld [vmem:[#allocation5 + $0x81c] sm:$0xff]
    %v4229 = vld [vmem:[#allocation5 + $0x824] sm:$0xf]
    %v4230 = vld [vmem:[#allocation5 + $0x828] sm:$0xff]
    %v4231 = vld [vmem:[#allocation5 + $0x830] sm:$0xf]
    %v4232 = vld [vmem:[#allocation5 + $0x834] sm:$0xff]
    %v4233 = vld [vmem:[#allocation5 + $0x83c] sm:$0xf]
    %v4234 = vld [vmem:[#allocation5 + $0x840] sm:$0xff]
    %v4235 = vld [vmem:[#allocation5 + $0x848] sm:$0xf]
    %v4236 = vld [vmem:[#allocation5 + $0x84c] sm:$0xff]
    %v4237 = vld [vmem:[#allocation5 + $0x854] sm:$0xf]
    %v4238 = vld [vmem:[#allocation5 + $0x858] sm:$0xff]
    %v4239 = vld [vmem:[#allocation5 + $0x860] sm:$0xf]
    %v4240 = vld [vmem:[#allocation5 + $0x864] sm:$0xff]
    %v4241 = vld [vmem:[#allocation5 + $0x86c] sm:$0xf]
    %v4242 = vld [vmem:[#allocation5 + $0x870] sm:$0xff]
    %v4243 = vld [vmem:[#allocation5 + $0x878] sm:$0xf]
    %v4244 = vld [vmem:[#allocation5 + $0x87c] sm:$0xff]
    %v4245 = vld [vmem:[#allocation5 + $0x884] sm:$0xf]
    %v4246 = vld [vmem:[#allocation5 + $0x888] sm:$0xff]
    %v4247 = vld [vmem:[#allocation5 + $0x890] sm:$0xf]
    %v4248 = vld [vmem:[#allocation5 + $0x894] sm:$0xff]
    %v4249 = vld [vmem:[#allocation5 + $0x89c] sm:$0xf]
    %v4250 = vld [vmem:[#allocation5 + $0x8a0] sm:$0xff]
    %v4251 = vld [vmem:[#allocation5 + $0x8a8] sm:$0xf]
    %v4252 = vld [vmem:[#allocation5 + $0x8ac] sm:$0xff]
    %v4253 = vld [vmem:[#allocation5 + $0x8b4] sm:$0xf]
    %v4254 = vld [vmem:[#allocation5 + $0x8b8] sm:$0xff]
    %v4255 = vld [vmem:[#allocation5 + $0x8c0] sm:$0xf]
    %v4256 = vld [vmem:[#allocation5 + $0x8c4] sm:$0xff]
    %v4257 = vld [vmem:[#allocation5 + $0x8cc] sm:$0xf]
    %v4258 = vld [vmem:[#allocation5 + $0x8d0] sm:$0xff]
    %v4259 = vld [vmem:[#allocation5 + $0x8d8] sm:$0xf]
    %v4260 = vld [vmem:[#allocation5 + $0x8dc] sm:$0xff]
    %v4261 = vld [vmem:[#allocation5 + $0x8e4] sm:$0xf]
    %v4262 = vld [vmem:[#allocation5 + $0x8e8] sm:$0xff]
    %v4263 = vld [vmem:[#allocation5 + $0x8f0] sm:$0xf]
    %v4264 = vld [vmem:[#allocation5 + $0x8f4] sm:$0xff]
    %v4265 = vld [vmem:[#allocation5 + $0x8fc] sm:$0xf]
    %v4266 = vld [vmem:[#allocation5 + $0x900] sm:$0xff]
    %v4267 = vld [vmem:[#allocation5 + $0x908] sm:$0xf]
    %v4268 = vld [vmem:[#allocation5 + $0x90c] sm:$0xff]
    %v4269 = vld [vmem:[#allocation5 + $0x914] sm:$0xf]
    %v4270 = vld [vmem:[#allocation5 + $0x918] sm:$0xff]
    %v4271 = vld [vmem:[#allocation5 + $0x920] sm:$0xf]
    %v4272 = vld [vmem:[#allocation5 + $0x924] sm:$0xff]
    %v4273 = vld [vmem:[#allocation5 + $0x92c] sm:$0xf]
    %v4274 = vld [vmem:[#allocation5 + $0x930] sm:$0xff]
    %v4275 = vld [vmem:[#allocation5 + $0x938] sm:$0xf]
    %v4276 = vld [vmem:[#allocation5 + $0x93c] sm:$0xff]
    %v4277 = vld [vmem:[#allocation5 + $0x944] sm:$0xf]
    %v4278 = vld [vmem:[#allocation5 + $0x948] sm:$0xff]
    %v4279 = vld [vmem:[#allocation5 + $0x950] sm:$0xf]
    %v4280 = vld [vmem:[#allocation5 + $0x954] sm:$0xff]
    %v4281 = vld [vmem:[#allocation5 + $0x95c] sm:$0xf]
    %v4282 = vld [vmem:[#allocation5 + $0x960] sm:$0xff]
    %v4283 = vld [vmem:[#allocation5 + $0x968] sm:$0xf]
    %v4284 = vld [vmem:[#allocation5 + $0x96c] sm:$0xff]
    %v4285 = vld [vmem:[#allocation5 + $0x974] sm:$0xf]
    %v4286 = vld [vmem:[#allocation5 + $0x978] sm:$0xff]
    %v4287 = vld [vmem:[#allocation5 + $0x980] sm:$0xf]
    %v4288 = vld [vmem:[#allocation5 + $0x984] sm:$0xff]
    %v4289 = vld [vmem:[#allocation5 + $0x98c] sm:$0xf]
    %v4290 = vld [vmem:[#allocation5 + $0x990] sm:$0xff]
    %v4291 = vld [vmem:[#allocation5 + $0x998] sm:$0xf]
    %v4292 = vld [vmem:[#allocation5 + $0x99c] sm:$0xff]
    %v4293 = vld [vmem:[#allocation5 + $0x9a4] sm:$0xf]
    %v4294 = vld [vmem:[#allocation5 + $0x9a8] sm:$0xff]
    %v4295 = vld [vmem:[#allocation5 + $0x9b0] sm:$0xf]
    %v4296 = vld [vmem:[#allocation5 + $0x9b4] sm:$0xff]
    %v4297 = vld [vmem:[#allocation5 + $0x9bc] sm:$0xf]
    %v4298 = vld [vmem:[#allocation5 + $0x9c0] sm:$0xff]
    %v4299 = vld [vmem:[#allocation5 + $0x9c8] sm:$0xf]
    %v4300 = vld [vmem:[#allocation5 + $0x9cc] sm:$0xff]
    %v4301 = vld [vmem:[#allocation5 + $0x9d4] sm:$0xf]
    %v4302 = vld [vmem:[#allocation5 + $0x9d8] sm:$0xff]
    %v4303 = vld [vmem:[#allocation5 + $0x9e0] sm:$0xf]
    %v4304 = vld [vmem:[#allocation5 + $0x9e4] sm:$0xff]
    %v4305 = vld [vmem:[#allocation5 + $0x9ec] sm:$0xf]
    %v4306 = vld [vmem:[#allocation5 + $0x9f0] sm:$0xff]
    %v4307 = vld [vmem:[#allocation5 + $0x9f8] sm:$0xf]
    %v4308 = vld [vmem:[#allocation5 + $0x9fc] sm:$0xff]
    %v4309 = vld [vmem:[#allocation5 + $0xa04] sm:$0xf]
    %v4310 = vld [vmem:[#allocation5 + $0xa08] sm:$0xff]
    %v4311 = vld [vmem:[#allocation5 + $0xa10] sm:$0xf]
    %v4312 = vld [vmem:[#allocation5 + $0xa14] sm:$0xff]
    %v4313 = vld [vmem:[#allocation5 + $0xa1c] sm:$0xf]
    %v4314 = vld [vmem:[#allocation5 + $0xa20] sm:$0xff]
    %v4315 = vld [vmem:[#allocation5 + $0xa28] sm:$0xf]
    %v4316 = vld [vmem:[#allocation5 + $0xa2c] sm:$0xff]
    %v4317 = vld [vmem:[#allocation5 + $0xa34] sm:$0xf]
    %v4318 = vld [vmem:[#allocation5 + $0xa38] sm:$0xff]
    %v4319 = vld [vmem:[#allocation5 + $0xa40] sm:$0xf]
    %v4320 = vld [vmem:[#allocation5 + $0xa44] sm:$0xff]
    %v4321 = vld [vmem:[#allocation5 + $0xa4c] sm:$0xf]
    %v4322 = vld [vmem:[#allocation5 + $0xa50] sm:$0xff]
    %v4323 = vld [vmem:[#allocation5 + $0xa58] sm:$0xf]
    %v4324 = vld [vmem:[#allocation5 + $0xa5c] sm:$0xff]
    %v4325 = vld [vmem:[#allocation5 + $0xa64] sm:$0xf]
    %v4326 = vld [vmem:[#allocation5 + $0xa68] sm:$0xff]
    %v4327 = vld [vmem:[#allocation5 + $0xa70] sm:$0xf]
    %v4328 = vld [vmem:[#allocation5 + $0xa74] sm:$0xff]
    %v4329 = vld [vmem:[#allocation5 + $0xa7c] sm:$0xf]
    %v4330 = vld [vmem:[#allocation5 + $0xa80] sm:$0xff]
    %v4331 = vld [vmem:[#allocation5 + $0xa88] sm:$0xf]
    %v4332 = vld [vmem:[#allocation5 + $0xa8c] sm:$0xff]
    %v4333 = vld [vmem:[#allocation5 + $0xa94] sm:$0xf]
    %v4334 = vld [vmem:[#allocation5 + $0xa98] sm:$0xff]
    %v4335 = vld [vmem:[#allocation5 + $0xaa0] sm:$0xf]
    %v4336 = vld [vmem:[#allocation5 + $0xaa4] sm:$0xff]
    %v4337 = vld [vmem:[#allocation5 + $0xaac] sm:$0xf]
    %v4338 = vld [vmem:[#allocation5 + $0xab0] sm:$0xff]
    %v4339 = vld [vmem:[#allocation5 + $0xab8] sm:$0xf]
    %v4340 = vld [vmem:[#allocation5 + $0xabc] sm:$0xff]
    %v4341 = vld [vmem:[#allocation5 + $0xac4] sm:$0xf]
    %v4342 = vld [vmem:[#allocation5 + $0xac8] sm:$0xff]
    %v4343 = vld [vmem:[#allocation5 + $0xad0] sm:$0xf]
    %v4344 = vld [vmem:[#allocation5 + $0xad4] sm:$0xff]
    %v4345 = vld [vmem:[#allocation5 + $0xadc] sm:$0xf]
    %v4346 = vld [vmem:[#allocation5 + $0xae0] sm:$0xff]
    %v4347 = vld [vmem:[#allocation5 + $0xae8] sm:$0xf]
    %v4348 = vld [vmem:[#allocation5 + $0xaec] sm:$0xff]
    %v4349 = vld [vmem:[#allocation5 + $0xaf4] sm:$0xf]
    %v4350 = vld [vmem:[#allocation5 + $0xaf8] sm:$0xff]
    %v4351 = vld [vmem:[#allocation5 + $0xb00] sm:$0xf]
    %v4352 = vld [vmem:[#allocation5 + $0xb04] sm:$0xff]
    %v4353 = vld [vmem:[#allocation5 + $0xb0c] sm:$0xf]
    %v4354 = vld [vmem:[#allocation5 + $0xb10] sm:$0xff]
    %v4355 = vld [vmem:[#allocation5 + $0xb18] sm:$0xf]
    %v4356 = vld [vmem:[#allocation5 + $0xb1c] sm:$0xff]
    %v4357 = vld [vmem:[#allocation5 + $0xb24] sm:$0xf]
    %v4358 = vld [vmem:[#allocation5 + $0xb28] sm:$0xff]
    %v4359 = vld [vmem:[#allocation5 + $0xb30] sm:$0xf]
    %v4360 = vld [vmem:[#allocation5 + $0xb34] sm:$0xff]
    %v4361 = vld [vmem:[#allocation5 + $0xb3c] sm:$0xf]
    %v4362 = vld [vmem:[#allocation5 + $0xb40] sm:$0xff]
    %v4363 = vld [vmem:[#allocation5 + $0xb48] sm:$0xf]
    %v4364 = vld [vmem:[#allocation5 + $0xb4c] sm:$0xff]
    %v4365 = vld [vmem:[#allocation5 + $0xb54] sm:$0xf]
    %v4366 = vld [vmem:[#allocation5 + $0xb58] sm:$0xff]
    %v4367 = vld [vmem:[#allocation5 + $0xb60] sm:$0xf]
    %v4368 = vld [vmem:[#allocation5 + $0xb64] sm:$0xff]
    %v4369 = vld [vmem:[#allocation5 + $0xb6c] sm:$0xf]
    %v4370 = vld [vmem:[#allocation5 + $0xb70] sm:$0xff]
    %v4371 = vld [vmem:[#allocation5 + $0xb78] sm:$0xf]
    %v4372 = vld [vmem:[#allocation5 + $0xb7c] sm:$0xff]
    %v4373 = vld [vmem:[#allocation5 + $0xb84] sm:$0xf]
    %v4374 = vld [vmem:[#allocation5 + $0xb88] sm:$0xff]
    %v4375 = vld [vmem:[#allocation5 + $0xb90] sm:$0xf]
    %v4376 = vld [vmem:[#allocation5 + $0xb94] sm:$0xff]
    %v4377 = vld [vmem:[#allocation5 + $0xb9c] sm:$0xf]
    %v4378 = vld [vmem:[#allocation5 + $0xba0] sm:$0xff]
    %v4379 = vld [vmem:[#allocation5 + $0xba8] sm:$0xf]
    %v4380 = vld [vmem:[#allocation5 + $0xbac] sm:$0xff]
    %v4381 = vld [vmem:[#allocation5 + $0xbb4] sm:$0xf]
    %v4382 = vld [vmem:[#allocation5 + $0xbb8] sm:$0xff]
    %v4383 = vld [vmem:[#allocation5 + $0xbc0] sm:$0xf]
    %v4384 = vld [vmem:[#allocation5 + $0xbc4] sm:$0xff]
    %v4385 = vld [vmem:[#allocation5 + $0xbcc] sm:$0xf]
    %v4386 = vld [vmem:[#allocation5 + $0xbd0] sm:$0xff]
    %v4387 = vld [vmem:[#allocation5 + $0xbd8] sm:$0xf]
    %v4388 = vld [vmem:[#allocation5 + $0xbdc] sm:$0xff]
    %v4389 = vld [vmem:[#allocation5 + $0xbe4] sm:$0xf]
    %v4390 = vld [vmem:[#allocation5 + $0xbe8] sm:$0xff]
    %v4391 = vld [vmem:[#allocation5 + $0xbf0] sm:$0xf]
    %v4392 = vld [vmem:[#allocation5 + $0xbf4] sm:$0xff]
    %v4393 = vld [vmem:[#allocation5 + $0xbfc] sm:$0xf]
    %v4394 = vld [vmem:[#allocation5 + $0xc00] sm:$0xff]
    %v4395 = vld [vmem:[#allocation5 + $0xc08] sm:$0xf]
    %v4396 = vld [vmem:[#allocation5 + $0xc0c] sm:$0xff]
    %v4397 = vld [vmem:[#allocation5 + $0xc14] sm:$0xf]
    %v4398 = vld [vmem:[#allocation5 + $0xc18] sm:$0xff]
    %v4399 = vld [vmem:[#allocation5 + $0xc20] sm:$0xf]
    %v4400 = vld [vmem:[#allocation5 + $0xc24] sm:$0xff]
    %v4401 = vld [vmem:[#allocation5 + $0xc2c] sm:$0xf]
    %v4402 = vld [vmem:[#allocation5 + $0xc30] sm:$0xff]
    %v4403 = vld [vmem:[#allocation5 + $0xc38] sm:$0xf]
    %v4404 = vld [vmem:[#allocation5 + $0xc3c] sm:$0xff]
    %v4405 = vld [vmem:[#allocation5 + $0xc44] sm:$0xf]
    %v4406 = vld [vmem:[#allocation5 + $0xc48] sm:$0xff]
    %v4407 = vld [vmem:[#allocation5 + $0xc50] sm:$0xf]
    %v4408 = vld [vmem:[#allocation5 + $0xc54] sm:$0xff]
    %v4409 = vld [vmem:[#allocation5 + $0xc5c] sm:$0xf]
    %v4410 = vld [vmem:[#allocation5 + $0xc60] sm:$0xff]
    %v4411 = vld [vmem:[#allocation5 + $0xc68] sm:$0xf]
    %v4412 = vld [vmem:[#allocation5 + $0xc6c] sm:$0xff]
    %v4413 = vld [vmem:[#allocation5 + $0xc74] sm:$0xf]
    %v4414 = vld [vmem:[#allocation5 + $0xc78] sm:$0xff]
    %v4415 = vld [vmem:[#allocation5 + $0xc80] sm:$0xf]
    %v4416 = vld [vmem:[#allocation5 + $0xc84] sm:$0xff]
    %v4417 = vld [vmem:[#allocation5 + $0xc8c] sm:$0xf]
    %v4418 = vld [vmem:[#allocation5 + $0xc90] sm:$0xff]
    %v4419 = vld [vmem:[#allocation5 + $0xc98] sm:$0xf]
    %v4420 = vld [vmem:[#allocation5 + $0xc9c] sm:$0xff]
    %v4421 = vld [vmem:[#allocation5 + $0xca4] sm:$0xf]
    %v4422 = vld [vmem:[#allocation5 + $0xca8] sm:$0xff]
    %v4423 = vld [vmem:[#allocation5 + $0xcb0] sm:$0xf]
    %v4424 = vld [vmem:[#allocation5 + $0xcb4] sm:$0xff]
    %v4425 = vld [vmem:[#allocation5 + $0xcbc] sm:$0xf]
    %v4426 = vld [vmem:[#allocation5 + $0xcc0] sm:$0xff]
    %v4427 = vld [vmem:[#allocation5 + $0xcc8] sm:$0xf]
    %v4428 = vld [vmem:[#allocation5 + $0xccc] sm:$0xff]
    %v4429 = vld [vmem:[#allocation5 + $0xcd4] sm:$0xf]
    %v4430 = vld [vmem:[#allocation5 + $0xcd8] sm:$0xff]
    %v4431 = vld [vmem:[#allocation5 + $0xce0] sm:$0xf]
    %v4432 = vld [vmem:[#allocation5 + $0xce4] sm:$0xff]
    %v4433 = vld [vmem:[#allocation5 + $0xcec] sm:$0xf]
    %v4434 = vld [vmem:[#allocation5 + $0xcf0] sm:$0xff]
    %v4435 = vld [vmem:[#allocation5 + $0xcf8] sm:$0xf]
    %v4436 = vld [vmem:[#allocation5 + $0xcfc] sm:$0xff]
    %v4437 = vld [vmem:[#allocation5 + $0xd04] sm:$0xf]
    %v4438 = vld [vmem:[#allocation5 + $0xd08] sm:$0xff]
    %v4439 = vld [vmem:[#allocation5 + $0xd10] sm:$0xf]
    %v4440 = vld [vmem:[#allocation5 + $0xd14] sm:$0xff]
    %v4441 = vld [vmem:[#allocation5 + $0xd1c] sm:$0xf]
    %v4442 = vld [vmem:[#allocation5 + $0xd20] sm:$0xff]
    %v4443 = vld [vmem:[#allocation5 + $0xd28] sm:$0xf]
    %v4444 = vld [vmem:[#allocation5 + $0xd2c] sm:$0xff]
    %v4445 = vld [vmem:[#allocation5 + $0xd34] sm:$0xf]
    %v4446 = vld [vmem:[#allocation5 + $0xd38] sm:$0xff]
    %v4447 = vld [vmem:[#allocation5 + $0xd40] sm:$0xf]
    %v4448 = vld [vmem:[#allocation5 + $0xd44] sm:$0xff]
    %v4449 = vld [vmem:[#allocation5 + $0xd4c] sm:$0xf]
    %v4450 = vld [vmem:[#allocation5 + $0xd50] sm:$0xff]
    %v4451 = vld [vmem:[#allocation5 + $0xd58] sm:$0xf]
    %v4452 = vld [vmem:[#allocation5 + $0xd5c] sm:$0xff]
    %v4453 = vld [vmem:[#allocation5 + $0xd64] sm:$0xf]
    %v4454 = vld [vmem:[#allocation5 + $0xd68] sm:$0xff]
    %v4455 = vld [vmem:[#allocation5 + $0xd70] sm:$0xf]
    %v4456 = vld [vmem:[#allocation5 + $0xd74] sm:$0xff]
    %v4457 = vld [vmem:[#allocation5 + $0xd7c] sm:$0xf]
    %v4458 = vld [vmem:[#allocation5 + $0xd80] sm:$0xff]
    %v4459 = vld [vmem:[#allocation5 + $0xd88] sm:$0xf]
    %v4460 = vld [vmem:[#allocation5 + $0xd8c] sm:$0xff]
    %v4461 = vld [vmem:[#allocation5 + $0xd94] sm:$0xf]
    %v4462 = vld [vmem:[#allocation5 + $0xd98] sm:$0xff]
    %v4463 = vld [vmem:[#allocation5 + $0xda0] sm:$0xf]
    %v4464 = vld [vmem:[#allocation5 + $0xda4] sm:$0xff]
    %v4465 = vld [vmem:[#allocation5 + $0xdac] sm:$0xf]
    %v4466 = vld [vmem:[#allocation5 + $0xdb0] sm:$0xff]
    %v4467 = vld [vmem:[#allocation5 + $0xdb8] sm:$0xf]
    %v4468 = vld [vmem:[#allocation5 + $0xdbc] sm:$0xff]
    %v4469 = vld [vmem:[#allocation5 + $0xdc4] sm:$0xf]
    %v4470 = vld [vmem:[#allocation5 + $0xdc8] sm:$0xff]
    %v4471 = vld [vmem:[#allocation5 + $0xdd0] sm:$0xf]
    %v4472 = vld [vmem:[#allocation5 + $0xdd4] sm:$0xff]
    %v4473 = vld [vmem:[#allocation5 + $0xddc] sm:$0xf]
    %v4474 = vld [vmem:[#allocation5 + $0xde0] sm:$0xff]
    %v4475 = vld [vmem:[#allocation5 + $0xde8] sm:$0xf]
    %v4476 = vld [vmem:[#allocation5 + $0xdec] sm:$0xff]
    %v4477 = vld [vmem:[#allocation5 + $0xdf4] sm:$0xf]
    %v4478 = vld [vmem:[#allocation5 + $0xdf8] sm:$0xff]
    %v4479 = vld [vmem:[#allocation5 + $0xe00] sm:$0xf]
    %v4480 = vld [vmem:[#allocation5 + $0xe04] sm:$0xff]
    %v4481 = vld [vmem:[#allocation5 + $0xe0c] sm:$0xf]
    %v4482 = vld [vmem:[#allocation5 + $0xe10] sm:$0xff]
    %v4483 = vld [vmem:[#allocation5 + $0xe18] sm:$0xf]
    %v4484 = vld [vmem:[#allocation5 + $0xe1c] sm:$0xff]
    %v4485 = vld [vmem:[#allocation5 + $0xe24] sm:$0xf]
    %v4486 = vld [vmem:[#allocation5 + $0xe28] sm:$0xff]
    %v4487 = vld [vmem:[#allocation5 + $0xe30] sm:$0xf]
    %v4488 = vld [vmem:[#allocation5 + $0xe34] sm:$0xff]
    %v4489 = vld [vmem:[#allocation5 + $0xe3c] sm:$0xf]
    %v4490 = vld [vmem:[#allocation5 + $0xe40] sm:$0xff]
    %v4491 = vld [vmem:[#allocation5 + $0xe48] sm:$0xf]
    %v4492 = vld [vmem:[#allocation5 + $0xe4c] sm:$0xff]
    %v4493 = vld [vmem:[#allocation5 + $0xe54] sm:$0xf]
    %v4494 = vld [vmem:[#allocation5 + $0xe58] sm:$0xff]
    %v4495 = vld [vmem:[#allocation5 + $0xe60] sm:$0xf]
    %v4496 = vld [vmem:[#allocation5 + $0xe64] sm:$0xff]
    %v4497 = vld [vmem:[#allocation5 + $0xe6c] sm:$0xf]
    %v4498 = vld [vmem:[#allocation5 + $0xe70] sm:$0xff]
    %v4499 = vld [vmem:[#allocation5 + $0xe78] sm:$0xf]
    %v4500 = vld [vmem:[#allocation5 + $0xe7c] sm:$0xff]
    %v4501 = vld [vmem:[#allocation5 + $0xe84] sm:$0xf]
    %v4502 = vld [vmem:[#allocation5 + $0xe88] sm:$0xff]
    %v4503 = vld [vmem:[#allocation5 + $0xe90] sm:$0xf]
    %v4504 = vld [vmem:[#allocation5 + $0xe94] sm:$0xff]
    %v4505 = vld [vmem:[#allocation5 + $0xe9c] sm:$0xf]
    %v4506 = vld [vmem:[#allocation5 + $0xea0] sm:$0xff]
    %v4507 = vld [vmem:[#allocation5 + $0xea8] sm:$0xf]
    %v4508 = vld [vmem:[#allocation5 + $0xeac] sm:$0xff]
    %v4509 = vld [vmem:[#allocation5 + $0xeb4] sm:$0xf]
    %v4510 = vld [vmem:[#allocation5 + $0xeb8] sm:$0xff]
    %v4511 = vld [vmem:[#allocation5 + $0xec0] sm:$0xf]
    %v4512 = vld [vmem:[#allocation5 + $0xec4] sm:$0xff]
    %v4513 = vld [vmem:[#allocation5 + $0xecc] sm:$0xf]
    %v4514 = vld [vmem:[#allocation5 + $0xed0] sm:$0xff]
    %v4515 = vld [vmem:[#allocation5 + $0xed8] sm:$0xf]
    %v4516 = vld [vmem:[#allocation5 + $0xedc] sm:$0xff]
    %v4517 = vld [vmem:[#allocation5 + $0xee4] sm:$0xf]
    %v4518 = vld [vmem:[#allocation5 + $0xee8] sm:$0xff]
    %v4519 = vld [vmem:[#allocation5 + $0xef0] sm:$0xf]
    %v4520 = vld [vmem:[#allocation5 + $0xef4] sm:$0xff]
    %v4521 = vld [vmem:[#allocation5 + $0xefc] sm:$0xf]
    %v4522 = vld [vmem:[#allocation5 + $0xf00] sm:$0xff]
    %v4523 = vld [vmem:[#allocation5 + $0xf08] sm:$0xf]
    %v4524 = vld [vmem:[#allocation5 + $0xf0c] sm:$0xff]
    %v4525 = vld [vmem:[#allocation5 + $0xf14] sm:$0xf]
    %v4526 = vld [vmem:[#allocation5 + $0xf18] sm:$0xff]
    %v4527 = vld [vmem:[#allocation5 + $0xf20] sm:$0xf]
    %v4528 = vld [vmem:[#allocation5 + $0xf24] sm:$0xff]
    %v4529 = vld [vmem:[#allocation5 + $0xf2c] sm:$0xf]
    %v4530 = vld [vmem:[#allocation5 + $0xf30] sm:$0xff]
    %v4531 = vld [vmem:[#allocation5 + $0xf38] sm:$0xf]
    %v4532 = vld [vmem:[#allocation5 + $0xf3c] sm:$0xff]
    %v4533 = vld [vmem:[#allocation5 + $0xf44] sm:$0xf]
    %v4534 = vld [vmem:[#allocation5 + $0xf48] sm:$0xff]
    %v4535 = vld [vmem:[#allocation5 + $0xf50] sm:$0xf]
    %v4536 = vld [vmem:[#allocation5 + $0xf54] sm:$0xff]
    %v4537 = vld [vmem:[#allocation5 + $0xf5c] sm:$0xf]
    %v4538 = vld [vmem:[#allocation5 + $0xf60] sm:$0xff]
    %v4539 = vld [vmem:[#allocation5 + $0xf68] sm:$0xf]
    %v4540 = vld [vmem:[#allocation5 + $0xf6c] sm:$0xff]
    %v4541 = vld [vmem:[#allocation5 + $0xf74] sm:$0xf]
    %v4542 = vld [vmem:[#allocation5 + $0xf78] sm:$0xff]
    %v4543 = vld [vmem:[#allocation5 + $0xf80] sm:$0xf]
    %v4544 = vld [vmem:[#allocation5 + $0xf84] sm:$0xff]
    %v4545 = vld [vmem:[#allocation5 + $0xf8c] sm:$0xf]
    %v4546 = vld [vmem:[#allocation5 + $0xf90] sm:$0xff]
    %v4547 = vld [vmem:[#allocation5 + $0xf98] sm:$0xf]
    %v4548 = vld [vmem:[#allocation5 + $0xf9c] sm:$0xff]
    %v4549 = vld [vmem:[#allocation5 + $0xfa4] sm:$0xf]
    %v4550 = vld [vmem:[#allocation5 + $0xfa8] sm:$0xff]
    %v4551 = vld [vmem:[#allocation5 + $0xfb0] sm:$0xf]
    %v4552 = vld [vmem:[#allocation5 + $0xfb4] sm:$0xff]
    %v4553 = vld [vmem:[#allocation5 + $0xfbc] sm:$0xf]
    %v4554 = vld [vmem:[#allocation5 + $0xfc0] sm:$0xff]
    %v4555 = vld [vmem:[#allocation5 + $0xfc8] sm:$0xf]
    %v4556 = vld [vmem:[#allocation5 + $0xfcc] sm:$0xff]
    %v4557 = vld [vmem:[#allocation5 + $0xfd4] sm:$0xf]
    %v4558 = vld [vmem:[#allocation5 + $0xfd8] sm:$0xff]
    %v4559 = vld [vmem:[#allocation5 + $0xfe0] sm:$0xf]
    %v4560 = vld [vmem:[#allocation5 + $0xfe4] sm:$0xff]
    %v4561 = vld [vmem:[#allocation5 + $0xfec] sm:$0xf]
    %v4562 = vld [vmem:[#allocation5 + $0xff0] sm:$0xff]
    %v4563 = vld [vmem:[#allocation5 + $0xff8] sm:$0xf]
    %v4564 = vld [vmem:[#allocation5 + $0xffc] sm:$0xff]
    %v4565 = vld [vmem:[#allocation5 + $0x1004] sm:$0xf]
    %v4566 = vld [vmem:[#allocation5 + $0x1008] sm:$0xff]
    %v4567 = vld [vmem:[#allocation5 + $0x1010] sm:$0xf]
    %v4568 = vld [vmem:[#allocation5 + $0x1014] sm:$0xff]
    %v4569 = vld [vmem:[#allocation5 + $0x101c] sm:$0xf]
    %v4570 = vld [vmem:[#allocation5 + $0x1020] sm:$0xff]
    %v4571 = vld [vmem:[#allocation5 + $0x1028] sm:$0xf]
    %v4572 = vld [vmem:[#allocation5 + $0x102c] sm:$0xff]
    %v4573 = vld [vmem:[#allocation5 + $0x1034] sm:$0xf]
    %v4574 = vld [vmem:[#allocation5 + $0x1038] sm:$0xff]
    %v4575 = vld [vmem:[#allocation5 + $0x1040] sm:$0xf]
    %v4576 = vld [vmem:[#allocation5 + $0x1044] sm:$0xff]
    %v4577 = vld [vmem:[#allocation5 + $0x104c] sm:$0xf]
    %v4578 = vld [vmem:[#allocation5 + $0x1050] sm:$0xff]
    %v4579 = vld [vmem:[#allocation5 + $0x1058] sm:$0xf]
    %v4580 = vld [vmem:[#allocation5 + $0x105c] sm:$0xff]
    %v4581 = vld [vmem:[#allocation5 + $0x1064] sm:$0xf]
    %v4582 = vld [vmem:[#allocation5 + $0x1068] sm:$0xff]
    %v4583 = vld [vmem:[#allocation5 + $0x1070] sm:$0xf]
    %v4584 = vld [vmem:[#allocation5 + $0x1074] sm:$0xff]
    %v4585 = vld [vmem:[#allocation5 + $0x107c] sm:$0xf]
    %v4586 = vld [vmem:[#allocation5 + $0x1080] sm:$0xff]
    %v4587 = vld [vmem:[#allocation5 + $0x1088] sm:$0xf]
    %v4588 = vld [vmem:[#allocation5 + $0x108c] sm:$0xff]
    %v4589 = vld [vmem:[#allocation5 + $0x1094] sm:$0xf]
    %v4590 = vld [vmem:[#allocation5 + $0x1098] sm:$0xff]
    %v4591 = vld [vmem:[#allocation5 + $0x10a0] sm:$0xf]
    %v4592 = vld [vmem:[#allocation5 + $0x10a4] sm:$0xff]
    %v4593 = vld [vmem:[#allocation5 + $0x10ac] sm:$0xf]
    %v4594 = vld [vmem:[#allocation5 + $0x10b0] sm:$0xff]
    %v4595 = vld [vmem:[#allocation5 + $0x10b8] sm:$0xf]
    %v4596 = vld [vmem:[#allocation5 + $0x10bc] sm:$0xff]
    %v4597 = vld [vmem:[#allocation5 + $0x10c4] sm:$0xf]
    %v4598 = vld [vmem:[#allocation5 + $0x10c8] sm:$0xff]
    %v4599 = vld [vmem:[#allocation5 + $0x10d0] sm:$0xf]
    %v4600 = vld [vmem:[#allocation5 + $0x10d4] sm:$0xff]
    %v4601 = vld [vmem:[#allocation5 + $0x10dc] sm:$0xf]
    %v4602 = vld [vmem:[#allocation5 + $0x10e0] sm:$0xff]
    %v4603 = vld [vmem:[#allocation5 + $0x10e8] sm:$0xf]
    %v4604 = vld [vmem:[#allocation5 + $0x10ec] sm:$0xff]
    %v4605 = vld [vmem:[#allocation5 + $0x10f4] sm:$0xf]
    %v4606 = vld [vmem:[#allocation5 + $0x10f8] sm:$0xff]
    %v4607 = vld [vmem:[#allocation5 + $0x1100] sm:$0xf]
    %v4608 = vld [vmem:[#allocation5 + $0x1104] sm:$0xff]
    %v4609 = vld [vmem:[#allocation5 + $0x110c] sm:$0xf]
    %v4610 = vld [vmem:[#allocation5 + $0x1110] sm:$0xff]
    %v4611 = vld [vmem:[#allocation5 + $0x1118] sm:$0xf]
    %v4612 = vld [vmem:[#allocation5 + $0x111c] sm:$0xff]
    %v4613 = vld [vmem:[#allocation5 + $0x1124] sm:$0xf]
    %v4614 = vld [vmem:[#allocation5 + $0x1128] sm:$0xff]
    %v4615 = vld [vmem:[#allocation5 + $0x1130] sm:$0xf]
    %v4616 = vld [vmem:[#allocation5 + $0x1134] sm:$0xff]
    %v4617 = vld [vmem:[#allocation5 + $0x113c] sm:$0xf]
    %v4618 = vld [vmem:[#allocation5 + $0x1140] sm:$0xff]
    %v4619 = vld [vmem:[#allocation5 + $0x1148] sm:$0xf]
    %v4620 = vld [vmem:[#allocation5 + $0x114c] sm:$0xff]
    %v4621 = vld [vmem:[#allocation5 + $0x1154] sm:$0xf]
    %v4622 = vld [vmem:[#allocation5 + $0x1158] sm:$0xff]
    %v4623 = vld [vmem:[#allocation5 + $0x1160] sm:$0xf]
    %v4624 = vld [vmem:[#allocation5 + $0x1164] sm:$0xff]
    %v4625 = vld [vmem:[#allocation5 + $0x116c] sm:$0xf]
    %v4626 = vld [vmem:[#allocation5 + $0x1170] sm:$0xff]
    %v4627 = vld [vmem:[#allocation5 + $0x1178] sm:$0xf]
    %v4628 = vld [vmem:[#allocation5 + $0x117c] sm:$0xff]
    %v4629 = vld [vmem:[#allocation5 + $0x1184] sm:$0xf]
    %v4630 = vld [vmem:[#allocation5 + $0x1188] sm:$0xff]
    %v4631 = vld [vmem:[#allocation5 + $0x1190] sm:$0xf]
    %v4632 = vld [vmem:[#allocation5 + $0x1194] sm:$0xff]
    %v4633 = vld [vmem:[#allocation5 + $0x119c] sm:$0xf]
    %v4634 = vld [vmem:[#allocation5 + $0x11a0] sm:$0xff]
    %v4635 = vld [vmem:[#allocation5 + $0x11a8] sm:$0xf]
    %v4636 = vld [vmem:[#allocation5 + $0x11ac] sm:$0xff]
    %v4637 = vld [vmem:[#allocation5 + $0x11b4] sm:$0xf]
    %v4638 = vld [vmem:[#allocation5 + $0x11b8] sm:$0xff]
    %v4639 = vld [vmem:[#allocation5 + $0x11c0] sm:$0xf]
    %v4640 = vld [vmem:[#allocation5 + $0x11c4] sm:$0xff]
    %v4641 = vld [vmem:[#allocation5 + $0x11cc] sm:$0xf]
    %v4642 = vld [vmem:[#allocation5 + $0x11d0] sm:$0xff]
    %v4643 = vld [vmem:[#allocation5 + $0x11d8] sm:$0xf]
    %v4644 = vld [vmem:[#allocation5 + $0x11dc] sm:$0xff]
    %v4645 = vld [vmem:[#allocation5 + $0x11e4] sm:$0xf]
    %v4646 = vld [vmem:[#allocation5 + $0x11e8] sm:$0xff]
    %v4647 = vld [vmem:[#allocation5 + $0x11f0] sm:$0xf]
    %v4648 = vld [vmem:[#allocation5 + $0x11f4] sm:$0xff]
    %v4649 = vld [vmem:[#allocation5 + $0x11fc] sm:$0xf]
    %v4650 = vld [vmem:[#allocation5 + $0x1200] sm:$0xff]
    %v4651 = vld [vmem:[#allocation5 + $0x1208] sm:$0xf]
    %v4652 = vld [vmem:[#allocation5 + $0x120c] sm:$0xff]
    %v4653 = vld [vmem:[#allocation5 + $0x1214] sm:$0xf]
    %v4654 = vld [vmem:[#allocation5 + $0x1218] sm:$0xff]
    %v4655 = vld [vmem:[#allocation5 + $0x1220] sm:$0xf]
    %v4656 = vld [vmem:[#allocation5 + $0x1224] sm:$0xff]
    %v4657 = vld [vmem:[#allocation5 + $0x122c] sm:$0xf]
    %v4658 = vld [vmem:[#allocation5 + $0x1230] sm:$0xff]
    %v4659 = vld [vmem:[#allocation5 + $0x1238] sm:$0xf]
    %v4660 = vld [vmem:[#allocation5 + $0x123c] sm:$0xff]
    %v4661 = vld [vmem:[#allocation5 + $0x1244] sm:$0xf]
    %v4662 = vld [vmem:[#allocation5 + $0x1248] sm:$0xff]
    %v4663 = vld [vmem:[#allocation5 + $0x1250] sm:$0xf]
    %v4664 = vld [vmem:[#allocation5 + $0x1254] sm:$0xff]
    %v4665 = vld [vmem:[#allocation5 + $0x125c] sm:$0xf]
    %v4666 = vld [vmem:[#allocation5 + $0x1260] sm:$0xff]
    %v4667 = vld [vmem:[#allocation5 + $0x1268] sm:$0xf]
    %v4668 = vld [vmem:[#allocation5 + $0x126c] sm:$0xff]
    %v4669 = vld [vmem:[#allocation5 + $0x1274] sm:$0xf]
    %v4670 = vld [vmem:[#allocation5 + $0x1278] sm:$0xff]
    %v4671 = vld [vmem:[#allocation5 + $0x1280] sm:$0xf]
    %v4672 = vld [vmem:[#allocation5 + $0x1284] sm:$0xff]
    %v4673 = vld [vmem:[#allocation5 + $0x128c] sm:$0xf]
    %v4674 = vld [vmem:[#allocation5 + $0x1290] sm:$0xff]
    %v4675 = vld [vmem:[#allocation5 + $0x1298] sm:$0xf]
    %v4676 = vld [vmem:[#allocation5 + $0x129c] sm:$0xff]
    %v4677 = vld [vmem:[#allocation5 + $0x12a4] sm:$0xf]
    %v4678 = vld [vmem:[#allocation5 + $0x12a8] sm:$0xff]
    %v4679 = vld [vmem:[#allocation5 + $0x12b0] sm:$0xf]
    %v4680 = vld [vmem:[#allocation5 + $0x12b4] sm:$0xff]
    %v4681 = vld [vmem:[#allocation5 + $0x12bc] sm:$0xf]
    %v4682 = vld [vmem:[#allocation5 + $0x12c0] sm:$0xff]
    %v4683 = vld [vmem:[#allocation5 + $0x12c8] sm:$0xf]
    %v4684 = vld [vmem:[#allocation5 + $0x12cc] sm:$0xff]
    %v4685 = vld [vmem:[#allocation5 + $0x12d4] sm:$0xf]
    %v4686 = vld [vmem:[#allocation5 + $0x12d8] sm:$0xff]
    %v4687 = vld [vmem:[#allocation5 + $0x12e0] sm:$0xf]
    %v4688 = vld [vmem:[#allocation5 + $0x12e4] sm:$0xff]
    %v4689 = vld [vmem:[#allocation5 + $0x12ec] sm:$0xf]
    %v4690 = vld [vmem:[#allocation5 + $0x12f0] sm:$0xff]
    %v4691 = vld [vmem:[#allocation5 + $0x12f8] sm:$0xf]
    %v4692 = vld [vmem:[#allocation5 + $0x12fc] sm:$0xff]
    %v4693 = vld [vmem:[#allocation5 + $0x1304] sm:$0xf]
    %v4694 = vld [vmem:[#allocation5 + $0x1308] sm:$0xff]
    %v4695 = vld [vmem:[#allocation5 + $0x1310] sm:$0xf]
    %v4696 = vld [vmem:[#allocation5 + $0x1314] sm:$0xff]
    %v4697 = vld [vmem:[#allocation5 + $0x131c] sm:$0xf]
    %v4698 = vld [vmem:[#allocation5 + $0x1320] sm:$0xff]
    %v4699 = vld [vmem:[#allocation5 + $0x1328] sm:$0xf]
    %v4700 = vld [vmem:[#allocation5 + $0x132c] sm:$0xff]
    %v4701 = vld [vmem:[#allocation5 + $0x1334] sm:$0xf]
    %v4702 = vld [vmem:[#allocation5 + $0x1338] sm:$0xff]
    %v4703 = vld [vmem:[#allocation5 + $0x1340] sm:$0xf]
    %v4704 = vld [vmem:[#allocation5 + $0x1344] sm:$0xff]
    %v4705 = vld [vmem:[#allocation5 + $0x134c] sm:$0xf]
    %v4706 = vld [vmem:[#allocation5 + $0x1350] sm:$0xff]
    %v4707 = vld [vmem:[#allocation5 + $0x1358] sm:$0xf]
    %v4708 = vld [vmem:[#allocation5 + $0x135c] sm:$0xff]
    %v4709 = vld [vmem:[#allocation5 + $0x1364] sm:$0xf]
    %v4710 = vld [vmem:[#allocation5 + $0x1368] sm:$0xff]
    %v4711 = vld [vmem:[#allocation5 + $0x1370] sm:$0xf]
    %v4712 = vld [vmem:[#allocation5 + $0x1374] sm:$0xff]
    %v4713 = vld [vmem:[#allocation5 + $0x137c] sm:$0xf]
    %v4714 = vld [vmem:[#allocation5 + $0x1380] sm:$0xff]
    %v4715 = vld [vmem:[#allocation5 + $0x1388] sm:$0xf]
    %v4716 = vld [vmem:[#allocation5 + $0x138c] sm:$0xff]
    %v4717 = vld [vmem:[#allocation5 + $0x1394] sm:$0xf]
    %v4718 = vld [vmem:[#allocation5 + $0x1398] sm:$0xff]
    %v4719 = vld [vmem:[#allocation5 + $0x13a0] sm:$0xf]
    %v4720 = vld [vmem:[#allocation5 + $0x13a4] sm:$0xff]
    %v4721 = vld [vmem:[#allocation5 + $0x13ac] sm:$0xf]
    %v4722 = vld [vmem:[#allocation5 + $0x13b0] sm:$0xff]
    %v4723 = vld [vmem:[#allocation5 + $0x13b8] sm:$0xf]
    %v4724 = vld [vmem:[#allocation5 + $0x13bc] sm:$0xff]
    %v4725 = vld [vmem:[#allocation5 + $0x13c4] sm:$0xf]
    %v4726 = vld [vmem:[#allocation5 + $0x13c8] sm:$0xff]
    %v4727 = vld [vmem:[#allocation5 + $0x13d0] sm:$0xf]
    %v4728 = vld [vmem:[#allocation5 + $0x13d4] sm:$0xff]
    %v4729 = vld [vmem:[#allocation5 + $0x13dc] sm:$0xf]
    %v4730 = vld [vmem:[#allocation5 + $0x13e0] sm:$0xff]
    %v4731 = vld [vmem:[#allocation5 + $0x13e8] sm:$0xf]
    %v4732 = vld [vmem:[#allocation5 + $0x13ec] sm:$0xff]
    %v4733 = vld [vmem:[#allocation5 + $0x13f4] sm:$0xf]
    %v4734 = vld [vmem:[#allocation5 + $0x13f8] sm:$0xff]
    %v4735 = vld [vmem:[#allocation5 + $0x1400] sm:$0xf]
    %v4736 = vld [vmem:[#allocation5 + $0x1404] sm:$0xff]
    %v4737 = vld [vmem:[#allocation5 + $0x140c] sm:$0xf]
    %v4738 = vld [vmem:[#allocation5 + $0x1410] sm:$0xff]
    %v4739 = vld [vmem:[#allocation5 + $0x1418] sm:$0xf]
    %v4740 = vld [vmem:[#allocation5 + $0x141c] sm:$0xff]
    %v4741 = vld [vmem:[#allocation5 + $0x1424] sm:$0xf]
    %v4742 = vld [vmem:[#allocation5 + $0x1428] sm:$0xff]
    %v4743 = vld [vmem:[#allocation5 + $0x1430] sm:$0xf]
    %v4744 = vld [vmem:[#allocation5 + $0x1434] sm:$0xff]
    %v4745 = vld [vmem:[#allocation5 + $0x143c] sm:$0xf]
    %v4746 = vld [vmem:[#allocation5 + $0x1440] sm:$0xff]
    %v4747 = vld [vmem:[#allocation5 + $0x1448] sm:$0xf]
    %v4748 = vld [vmem:[#allocation5 + $0x144c] sm:$0xff]
    %v4749 = vld [vmem:[#allocation5 + $0x1454] sm:$0xf]
    %v4750 = vld [vmem:[#allocation5 + $0x1458] sm:$0xff]
    %v4751 = vld [vmem:[#allocation5 + $0x1460] sm:$0xf]
    %v4752 = vld [vmem:[#allocation5 + $0x1464] sm:$0xff]
    %v4753 = vld [vmem:[#allocation5 + $0x146c] sm:$0xf]
    %v4754 = vld [vmem:[#allocation5 + $0x1470] sm:$0xff]
    %v4755 = vld [vmem:[#allocation5 + $0x1478] sm:$0xf]
    %v4756 = vld [vmem:[#allocation5 + $0x147c] sm:$0xff]
    %v4757 = vld [vmem:[#allocation5 + $0x1484] sm:$0xf]
    %v4758 = vld [vmem:[#allocation5 + $0x1488] sm:$0xff]
    %v4759 = vld [vmem:[#allocation5 + $0x1490] sm:$0xf]
    %v4760 = vld [vmem:[#allocation5 + $0x1494] sm:$0xff]
    %v4761 = vld [vmem:[#allocation5 + $0x149c] sm:$0xf]
    %v4762 = vld [vmem:[#allocation5 + $0x14a0] sm:$0xff]
    %v4763 = vld [vmem:[#allocation5 + $0x14a8] sm:$0xf]
    %v4764 = vld [vmem:[#allocation5 + $0x14ac] sm:$0xff]
    %v4765 = vld [vmem:[#allocation5 + $0x14b4] sm:$0xf]
    %v4766 = vld [vmem:[#allocation5 + $0x14b8] sm:$0xff]
    %v4767 = vld [vmem:[#allocation5 + $0x14c0] sm:$0xf]
    %v4768 = vld [vmem:[#allocation5 + $0x14c4] sm:$0xff]
    %v4769 = vld [vmem:[#allocation5 + $0x14cc] sm:$0xf]
    %v4770 = vld [vmem:[#allocation5 + $0x14d0] sm:$0xff]
    %v4771 = vld [vmem:[#allocation5 + $0x14d8] sm:$0xf]
    %v4772 = vld [vmem:[#allocation5 + $0x14dc] sm:$0xff]
    %v4773 = vld [vmem:[#allocation5 + $0x14e4] sm:$0xf]
    %v4774 = vld [vmem:[#allocation5 + $0x14e8] sm:$0xff]
    %v4775 = vld [vmem:[#allocation5 + $0x14f0] sm:$0xf]
    %v4776 = vld [vmem:[#allocation5 + $0x14f4] sm:$0xff]
    %v4777 = vld [vmem:[#allocation5 + $0x14fc] sm:$0xf]
    %v4778 = vld [vmem:[#allocation5 + $0x1500] sm:$0xff]
    %v4779 = vld [vmem:[#allocation5 + $0x1508] sm:$0xf]
    %v4780 = vld [vmem:[#allocation5 + $0x150c] sm:$0xff]
    %v4781 = vld [vmem:[#allocation5 + $0x1514] sm:$0xf]
    %v4782 = vld [vmem:[#allocation5 + $0x1518] sm:$0xff]
    %v4783 = vld [vmem:[#allocation5 + $0x1520] sm:$0xf]
    %v4784 = vld [vmem:[#allocation5 + $0x1524] sm:$0xff]
    %v4785 = vld [vmem:[#allocation5 + $0x152c] sm:$0xf]
    %v4786 = vld [vmem:[#allocation5 + $0x1530] sm:$0xff]
    %v4787 = vld [vmem:[#allocation5 + $0x1538] sm:$0xf]
    %v4788 = vld [vmem:[#allocation5 + $0x153c] sm:$0xff]
    %v4789 = vld [vmem:[#allocation5 + $0x1544] sm:$0xf]
    %v4790 = vld [vmem:[#allocation5 + $0x1548] sm:$0xff]
    %v4791 = vld [vmem:[#allocation5 + $0x1550] sm:$0xf]
    %v4792 = vld [vmem:[#allocation5 + $0x1554] sm:$0xff]
    %v4793 = vld [vmem:[#allocation5 + $0x155c] sm:$0xf]
    %v4794 = vld [vmem:[#allocation5 + $0x1560] sm:$0xff]
    %v4795 = vld [vmem:[#allocation5 + $0x1568] sm:$0xf]
    %v4796 = vld [vmem:[#allocation5 + $0x156c] sm:$0xff]
    %v4797 = vld [vmem:[#allocation5 + $0x1574] sm:$0xf]
    %v4798 = vld [vmem:[#allocation5 + $0x1578] sm:$0xff]
    %v4799 = vld [vmem:[#allocation5 + $0x1580] sm:$0xf]
    %v4800 = vld [vmem:[#allocation5 + $0x1584] sm:$0xff]
    %v4801 = vld [vmem:[#allocation5 + $0x158c] sm:$0xf]
    %v4802 = vld [vmem:[#allocation5 + $0x1590] sm:$0xff]
    %v4803 = vld [vmem:[#allocation5 + $0x1598] sm:$0xf]
    %v4804 = vld [vmem:[#allocation5 + $0x159c] sm:$0xff]
    %v4805 = vld [vmem:[#allocation5 + $0x15a4] sm:$0xf]
    %v4806 = vld [vmem:[#allocation5 + $0x15a8] sm:$0xff]
    %v4807 = vld [vmem:[#allocation5 + $0x15b0] sm:$0xf]
    %v4808 = vld [vmem:[#allocation5 + $0x15b4] sm:$0xff]
    %v4809 = vld [vmem:[#allocation5 + $0x15bc] sm:$0xf]
    %v4810 = vld [vmem:[#allocation5 + $0x15c0] sm:$0xff]
    %v4811 = vld [vmem:[#allocation5 + $0x15c8] sm:$0xf]
    %v4812 = vld [vmem:[#allocation5 + $0x15cc] sm:$0xff]
    %v4813 = vld [vmem:[#allocation5 + $0x15d4] sm:$0xf]
    %v4814 = vld [vmem:[#allocation5 + $0x15d8] sm:$0xff]
    %v4815 = vld [vmem:[#allocation5 + $0x15e0] sm:$0xf]
    %v4816 = vld [vmem:[#allocation5 + $0x15e4] sm:$0xff]
    %v4817 = vld [vmem:[#allocation5 + $0x15ec] sm:$0xf]
    %v4818 = vld [vmem:[#allocation5 + $0x15f0] sm:$0xff]
    %v4819 = vld [vmem:[#allocation5 + $0x15f8] sm:$0xf]
    %v4820 = vld [vmem:[#allocation5 + $0x15fc] sm:$0xff]
    %v4821 = vld [vmem:[#allocation5 + $0x1604] sm:$0xf]
    %v4822 = vld [vmem:[#allocation5 + $0x1608] sm:$0xff]
    %v4823 = vld [vmem:[#allocation5 + $0x1610] sm:$0xf]
    %v4824 = vld [vmem:[#allocation5 + $0x1614] sm:$0xff]
    %v4825 = vld [vmem:[#allocation5 + $0x161c] sm:$0xf]
    %v4826 = vld [vmem:[#allocation5 + $0x1620] sm:$0xff]
    %v4827 = vld [vmem:[#allocation5 + $0x1628] sm:$0xf]
    %v4828 = vld [vmem:[#allocation5 + $0x162c] sm:$0xff]
    %v4829 = vld [vmem:[#allocation5 + $0x1634] sm:$0xf]
    %v4830 = vld [vmem:[#allocation5 + $0x1638] sm:$0xff]
    %v4831 = vld [vmem:[#allocation5 + $0x1640] sm:$0xf]
    %v4832 = vld [vmem:[#allocation5 + $0x1644] sm:$0xff]
    %v4833 = vld [vmem:[#allocation5 + $0x164c] sm:$0xf]
    %v4834 = vld [vmem:[#allocation5 + $0x1650] sm:$0xff]
    %v4835 = vld [vmem:[#allocation5 + $0x1658] sm:$0xf]
    %v4836 = vld [vmem:[#allocation5 + $0x165c] sm:$0xff]
    %v4837 = vld [vmem:[#allocation5 + $0x1664] sm:$0xf]
    %v4838 = vld [vmem:[#allocation5 + $0x1668] sm:$0xff]
    %v4839 = vld [vmem:[#allocation5 + $0x1670] sm:$0xf]
    %v4840 = vld [vmem:[#allocation5 + $0x1674] sm:$0xff]
    %v4841 = vld [vmem:[#allocation5 + $0x167c] sm:$0xf]
    %v4842 = vld [vmem:[#allocation5 + $0x1680] sm:$0xff]
    %v4843 = vld [vmem:[#allocation5 + $0x1688] sm:$0xf]
    %v4844 = vld [vmem:[#allocation5 + $0x168c] sm:$0xff]
    %v4845 = vld [vmem:[#allocation5 + $0x1694] sm:$0xf]
    %v4846 = vld [vmem:[#allocation5 + $0x1698] sm:$0xff]
    %v4847 = vld [vmem:[#allocation5 + $0x16a0] sm:$0xf]
    %v4848 = vld [vmem:[#allocation5 + $0x16a4] sm:$0xff]
    %v4849 = vld [vmem:[#allocation5 + $0x16ac] sm:$0xf]
    %v4850 = vld [vmem:[#allocation5 + $0x16b0] sm:$0xff]
    %v4851 = vld [vmem:[#allocation5 + $0x16b8] sm:$0xf]
    %v4852 = vld [vmem:[#allocation5 + $0x16bc] sm:$0xff]
    %v4853 = vld [vmem:[#allocation5 + $0x16c4] sm:$0xf]
    %v4854 = vld [vmem:[#allocation5 + $0x16c8] sm:$0xff]
    %v4855 = vld [vmem:[#allocation5 + $0x16d0] sm:$0xf]
    %v4856 = vld [vmem:[#allocation5 + $0x16d4] sm:$0xff]
    %v4857 = vld [vmem:[#allocation5 + $0x16dc] sm:$0xf]
    %v4858 = vld [vmem:[#allocation5 + $0x16e0] sm:$0xff]
    %v4859 = vld [vmem:[#allocation5 + $0x16e8] sm:$0xf]
    %v4860 = vld [vmem:[#allocation5 + $0x16ec] sm:$0xff]
    %v4861 = vld [vmem:[#allocation5 + $0x16f4] sm:$0xf]
    %v4862 = vld [vmem:[#allocation5 + $0x16f8] sm:$0xff]
    %v4863 = vld [vmem:[#allocation5 + $0x1700] sm:$0xf]
    %v4864 = vld [vmem:[#allocation5 + $0x1704] sm:$0xff]
    %v4865 = vld [vmem:[#allocation5 + $0x170c] sm:$0xf]
    %v4866 = vld [vmem:[#allocation5 + $0x1710] sm:$0xff]
    %v4867 = vld [vmem:[#allocation5 + $0x1718] sm:$0xf]
    %v4868 = vld [vmem:[#allocation5 + $0x171c] sm:$0xff]
    %v4869 = vld [vmem:[#allocation5 + $0x1724] sm:$0xf]
    %v4870 = vld [vmem:[#allocation5 + $0x1728] sm:$0xff]
    %v4871 = vld [vmem:[#allocation5 + $0x1730] sm:$0xf]
    %v4872 = vld [vmem:[#allocation5 + $0x1734] sm:$0xff]
    %v4873 = vld [vmem:[#allocation5 + $0x173c] sm:$0xf]
    %v4874 = vld [vmem:[#allocation5 + $0x1740] sm:$0xff]
    %v4875 = vld [vmem:[#allocation5 + $0x1748] sm:$0xf]
    %v4876 = vld [vmem:[#allocation5 + $0x174c] sm:$0xff]
    %v4877 = vld [vmem:[#allocation5 + $0x1754] sm:$0xf]
    %v4878 = vld [vmem:[#allocation5 + $0x1758] sm:$0xff]
    %v4879 = vld [vmem:[#allocation5 + $0x1760] sm:$0xf]
    %v4880 = vld [vmem:[#allocation5 + $0x1764] sm:$0xff]
    %v4881 = vld [vmem:[#allocation5 + $0x176c] sm:$0xf]
    %v4882 = vld [vmem:[#allocation5 + $0x1770] sm:$0xff]
    %v4883 = vld [vmem:[#allocation5 + $0x1778] sm:$0xf]
    %v4884 = vld [vmem:[#allocation5 + $0x177c] sm:$0xff]
    %v4885 = vld [vmem:[#allocation5 + $0x1784] sm:$0xf]
    %v4886 = vld [vmem:[#allocation5 + $0x1788] sm:$0xff]
    %v4887 = vld [vmem:[#allocation5 + $0x1790] sm:$0xf]
    %v4888 = vld [vmem:[#allocation5 + $0x1794] sm:$0xff]
    %v4889 = vld [vmem:[#allocation5 + $0x179c] sm:$0xf]
    %v4890 = vld [vmem:[#allocation5 + $0x17a0] sm:$0xff]
    %v4891 = vld [vmem:[#allocation5 + $0x17a8] sm:$0xf]
    %v4892 = vld [vmem:[#allocation5 + $0x17ac] sm:$0xff]
    %v4893 = vld [vmem:[#allocation5 + $0x17b4] sm:$0xf]
    %v4894 = vld [vmem:[#allocation5 + $0x17b8] sm:$0xff]
    %v4895 = vld [vmem:[#allocation5 + $0x17c0] sm:$0xf]
    %v4896 = vld [vmem:[#allocation5 + $0x17c4] sm:$0xff]
    %v4897 = vld [vmem:[#allocation5 + $0x17cc] sm:$0xf]
    %v4898 = vld [vmem:[#allocation5 + $0x17d0] sm:$0xff]
    %v4899 = vld [vmem:[#allocation5 + $0x17d8] sm:$0xf]
    %v4900 = vld [vmem:[#allocation5 + $0x17dc] sm:$0xff]
    %v4901 = vld [vmem:[#allocation5 + $0x17e4] sm:$0xf]
    %v4902 = vld [vmem:[#allocation5 + $0x17e8] sm:$0xff]
    %v4903 = vld [vmem:[#allocation5 + $0x17f0] sm:$0xf]
    %v4904 = vld [vmem:[#allocation5 + $0x17f4] sm:$0xff]
    %v4905 = vld [vmem:[#allocation5 + $0x17fc] sm:$0xf]
    %v4906 = vld [vmem:[#allocation7] sm:$0x7]
    %v4908 = vlaneseq
    %v4909 = vshrl.u32 %v4908, 7
    %v4910 = vsub.s32 0, %v4909
    %v4911 = vrot.slane %v4906, %v4910
    %v4912 = vlaneseq
    %v4913 = vshrl.u32 %v4912, 7
    %v4914 = vsub.s32 1, %v4913
    %v4915 = vrot.slane %v4906, %v4914
    %v4916 = vlaneseq
    %v4917 = vshrl.u32 %v4916, 7
    %v4918 = vsub.s32 2, %v4917
    %v4919 = vrot.slane %v4906, %v4918
    %v5947 = vunpack.c.l.b16 %v3882
    %v5948 = vunpack.c.h.b16 %v3882
    %v5949 = vunpack.c.l.b16 %v3883
    %v5950 = vunpack.c.l.b16 %v3884
    %v5951 = vunpack.c.h.b16 %v3884
    %v5952 = vunpack.c.l.b16 %v3885
    %v5953 = vunpack.c.l.b16 %v3886
    %v5954 = vunpack.c.h.b16 %v3886
    %v5955 = vunpack.c.l.b16 %v3887
    %v5956 = vunpack.c.l.b16 %v3888
    %v5957 = vunpack.c.h.b16 %v3888
    %v5958 = vunpack.c.l.b16 %v3889
    %v5959 = vunpack.c.l.b16 %v3890
    %v5960 = vunpack.c.h.b16 %v3890
    %v5961 = vunpack.c.l.b16 %v3891
    %v5962 = vunpack.c.l.b16 %v3892
    %v5963 = vunpack.c.h.b16 %v3892
    %v5964 = vunpack.c.l.b16 %v3893
    %v5965 = vunpack.c.l.b16 %v3894
    %v5966 = vunpack.c.h.b16 %v3894
    %v5967 = vunpack.c.l.b16 %v3895
    %v5968 = vunpack.c.l.b16 %v3896
    %v5969 = vunpack.c.h.b16 %v3896
    %v5970 = vunpack.c.l.b16 %v3897
    %v5971 = vunpack.c.l.b16 %v3898
    %v5972 = vunpack.c.h.b16 %v3898
    %v5973 = vunpack.c.l.b16 %v3899
    %v5974 = vunpack.c.l.b16 %v3900
    %v5975 = vunpack.c.h.b16 %v3900
    %v5976 = vunpack.c.l.b16 %v3901
    %v5977 = vunpack.c.l.b16 %v3902
    %v5978 = vunpack.c.h.b16 %v3902
    %v5979 = vunpack.c.l.b16 %v3903
    %v5980 = vunpack.c.l.b16 %v3904
    %v5981 = vunpack.c.h.b16 %v3904
    %v5982 = vunpack.c.l.b16 %v3905
    %v5983 = vunpack.c.l.b16 %v3906
    %v5984 = vunpack.c.h.b16 %v3906
    %v5985 = vunpack.c.l.b16 %v3907
    %v5986 = vunpack.c.l.b16 %v3908
    %v5987 = vunpack.c.h.b16 %v3908
    %v5988 = vunpack.c.l.b16 %v3909
    %v5989 = vunpack.c.l.b16 %v3910
    %v5990 = vunpack.c.h.b16 %v3910
    %v5991 = vunpack.c.l.b16 %v3911
    %v5992 = vunpack.c.l.b16 %v3912
    %v5993 = vunpack.c.h.b16 %v3912
    %v5994 = vunpack.c.l.b16 %v3913
    %v5995 = vunpack.c.l.b16 %v3914
    %v5996 = vunpack.c.h.b16 %v3914
    %v5997 = vunpack.c.l.b16 %v3915
    %v5998 = vunpack.c.l.b16 %v3916
    %v5999 = vunpack.c.h.b16 %v3916
    %v6000 = vunpack.c.l.b16 %v3917
    %v6001 = vunpack.c.l.b16 %v3918
    %v6002 = vunpack.c.h.b16 %v3918
    %v6003 = vunpack.c.l.b16 %v3919
    %v6004 = vunpack.c.l.b16 %v3920
    %v6005 = vunpack.c.h.b16 %v3920
    %v6006 = vunpack.c.l.b16 %v3921
    %v6007 = vunpack.c.l.b16 %v3922
    %v6008 = vunpack.c.h.b16 %v3922
    %v6009 = vunpack.c.l.b16 %v3923
    %v6010 = vunpack.c.l.b16 %v3924
    %v6011 = vunpack.c.h.b16 %v3924
    %v6012 = vunpack.c.l.b16 %v3925
    %v6013 = vunpack.c.l.b16 %v3926
    %v6014 = vunpack.c.h.b16 %v3926
    %v6015 = vunpack.c.l.b16 %v3927
    %v6016 = vunpack.c.l.b16 %v3928
    %v6017 = vunpack.c.h.b16 %v3928
    %v6018 = vunpack.c.l.b16 %v3929
    %v6019 = vunpack.c.l.b16 %v3930
    %v6020 = vunpack.c.h.b16 %v3930
    %v6021 = vunpack.c.l.b16 %v3931
    %v6022 = vunpack.c.l.b16 %v3932
    %v6023 = vunpack.c.h.b16 %v3932
    %v6024 = vunpack.c.l.b16 %v3933
    %v6025 = vunpack.c.l.b16 %v3934
    %v6026 = vunpack.c.h.b16 %v3934
    %v6027 = vunpack.c.l.b16 %v3935
    %v6028 = vunpack.c.l.b16 %v3936
    %v6029 = vunpack.c.h.b16 %v3936
    %v6030 = vunpack.c.l.b16 %v3937
    %v6031 = vunpack.c.l.b16 %v3938
    %v6032 = vunpack.c.h.b16 %v3938
    %v6033 = vunpack.c.l.b16 %v3939
    %v6034 = vunpack.c.l.b16 %v3940
    %v6035 = vunpack.c.h.b16 %v3940
    %v6036 = vunpack.c.l.b16 %v3941
    %v6037 = vunpack.c.l.b16 %v3942
    %v6038 = vunpack.c.h.b16 %v3942
    %v6039 = vunpack.c.l.b16 %v3943
    %v6040 = vunpack.c.l.b16 %v3944
    %v6041 = vunpack.c.h.b16 %v3944
    %v6042 = vunpack.c.l.b16 %v3945
    %v6043 = vunpack.c.l.b16 %v3946
    %v6044 = vunpack.c.h.b16 %v3946
    %v6045 = vunpack.c.l.b16 %v3947
    %v6046 = vunpack.c.l.b16 %v3948
    %v6047 = vunpack.c.h.b16 %v3948
    %v6048 = vunpack.c.l.b16 %v3949
    %v6049 = vunpack.c.l.b16 %v3950
    %v6050 = vunpack.c.h.b16 %v3950
    %v6051 = vunpack.c.l.b16 %v3951
    %v6052 = vunpack.c.l.b16 %v3952
    %v6053 = vunpack.c.h.b16 %v3952
    %v6054 = vunpack.c.l.b16 %v3953
    %v6055 = vunpack.c.l.b16 %v3954
    %v6056 = vunpack.c.h.b16 %v3954
    %v6057 = vunpack.c.l.b16 %v3955
    %v6058 = vunpack.c.l.b16 %v3956
    %v6059 = vunpack.c.h.b16 %v3956
    %v6060 = vunpack.c.l.b16 %v3957
    %v6061 = vunpack.c.l.b16 %v3958
    %v6062 = vunpack.c.h.b16 %v3958
    %v6063 = vunpack.c.l.b16 %v3959
    %v6064 = vunpack.c.l.b16 %v3960
    %v6065 = vunpack.c.h.b16 %v3960
    %v6066 = vunpack.c.l.b16 %v3961
    %v6067 = vunpack.c.l.b16 %v3962
    %v6068 = vunpack.c.h.b16 %v3962
    %v6069 = vunpack.c.l.b16 %v3963
    %v6070 = vunpack.c.l.b16 %v3964
    %v6071 = vunpack.c.h.b16 %v3964
    %v6072 = vunpack.c.l.b16 %v3965
    %v6073 = vunpack.c.l.b16 %v3966
    %v6074 = vunpack.c.h.b16 %v3966
    %v6075 = vunpack.c.l.b16 %v3967
    %v6076 = vunpack.c.l.b16 %v3968
    %v6077 = vunpack.c.h.b16 %v3968
    %v6078 = vunpack.c.l.b16 %v3969
    %v6079 = vunpack.c.l.b16 %v3970
    %v6080 = vunpack.c.h.b16 %v3970
    %v6081 = vunpack.c.l.b16 %v3971
    %v6082 = vunpack.c.l.b16 %v3972
    %v6083 = vunpack.c.h.b16 %v3972
    %v6084 = vunpack.c.l.b16 %v3973
    %v6085 = vunpack.c.l.b16 %v3974
    %v6086 = vunpack.c.h.b16 %v3974
    %v6087 = vunpack.c.l.b16 %v3975
    %v6088 = vunpack.c.l.b16 %v3976
    %v6089 = vunpack.c.h.b16 %v3976
    %v6090 = vunpack.c.l.b16 %v3977
    %v6091 = vunpack.c.l.b16 %v3978
    %v6092 = vunpack.c.h.b16 %v3978
    %v6093 = vunpack.c.l.b16 %v3979
    %v6094 = vunpack.c.l.b16 %v3980
    %v6095 = vunpack.c.h.b16 %v3980
    %v6096 = vunpack.c.l.b16 %v3981
    %v6097 = vunpack.c.l.b16 %v3982
    %v6098 = vunpack.c.h.b16 %v3982
    %v6099 = vunpack.c.l.b16 %v3983
    %v6100 = vunpack.c.l.b16 %v3984
    %v6101 = vunpack.c.h.b16 %v3984
    %v6102 = vunpack.c.l.b16 %v3985
    %v6103 = vunpack.c.l.b16 %v3986
    %v6104 = vunpack.c.h.b16 %v3986
    %v6105 = vunpack.c.l.b16 %v3987
    %v6106 = vunpack.c.l.b16 %v3988
    %v6107 = vunpack.c.h.b16 %v3988
    %v6108 = vunpack.c.l.b16 %v3989
    %v6109 = vunpack.c.l.b16 %v3990
    %v6110 = vunpack.c.h.b16 %v3990
    %v6111 = vunpack.c.l.b16 %v3991
    %v6112 = vunpack.c.l.b16 %v3992
    %v6113 = vunpack.c.h.b16 %v3992
    %v6114 = vunpack.c.l.b16 %v3993
    %v6115 = vunpack.c.l.b16 %v3994
    %v6116 = vunpack.c.h.b16 %v3994
    %v6117 = vunpack.c.l.b16 %v3995
    %v6118 = vunpack.c.l.b16 %v3996
    %v6119 = vunpack.c.h.b16 %v3996
    %v6120 = vunpack.c.l.b16 %v3997
    %v6121 = vunpack.c.l.b16 %v3998
    %v6122 = vunpack.c.h.b16 %v3998
    %v6123 = vunpack.c.l.b16 %v3999
    %v6124 = vunpack.c.l.b16 %v4000
    %v6125 = vunpack.c.h.b16 %v4000
    %v6126 = vunpack.c.l.b16 %v4001
    %v6127 = vunpack.c.l.b16 %v4002
    %v6128 = vunpack.c.h.b16 %v4002
    %v6129 = vunpack.c.l.b16 %v4003
    %v6130 = vunpack.c.l.b16 %v4004
    %v6131 = vunpack.c.h.b16 %v4004
    %v6132 = vunpack.c.l.b16 %v4005
    %v6133 = vunpack.c.l.b16 %v4006
    %v6134 = vunpack.c.h.b16 %v4006
    %v6135 = vunpack.c.l.b16 %v4007
    %v6136 = vunpack.c.l.b16 %v4008
    %v6137 = vunpack.c.h.b16 %v4008
    %v6138 = vunpack.c.l.b16 %v4009
    %v6139 = vunpack.c.l.b16 %v4010
    %v6140 = vunpack.c.h.b16 %v4010
    %v6141 = vunpack.c.l.b16 %v4011
    %v6142 = vunpack.c.l.b16 %v4012
    %v6143 = vunpack.c.h.b16 %v4012
    %v6144 = vunpack.c.l.b16 %v4013
    %v6145 = vunpack.c.l.b16 %v4014
    %v6146 = vunpack.c.h.b16 %v4014
    %v6147 = vunpack.c.l.b16 %v4015
    %v6148 = vunpack.c.l.b16 %v4016
    %v6149 = vunpack.c.h.b16 %v4016
    %v6150 = vunpack.c.l.b16 %v4017
    %v6151 = vunpack.c.l.b16 %v4018
    %v6152 = vunpack.c.h.b16 %v4018
    %v6153 = vunpack.c.l.b16 %v4019
    %v6154 = vunpack.c.l.b16 %v4020
    %v6155 = vunpack.c.h.b16 %v4020
    %v6156 = vunpack.c.l.b16 %v4021
    %v6157 = vunpack.c.l.b16 %v4022
    %v6158 = vunpack.c.h.b16 %v4022
    %v6159 = vunpack.c.l.b16 %v4023
    %v6160 = vunpack.c.l.b16 %v4024
    %v6161 = vunpack.c.h.b16 %v4024
    %v6162 = vunpack.c.l.b16 %v4025
    %v6163 = vunpack.c.l.b16 %v4026
    %v6164 = vunpack.c.h.b16 %v4026
    %v6165 = vunpack.c.l.b16 %v4027
    %v6166 = vunpack.c.l.b16 %v4028
    %v6167 = vunpack.c.h.b16 %v4028
    %v6168 = vunpack.c.l.b16 %v4029
    %v6169 = vunpack.c.l.b16 %v4030
    %v6170 = vunpack.c.h.b16 %v4030
    %v6171 = vunpack.c.l.b16 %v4031
    %v6172 = vunpack.c.l.b16 %v4032
    %v6173 = vunpack.c.h.b16 %v4032
    %v6174 = vunpack.c.l.b16 %v4033
    %v6175 = vunpack.c.l.b16 %v4034
    %v6176 = vunpack.c.h.b16 %v4034
    %v6177 = vunpack.c.l.b16 %v4035
    %v6178 = vunpack.c.l.b16 %v4036
    %v6179 = vunpack.c.h.b16 %v4036
    %v6180 = vunpack.c.l.b16 %v4037
    %v6181 = vunpack.c.l.b16 %v4038
    %v6182 = vunpack.c.h.b16 %v4038
    %v6183 = vunpack.c.l.b16 %v4039
    %v6184 = vunpack.c.l.b16 %v4040
    %v6185 = vunpack.c.h.b16 %v4040
    %v6186 = vunpack.c.l.b16 %v4041
    %v6187 = vunpack.c.l.b16 %v4042
    %v6188 = vunpack.c.h.b16 %v4042
    %v6189 = vunpack.c.l.b16 %v4043
    %v6190 = vunpack.c.l.b16 %v4044
    %v6191 = vunpack.c.h.b16 %v4044
    %v6192 = vunpack.c.l.b16 %v4045
    %v6193 = vunpack.c.l.b16 %v4046
    %v6194 = vunpack.c.h.b16 %v4046
    %v6195 = vunpack.c.l.b16 %v4047
    %v6196 = vunpack.c.l.b16 %v4048
    %v6197 = vunpack.c.h.b16 %v4048
    %v6198 = vunpack.c.l.b16 %v4049
    %v6199 = vunpack.c.l.b16 %v4050
    %v6200 = vunpack.c.h.b16 %v4050
    %v6201 = vunpack.c.l.b16 %v4051
    %v6202 = vunpack.c.l.b16 %v4052
    %v6203 = vunpack.c.h.b16 %v4052
    %v6204 = vunpack.c.l.b16 %v4053
    %v6205 = vunpack.c.l.b16 %v4054
    %v6206 = vunpack.c.h.b16 %v4054
    %v6207 = vunpack.c.l.b16 %v4055
    %v6208 = vunpack.c.l.b16 %v4056
    %v6209 = vunpack.c.h.b16 %v4056
    %v6210 = vunpack.c.l.b16 %v4057
    %v6211 = vunpack.c.l.b16 %v4058
    %v6212 = vunpack.c.h.b16 %v4058
    %v6213 = vunpack.c.l.b16 %v4059
    %v6214 = vunpack.c.l.b16 %v4060
    %v6215 = vunpack.c.h.b16 %v4060
    %v6216 = vunpack.c.l.b16 %v4061
    %v6217 = vunpack.c.l.b16 %v4062
    %v6218 = vunpack.c.h.b16 %v4062
    %v6219 = vunpack.c.l.b16 %v4063
    %v6220 = vunpack.c.l.b16 %v4064
    %v6221 = vunpack.c.h.b16 %v4064
    %v6222 = vunpack.c.l.b16 %v4065
    %v6223 = vunpack.c.l.b16 %v4066
    %v6224 = vunpack.c.h.b16 %v4066
    %v6225 = vunpack.c.l.b16 %v4067
    %v6226 = vunpack.c.l.b16 %v4068
    %v6227 = vunpack.c.h.b16 %v4068
    %v6228 = vunpack.c.l.b16 %v4069
    %v6229 = vunpack.c.l.b16 %v4070
    %v6230 = vunpack.c.h.b16 %v4070
    %v6231 = vunpack.c.l.b16 %v4071
    %v6232 = vunpack.c.l.b16 %v4072
    %v6233 = vunpack.c.h.b16 %v4072
    %v6234 = vunpack.c.l.b16 %v4073
    %v6235 = vunpack.c.l.b16 %v4074
    %v6236 = vunpack.c.h.b16 %v4074
    %v6237 = vunpack.c.l.b16 %v4075
    %v6238 = vunpack.c.l.b16 %v4076
    %v6239 = vunpack.c.h.b16 %v4076
    %v6240 = vunpack.c.l.b16 %v4077
    %v6241 = vunpack.c.l.b16 %v4078
    %v6242 = vunpack.c.h.b16 %v4078
    %v6243 = vunpack.c.l.b16 %v4079
    %v6244 = vunpack.c.l.b16 %v4080
    %v6245 = vunpack.c.h.b16 %v4080
    %v6246 = vunpack.c.l.b16 %v4081
    %v6247 = vunpack.c.l.b16 %v4082
    %v6248 = vunpack.c.h.b16 %v4082
    %v6249 = vunpack.c.l.b16 %v4083
    %v6250 = vunpack.c.l.b16 %v4084
    %v6251 = vunpack.c.h.b16 %v4084
    %v6252 = vunpack.c.l.b16 %v4085
    %v6253 = vunpack.c.l.b16 %v4086
    %v6254 = vunpack.c.h.b16 %v4086
    %v6255 = vunpack.c.l.b16 %v4087
    %v6256 = vunpack.c.l.b16 %v4088
    %v6257 = vunpack.c.h.b16 %v4088
    %v6258 = vunpack.c.l.b16 %v4089
    %v6259 = vunpack.c.l.b16 %v4090
    %v6260 = vunpack.c.h.b16 %v4090
    %v6261 = vunpack.c.l.b16 %v4091
    %v6262 = vunpack.c.l.b16 %v4092
    %v6263 = vunpack.c.h.b16 %v4092
    %v6264 = vunpack.c.l.b16 %v4093
    %v6265 = vunpack.c.l.b16 %v4094
    %v6266 = vunpack.c.h.b16 %v4094
    %v6267 = vunpack.c.l.b16 %v4095
    %v6268 = vunpack.c.l.b16 %v4096
    %v6269 = vunpack.c.h.b16 %v4096
    %v6270 = vunpack.c.l.b16 %v4097
    %v6271 = vunpack.c.l.b16 %v4098
    %v6272 = vunpack.c.h.b16 %v4098
    %v6273 = vunpack.c.l.b16 %v4099
    %v6274 = vunpack.c.l.b16 %v4100
    %v6275 = vunpack.c.h.b16 %v4100
    %v6276 = vunpack.c.l.b16 %v4101
    %v6277 = vunpack.c.l.b16 %v4102
    %v6278 = vunpack.c.h.b16 %v4102
    %v6279 = vunpack.c.l.b16 %v4103
    %v6280 = vunpack.c.l.b16 %v4104
    %v6281 = vunpack.c.h.b16 %v4104
    %v6282 = vunpack.c.l.b16 %v4105
    %v6283 = vunpack.c.l.b16 %v4106
    %v6284 = vunpack.c.h.b16 %v4106
    %v6285 = vunpack.c.l.b16 %v4107
    %v6286 = vunpack.c.l.b16 %v4108
    %v6287 = vunpack.c.h.b16 %v4108
    %v6288 = vunpack.c.l.b16 %v4109
    %v6289 = vunpack.c.l.b16 %v4110
    %v6290 = vunpack.c.h.b16 %v4110
    %v6291 = vunpack.c.l.b16 %v4111
    %v6292 = vunpack.c.l.b16 %v4112
    %v6293 = vunpack.c.h.b16 %v4112
    %v6294 = vunpack.c.l.b16 %v4113
    %v6295 = vunpack.c.l.b16 %v4114
    %v6296 = vunpack.c.h.b16 %v4114
    %v6297 = vunpack.c.l.b16 %v4115
    %v6298 = vunpack.c.l.b16 %v4116
    %v6299 = vunpack.c.h.b16 %v4116
    %v6300 = vunpack.c.l.b16 %v4117
    %v6301 = vunpack.c.l.b16 %v4118
    %v6302 = vunpack.c.h.b16 %v4118
    %v6303 = vunpack.c.l.b16 %v4119
    %v6304 = vunpack.c.l.b16 %v4120
    %v6305 = vunpack.c.h.b16 %v4120
    %v6306 = vunpack.c.l.b16 %v4121
    %v6307 = vunpack.c.l.b16 %v4122
    %v6308 = vunpack.c.h.b16 %v4122
    %v6309 = vunpack.c.l.b16 %v4123
    %v6310 = vunpack.c.l.b16 %v4124
    %v6311 = vunpack.c.h.b16 %v4124
    %v6312 = vunpack.c.l.b16 %v4125
    %v6313 = vunpack.c.l.b16 %v4126
    %v6314 = vunpack.c.h.b16 %v4126
    %v6315 = vunpack.c.l.b16 %v4127
    %v6316 = vunpack.c.l.b16 %v4128
    %v6317 = vunpack.c.h.b16 %v4128
    %v6318 = vunpack.c.l.b16 %v4129
    %v6319 = vunpack.c.l.b16 %v4130
    %v6320 = vunpack.c.h.b16 %v4130
    %v6321 = vunpack.c.l.b16 %v4131
    %v6322 = vunpack.c.l.b16 %v4132
    %v6323 = vunpack.c.h.b16 %v4132
    %v6324 = vunpack.c.l.b16 %v4133
    %v6325 = vunpack.c.l.b16 %v4134
    %v6326 = vunpack.c.h.b16 %v4134
    %v6327 = vunpack.c.l.b16 %v4135
    %v6328 = vunpack.c.l.b16 %v4136
    %v6329 = vunpack.c.h.b16 %v4136
    %v6330 = vunpack.c.l.b16 %v4137
    %v6331 = vunpack.c.l.b16 %v4138
    %v6332 = vunpack.c.h.b16 %v4138
    %v6333 = vunpack.c.l.b16 %v4139
    %v6334 = vunpack.c.l.b16 %v4140
    %v6335 = vunpack.c.h.b16 %v4140
    %v6336 = vunpack.c.l.b16 %v4141
    %v6337 = vunpack.c.l.b16 %v4142
    %v6338 = vunpack.c.h.b16 %v4142
    %v6339 = vunpack.c.l.b16 %v4143
    %v6340 = vunpack.c.l.b16 %v4144
    %v6341 = vunpack.c.h.b16 %v4144
    %v6342 = vunpack.c.l.b16 %v4145
    %v6343 = vunpack.c.l.b16 %v4146
    %v6344 = vunpack.c.h.b16 %v4146
    %v6345 = vunpack.c.l.b16 %v4147
    %v6346 = vunpack.c.l.b16 %v4148
    %v6347 = vunpack.c.h.b16 %v4148
    %v6348 = vunpack.c.l.b16 %v4149
    %v6349 = vunpack.c.l.b16 %v4150
    %v6350 = vunpack.c.h.b16 %v4150
    %v6351 = vunpack.c.l.b16 %v4151
    %v6352 = vunpack.c.l.b16 %v4152
    %v6353 = vunpack.c.h.b16 %v4152
    %v6354 = vunpack.c.l.b16 %v4153
    %v6355 = vunpack.c.l.b16 %v4154
    %v6356 = vunpack.c.h.b16 %v4154
    %v6357 = vunpack.c.l.b16 %v4155
    %v6358 = vunpack.c.l.b16 %v4156
    %v6359 = vunpack.c.h.b16 %v4156
    %v6360 = vunpack.c.l.b16 %v4157
    %v6361 = vunpack.c.l.b16 %v4158
    %v6362 = vunpack.c.h.b16 %v4158
    %v6363 = vunpack.c.l.b16 %v4159
    %v6364 = vunpack.c.l.b16 %v4160
    %v6365 = vunpack.c.h.b16 %v4160
    %v6366 = vunpack.c.l.b16 %v4161
    %v6367 = vunpack.c.l.b16 %v4162
    %v6368 = vunpack.c.h.b16 %v4162
    %v6369 = vunpack.c.l.b16 %v4163
    %v6370 = vunpack.c.l.b16 %v4164
    %v6371 = vunpack.c.h.b16 %v4164
    %v6372 = vunpack.c.l.b16 %v4165
    %v6373 = vunpack.c.l.b16 %v4166
    %v6374 = vunpack.c.h.b16 %v4166
    %v6375 = vunpack.c.l.b16 %v4167
    %v6376 = vunpack.c.l.b16 %v4168
    %v6377 = vunpack.c.h.b16 %v4168
    %v6378 = vunpack.c.l.b16 %v4169
    %v6379 = vunpack.c.l.b16 %v4170
    %v6380 = vunpack.c.h.b16 %v4170
    %v6381 = vunpack.c.l.b16 %v4171
    %v6382 = vunpack.c.l.b16 %v4172
    %v6383 = vunpack.c.h.b16 %v4172
    %v6384 = vunpack.c.l.b16 %v4173
    %v6385 = vunpack.c.l.b16 %v4174
    %v6386 = vunpack.c.h.b16 %v4174
    %v6387 = vunpack.c.l.b16 %v4175
    %v6388 = vunpack.c.l.b16 %v4176
    %v6389 = vunpack.c.h.b16 %v4176
    %v6390 = vunpack.c.l.b16 %v4177
    %v6391 = vunpack.c.l.b16 %v4178
    %v6392 = vunpack.c.h.b16 %v4178
    %v6393 = vunpack.c.l.b16 %v4179
    %v6394 = vunpack.c.l.b16 %v4180
    %v6395 = vunpack.c.h.b16 %v4180
    %v6396 = vunpack.c.l.b16 %v4181
    %v6397 = vunpack.c.l.b16 %v4182
    %v6398 = vunpack.c.h.b16 %v4182
    %v6399 = vunpack.c.l.b16 %v4183
    %v6400 = vunpack.c.l.b16 %v4184
    %v6401 = vunpack.c.h.b16 %v4184
    %v6402 = vunpack.c.l.b16 %v4185
    %v6403 = vunpack.c.l.b16 %v4186
    %v6404 = vunpack.c.h.b16 %v4186
    %v6405 = vunpack.c.l.b16 %v4187
    %v6406 = vunpack.c.l.b16 %v4188
    %v6407 = vunpack.c.h.b16 %v4188
    %v6408 = vunpack.c.l.b16 %v4189
    %v6409 = vunpack.c.l.b16 %v4190
    %v6410 = vunpack.c.h.b16 %v4190
    %v6411 = vunpack.c.l.b16 %v4191
    %v6412 = vunpack.c.l.b16 %v4192
    %v6413 = vunpack.c.h.b16 %v4192
    %v6414 = vunpack.c.l.b16 %v4193
    %v6415 = vunpack.c.l.b16 %v4194
    %v6416 = vunpack.c.h.b16 %v4194
    %v6417 = vunpack.c.l.b16 %v4195
    %v6418 = vunpack.c.l.b16 %v4196
    %v6419 = vunpack.c.h.b16 %v4196
    %v6420 = vunpack.c.l.b16 %v4197
    %v6421 = vunpack.c.l.b16 %v4198
    %v6422 = vunpack.c.h.b16 %v4198
    %v6423 = vunpack.c.l.b16 %v4199
    %v6424 = vunpack.c.l.b16 %v4200
    %v6425 = vunpack.c.h.b16 %v4200
    %v6426 = vunpack.c.l.b16 %v4201
    %v6427 = vunpack.c.l.b16 %v4202
    %v6428 = vunpack.c.h.b16 %v4202
    %v6429 = vunpack.c.l.b16 %v4203
    %v6430 = vunpack.c.l.b16 %v4204
    %v6431 = vunpack.c.h.b16 %v4204
    %v6432 = vunpack.c.l.b16 %v4205
    %v6433 = vunpack.c.l.b16 %v4206
    %v6434 = vunpack.c.h.b16 %v4206
    %v6435 = vunpack.c.l.b16 %v4207
    %v6436 = vunpack.c.l.b16 %v4208
    %v6437 = vunpack.c.h.b16 %v4208
    %v6438 = vunpack.c.l.b16 %v4209
    %v6439 = vunpack.c.l.b16 %v4210
    %v6440 = vunpack.c.h.b16 %v4210
    %v6441 = vunpack.c.l.b16 %v4211
    %v6442 = vunpack.c.l.b16 %v4212
    %v6443 = vunpack.c.h.b16 %v4212
    %v6444 = vunpack.c.l.b16 %v4213
    %v6445 = vunpack.c.l.b16 %v4214
    %v6446 = vunpack.c.h.b16 %v4214
    %v6447 = vunpack.c.l.b16 %v4215
    %v6448 = vunpack.c.l.b16 %v4216
    %v6449 = vunpack.c.h.b16 %v4216
    %v6450 = vunpack.c.l.b16 %v4217
    %v6451 = vunpack.c.l.b16 %v4218
    %v6452 = vunpack.c.h.b16 %v4218
    %v6453 = vunpack.c.l.b16 %v4219
    %v6454 = vunpack.c.l.b16 %v4220
    %v6455 = vunpack.c.h.b16 %v4220
    %v6456 = vunpack.c.l.b16 %v4221
    %v6457 = vunpack.c.l.b16 %v4222
    %v6458 = vunpack.c.h.b16 %v4222
    %v6459 = vunpack.c.l.b16 %v4223
    %v6460 = vunpack.c.l.b16 %v4224
    %v6461 = vunpack.c.h.b16 %v4224
    %v6462 = vunpack.c.l.b16 %v4225
    %v6463 = vunpack.c.l.b16 %v4226
    %v6464 = vunpack.c.h.b16 %v4226
    %v6465 = vunpack.c.l.b16 %v4227
    %v6466 = vunpack.c.l.b16 %v4228
    %v6467 = vunpack.c.h.b16 %v4228
    %v6468 = vunpack.c.l.b16 %v4229
    %v6469 = vunpack.c.l.b16 %v4230
    %v6470 = vunpack.c.h.b16 %v4230
    %v6471 = vunpack.c.l.b16 %v4231
    %v6472 = vunpack.c.l.b16 %v4232
    %v6473 = vunpack.c.h.b16 %v4232
    %v6474 = vunpack.c.l.b16 %v4233
    %v6475 = vunpack.c.l.b16 %v4234
    %v6476 = vunpack.c.h.b16 %v4234
    %v6477 = vunpack.c.l.b16 %v4235
    %v6478 = vunpack.c.l.b16 %v4236
    %v6479 = vunpack.c.h.b16 %v4236
    %v6480 = vunpack.c.l.b16 %v4237
    %v6481 = vunpack.c.l.b16 %v4238
    %v6482 = vunpack.c.h.b16 %v4238
    %v6483 = vunpack.c.l.b16 %v4239
    %v6484 = vunpack.c.l.b16 %v4240
    %v6485 = vunpack.c.h.b16 %v4240
    %v6486 = vunpack.c.l.b16 %v4241
    %v6487 = vunpack.c.l.b16 %v4242
    %v6488 = vunpack.c.h.b16 %v4242
    %v6489 = vunpack.c.l.b16 %v4243
    %v6490 = vunpack.c.l.b16 %v4244
    %v6491 = vunpack.c.h.b16 %v4244
    %v6492 = vunpack.c.l.b16 %v4245
    %v6493 = vunpack.c.l.b16 %v4246
    %v6494 = vunpack.c.h.b16 %v4246
    %v6495 = vunpack.c.l.b16 %v4247
    %v6496 = vunpack.c.l.b16 %v4248
    %v6497 = vunpack.c.h.b16 %v4248
    %v6498 = vunpack.c.l.b16 %v4249
    %v6499 = vunpack.c.l.b16 %v4250
    %v6500 = vunpack.c.h.b16 %v4250
    %v6501 = vunpack.c.l.b16 %v4251
    %v6502 = vunpack.c.l.b16 %v4252
    %v6503 = vunpack.c.h.b16 %v4252
    %v6504 = vunpack.c.l.b16 %v4253
    %v6505 = vunpack.c.l.b16 %v4254
    %v6506 = vunpack.c.h.b16 %v4254
    %v6507 = vunpack.c.l.b16 %v4255
    %v6508 = vunpack.c.l.b16 %v4256
    %v6509 = vunpack.c.h.b16 %v4256
    %v6510 = vunpack.c.l.b16 %v4257
    %v6511 = vunpack.c.l.b16 %v4258
    %v6512 = vunpack.c.h.b16 %v4258
    %v6513 = vunpack.c.l.b16 %v4259
    %v6514 = vunpack.c.l.b16 %v4260
    %v6515 = vunpack.c.h.b16 %v4260
    %v6516 = vunpack.c.l.b16 %v4261
    %v6517 = vunpack.c.l.b16 %v4262
    %v6518 = vunpack.c.h.b16 %v4262
    %v6519 = vunpack.c.l.b16 %v4263
    %v6520 = vunpack.c.l.b16 %v4264
    %v6521 = vunpack.c.h.b16 %v4264
    %v6522 = vunpack.c.l.b16 %v4265
    %v6523 = vunpack.c.l.b16 %v4266
    %v6524 = vunpack.c.h.b16 %v4266
    %v6525 = vunpack.c.l.b16 %v4267
    %v6526 = vunpack.c.l.b16 %v4268
    %v6527 = vunpack.c.h.b16 %v4268
    %v6528 = vunpack.c.l.b16 %v4269
    %v6529 = vunpack.c.l.b16 %v4270
    %v6530 = vunpack.c.h.b16 %v4270
    %v6531 = vunpack.c.l.b16 %v4271
    %v6532 = vunpack.c.l.b16 %v4272
    %v6533 = vunpack.c.h.b16 %v4272
    %v6534 = vunpack.c.l.b16 %v4273
    %v6535 = vunpack.c.l.b16 %v4274
    %v6536 = vunpack.c.h.b16 %v4274
    %v6537 = vunpack.c.l.b16 %v4275
    %v6538 = vunpack.c.l.b16 %v4276
    %v6539 = vunpack.c.h.b16 %v4276
    %v6540 = vunpack.c.l.b16 %v4277
    %v6541 = vunpack.c.l.b16 %v4278
    %v6542 = vunpack.c.h.b16 %v4278
    %v6543 = vunpack.c.l.b16 %v4279
    %v6544 = vunpack.c.l.b16 %v4280
    %v6545 = vunpack.c.h.b16 %v4280
    %v6546 = vunpack.c.l.b16 %v4281
    %v6547 = vunpack.c.l.b16 %v4282
    %v6548 = vunpack.c.h.b16 %v4282
    %v6549 = vunpack.c.l.b16 %v4283
    %v6550 = vunpack.c.l.b16 %v4284
    %v6551 = vunpack.c.h.b16 %v4284
    %v6552 = vunpack.c.l.b16 %v4285
    %v6553 = vunpack.c.l.b16 %v4286
    %v6554 = vunpack.c.h.b16 %v4286
    %v6555 = vunpack.c.l.b16 %v4287
    %v6556 = vunpack.c.l.b16 %v4288
    %v6557 = vunpack.c.h.b16 %v4288
    %v6558 = vunpack.c.l.b16 %v4289
    %v6559 = vunpack.c.l.b16 %v4290
    %v6560 = vunpack.c.h.b16 %v4290
    %v6561 = vunpack.c.l.b16 %v4291
    %v6562 = vunpack.c.l.b16 %v4292
    %v6563 = vunpack.c.h.b16 %v4292
    %v6564 = vunpack.c.l.b16 %v4293
    %v6565 = vunpack.c.l.b16 %v4294
    %v6566 = vunpack.c.h.b16 %v4294
    %v6567 = vunpack.c.l.b16 %v4295
    %v6568 = vunpack.c.l.b16 %v4296
    %v6569 = vunpack.c.h.b16 %v4296
    %v6570 = vunpack.c.l.b16 %v4297
    %v6571 = vunpack.c.l.b16 %v4298
    %v6572 = vunpack.c.h.b16 %v4298
    %v6573 = vunpack.c.l.b16 %v4299
    %v6574 = vunpack.c.l.b16 %v4300
    %v6575 = vunpack.c.h.b16 %v4300
    %v6576 = vunpack.c.l.b16 %v4301
    %v6577 = vunpack.c.l.b16 %v4302
    %v6578 = vunpack.c.h.b16 %v4302
    %v6579 = vunpack.c.l.b16 %v4303
    %v6580 = vunpack.c.l.b16 %v4304
    %v6581 = vunpack.c.h.b16 %v4304
    %v6582 = vunpack.c.l.b16 %v4305
    %v6583 = vunpack.c.l.b16 %v4306
    %v6584 = vunpack.c.h.b16 %v4306
    %v6585 = vunpack.c.l.b16 %v4307
    %v6586 = vunpack.c.l.b16 %v4308
    %v6587 = vunpack.c.h.b16 %v4308
    %v6588 = vunpack.c.l.b16 %v4309
    %v6589 = vunpack.c.l.b16 %v4310
    %v6590 = vunpack.c.h.b16 %v4310
    %v6591 = vunpack.c.l.b16 %v4311
    %v6592 = vunpack.c.l.b16 %v4312
    %v6593 = vunpack.c.h.b16 %v4312
    %v6594 = vunpack.c.l.b16 %v4313
    %v6595 = vunpack.c.l.b16 %v4314
    %v6596 = vunpack.c.h.b16 %v4314
    %v6597 = vunpack.c.l.b16 %v4315
    %v6598 = vunpack.c.l.b16 %v4316
    %v6599 = vunpack.c.h.b16 %v4316
    %v6600 = vunpack.c.l.b16 %v4317
    %v6601 = vunpack.c.l.b16 %v4318
    %v6602 = vunpack.c.h.b16 %v4318
    %v6603 = vunpack.c.l.b16 %v4319
    %v6604 = vunpack.c.l.b16 %v4320
    %v6605 = vunpack.c.h.b16 %v4320
    %v6606 = vunpack.c.l.b16 %v4321
    %v6607 = vunpack.c.l.b16 %v4322
    %v6608 = vunpack.c.h.b16 %v4322
    %v6609 = vunpack.c.l.b16 %v4323
    %v6610 = vunpack.c.l.b16 %v4324
    %v6611 = vunpack.c.h.b16 %v4324
    %v6612 = vunpack.c.l.b16 %v4325
    %v6613 = vunpack.c.l.b16 %v4326
    %v6614 = vunpack.c.h.b16 %v4326
    %v6615 = vunpack.c.l.b16 %v4327
    %v6616 = vunpack.c.l.b16 %v4328
    %v6617 = vunpack.c.h.b16 %v4328
    %v6618 = vunpack.c.l.b16 %v4329
    %v6619 = vunpack.c.l.b16 %v4330
    %v6620 = vunpack.c.h.b16 %v4330
    %v6621 = vunpack.c.l.b16 %v4331
    %v6622 = vunpack.c.l.b16 %v4332
    %v6623 = vunpack.c.h.b16 %v4332
    %v6624 = vunpack.c.l.b16 %v4333
    %v6625 = vunpack.c.l.b16 %v4334
    %v6626 = vunpack.c.h.b16 %v4334
    %v6627 = vunpack.c.l.b16 %v4335
    %v6628 = vunpack.c.l.b16 %v4336
    %v6629 = vunpack.c.h.b16 %v4336
    %v6630 = vunpack.c.l.b16 %v4337
    %v6631 = vunpack.c.l.b16 %v4338
    %v6632 = vunpack.c.h.b16 %v4338
    %v6633 = vunpack.c.l.b16 %v4339
    %v6634 = vunpack.c.l.b16 %v4340
    %v6635 = vunpack.c.h.b16 %v4340
    %v6636 = vunpack.c.l.b16 %v4341
    %v6637 = vunpack.c.l.b16 %v4342
    %v6638 = vunpack.c.h.b16 %v4342
    %v6639 = vunpack.c.l.b16 %v4343
    %v6640 = vunpack.c.l.b16 %v4344
    %v6641 = vunpack.c.h.b16 %v4344
    %v6642 = vunpack.c.l.b16 %v4345
    %v6643 = vunpack.c.l.b16 %v4346
    %v6644 = vunpack.c.h.b16 %v4346
    %v6645 = vunpack.c.l.b16 %v4347
    %v6646 = vunpack.c.l.b16 %v4348
    %v6647 = vunpack.c.h.b16 %v4348
    %v6648 = vunpack.c.l.b16 %v4349
    %v6649 = vunpack.c.l.b16 %v4350
    %v6650 = vunpack.c.h.b16 %v4350
    %v6651 = vunpack.c.l.b16 %v4351
    %v6652 = vunpack.c.l.b16 %v4352
    %v6653 = vunpack.c.h.b16 %v4352
    %v6654 = vunpack.c.l.b16 %v4353
    %v6655 = vunpack.c.l.b16 %v4354
    %v6656 = vunpack.c.h.b16 %v4354
    %v6657 = vunpack.c.l.b16 %v4355
    %v6658 = vunpack.c.l.b16 %v4356
    %v6659 = vunpack.c.h.b16 %v4356
    %v6660 = vunpack.c.l.b16 %v4357
    %v6661 = vunpack.c.l.b16 %v4358
    %v6662 = vunpack.c.h.b16 %v4358
    %v6663 = vunpack.c.l.b16 %v4359
    %v6664 = vunpack.c.l.b16 %v4360
    %v6665 = vunpack.c.h.b16 %v4360
    %v6666 = vunpack.c.l.b16 %v4361
    %v6667 = vunpack.c.l.b16 %v4362
    %v6668 = vunpack.c.h.b16 %v4362
    %v6669 = vunpack.c.l.b16 %v4363
    %v6670 = vunpack.c.l.b16 %v4364
    %v6671 = vunpack.c.h.b16 %v4364
    %v6672 = vunpack.c.l.b16 %v4365
    %v6673 = vunpack.c.l.b16 %v4366
    %v6674 = vunpack.c.h.b16 %v4366
    %v6675 = vunpack.c.l.b16 %v4367
    %v6676 = vunpack.c.l.b16 %v4368
    %v6677 = vunpack.c.h.b16 %v4368
    %v6678 = vunpack.c.l.b16 %v4369
    %v6679 = vunpack.c.l.b16 %v4370
    %v6680 = vunpack.c.h.b16 %v4370
    %v6681 = vunpack.c.l.b16 %v4371
    %v6682 = vunpack.c.l.b16 %v4372
    %v6683 = vunpack.c.h.b16 %v4372
    %v6684 = vunpack.c.l.b16 %v4373
    %v6685 = vunpack.c.l.b16 %v4374
    %v6686 = vunpack.c.h.b16 %v4374
    %v6687 = vunpack.c.l.b16 %v4375
    %v6688 = vunpack.c.l.b16 %v4376
    %v6689 = vunpack.c.h.b16 %v4376
    %v6690 = vunpack.c.l.b16 %v4377
    %v6691 = vunpack.c.l.b16 %v4378
    %v6692 = vunpack.c.h.b16 %v4378
    %v6693 = vunpack.c.l.b16 %v4379
    %v6694 = vunpack.c.l.b16 %v4380
    %v6695 = vunpack.c.h.b16 %v4380
    %v6696 = vunpack.c.l.b16 %v4381
    %v6697 = vunpack.c.l.b16 %v4382
    %v6698 = vunpack.c.h.b16 %v4382
    %v6699 = vunpack.c.l.b16 %v4383
    %v6700 = vunpack.c.l.b16 %v4384
    %v6701 = vunpack.c.h.b16 %v4384
    %v6702 = vunpack.c.l.b16 %v4385
    %v6703 = vunpack.c.l.b16 %v4386
    %v6704 = vunpack.c.h.b16 %v4386
    %v6705 = vunpack.c.l.b16 %v4387
    %v6706 = vunpack.c.l.b16 %v4388
    %v6707 = vunpack.c.h.b16 %v4388
    %v6708 = vunpack.c.l.b16 %v4389
    %v6709 = vunpack.c.l.b16 %v4390
    %v6710 = vunpack.c.h.b16 %v4390
    %v6711 = vunpack.c.l.b16 %v4391
    %v6712 = vunpack.c.l.b16 %v4392
    %v6713 = vunpack.c.h.b16 %v4392
    %v6714 = vunpack.c.l.b16 %v4393
    %v6715 = vunpack.c.l.b16 %v4394
    %v6716 = vunpack.c.h.b16 %v4394
    %v6717 = vunpack.c.l.b16 %v4395
    %v6718 = vunpack.c.l.b16 %v4396
    %v6719 = vunpack.c.h.b16 %v4396
    %v6720 = vunpack.c.l.b16 %v4397
    %v6721 = vunpack.c.l.b16 %v4398
    %v6722 = vunpack.c.h.b16 %v4398
    %v6723 = vunpack.c.l.b16 %v4399
    %v6724 = vunpack.c.l.b16 %v4400
    %v6725 = vunpack.c.h.b16 %v4400
    %v6726 = vunpack.c.l.b16 %v4401
    %v6727 = vunpack.c.l.b16 %v4402
    %v6728 = vunpack.c.h.b16 %v4402
    %v6729 = vunpack.c.l.b16 %v4403
    %v6730 = vunpack.c.l.b16 %v4404
    %v6731 = vunpack.c.h.b16 %v4404
    %v6732 = vunpack.c.l.b16 %v4405
    %v6733 = vunpack.c.l.b16 %v4406
    %v6734 = vunpack.c.h.b16 %v4406
    %v6735 = vunpack.c.l.b16 %v4407
    %v6736 = vunpack.c.l.b16 %v4408
    %v6737 = vunpack.c.h.b16 %v4408
    %v6738 = vunpack.c.l.b16 %v4409
    %v6739 = vunpack.c.l.b16 %v4410
    %v6740 = vunpack.c.h.b16 %v4410
    %v6741 = vunpack.c.l.b16 %v4411
    %v6742 = vunpack.c.l.b16 %v4412
    %v6743 = vunpack.c.h.b16 %v4412
    %v6744 = vunpack.c.l.b16 %v4413
    %v6745 = vunpack.c.l.b16 %v4414
    %v6746 = vunpack.c.h.b16 %v4414
    %v6747 = vunpack.c.l.b16 %v4415
    %v6748 = vunpack.c.l.b16 %v4416
    %v6749 = vunpack.c.h.b16 %v4416
    %v6750 = vunpack.c.l.b16 %v4417
    %v6751 = vunpack.c.l.b16 %v4418
    %v6752 = vunpack.c.h.b16 %v4418
    %v6753 = vunpack.c.l.b16 %v4419
    %v6754 = vunpack.c.l.b16 %v4420
    %v6755 = vunpack.c.h.b16 %v4420
    %v6756 = vunpack.c.l.b16 %v4421
    %v6757 = vunpack.c.l.b16 %v4422
    %v6758 = vunpack.c.h.b16 %v4422
    %v6759 = vunpack.c.l.b16 %v4423
    %v6760 = vunpack.c.l.b16 %v4424
    %v6761 = vunpack.c.h.b16 %v4424
    %v6762 = vunpack.c.l.b16 %v4425
    %v6763 = vunpack.c.l.b16 %v4426
    %v6764 = vunpack.c.h.b16 %v4426
    %v6765 = vunpack.c.l.b16 %v4427
    %v6766 = vunpack.c.l.b16 %v4428
    %v6767 = vunpack.c.h.b16 %v4428
    %v6768 = vunpack.c.l.b16 %v4429
    %v6769 = vunpack.c.l.b16 %v4430
    %v6770 = vunpack.c.h.b16 %v4430
    %v6771 = vunpack.c.l.b16 %v4431
    %v6772 = vunpack.c.l.b16 %v4432
    %v6773 = vunpack.c.h.b16 %v4432
    %v6774 = vunpack.c.l.b16 %v4433
    %v6775 = vunpack.c.l.b16 %v4434
    %v6776 = vunpack.c.h.b16 %v4434
    %v6777 = vunpack.c.l.b16 %v4435
    %v6778 = vunpack.c.l.b16 %v4436
    %v6779 = vunpack.c.h.b16 %v4436
    %v6780 = vunpack.c.l.b16 %v4437
    %v6781 = vunpack.c.l.b16 %v4438
    %v6782 = vunpack.c.h.b16 %v4438
    %v6783 = vunpack.c.l.b16 %v4439
    %v6784 = vunpack.c.l.b16 %v4440
    %v6785 = vunpack.c.h.b16 %v4440
    %v6786 = vunpack.c.l.b16 %v4441
    %v6787 = vunpack.c.l.b16 %v4442
    %v6788 = vunpack.c.h.b16 %v4442
    %v6789 = vunpack.c.l.b16 %v4443
    %v6790 = vunpack.c.l.b16 %v4444
    %v6791 = vunpack.c.h.b16 %v4444
    %v6792 = vunpack.c.l.b16 %v4445
    %v6793 = vunpack.c.l.b16 %v4446
    %v6794 = vunpack.c.h.b16 %v4446
    %v6795 = vunpack.c.l.b16 %v4447
    %v6796 = vunpack.c.l.b16 %v4448
    %v6797 = vunpack.c.h.b16 %v4448
    %v6798 = vunpack.c.l.b16 %v4449
    %v6799 = vunpack.c.l.b16 %v4450
    %v6800 = vunpack.c.h.b16 %v4450
    %v6801 = vunpack.c.l.b16 %v4451
    %v6802 = vunpack.c.l.b16 %v4452
    %v6803 = vunpack.c.h.b16 %v4452
    %v6804 = vunpack.c.l.b16 %v4453
    %v6805 = vunpack.c.l.b16 %v4454
    %v6806 = vunpack.c.h.b16 %v4454
    %v6807 = vunpack.c.l.b16 %v4455
    %v6808 = vunpack.c.l.b16 %v4456
    %v6809 = vunpack.c.h.b16 %v4456
    %v6810 = vunpack.c.l.b16 %v4457
    %v6811 = vunpack.c.l.b16 %v4458
    %v6812 = vunpack.c.h.b16 %v4458
    %v6813 = vunpack.c.l.b16 %v4459
    %v6814 = vunpack.c.l.b16 %v4460
    %v6815 = vunpack.c.h.b16 %v4460
    %v6816 = vunpack.c.l.b16 %v4461
    %v6817 = vunpack.c.l.b16 %v4462
    %v6818 = vunpack.c.h.b16 %v4462
    %v6819 = vunpack.c.l.b16 %v4463
    %v6820 = vunpack.c.l.b16 %v4464
    %v6821 = vunpack.c.h.b16 %v4464
    %v6822 = vunpack.c.l.b16 %v4465
    %v6823 = vunpack.c.l.b16 %v4466
    %v6824 = vunpack.c.h.b16 %v4466
    %v6825 = vunpack.c.l.b16 %v4467
    %v6826 = vunpack.c.l.b16 %v4468
    %v6827 = vunpack.c.h.b16 %v4468
    %v6828 = vunpack.c.l.b16 %v4469
    %v6829 = vunpack.c.l.b16 %v4470
    %v6830 = vunpack.c.h.b16 %v4470
    %v6831 = vunpack.c.l.b16 %v4471
    %v6832 = vunpack.c.l.b16 %v4472
    %v6833 = vunpack.c.h.b16 %v4472
    %v6834 = vunpack.c.l.b16 %v4473
    %v6835 = vunpack.c.l.b16 %v4474
    %v6836 = vunpack.c.h.b16 %v4474
    %v6837 = vunpack.c.l.b16 %v4475
    %v6838 = vunpack.c.l.b16 %v4476
    %v6839 = vunpack.c.h.b16 %v4476
    %v6840 = vunpack.c.l.b16 %v4477
    %v6841 = vunpack.c.l.b16 %v4478
    %v6842 = vunpack.c.h.b16 %v4478
    %v6843 = vunpack.c.l.b16 %v4479
    %v6844 = vunpack.c.l.b16 %v4480
    %v6845 = vunpack.c.h.b16 %v4480
    %v6846 = vunpack.c.l.b16 %v4481
    %v6847 = vunpack.c.l.b16 %v4482
    %v6848 = vunpack.c.h.b16 %v4482
    %v6849 = vunpack.c.l.b16 %v4483
    %v6850 = vunpack.c.l.b16 %v4484
    %v6851 = vunpack.c.h.b16 %v4484
    %v6852 = vunpack.c.l.b16 %v4485
    %v6853 = vunpack.c.l.b16 %v4486
    %v6854 = vunpack.c.h.b16 %v4486
    %v6855 = vunpack.c.l.b16 %v4487
    %v6856 = vunpack.c.l.b16 %v4488
    %v6857 = vunpack.c.h.b16 %v4488
    %v6858 = vunpack.c.l.b16 %v4489
    %v6859 = vunpack.c.l.b16 %v4490
    %v6860 = vunpack.c.h.b16 %v4490
    %v6861 = vunpack.c.l.b16 %v4491
    %v6862 = vunpack.c.l.b16 %v4492
    %v6863 = vunpack.c.h.b16 %v4492
    %v6864 = vunpack.c.l.b16 %v4493
    %v6865 = vunpack.c.l.b16 %v4494
    %v6866 = vunpack.c.h.b16 %v4494
    %v6867 = vunpack.c.l.b16 %v4495
    %v6868 = vunpack.c.l.b16 %v4496
    %v6869 = vunpack.c.h.b16 %v4496
    %v6870 = vunpack.c.l.b16 %v4497
    %v6871 = vunpack.c.l.b16 %v4498
    %v6872 = vunpack.c.h.b16 %v4498
    %v6873 = vunpack.c.l.b16 %v4499
    %v6874 = vunpack.c.l.b16 %v4500
    %v6875 = vunpack.c.h.b16 %v4500
    %v6876 = vunpack.c.l.b16 %v4501
    %v6877 = vunpack.c.l.b16 %v4502
    %v6878 = vunpack.c.h.b16 %v4502
    %v6879 = vunpack.c.l.b16 %v4503
    %v6880 = vunpack.c.l.b16 %v4504
    %v6881 = vunpack.c.h.b16 %v4504
    %v6882 = vunpack.c.l.b16 %v4505
    %v6883 = vunpack.c.l.b16 %v4506
    %v6884 = vunpack.c.h.b16 %v4506
    %v6885 = vunpack.c.l.b16 %v4507
    %v6886 = vunpack.c.l.b16 %v4508
    %v6887 = vunpack.c.h.b16 %v4508
    %v6888 = vunpack.c.l.b16 %v4509
    %v6889 = vunpack.c.l.b16 %v4510
    %v6890 = vunpack.c.h.b16 %v4510
    %v6891 = vunpack.c.l.b16 %v4511
    %v6892 = vunpack.c.l.b16 %v4512
    %v6893 = vunpack.c.h.b16 %v4512
    %v6894 = vunpack.c.l.b16 %v4513
    %v6895 = vunpack.c.l.b16 %v4514
    %v6896 = vunpack.c.h.b16 %v4514
    %v6897 = vunpack.c.l.b16 %v4515
    %v6898 = vunpack.c.l.b16 %v4516
    %v6899 = vunpack.c.h.b16 %v4516
    %v6900 = vunpack.c.l.b16 %v4517
    %v6901 = vunpack.c.l.b16 %v4518
    %v6902 = vunpack.c.h.b16 %v4518
    %v6903 = vunpack.c.l.b16 %v4519
    %v6904 = vunpack.c.l.b16 %v4520
    %v6905 = vunpack.c.h.b16 %v4520
    %v6906 = vunpack.c.l.b16 %v4521
    %v6907 = vunpack.c.l.b16 %v4522
    %v6908 = vunpack.c.h.b16 %v4522
    %v6909 = vunpack.c.l.b16 %v4523
    %v6910 = vunpack.c.l.b16 %v4524
    %v6911 = vunpack.c.h.b16 %v4524
    %v6912 = vunpack.c.l.b16 %v4525
    %v6913 = vunpack.c.l.b16 %v4526
    %v6914 = vunpack.c.h.b16 %v4526
    %v6915 = vunpack.c.l.b16 %v4527
    %v6916 = vunpack.c.l.b16 %v4528
    %v6917 = vunpack.c.h.b16 %v4528
    %v6918 = vunpack.c.l.b16 %v4529
    %v6919 = vunpack.c.l.b16 %v4530
    %v6920 = vunpack.c.h.b16 %v4530
    %v6921 = vunpack.c.l.b16 %v4531
    %v6922 = vunpack.c.l.b16 %v4532
    %v6923 = vunpack.c.h.b16 %v4532
    %v6924 = vunpack.c.l.b16 %v4533
    %v6925 = vunpack.c.l.b16 %v4534
    %v6926 = vunpack.c.h.b16 %v4534
    %v6927 = vunpack.c.l.b16 %v4535
    %v6928 = vunpack.c.l.b16 %v4536
    %v6929 = vunpack.c.h.b16 %v4536
    %v6930 = vunpack.c.l.b16 %v4537
    %v6931 = vunpack.c.l.b16 %v4538
    %v6932 = vunpack.c.h.b16 %v4538
    %v6933 = vunpack.c.l.b16 %v4539
    %v6934 = vunpack.c.l.b16 %v4540
    %v6935 = vunpack.c.h.b16 %v4540
    %v6936 = vunpack.c.l.b16 %v4541
    %v6937 = vunpack.c.l.b16 %v4542
    %v6938 = vunpack.c.h.b16 %v4542
    %v6939 = vunpack.c.l.b16 %v4543
    %v6940 = vunpack.c.l.b16 %v4544
    %v6941 = vunpack.c.h.b16 %v4544
    %v6942 = vunpack.c.l.b16 %v4545
    %v6943 = vunpack.c.l.b16 %v4546
    %v6944 = vunpack.c.h.b16 %v4546
    %v6945 = vunpack.c.l.b16 %v4547
    %v6946 = vunpack.c.l.b16 %v4548
    %v6947 = vunpack.c.h.b16 %v4548
    %v6948 = vunpack.c.l.b16 %v4549
    %v6949 = vunpack.c.l.b16 %v4550
    %v6950 = vunpack.c.h.b16 %v4550
    %v6951 = vunpack.c.l.b16 %v4551
    %v6952 = vunpack.c.l.b16 %v4552
    %v6953 = vunpack.c.h.b16 %v4552
    %v6954 = vunpack.c.l.b16 %v4553
    %v6955 = vunpack.c.l.b16 %v4554
    %v6956 = vunpack.c.h.b16 %v4554
    %v6957 = vunpack.c.l.b16 %v4555
    %v6958 = vunpack.c.l.b16 %v4556
    %v6959 = vunpack.c.h.b16 %v4556
    %v6960 = vunpack.c.l.b16 %v4557
    %v6961 = vunpack.c.l.b16 %v4558
    %v6962 = vunpack.c.h.b16 %v4558
    %v6963 = vunpack.c.l.b16 %v4559
    %v6964 = vunpack.c.l.b16 %v4560
    %v6965 = vunpack.c.h.b16 %v4560
    %v6966 = vunpack.c.l.b16 %v4561
    %v6967 = vunpack.c.l.b16 %v4562
    %v6968 = vunpack.c.h.b16 %v4562
    %v6969 = vunpack.c.l.b16 %v4563
    %v6970 = vunpack.c.l.b16 %v4564
    %v6971 = vunpack.c.h.b16 %v4564
    %v6972 = vunpack.c.l.b16 %v4565
    %v6973 = vunpack.c.l.b16 %v4566
    %v6974 = vunpack.c.h.b16 %v4566
    %v6975 = vunpack.c.l.b16 %v4567
    %v6976 = vunpack.c.l.b16 %v4568
    %v6977 = vunpack.c.h.b16 %v4568
    %v6978 = vunpack.c.l.b16 %v4569
    %v6979 = vunpack.c.l.b16 %v4570
    %v6980 = vunpack.c.h.b16 %v4570
    %v6981 = vunpack.c.l.b16 %v4571
    %v6982 = vunpack.c.l.b16 %v4572
    %v6983 = vunpack.c.h.b16 %v4572
    %v6984 = vunpack.c.l.b16 %v4573
    %v6985 = vunpack.c.l.b16 %v4574
    %v6986 = vunpack.c.h.b16 %v4574
    %v6987 = vunpack.c.l.b16 %v4575
    %v6988 = vunpack.c.l.b16 %v4576
    %v6989 = vunpack.c.h.b16 %v4576
    %v6990 = vunpack.c.l.b16 %v4577
    %v6991 = vunpack.c.l.b16 %v4578
    %v6992 = vunpack.c.h.b16 %v4578
    %v6993 = vunpack.c.l.b16 %v4579
    %v6994 = vunpack.c.l.b16 %v4580
    %v6995 = vunpack.c.h.b16 %v4580
    %v6996 = vunpack.c.l.b16 %v4581
    %v6997 = vunpack.c.l.b16 %v4582
    %v6998 = vunpack.c.h.b16 %v4582
    %v6999 = vunpack.c.l.b16 %v4583
    %v7000 = vunpack.c.l.b16 %v4584
    %v7001 = vunpack.c.h.b16 %v4584
    %v7002 = vunpack.c.l.b16 %v4585
    %v7003 = vunpack.c.l.b16 %v4586
    %v7004 = vunpack.c.h.b16 %v4586
    %v7005 = vunpack.c.l.b16 %v4587
    %v7006 = vunpack.c.l.b16 %v4588
    %v7007 = vunpack.c.h.b16 %v4588
    %v7008 = vunpack.c.l.b16 %v4589
    %v7009 = vunpack.c.l.b16 %v4590
    %v7010 = vunpack.c.h.b16 %v4590
    %v7011 = vunpack.c.l.b16 %v4591
    %v7012 = vunpack.c.l.b16 %v4592
    %v7013 = vunpack.c.h.b16 %v4592
    %v7014 = vunpack.c.l.b16 %v4593
    %v7015 = vunpack.c.l.b16 %v4594
    %v7016 = vunpack.c.h.b16 %v4594
    %v7017 = vunpack.c.l.b16 %v4595
    %v7018 = vunpack.c.l.b16 %v4596
    %v7019 = vunpack.c.h.b16 %v4596
    %v7020 = vunpack.c.l.b16 %v4597
    %v7021 = vunpack.c.l.b16 %v4598
    %v7022 = vunpack.c.h.b16 %v4598
    %v7023 = vunpack.c.l.b16 %v4599
    %v7024 = vunpack.c.l.b16 %v4600
    %v7025 = vunpack.c.h.b16 %v4600
    %v7026 = vunpack.c.l.b16 %v4601
    %v7027 = vunpack.c.l.b16 %v4602
    %v7028 = vunpack.c.h.b16 %v4602
    %v7029 = vunpack.c.l.b16 %v4603
    %v7030 = vunpack.c.l.b16 %v4604
    %v7031 = vunpack.c.h.b16 %v4604
    %v7032 = vunpack.c.l.b16 %v4605
    %v7033 = vunpack.c.l.b16 %v4606
    %v7034 = vunpack.c.h.b16 %v4606
    %v7035 = vunpack.c.l.b16 %v4607
    %v7036 = vunpack.c.l.b16 %v4608
    %v7037 = vunpack.c.h.b16 %v4608
    %v7038 = vunpack.c.l.b16 %v4609
    %v7039 = vunpack.c.l.b16 %v4610
    %v7040 = vunpack.c.h.b16 %v4610
    %v7041 = vunpack.c.l.b16 %v4611
    %v7042 = vunpack.c.l.b16 %v4612
    %v7043 = vunpack.c.h.b16 %v4612
    %v7044 = vunpack.c.l.b16 %v4613
    %v7045 = vunpack.c.l.b16 %v4614
    %v7046 = vunpack.c.h.b16 %v4614
    %v7047 = vunpack.c.l.b16 %v4615
    %v7048 = vunpack.c.l.b16 %v4616
    %v7049 = vunpack.c.h.b16 %v4616
    %v7050 = vunpack.c.l.b16 %v4617
    %v7051 = vunpack.c.l.b16 %v4618
    %v7052 = vunpack.c.h.b16 %v4618
    %v7053 = vunpack.c.l.b16 %v4619
    %v7054 = vunpack.c.l.b16 %v4620
    %v7055 = vunpack.c.h.b16 %v4620
    %v7056 = vunpack.c.l.b16 %v4621
    %v7057 = vunpack.c.l.b16 %v4622
    %v7058 = vunpack.c.h.b16 %v4622
    %v7059 = vunpack.c.l.b16 %v4623
    %v7060 = vunpack.c.l.b16 %v4624
    %v7061 = vunpack.c.h.b16 %v4624
    %v7062 = vunpack.c.l.b16 %v4625
    %v7063 = vunpack.c.l.b16 %v4626
    %v7064 = vunpack.c.h.b16 %v4626
    %v7065 = vunpack.c.l.b16 %v4627
    %v7066 = vunpack.c.l.b16 %v4628
    %v7067 = vunpack.c.h.b16 %v4628
    %v7068 = vunpack.c.l.b16 %v4629
    %v7069 = vunpack.c.l.b16 %v4630
    %v7070 = vunpack.c.h.b16 %v4630
    %v7071 = vunpack.c.l.b16 %v4631
    %v7072 = vunpack.c.l.b16 %v4632
    %v7073 = vunpack.c.h.b16 %v4632
    %v7074 = vunpack.c.l.b16 %v4633
    %v7075 = vunpack.c.l.b16 %v4634
    %v7076 = vunpack.c.h.b16 %v4634
    %v7077 = vunpack.c.l.b16 %v4635
    %v7078 = vunpack.c.l.b16 %v4636
    %v7079 = vunpack.c.h.b16 %v4636
    %v7080 = vunpack.c.l.b16 %v4637
    %v7081 = vunpack.c.l.b16 %v4638
    %v7082 = vunpack.c.h.b16 %v4638
    %v7083 = vunpack.c.l.b16 %v4639
    %v7084 = vunpack.c.l.b16 %v4640
    %v7085 = vunpack.c.h.b16 %v4640
    %v7086 = vunpack.c.l.b16 %v4641
    %v7087 = vunpack.c.l.b16 %v4642
    %v7088 = vunpack.c.h.b16 %v4642
    %v7089 = vunpack.c.l.b16 %v4643
    %v7090 = vunpack.c.l.b16 %v4644
    %v7091 = vunpack.c.h.b16 %v4644
    %v7092 = vunpack.c.l.b16 %v4645
    %v7093 = vunpack.c.l.b16 %v4646
    %v7094 = vunpack.c.h.b16 %v4646
    %v7095 = vunpack.c.l.b16 %v4647
    %v7096 = vunpack.c.l.b16 %v4648
    %v7097 = vunpack.c.h.b16 %v4648
    %v7098 = vunpack.c.l.b16 %v4649
    %v7099 = vunpack.c.l.b16 %v4650
    %v7100 = vunpack.c.h.b16 %v4650
    %v7101 = vunpack.c.l.b16 %v4651
    %v7102 = vunpack.c.l.b16 %v4652
    %v7103 = vunpack.c.h.b16 %v4652
    %v7104 = vunpack.c.l.b16 %v4653
    %v7105 = vunpack.c.l.b16 %v4654
    %v7106 = vunpack.c.h.b16 %v4654
    %v7107 = vunpack.c.l.b16 %v4655
    %v7108 = vunpack.c.l.b16 %v4656
    %v7109 = vunpack.c.h.b16 %v4656
    %v7110 = vunpack.c.l.b16 %v4657
    %v7111 = vunpack.c.l.b16 %v4658
    %v7112 = vunpack.c.h.b16 %v4658
    %v7113 = vunpack.c.l.b16 %v4659
    %v7114 = vunpack.c.l.b16 %v4660
    %v7115 = vunpack.c.h.b16 %v4660
    %v7116 = vunpack.c.l.b16 %v4661
    %v7117 = vunpack.c.l.b16 %v4662
    %v7118 = vunpack.c.h.b16 %v4662
    %v7119 = vunpack.c.l.b16 %v4663
    %v7120 = vunpack.c.l.b16 %v4664
    %v7121 = vunpack.c.h.b16 %v4664
    %v7122 = vunpack.c.l.b16 %v4665
    %v7123 = vunpack.c.l.b16 %v4666
    %v7124 = vunpack.c.h.b16 %v4666
    %v7125 = vunpack.c.l.b16 %v4667
    %v7126 = vunpack.c.l.b16 %v4668
    %v7127 = vunpack.c.h.b16 %v4668
    %v7128 = vunpack.c.l.b16 %v4669
    %v7129 = vunpack.c.l.b16 %v4670
    %v7130 = vunpack.c.h.b16 %v4670
    %v7131 = vunpack.c.l.b16 %v4671
    %v7132 = vunpack.c.l.b16 %v4672
    %v7133 = vunpack.c.h.b16 %v4672
    %v7134 = vunpack.c.l.b16 %v4673
    %v7135 = vunpack.c.l.b16 %v4674
    %v7136 = vunpack.c.h.b16 %v4674
    %v7137 = vunpack.c.l.b16 %v4675
    %v7138 = vunpack.c.l.b16 %v4676
    %v7139 = vunpack.c.h.b16 %v4676
    %v7140 = vunpack.c.l.b16 %v4677
    %v7141 = vunpack.c.l.b16 %v4678
    %v7142 = vunpack.c.h.b16 %v4678
    %v7143 = vunpack.c.l.b16 %v4679
    %v7144 = vunpack.c.l.b16 %v4680
    %v7145 = vunpack.c.h.b16 %v4680
    %v7146 = vunpack.c.l.b16 %v4681
    %v7147 = vunpack.c.l.b16 %v4682
    %v7148 = vunpack.c.h.b16 %v4682
    %v7149 = vunpack.c.l.b16 %v4683
    %v7150 = vunpack.c.l.b16 %v4684
    %v7151 = vunpack.c.h.b16 %v4684
    %v7152 = vunpack.c.l.b16 %v4685
    %v7153 = vunpack.c.l.b16 %v4686
    %v7154 = vunpack.c.h.b16 %v4686
    %v7155 = vunpack.c.l.b16 %v4687
    %v7156 = vunpack.c.l.b16 %v4688
    %v7157 = vunpack.c.h.b16 %v4688
    %v7158 = vunpack.c.l.b16 %v4689
    %v7159 = vunpack.c.l.b16 %v4690
    %v7160 = vunpack.c.h.b16 %v4690
    %v7161 = vunpack.c.l.b16 %v4691
    %v7162 = vunpack.c.l.b16 %v4692
    %v7163 = vunpack.c.h.b16 %v4692
    %v7164 = vunpack.c.l.b16 %v4693
    %v7165 = vunpack.c.l.b16 %v4694
    %v7166 = vunpack.c.h.b16 %v4694
    %v7167 = vunpack.c.l.b16 %v4695
    %v7168 = vunpack.c.l.b16 %v4696
    %v7169 = vunpack.c.h.b16 %v4696
    %v7170 = vunpack.c.l.b16 %v4697
    %v7171 = vunpack.c.l.b16 %v4698
    %v7172 = vunpack.c.h.b16 %v4698
    %v7173 = vunpack.c.l.b16 %v4699
    %v7174 = vunpack.c.l.b16 %v4700
    %v7175 = vunpack.c.h.b16 %v4700
    %v7176 = vunpack.c.l.b16 %v4701
    %v7177 = vunpack.c.l.b16 %v4702
    %v7178 = vunpack.c.h.b16 %v4702
    %v7179 = vunpack.c.l.b16 %v4703
    %v7180 = vunpack.c.l.b16 %v4704
    %v7181 = vunpack.c.h.b16 %v4704
    %v7182 = vunpack.c.l.b16 %v4705
    %v7183 = vunpack.c.l.b16 %v4706
    %v7184 = vunpack.c.h.b16 %v4706
    %v7185 = vunpack.c.l.b16 %v4707
    %v7186 = vunpack.c.l.b16 %v4708
    %v7187 = vunpack.c.h.b16 %v4708
    %v7188 = vunpack.c.l.b16 %v4709
    %v7189 = vunpack.c.l.b16 %v4710
    %v7190 = vunpack.c.h.b16 %v4710
    %v7191 = vunpack.c.l.b16 %v4711
    %v7192 = vunpack.c.l.b16 %v4712
    %v7193 = vunpack.c.h.b16 %v4712
    %v7194 = vunpack.c.l.b16 %v4713
    %v7195 = vunpack.c.l.b16 %v4714
    %v7196 = vunpack.c.h.b16 %v4714
    %v7197 = vunpack.c.l.b16 %v4715
    %v7198 = vunpack.c.l.b16 %v4716
    %v7199 = vunpack.c.h.b16 %v4716
    %v7200 = vunpack.c.l.b16 %v4717
    %v7201 = vunpack.c.l.b16 %v4718
    %v7202 = vunpack.c.h.b16 %v4718
    %v7203 = vunpack.c.l.b16 %v4719
    %v7204 = vunpack.c.l.b16 %v4720
    %v7205 = vunpack.c.h.b16 %v4720
    %v7206 = vunpack.c.l.b16 %v4721
    %v7207 = vunpack.c.l.b16 %v4722
    %v7208 = vunpack.c.h.b16 %v4722
    %v7209 = vunpack.c.l.b16 %v4723
    %v7210 = vunpack.c.l.b16 %v4724
    %v7211 = vunpack.c.h.b16 %v4724
    %v7212 = vunpack.c.l.b16 %v4725
    %v7213 = vunpack.c.l.b16 %v4726
    %v7214 = vunpack.c.h.b16 %v4726
    %v7215 = vunpack.c.l.b16 %v4727
    %v7216 = vunpack.c.l.b16 %v4728
    %v7217 = vunpack.c.h.b16 %v4728
    %v7218 = vunpack.c.l.b16 %v4729
    %v7219 = vunpack.c.l.b16 %v4730
    %v7220 = vunpack.c.h.b16 %v4730
    %v7221 = vunpack.c.l.b16 %v4731
    %v7222 = vunpack.c.l.b16 %v4732
    %v7223 = vunpack.c.h.b16 %v4732
    %v7224 = vunpack.c.l.b16 %v4733
    %v7225 = vunpack.c.l.b16 %v4734
    %v7226 = vunpack.c.h.b16 %v4734
    %v7227 = vunpack.c.l.b16 %v4735
    %v7228 = vunpack.c.l.b16 %v4736
    %v7229 = vunpack.c.h.b16 %v4736
    %v7230 = vunpack.c.l.b16 %v4737
    %v7231 = vunpack.c.l.b16 %v4738
    %v7232 = vunpack.c.h.b16 %v4738
    %v7233 = vunpack.c.l.b16 %v4739
    %v7234 = vunpack.c.l.b16 %v4740
    %v7235 = vunpack.c.h.b16 %v4740
    %v7236 = vunpack.c.l.b16 %v4741
    %v7237 = vunpack.c.l.b16 %v4742
    %v7238 = vunpack.c.h.b16 %v4742
    %v7239 = vunpack.c.l.b16 %v4743
    %v7240 = vunpack.c.l.b16 %v4744
    %v7241 = vunpack.c.h.b16 %v4744
    %v7242 = vunpack.c.l.b16 %v4745
    %v7243 = vunpack.c.l.b16 %v4746
    %v7244 = vunpack.c.h.b16 %v4746
    %v7245 = vunpack.c.l.b16 %v4747
    %v7246 = vunpack.c.l.b16 %v4748
    %v7247 = vunpack.c.h.b16 %v4748
    %v7248 = vunpack.c.l.b16 %v4749
    %v7249 = vunpack.c.l.b16 %v4750
    %v7250 = vunpack.c.h.b16 %v4750
    %v7251 = vunpack.c.l.b16 %v4751
    %v7252 = vunpack.c.l.b16 %v4752
    %v7253 = vunpack.c.h.b16 %v4752
    %v7254 = vunpack.c.l.b16 %v4753
    %v7255 = vunpack.c.l.b16 %v4754
    %v7256 = vunpack.c.h.b16 %v4754
    %v7257 = vunpack.c.l.b16 %v4755
    %v7258 = vunpack.c.l.b16 %v4756
    %v7259 = vunpack.c.h.b16 %v4756
    %v7260 = vunpack.c.l.b16 %v4757
    %v7261 = vunpack.c.l.b16 %v4758
    %v7262 = vunpack.c.h.b16 %v4758
    %v7263 = vunpack.c.l.b16 %v4759
    %v7264 = vunpack.c.l.b16 %v4760
    %v7265 = vunpack.c.h.b16 %v4760
    %v7266 = vunpack.c.l.b16 %v4761
    %v7267 = vunpack.c.l.b16 %v4762
    %v7268 = vunpack.c.h.b16 %v4762
    %v7269 = vunpack.c.l.b16 %v4763
    %v7270 = vunpack.c.l.b16 %v4764
    %v7271 = vunpack.c.h.b16 %v4764
    %v7272 = vunpack.c.l.b16 %v4765
    %v7273 = vunpack.c.l.b16 %v4766
    %v7274 = vunpack.c.h.b16 %v4766
    %v7275 = vunpack.c.l.b16 %v4767
    %v7276 = vunpack.c.l.b16 %v4768
    %v7277 = vunpack.c.h.b16 %v4768
    %v7278 = vunpack.c.l.b16 %v4769
    %v7279 = vunpack.c.l.b16 %v4770
    %v7280 = vunpack.c.h.b16 %v4770
    %v7281 = vunpack.c.l.b16 %v4771
    %v7282 = vunpack.c.l.b16 %v4772
    %v7283 = vunpack.c.h.b16 %v4772
    %v7284 = vunpack.c.l.b16 %v4773
    %v7285 = vunpack.c.l.b16 %v4774
    %v7286 = vunpack.c.h.b16 %v4774
    %v7287 = vunpack.c.l.b16 %v4775
    %v7288 = vunpack.c.l.b16 %v4776
    %v7289 = vunpack.c.h.b16 %v4776
    %v7290 = vunpack.c.l.b16 %v4777
    %v7291 = vunpack.c.l.b16 %v4778
    %v7292 = vunpack.c.h.b16 %v4778
    %v7293 = vunpack.c.l.b16 %v4779
    %v7294 = vunpack.c.l.b16 %v4780
    %v7295 = vunpack.c.h.b16 %v4780
    %v7296 = vunpack.c.l.b16 %v4781
    %v7297 = vunpack.c.l.b16 %v4782
    %v7298 = vunpack.c.h.b16 %v4782
    %v7299 = vunpack.c.l.b16 %v4783
    %v7300 = vunpack.c.l.b16 %v4784
    %v7301 = vunpack.c.h.b16 %v4784
    %v7302 = vunpack.c.l.b16 %v4785
    %v7303 = vunpack.c.l.b16 %v4786
    %v7304 = vunpack.c.h.b16 %v4786
    %v7305 = vunpack.c.l.b16 %v4787
    %v7306 = vunpack.c.l.b16 %v4788
    %v7307 = vunpack.c.h.b16 %v4788
    %v7308 = vunpack.c.l.b16 %v4789
    %v7309 = vunpack.c.l.b16 %v4790
    %v7310 = vunpack.c.h.b16 %v4790
    %v7311 = vunpack.c.l.b16 %v4791
    %v7312 = vunpack.c.l.b16 %v4792
    %v7313 = vunpack.c.h.b16 %v4792
    %v7314 = vunpack.c.l.b16 %v4793
    %v7315 = vunpack.c.l.b16 %v4794
    %v7316 = vunpack.c.h.b16 %v4794
    %v7317 = vunpack.c.l.b16 %v4795
    %v7318 = vunpack.c.l.b16 %v4796
    %v7319 = vunpack.c.h.b16 %v4796
    %v7320 = vunpack.c.l.b16 %v4797
    %v7321 = vunpack.c.l.b16 %v4798
    %v7322 = vunpack.c.h.b16 %v4798
    %v7323 = vunpack.c.l.b16 %v4799
    %v7324 = vunpack.c.l.b16 %v4800
    %v7325 = vunpack.c.h.b16 %v4800
    %v7326 = vunpack.c.l.b16 %v4801
    %v7327 = vunpack.c.l.b16 %v4802
    %v7328 = vunpack.c.h.b16 %v4802
    %v7329 = vunpack.c.l.b16 %v4803
    %v7330 = vunpack.c.l.b16 %v4804
    %v7331 = vunpack.c.h.b16 %v4804
    %v7332 = vunpack.c.l.b16 %v4805
    %v7333 = vunpack.c.l.b16 %v4806
    %v7334 = vunpack.c.h.b16 %v4806
    %v7335 = vunpack.c.l.b16 %v4807
    %v7336 = vunpack.c.l.b16 %v4808
    %v7337 = vunpack.c.h.b16 %v4808
    %v7338 = vunpack.c.l.b16 %v4809
    %v7339 = vunpack.c.l.b16 %v4810
    %v7340 = vunpack.c.h.b16 %v4810
    %v7341 = vunpack.c.l.b16 %v4811
    %v7342 = vunpack.c.l.b16 %v4812
    %v7343 = vunpack.c.h.b16 %v4812
    %v7344 = vunpack.c.l.b16 %v4813
    %v7345 = vunpack.c.l.b16 %v4814
    %v7346 = vunpack.c.h.b16 %v4814
    %v7347 = vunpack.c.l.b16 %v4815
    %v7348 = vunpack.c.l.b16 %v4816
    %v7349 = vunpack.c.h.b16 %v4816
    %v7350 = vunpack.c.l.b16 %v4817
    %v7351 = vunpack.c.l.b16 %v4818
    %v7352 = vunpack.c.h.b16 %v4818
    %v7353 = vunpack.c.l.b16 %v4819
    %v7354 = vunpack.c.l.b16 %v4820
    %v7355 = vunpack.c.h.b16 %v4820
    %v7356 = vunpack.c.l.b16 %v4821
    %v7357 = vunpack.c.l.b16 %v4822
    %v7358 = vunpack.c.h.b16 %v4822
    %v7359 = vunpack.c.l.b16 %v4823
    %v7360 = vunpack.c.l.b16 %v4824
    %v7361 = vunpack.c.h.b16 %v4824
    %v7362 = vunpack.c.l.b16 %v4825
    %v7363 = vunpack.c.l.b16 %v4826
    %v7364 = vunpack.c.h.b16 %v4826
    %v7365 = vunpack.c.l.b16 %v4827
    %v7366 = vunpack.c.l.b16 %v4828
    %v7367 = vunpack.c.h.b16 %v4828
    %v7368 = vunpack.c.l.b16 %v4829
    %v7369 = vunpack.c.l.b16 %v4830
    %v7370 = vunpack.c.h.b16 %v4830
    %v7371 = vunpack.c.l.b16 %v4831
    %v7372 = vunpack.c.l.b16 %v4832
    %v7373 = vunpack.c.h.b16 %v4832
    %v7374 = vunpack.c.l.b16 %v4833
    %v7375 = vunpack.c.l.b16 %v4834
    %v7376 = vunpack.c.h.b16 %v4834
    %v7377 = vunpack.c.l.b16 %v4835
    %v7378 = vunpack.c.l.b16 %v4836
    %v7379 = vunpack.c.h.b16 %v4836
    %v7380 = vunpack.c.l.b16 %v4837
    %v7381 = vunpack.c.l.b16 %v4838
    %v7382 = vunpack.c.h.b16 %v4838
    %v7383 = vunpack.c.l.b16 %v4839
    %v7384 = vunpack.c.l.b16 %v4840
    %v7385 = vunpack.c.h.b16 %v4840
    %v7386 = vunpack.c.l.b16 %v4841
    %v7387 = vunpack.c.l.b16 %v4842
    %v7388 = vunpack.c.h.b16 %v4842
    %v7389 = vunpack.c.l.b16 %v4843
    %v7390 = vunpack.c.l.b16 %v4844
    %v7391 = vunpack.c.h.b16 %v4844
    %v7392 = vunpack.c.l.b16 %v4845
    %v7393 = vunpack.c.l.b16 %v4846
    %v7394 = vunpack.c.h.b16 %v4846
    %v7395 = vunpack.c.l.b16 %v4847
    %v7396 = vunpack.c.l.b16 %v4848
    %v7397 = vunpack.c.h.b16 %v4848
    %v7398 = vunpack.c.l.b16 %v4849
    %v7399 = vunpack.c.l.b16 %v4850
    %v7400 = vunpack.c.h.b16 %v4850
    %v7401 = vunpack.c.l.b16 %v4851
    %v7402 = vunpack.c.l.b16 %v4852
    %v7403 = vunpack.c.h.b16 %v4852
    %v7404 = vunpack.c.l.b16 %v4853
    %v7405 = vunpack.c.l.b16 %v4854
    %v7406 = vunpack.c.h.b16 %v4854
    %v7407 = vunpack.c.l.b16 %v4855
    %v7408 = vunpack.c.l.b16 %v4856
    %v7409 = vunpack.c.h.b16 %v4856
    %v7410 = vunpack.c.l.b16 %v4857
    %v7411 = vunpack.c.l.b16 %v4858
    %v7412 = vunpack.c.h.b16 %v4858
    %v7413 = vunpack.c.l.b16 %v4859
    %v7414 = vunpack.c.l.b16 %v4860
    %v7415 = vunpack.c.h.b16 %v4860
    %v7416 = vunpack.c.l.b16 %v4861
    %v7417 = vunpack.c.l.b16 %v4862
    %v7418 = vunpack.c.h.b16 %v4862
    %v7419 = vunpack.c.l.b16 %v4863
    %v7420 = vunpack.c.l.b16 %v4864
    %v7421 = vunpack.c.h.b16 %v4864
    %v7422 = vunpack.c.l.b16 %v4865
    %v7423 = vunpack.c.l.b16 %v4866
    %v7424 = vunpack.c.h.b16 %v4866
    %v7425 = vunpack.c.l.b16 %v4867
    %v7426 = vunpack.c.l.b16 %v4868
    %v7427 = vunpack.c.h.b16 %v4868
    %v7428 = vunpack.c.l.b16 %v4869
    %v7429 = vunpack.c.l.b16 %v4870
    %v7430 = vunpack.c.h.b16 %v4870
    %v7431 = vunpack.c.l.b16 %v4871
    %v7432 = vunpack.c.l.b16 %v4872
    %v7433 = vunpack.c.h.b16 %v4872
    %v7434 = vunpack.c.l.b16 %v4873
    %v7435 = vunpack.c.l.b16 %v4874
    %v7436 = vunpack.c.h.b16 %v4874
    %v7437 = vunpack.c.l.b16 %v4875
    %v7438 = vunpack.c.l.b16 %v4876
    %v7439 = vunpack.c.h.b16 %v4876
    %v7440 = vunpack.c.l.b16 %v4877
    %v7441 = vunpack.c.l.b16 %v4878
    %v7442 = vunpack.c.h.b16 %v4878
    %v7443 = vunpack.c.l.b16 %v4879
    %v7444 = vunpack.c.l.b16 %v4880
    %v7445 = vunpack.c.h.b16 %v4880
    %v7446 = vunpack.c.l.b16 %v4881
    %v7447 = vunpack.c.l.b16 %v4882
    %v7448 = vunpack.c.h.b16 %v4882
    %v7449 = vunpack.c.l.b16 %v4883
    %v7450 = vunpack.c.l.b16 %v4884
    %v7451 = vunpack.c.h.b16 %v4884
    %v7452 = vunpack.c.l.b16 %v4885
    %v7453 = vunpack.c.l.b16 %v4886
    %v7454 = vunpack.c.h.b16 %v4886
    %v7455 = vunpack.c.l.b16 %v4887
    %v7456 = vunpack.c.l.b16 %v4888
    %v7457 = vunpack.c.h.b16 %v4888
    %v7458 = vunpack.c.l.b16 %v4889
    %v7459 = vunpack.c.l.b16 %v4890
    %v7460 = vunpack.c.h.b16 %v4890
    %v7461 = vunpack.c.l.b16 %v4891
    %v7462 = vunpack.c.l.b16 %v4892
    %v7463 = vunpack.c.h.b16 %v4892
    %v7464 = vunpack.c.l.b16 %v4893
    %v7465 = vunpack.c.l.b16 %v4894
    %v7466 = vunpack.c.h.b16 %v4894
    %v7467 = vunpack.c.l.b16 %v4895
    %v7468 = vunpack.c.l.b16 %v4896
    %v7469 = vunpack.c.h.b16 %v4896
    %v7470 = vunpack.c.l.b16 %v4897
    %v7471 = vunpack.c.l.b16 %v4898
    %v7472 = vunpack.c.h.b16 %v4898
    %v7473 = vunpack.c.l.b16 %v4899
    %v7474 = vunpack.c.l.b16 %v4900
    %v7475 = vunpack.c.h.b16 %v4900
    %v7476 = vunpack.c.l.b16 %v4901
    %v7477 = vunpack.c.l.b16 %v4902
    %v7478 = vunpack.c.h.b16 %v4902
    %v7479 = vunpack.c.l.b16 %v4903
    %v7480 = vunpack.c.l.b16 %v4904
    %v7481 = vunpack.c.h.b16 %v4904
    %v7482 = vunpack.c.l.b16 %v4905
    %v7483 = vpack.c.b16 %v5950, %v5947
    %v7484 = vpack.c.b16 %v5951, %v5948
    %v7485 = vpack.c.b16 %v5952, %v5949
    %v7486 = vpack.c.b16 %v5956, %v5953
    %v7487 = vpack.c.b16 %v5957, %v5954
    %v7488 = vpack.c.b16 %v5958, %v5955
    %v7489 = vpack.c.b16 %v5962, %v5959
    %v7490 = vpack.c.b16 %v5963, %v5960
    %v7491 = vpack.c.b16 %v5964, %v5961
    %v7492 = vpack.c.b16 %v5968, %v5965
    %v7493 = vpack.c.b16 %v5969, %v5966
    %v7494 = vpack.c.b16 %v5970, %v5967
    %v7495 = vpack.c.b16 %v5974, %v5971
    %v7496 = vpack.c.b16 %v5975, %v5972
    %v7497 = vpack.c.b16 %v5976, %v5973
    %v7498 = vpack.c.b16 %v5980, %v5977
    %v7499 = vpack.c.b16 %v5981, %v5978
    %v7500 = vpack.c.b16 %v5982, %v5979
    %v7501 = vpack.c.b16 %v5986, %v5983
    %v7502 = vpack.c.b16 %v5987, %v5984
    %v7503 = vpack.c.b16 %v5988, %v5985
    %v7504 = vpack.c.b16 %v5992, %v5989
    %v7505 = vpack.c.b16 %v5993, %v5990
    %v7506 = vpack.c.b16 %v5994, %v5991
    %v7507 = vpack.c.b16 %v5998, %v5995
    %v7508 = vpack.c.b16 %v5999, %v5996
    %v7509 = vpack.c.b16 %v6000, %v5997
    %v7510 = vpack.c.b16 %v6004, %v6001
    %v7511 = vpack.c.b16 %v6005, %v6002
    %v7512 = vpack.c.b16 %v6006, %v6003
    %v7513 = vpack.c.b16 %v6010, %v6007
    %v7514 = vpack.c.b16 %v6011, %v6008
    %v7515 = vpack.c.b16 %v6012, %v6009
    %v7516 = vpack.c.b16 %v6016, %v6013
    %v7517 = vpack.c.b16 %v6017, %v6014
    %v7518 = vpack.c.b16 %v6018, %v6015
    %v7519 = vpack.c.b16 %v6022, %v6019
    %v7520 = vpack.c.b16 %v6023, %v6020
    %v7521 = vpack.c.b16 %v6024, %v6021
    %v7522 = vpack.c.b16 %v6028, %v6025
    %v7523 = vpack.c.b16 %v6029, %v6026
    %v7524 = vpack.c.b16 %v6030, %v6027
    %v7525 = vpack.c.b16 %v6034, %v6031
    %v7526 = vpack.c.b16 %v6035, %v6032
    %v7527 = vpack.c.b16 %v6036, %v6033
    %v7528 = vpack.c.b16 %v6040, %v6037
    %v7529 = vpack.c.b16 %v6041, %v6038
    %v7530 = vpack.c.b16 %v6042, %v6039
    %v7531 = vpack.c.b16 %v6046, %v6043
    %v7532 = vpack.c.b16 %v6047, %v6044
    %v7533 = vpack.c.b16 %v6048, %v6045
    %v7534 = vpack.c.b16 %v6052, %v6049
    %v7535 = vpack.c.b16 %v6053, %v6050
    %v7536 = vpack.c.b16 %v6054, %v6051
    %v7537 = vpack.c.b16 %v6058, %v6055
    %v7538 = vpack.c.b16 %v6059, %v6056
    %v7539 = vpack.c.b16 %v6060, %v6057
    %v7540 = vpack.c.b16 %v6064, %v6061
    %v7541 = vpack.c.b16 %v6065, %v6062
    %v7542 = vpack.c.b16 %v6066, %v6063
    %v7543 = vpack.c.b16 %v6070, %v6067
    %v7544 = vpack.c.b16 %v6071, %v6068
    %v7545 = vpack.c.b16 %v6072, %v6069
    %v7546 = vpack.c.b16 %v6076, %v6073
    %v7547 = vpack.c.b16 %v6077, %v6074
    %v7548 = vpack.c.b16 %v6078, %v6075
    %v7549 = vpack.c.b16 %v6082, %v6079
    %v7550 = vpack.c.b16 %v6083, %v6080
    %v7551 = vpack.c.b16 %v6084, %v6081
    %v7552 = vpack.c.b16 %v6088, %v6085
    %v7553 = vpack.c.b16 %v6089, %v6086
    %v7554 = vpack.c.b16 %v6090, %v6087
    %v7555 = vpack.c.b16 %v6094, %v6091
    %v7556 = vpack.c.b16 %v6095, %v6092
    %v7557 = vpack.c.b16 %v6096, %v6093
    %v7558 = vpack.c.b16 %v6100, %v6097
    %v7559 = vpack.c.b16 %v6101, %v6098
    %v7560 = vpack.c.b16 %v6102, %v6099
    %v7561 = vpack.c.b16 %v6106, %v6103
    %v7562 = vpack.c.b16 %v6107, %v6104
    %v7563 = vpack.c.b16 %v6108, %v6105
    %v7564 = vpack.c.b16 %v6112, %v6109
    %v7565 = vpack.c.b16 %v6113, %v6110
    %v7566 = vpack.c.b16 %v6114, %v6111
    %v7567 = vpack.c.b16 %v6118, %v6115
    %v7568 = vpack.c.b16 %v6119, %v6116
    %v7569 = vpack.c.b16 %v6120, %v6117
    %v7570 = vpack.c.b16 %v6124, %v6121
    %v7571 = vpack.c.b16 %v6125, %v6122
    %v7572 = vpack.c.b16 %v6126, %v6123
    %v7573 = vpack.c.b16 %v6130, %v6127
    %v7574 = vpack.c.b16 %v6131, %v6128
    %v7575 = vpack.c.b16 %v6132, %v6129
    %v7576 = vpack.c.b16 %v6136, %v6133
    %v7577 = vpack.c.b16 %v6137, %v6134
    %v7578 = vpack.c.b16 %v6138, %v6135
    %v7579 = vpack.c.b16 %v6142, %v6139
    %v7580 = vpack.c.b16 %v6143, %v6140
    %v7581 = vpack.c.b16 %v6144, %v6141
    %v7582 = vpack.c.b16 %v6148, %v6145
    %v7583 = vpack.c.b16 %v6149, %v6146
    %v7584 = vpack.c.b16 %v6150, %v6147
    %v7585 = vpack.c.b16 %v6154, %v6151
    %v7586 = vpack.c.b16 %v6155, %v6152
    %v7587 = vpack.c.b16 %v6156, %v6153
    %v7588 = vpack.c.b16 %v6160, %v6157
    %v7589 = vpack.c.b16 %v6161, %v6158
    %v7590 = vpack.c.b16 %v6162, %v6159
    %v7591 = vpack.c.b16 %v6166, %v6163
    %v7592 = vpack.c.b16 %v6167, %v6164
    %v7593 = vpack.c.b16 %v6168, %v6165
    %v7594 = vpack.c.b16 %v6172, %v6169
    %v7595 = vpack.c.b16 %v6173, %v6170
    %v7596 = vpack.c.b16 %v6174, %v6171
    %v7597 = vpack.c.b16 %v6178, %v6175
    %v7598 = vpack.c.b16 %v6179, %v6176
    %v7599 = vpack.c.b16 %v6180, %v6177
    %v7600 = vpack.c.b16 %v6184, %v6181
    %v7601 = vpack.c.b16 %v6185, %v6182
    %v7602 = vpack.c.b16 %v6186, %v6183
    %v7603 = vpack.c.b16 %v6190, %v6187
    %v7604 = vpack.c.b16 %v6191, %v6188
    %v7605 = vpack.c.b16 %v6192, %v6189
    %v7606 = vpack.c.b16 %v6196, %v6193
    %v7607 = vpack.c.b16 %v6197, %v6194
    %v7608 = vpack.c.b16 %v6198, %v6195
    %v7609 = vpack.c.b16 %v6202, %v6199
    %v7610 = vpack.c.b16 %v6203, %v6200
    %v7611 = vpack.c.b16 %v6204, %v6201
    %v7612 = vpack.c.b16 %v6208, %v6205
    %v7613 = vpack.c.b16 %v6209, %v6206
    %v7614 = vpack.c.b16 %v6210, %v6207
    %v7615 = vpack.c.b16 %v6214, %v6211
    %v7616 = vpack.c.b16 %v6215, %v6212
    %v7617 = vpack.c.b16 %v6216, %v6213
    %v7618 = vpack.c.b16 %v6220, %v6217
    %v7619 = vpack.c.b16 %v6221, %v6218
    %v7620 = vpack.c.b16 %v6222, %v6219
    %v7621 = vpack.c.b16 %v6226, %v6223
    %v7622 = vpack.c.b16 %v6227, %v6224
    %v7623 = vpack.c.b16 %v6228, %v6225
    %v7624 = vpack.c.b16 %v6232, %v6229
    %v7625 = vpack.c.b16 %v6233, %v6230
    %v7626 = vpack.c.b16 %v6234, %v6231
    %v7627 = vpack.c.b16 %v6238, %v6235
    %v7628 = vpack.c.b16 %v6239, %v6236
    %v7629 = vpack.c.b16 %v6240, %v6237
    %v7630 = vpack.c.b16 %v6244, %v6241
    %v7631 = vpack.c.b16 %v6245, %v6242
    %v7632 = vpack.c.b16 %v6246, %v6243
    %v7633 = vpack.c.b16 %v6250, %v6247
    %v7634 = vpack.c.b16 %v6251, %v6248
    %v7635 = vpack.c.b16 %v6252, %v6249
    %v7636 = vpack.c.b16 %v6256, %v6253
    %v7637 = vpack.c.b16 %v6257, %v6254
    %v7638 = vpack.c.b16 %v6258, %v6255
    %v7639 = vpack.c.b16 %v6262, %v6259
    %v7640 = vpack.c.b16 %v6263, %v6260
    %v7641 = vpack.c.b16 %v6264, %v6261
    %v7642 = vpack.c.b16 %v6268, %v6265
    %v7643 = vpack.c.b16 %v6269, %v6266
    %v7644 = vpack.c.b16 %v6270, %v6267
    %v7645 = vpack.c.b16 %v6274, %v6271
    %v7646 = vpack.c.b16 %v6275, %v6272
    %v7647 = vpack.c.b16 %v6276, %v6273
    %v7648 = vpack.c.b16 %v6280, %v6277
    %v7649 = vpack.c.b16 %v6281, %v6278
    %v7650 = vpack.c.b16 %v6282, %v6279
    %v7651 = vpack.c.b16 %v6286, %v6283
    %v7652 = vpack.c.b16 %v6287, %v6284
    %v7653 = vpack.c.b16 %v6288, %v6285
    %v7654 = vpack.c.b16 %v6292, %v6289
    %v7655 = vpack.c.b16 %v6293, %v6290
    %v7656 = vpack.c.b16 %v6294, %v6291
    %v7657 = vpack.c.b16 %v6298, %v6295
    %v7658 = vpack.c.b16 %v6299, %v6296
    %v7659 = vpack.c.b16 %v6300, %v6297
    %v7660 = vpack.c.b16 %v6304, %v6301
    %v7661 = vpack.c.b16 %v6305, %v6302
    %v7662 = vpack.c.b16 %v6306, %v6303
    %v7663 = vpack.c.b16 %v6310, %v6307
    %v7664 = vpack.c.b16 %v6311, %v6308
    %v7665 = vpack.c.b16 %v6312, %v6309
    %v7666 = vpack.c.b16 %v6316, %v6313
    %v7667 = vpack.c.b16 %v6317, %v6314
    %v7668 = vpack.c.b16 %v6318, %v6315
    %v7669 = vpack.c.b16 %v6322, %v6319
    %v7670 = vpack.c.b16 %v6323, %v6320
    %v7671 = vpack.c.b16 %v6324, %v6321
    %v7672 = vpack.c.b16 %v6328, %v6325
    %v7673 = vpack.c.b16 %v6329, %v6326
    %v7674 = vpack.c.b16 %v6330, %v6327
    %v7675 = vpack.c.b16 %v6334, %v6331
    %v7676 = vpack.c.b16 %v6335, %v6332
    %v7677 = vpack.c.b16 %v6336, %v6333
    %v7678 = vpack.c.b16 %v6340, %v6337
    %v7679 = vpack.c.b16 %v6341, %v6338
    %v7680 = vpack.c.b16 %v6342, %v6339
    %v7681 = vpack.c.b16 %v6346, %v6343
    %v7682 = vpack.c.b16 %v6347, %v6344
    %v7683 = vpack.c.b16 %v6348, %v6345
    %v7684 = vpack.c.b16 %v6352, %v6349
    %v7685 = vpack.c.b16 %v6353, %v6350
    %v7686 = vpack.c.b16 %v6354, %v6351
    %v7687 = vpack.c.b16 %v6358, %v6355
    %v7688 = vpack.c.b16 %v6359, %v6356
    %v7689 = vpack.c.b16 %v6360, %v6357
    %v7690 = vpack.c.b16 %v6364, %v6361
    %v7691 = vpack.c.b16 %v6365, %v6362
    %v7692 = vpack.c.b16 %v6366, %v6363
    %v7693 = vpack.c.b16 %v6370, %v6367
    %v7694 = vpack.c.b16 %v6371, %v6368
    %v7695 = vpack.c.b16 %v6372, %v6369
    %v7696 = vpack.c.b16 %v6376, %v6373
    %v7697 = vpack.c.b16 %v6377, %v6374
    %v7698 = vpack.c.b16 %v6378, %v6375
    %v7699 = vpack.c.b16 %v6382, %v6379
    %v7700 = vpack.c.b16 %v6383, %v6380
    %v7701 = vpack.c.b16 %v6384, %v6381
    %v7702 = vpack.c.b16 %v6388, %v6385
    %v7703 = vpack.c.b16 %v6389, %v6386
    %v7704 = vpack.c.b16 %v6390, %v6387
    %v7705 = vpack.c.b16 %v6394, %v6391
    %v7706 = vpack.c.b16 %v6395, %v6392
    %v7707 = vpack.c.b16 %v6396, %v6393
    %v7708 = vpack.c.b16 %v6400, %v6397
    %v7709 = vpack.c.b16 %v6401, %v6398
    %v7710 = vpack.c.b16 %v6402, %v6399
    %v7711 = vpack.c.b16 %v6406, %v6403
    %v7712 = vpack.c.b16 %v6407, %v6404
    %v7713 = vpack.c.b16 %v6408, %v6405
    %v7714 = vpack.c.b16 %v6412, %v6409
    %v7715 = vpack.c.b16 %v6413, %v6410
    %v7716 = vpack.c.b16 %v6414, %v6411
    %v7717 = vpack.c.b16 %v6418, %v6415
    %v7718 = vpack.c.b16 %v6419, %v6416
    %v7719 = vpack.c.b16 %v6420, %v6417
    %v7720 = vpack.c.b16 %v6424, %v6421
    %v7721 = vpack.c.b16 %v6425, %v6422
    %v7722 = vpack.c.b16 %v6426, %v6423
    %v7723 = vpack.c.b16 %v6430, %v6427
    %v7724 = vpack.c.b16 %v6431, %v6428
    %v7725 = vpack.c.b16 %v6432, %v6429
    %v7726 = vpack.c.b16 %v6436, %v6433
    %v7727 = vpack.c.b16 %v6437, %v6434
    %v7728 = vpack.c.b16 %v6438, %v6435
    %v7729 = vpack.c.b16 %v6442, %v6439
    %v7730 = vpack.c.b16 %v6443, %v6440
    %v7731 = vpack.c.b16 %v6444, %v6441
    %v7732 = vpack.c.b16 %v6448, %v6445
    %v7733 = vpack.c.b16 %v6449, %v6446
    %v7734 = vpack.c.b16 %v6450, %v6447
    %v7735 = vpack.c.b16 %v6454, %v6451
    %v7736 = vpack.c.b16 %v6455, %v6452
    %v7737 = vpack.c.b16 %v6456, %v6453
    %v7738 = vpack.c.b16 %v6460, %v6457
    %v7739 = vpack.c.b16 %v6461, %v6458
    %v7740 = vpack.c.b16 %v6462, %v6459
    %v7741 = vpack.c.b16 %v6466, %v6463
    %v7742 = vpack.c.b16 %v6467, %v6464
    %v7743 = vpack.c.b16 %v6468, %v6465
    %v7744 = vpack.c.b16 %v6472, %v6469
    %v7745 = vpack.c.b16 %v6473, %v6470
    %v7746 = vpack.c.b16 %v6474, %v6471
    %v7747 = vpack.c.b16 %v6478, %v6475
    %v7748 = vpack.c.b16 %v6479, %v6476
    %v7749 = vpack.c.b16 %v6480, %v6477
    %v7750 = vpack.c.b16 %v6484, %v6481
    %v7751 = vpack.c.b16 %v6485, %v6482
    %v7752 = vpack.c.b16 %v6486, %v6483
    %v7753 = vpack.c.b16 %v6490, %v6487
    %v7754 = vpack.c.b16 %v6491, %v6488
    %v7755 = vpack.c.b16 %v6492, %v6489
    %v7756 = vpack.c.b16 %v6496, %v6493
    %v7757 = vpack.c.b16 %v6497, %v6494
    %v7758 = vpack.c.b16 %v6498, %v6495
    %v7759 = vpack.c.b16 %v6502, %v6499
    %v7760 = vpack.c.b16 %v6503, %v6500
    %v7761 = vpack.c.b16 %v6504, %v6501
    %v7762 = vpack.c.b16 %v6508, %v6505
    %v7763 = vpack.c.b16 %v6509, %v6506
    %v7764 = vpack.c.b16 %v6510, %v6507
    %v7765 = vpack.c.b16 %v6514, %v6511
    %v7766 = vpack.c.b16 %v6515, %v6512
    %v7767 = vpack.c.b16 %v6516, %v6513
    %v7768 = vpack.c.b16 %v6520, %v6517
    %v7769 = vpack.c.b16 %v6521, %v6518
    %v7770 = vpack.c.b16 %v6522, %v6519
    %v7771 = vpack.c.b16 %v6526, %v6523
    %v7772 = vpack.c.b16 %v6527, %v6524
    %v7773 = vpack.c.b16 %v6528, %v6525
    %v7774 = vpack.c.b16 %v6532, %v6529
    %v7775 = vpack.c.b16 %v6533, %v6530
    %v7776 = vpack.c.b16 %v6534, %v6531
    %v7777 = vpack.c.b16 %v6538, %v6535
    %v7778 = vpack.c.b16 %v6539, %v6536
    %v7779 = vpack.c.b16 %v6540, %v6537
    %v7780 = vpack.c.b16 %v6544, %v6541
    %v7781 = vpack.c.b16 %v6545, %v6542
    %v7782 = vpack.c.b16 %v6546, %v6543
    %v7783 = vpack.c.b16 %v6550, %v6547
    %v7784 = vpack.c.b16 %v6551, %v6548
    %v7785 = vpack.c.b16 %v6552, %v6549
    %v7786 = vpack.c.b16 %v6556, %v6553
    %v7787 = vpack.c.b16 %v6557, %v6554
    %v7788 = vpack.c.b16 %v6558, %v6555
    %v7789 = vpack.c.b16 %v6562, %v6559
    %v7790 = vpack.c.b16 %v6563, %v6560
    %v7791 = vpack.c.b16 %v6564, %v6561
    %v7792 = vpack.c.b16 %v6568, %v6565
    %v7793 = vpack.c.b16 %v6569, %v6566
    %v7794 = vpack.c.b16 %v6570, %v6567
    %v7795 = vpack.c.b16 %v6574, %v6571
    %v7796 = vpack.c.b16 %v6575, %v6572
    %v7797 = vpack.c.b16 %v6576, %v6573
    %v7798 = vpack.c.b16 %v6580, %v6577
    %v7799 = vpack.c.b16 %v6581, %v6578
    %v7800 = vpack.c.b16 %v6582, %v6579
    %v7801 = vpack.c.b16 %v6586, %v6583
    %v7802 = vpack.c.b16 %v6587, %v6584
    %v7803 = vpack.c.b16 %v6588, %v6585
    %v7804 = vpack.c.b16 %v6592, %v6589
    %v7805 = vpack.c.b16 %v6593, %v6590
    %v7806 = vpack.c.b16 %v6594, %v6591
    %v7807 = vpack.c.b16 %v6598, %v6595
    %v7808 = vpack.c.b16 %v6599, %v6596
    %v7809 = vpack.c.b16 %v6600, %v6597
    %v7810 = vpack.c.b16 %v6604, %v6601
    %v7811 = vpack.c.b16 %v6605, %v6602
    %v7812 = vpack.c.b16 %v6606, %v6603
    %v7813 = vpack.c.b16 %v6610, %v6607
    %v7814 = vpack.c.b16 %v6611, %v6608
    %v7815 = vpack.c.b16 %v6612, %v6609
    %v7816 = vpack.c.b16 %v6616, %v6613
    %v7817 = vpack.c.b16 %v6617, %v6614
    %v7818 = vpack.c.b16 %v6618, %v6615
    %v7819 = vpack.c.b16 %v6622, %v6619
    %v7820 = vpack.c.b16 %v6623, %v6620
    %v7821 = vpack.c.b16 %v6624, %v6621
    %v7822 = vpack.c.b16 %v6628, %v6625
    %v7823 = vpack.c.b16 %v6629, %v6626
    %v7824 = vpack.c.b16 %v6630, %v6627
    %v7825 = vpack.c.b16 %v6634, %v6631
    %v7826 = vpack.c.b16 %v6635, %v6632
    %v7827 = vpack.c.b16 %v6636, %v6633
    %v7828 = vpack.c.b16 %v6640, %v6637
    %v7829 = vpack.c.b16 %v6641, %v6638
    %v7830 = vpack.c.b16 %v6642, %v6639
    %v7831 = vpack.c.b16 %v6646, %v6643
    %v7832 = vpack.c.b16 %v6647, %v6644
    %v7833 = vpack.c.b16 %v6648, %v6645
    %v7834 = vpack.c.b16 %v6652, %v6649
    %v7835 = vpack.c.b16 %v6653, %v6650
    %v7836 = vpack.c.b16 %v6654, %v6651
    %v7837 = vpack.c.b16 %v6658, %v6655
    %v7838 = vpack.c.b16 %v6659, %v6656
    %v7839 = vpack.c.b16 %v6660, %v6657
    %v7840 = vpack.c.b16 %v6664, %v6661
    %v7841 = vpack.c.b16 %v6665, %v6662
    %v7842 = vpack.c.b16 %v6666, %v6663
    %v7843 = vpack.c.b16 %v6670, %v6667
    %v7844 = vpack.c.b16 %v6671, %v6668
    %v7845 = vpack.c.b16 %v6672, %v6669
    %v7846 = vpack.c.b16 %v6676, %v6673
    %v7847 = vpack.c.b16 %v6677, %v6674
    %v7848 = vpack.c.b16 %v6678, %v6675
    %v7849 = vpack.c.b16 %v6682, %v6679
    %v7850 = vpack.c.b16 %v6683, %v6680
    %v7851 = vpack.c.b16 %v6684, %v6681
    %v7852 = vpack.c.b16 %v6688, %v6685
    %v7853 = vpack.c.b16 %v6689, %v6686
    %v7854 = vpack.c.b16 %v6690, %v6687
    %v7855 = vpack.c.b16 %v6694, %v6691
    %v7856 = vpack.c.b16 %v6695, %v6692
    %v7857 = vpack.c.b16 %v6696, %v6693
    %v7858 = vpack.c.b16 %v6700, %v6697
    %v7859 = vpack.c.b16 %v6701, %v6698
    %v7860 = vpack.c.b16 %v6702, %v6699
    %v7861 = vpack.c.b16 %v6706, %v6703
    %v7862 = vpack.c.b16 %v6707, %v6704
    %v7863 = vpack.c.b16 %v6708, %v6705
    %v7864 = vpack.c.b16 %v6712, %v6709
    %v7865 = vpack.c.b16 %v6713, %v6710
    %v7866 = vpack.c.b16 %v6714, %v6711
    %v7867 = vpack.c.b16 %v6718, %v6715
    %v7868 = vpack.c.b16 %v6719, %v6716
    %v7869 = vpack.c.b16 %v6720, %v6717
    %v7870 = vpack.c.b16 %v6724, %v6721
    %v7871 = vpack.c.b16 %v6725, %v6722
    %v7872 = vpack.c.b16 %v6726, %v6723
    %v7873 = vpack.c.b16 %v6730, %v6727
    %v7874 = vpack.c.b16 %v6731, %v6728
    %v7875 = vpack.c.b16 %v6732, %v6729
    %v7876 = vpack.c.b16 %v6736, %v6733
    %v7877 = vpack.c.b16 %v6737, %v6734
    %v7878 = vpack.c.b16 %v6738, %v6735
    %v7879 = vpack.c.b16 %v6742, %v6739
    %v7880 = vpack.c.b16 %v6743, %v6740
    %v7881 = vpack.c.b16 %v6744, %v6741
    %v7882 = vpack.c.b16 %v6748, %v6745
    %v7883 = vpack.c.b16 %v6749, %v6746
    %v7884 = vpack.c.b16 %v6750, %v6747
    %v7885 = vpack.c.b16 %v6754, %v6751
    %v7886 = vpack.c.b16 %v6755, %v6752
    %v7887 = vpack.c.b16 %v6756, %v6753
    %v7888 = vpack.c.b16 %v6760, %v6757
    %v7889 = vpack.c.b16 %v6761, %v6758
    %v7890 = vpack.c.b16 %v6762, %v6759
    %v7891 = vpack.c.b16 %v6766, %v6763
    %v7892 = vpack.c.b16 %v6767, %v6764
    %v7893 = vpack.c.b16 %v6768, %v6765
    %v7894 = vpack.c.b16 %v6772, %v6769
    %v7895 = vpack.c.b16 %v6773, %v6770
    %v7896 = vpack.c.b16 %v6774, %v6771
    %v7897 = vpack.c.b16 %v6778, %v6775
    %v7898 = vpack.c.b16 %v6779, %v6776
    %v7899 = vpack.c.b16 %v6780, %v6777
    %v7900 = vpack.c.b16 %v6784, %v6781
    %v7901 = vpack.c.b16 %v6785, %v6782
    %v7902 = vpack.c.b16 %v6786, %v6783
    %v7903 = vpack.c.b16 %v6790, %v6787
    %v7904 = vpack.c.b16 %v6791, %v6788
    %v7905 = vpack.c.b16 %v6792, %v6789
    %v7906 = vpack.c.b16 %v6796, %v6793
    %v7907 = vpack.c.b16 %v6797, %v6794
    %v7908 = vpack.c.b16 %v6798, %v6795
    %v7909 = vpack.c.b16 %v6802, %v6799
    %v7910 = vpack.c.b16 %v6803, %v6800
    %v7911 = vpack.c.b16 %v6804, %v6801
    %v7912 = vpack.c.b16 %v6808, %v6805
    %v7913 = vpack.c.b16 %v6809, %v6806
    %v7914 = vpack.c.b16 %v6810, %v6807
    %v7915 = vpack.c.b16 %v6814, %v6811
    %v7916 = vpack.c.b16 %v6815, %v6812
    %v7917 = vpack.c.b16 %v6816, %v6813
    %v7918 = vpack.c.b16 %v6820, %v6817
    %v7919 = vpack.c.b16 %v6821, %v6818
    %v7920 = vpack.c.b16 %v6822, %v6819
    %v7921 = vpack.c.b16 %v6826, %v6823
    %v7922 = vpack.c.b16 %v6827, %v6824
    %v7923 = vpack.c.b16 %v6828, %v6825
    %v7924 = vpack.c.b16 %v6832, %v6829
    %v7925 = vpack.c.b16 %v6833, %v6830
    %v7926 = vpack.c.b16 %v6834, %v6831
    %v7927 = vpack.c.b16 %v6838, %v6835
    %v7928 = vpack.c.b16 %v6839, %v6836
    %v7929 = vpack.c.b16 %v6840, %v6837
    %v7930 = vpack.c.b16 %v6844, %v6841
    %v7931 = vpack.c.b16 %v6845, %v6842
    %v7932 = vpack.c.b16 %v6846, %v6843
    %v7933 = vpack.c.b16 %v6850, %v6847
    %v7934 = vpack.c.b16 %v6851, %v6848
    %v7935 = vpack.c.b16 %v6852, %v6849
    %v7936 = vpack.c.b16 %v6856, %v6853
    %v7937 = vpack.c.b16 %v6857, %v6854
    %v7938 = vpack.c.b16 %v6858, %v6855
    %v7939 = vpack.c.b16 %v6862, %v6859
    %v7940 = vpack.c.b16 %v6863, %v6860
    %v7941 = vpack.c.b16 %v6864, %v6861
    %v7942 = vpack.c.b16 %v6868, %v6865
    %v7943 = vpack.c.b16 %v6869, %v6866
    %v7944 = vpack.c.b16 %v6870, %v6867
    %v7945 = vpack.c.b16 %v6874, %v6871
    %v7946 = vpack.c.b16 %v6875, %v6872
    %v7947 = vpack.c.b16 %v6876, %v6873
    %v7948 = vpack.c.b16 %v6880, %v6877
    %v7949 = vpack.c.b16 %v6881, %v6878
    %v7950 = vpack.c.b16 %v6882, %v6879
    %v7951 = vpack.c.b16 %v6886, %v6883
    %v7952 = vpack.c.b16 %v6887, %v6884
    %v7953 = vpack.c.b16 %v6888, %v6885
    %v7954 = vpack.c.b16 %v6892, %v6889
    %v7955 = vpack.c.b16 %v6893, %v6890
    %v7956 = vpack.c.b16 %v6894, %v6891
    %v7957 = vpack.c.b16 %v6898, %v6895
    %v7958 = vpack.c.b16 %v6899, %v6896
    %v7959 = vpack.c.b16 %v6900, %v6897
    %v7960 = vpack.c.b16 %v6904, %v6901
    %v7961 = vpack.c.b16 %v6905, %v6902
    %v7962 = vpack.c.b16 %v6906, %v6903
    %v7963 = vpack.c.b16 %v6910, %v6907
    %v7964 = vpack.c.b16 %v6911, %v6908
    %v7965 = vpack.c.b16 %v6912, %v6909
    %v7966 = vpack.c.b16 %v6916, %v6913
    %v7967 = vpack.c.b16 %v6917, %v6914
    %v7968 = vpack.c.b16 %v6918, %v6915
    %v7969 = vpack.c.b16 %v6922, %v6919
    %v7970 = vpack.c.b16 %v6923, %v6920
    %v7971 = vpack.c.b16 %v6924, %v6921
    %v7972 = vpack.c.b16 %v6928, %v6925
    %v7973 = vpack.c.b16 %v6929, %v6926
    %v7974 = vpack.c.b16 %v6930, %v6927
    %v7975 = vpack.c.b16 %v6934, %v6931
    %v7976 = vpack.c.b16 %v6935, %v6932
    %v7977 = vpack.c.b16 %v6936, %v6933
    %v7978 = vpack.c.b16 %v6940, %v6937
    %v7979 = vpack.c.b16 %v6941, %v6938
    %v7980 = vpack.c.b16 %v6942, %v6939
    %v7981 = vpack.c.b16 %v6946, %v6943
    %v7982 = vpack.c.b16 %v6947, %v6944
    %v7983 = vpack.c.b16 %v6948, %v6945
    %v7984 = vpack.c.b16 %v6952, %v6949
    %v7985 = vpack.c.b16 %v6953, %v6950
    %v7986 = vpack.c.b16 %v6954, %v6951
    %v7987 = vpack.c.b16 %v6958, %v6955
    %v7988 = vpack.c.b16 %v6959, %v6956
    %v7989 = vpack.c.b16 %v6960, %v6957
    %v7990 = vpack.c.b16 %v6964, %v6961
    %v7991 = vpack.c.b16 %v6965, %v6962
    %v7992 = vpack.c.b16 %v6966, %v6963
    %v7993 = vpack.c.b16 %v6970, %v6967
    %v7994 = vpack.c.b16 %v6971, %v6968
    %v7995 = vpack.c.b16 %v6972, %v6969
    %v7996 = vpack.c.b16 %v6976, %v6973
    %v7997 = vpack.c.b16 %v6977, %v6974
    %v7998 = vpack.c.b16 %v6978, %v6975
    %v7999 = vpack.c.b16 %v6982, %v6979
    %v8000 = vpack.c.b16 %v6983, %v6980
    %v8001 = vpack.c.b16 %v6984, %v6981
    %v8002 = vpack.c.b16 %v6988, %v6985
    %v8003 = vpack.c.b16 %v6989, %v6986
    %v8004 = vpack.c.b16 %v6990, %v6987
    %v8005 = vpack.c.b16 %v6994, %v6991
    %v8006 = vpack.c.b16 %v6995, %v6992
    %v8007 = vpack.c.b16 %v6996, %v6993
    %v8008 = vpack.c.b16 %v7000, %v6997
    %v8009 = vpack.c.b16 %v7001, %v6998
    %v8010 = vpack.c.b16 %v7002, %v6999
    %v8011 = vpack.c.b16 %v7006, %v7003
    %v8012 = vpack.c.b16 %v7007, %v7004
    %v8013 = vpack.c.b16 %v7008, %v7005
    %v8014 = vpack.c.b16 %v7012, %v7009
    %v8015 = vpack.c.b16 %v7013, %v7010
    %v8016 = vpack.c.b16 %v7014, %v7011
    %v8017 = vpack.c.b16 %v7018, %v7015
    %v8018 = vpack.c.b16 %v7019, %v7016
    %v8019 = vpack.c.b16 %v7020, %v7017
    %v8020 = vpack.c.b16 %v7024, %v7021
    %v8021 = vpack.c.b16 %v7025, %v7022
    %v8022 = vpack.c.b16 %v7026, %v7023
    %v8023 = vpack.c.b16 %v7030, %v7027
    %v8024 = vpack.c.b16 %v7031, %v7028
    %v8025 = vpack.c.b16 %v7032, %v7029
    %v8026 = vpack.c.b16 %v7036, %v7033
    %v8027 = vpack.c.b16 %v7037, %v7034
    %v8028 = vpack.c.b16 %v7038, %v7035
    %v8029 = vpack.c.b16 %v7042, %v7039
    %v8030 = vpack.c.b16 %v7043, %v7040
    %v8031 = vpack.c.b16 %v7044, %v7041
    %v8032 = vpack.c.b16 %v7048, %v7045
    %v8033 = vpack.c.b16 %v7049, %v7046
    %v8034 = vpack.c.b16 %v7050, %v7047
    %v8035 = vpack.c.b16 %v7054, %v7051
    %v8036 = vpack.c.b16 %v7055, %v7052
    %v8037 = vpack.c.b16 %v7056, %v7053
    %v8038 = vpack.c.b16 %v7060, %v7057
    %v8039 = vpack.c.b16 %v7061, %v7058
    %v8040 = vpack.c.b16 %v7062, %v7059
    %v8041 = vpack.c.b16 %v7066, %v7063
    %v8042 = vpack.c.b16 %v7067, %v7064
    %v8043 = vpack.c.b16 %v7068, %v7065
    %v8044 = vpack.c.b16 %v7072, %v7069
    %v8045 = vpack.c.b16 %v7073, %v7070
    %v8046 = vpack.c.b16 %v7074, %v7071
    %v8047 = vpack.c.b16 %v7078, %v7075
    %v8048 = vpack.c.b16 %v7079, %v7076
    %v8049 = vpack.c.b16 %v7080, %v7077
    %v8050 = vpack.c.b16 %v7084, %v7081
    %v8051 = vpack.c.b16 %v7085, %v7082
    %v8052 = vpack.c.b16 %v7086, %v7083
    %v8053 = vpack.c.b16 %v7090, %v7087
    %v8054 = vpack.c.b16 %v7091, %v7088
    %v8055 = vpack.c.b16 %v7092, %v7089
    %v8056 = vpack.c.b16 %v7096, %v7093
    %v8057 = vpack.c.b16 %v7097, %v7094
    %v8058 = vpack.c.b16 %v7098, %v7095
    %v8059 = vpack.c.b16 %v7102, %v7099
    %v8060 = vpack.c.b16 %v7103, %v7100
    %v8061 = vpack.c.b16 %v7104, %v7101
    %v8062 = vpack.c.b16 %v7108, %v7105
    %v8063 = vpack.c.b16 %v7109, %v7106
    %v8064 = vpack.c.b16 %v7110, %v7107
    %v8065 = vpack.c.b16 %v7114, %v7111
    %v8066 = vpack.c.b16 %v7115, %v7112
    %v8067 = vpack.c.b16 %v7116, %v7113
    %v8068 = vpack.c.b16 %v7120, %v7117
    %v8069 = vpack.c.b16 %v7121, %v7118
    %v8070 = vpack.c.b16 %v7122, %v7119
    %v8071 = vpack.c.b16 %v7126, %v7123
    %v8072 = vpack.c.b16 %v7127, %v7124
    %v8073 = vpack.c.b16 %v7128, %v7125
    %v8074 = vpack.c.b16 %v7132, %v7129
    %v8075 = vpack.c.b16 %v7133, %v7130
    %v8076 = vpack.c.b16 %v7134, %v7131
    %v8077 = vpack.c.b16 %v7138, %v7135
    %v8078 = vpack.c.b16 %v7139, %v7136
    %v8079 = vpack.c.b16 %v7140, %v7137
    %v8080 = vpack.c.b16 %v7144, %v7141
    %v8081 = vpack.c.b16 %v7145, %v7142
    %v8082 = vpack.c.b16 %v7146, %v7143
    %v8083 = vpack.c.b16 %v7150, %v7147
    %v8084 = vpack.c.b16 %v7151, %v7148
    %v8085 = vpack.c.b16 %v7152, %v7149
    %v8086 = vpack.c.b16 %v7156, %v7153
    %v8087 = vpack.c.b16 %v7157, %v7154
    %v8088 = vpack.c.b16 %v7158, %v7155
    %v8089 = vpack.c.b16 %v7162, %v7159
    %v8090 = vpack.c.b16 %v7163, %v7160
    %v8091 = vpack.c.b16 %v7164, %v7161
    %v8092 = vpack.c.b16 %v7168, %v7165
    %v8093 = vpack.c.b16 %v7169, %v7166
    %v8094 = vpack.c.b16 %v7170, %v7167
    %v8095 = vpack.c.b16 %v7174, %v7171
    %v8096 = vpack.c.b16 %v7175, %v7172
    %v8097 = vpack.c.b16 %v7176, %v7173
    %v8098 = vpack.c.b16 %v7180, %v7177
    %v8099 = vpack.c.b16 %v7181, %v7178
    %v8100 = vpack.c.b16 %v7182, %v7179
    %v8101 = vpack.c.b16 %v7186, %v7183
    %v8102 = vpack.c.b16 %v7187, %v7184
    %v8103 = vpack.c.b16 %v7188, %v7185
    %v8104 = vpack.c.b16 %v7192, %v7189
    %v8105 = vpack.c.b16 %v7193, %v7190
    %v8106 = vpack.c.b16 %v7194, %v7191
    %v8107 = vpack.c.b16 %v7198, %v7195
    %v8108 = vpack.c.b16 %v7199, %v7196
    %v8109 = vpack.c.b16 %v7200, %v7197
    %v8110 = vpack.c.b16 %v7204, %v7201
    %v8111 = vpack.c.b16 %v7205, %v7202
    %v8112 = vpack.c.b16 %v7206, %v7203
    %v8113 = vpack.c.b16 %v7210, %v7207
    %v8114 = vpack.c.b16 %v7211, %v7208
    %v8115 = vpack.c.b16 %v7212, %v7209
    %v8116 = vpack.c.b16 %v7216, %v7213
    %v8117 = vpack.c.b16 %v7217, %v7214
    %v8118 = vpack.c.b16 %v7218, %v7215
    %v8119 = vpack.c.b16 %v7222, %v7219
    %v8120 = vpack.c.b16 %v7223, %v7220
    %v8121 = vpack.c.b16 %v7224, %v7221
    %v8122 = vpack.c.b16 %v7228, %v7225
    %v8123 = vpack.c.b16 %v7229, %v7226
    %v8124 = vpack.c.b16 %v7230, %v7227
    %v8125 = vpack.c.b16 %v7234, %v7231
    %v8126 = vpack.c.b16 %v7235, %v7232
    %v8127 = vpack.c.b16 %v7236, %v7233
    %v8128 = vpack.c.b16 %v7240, %v7237
    %v8129 = vpack.c.b16 %v7241, %v7238
    %v8130 = vpack.c.b16 %v7242, %v7239
    %v8131 = vpack.c.b16 %v7246, %v7243
    %v8132 = vpack.c.b16 %v7247, %v7244
    %v8133 = vpack.c.b16 %v7248, %v7245
    %v8134 = vpack.c.b16 %v7252, %v7249
    %v8135 = vpack.c.b16 %v7253, %v7250
    %v8136 = vpack.c.b16 %v7254, %v7251
    %v8137 = vpack.c.b16 %v7258, %v7255
    %v8138 = vpack.c.b16 %v7259, %v7256
    %v8139 = vpack.c.b16 %v7260, %v7257
    %v8140 = vpack.c.b16 %v7264, %v7261
    %v8141 = vpack.c.b16 %v7265, %v7262
    %v8142 = vpack.c.b16 %v7266, %v7263
    %v8143 = vpack.c.b16 %v7270, %v7267
    %v8144 = vpack.c.b16 %v7271, %v7268
    %v8145 = vpack.c.b16 %v7272, %v7269
    %v8146 = vpack.c.b16 %v7276, %v7273
    %v8147 = vpack.c.b16 %v7277, %v7274
    %v8148 = vpack.c.b16 %v7278, %v7275
    %v8149 = vpack.c.b16 %v7282, %v7279
    %v8150 = vpack.c.b16 %v7283, %v7280
    %v8151 = vpack.c.b16 %v7284, %v7281
    %v8152 = vpack.c.b16 %v7288, %v7285
    %v8153 = vpack.c.b16 %v7289, %v7286
    %v8154 = vpack.c.b16 %v7290, %v7287
    %v8155 = vpack.c.b16 %v7294, %v7291
    %v8156 = vpack.c.b16 %v7295, %v7292
    %v8157 = vpack.c.b16 %v7296, %v7293
    %v8158 = vpack.c.b16 %v7300, %v7297
    %v8159 = vpack.c.b16 %v7301, %v7298
    %v8160 = vpack.c.b16 %v7302, %v7299
    %v8161 = vpack.c.b16 %v7306, %v7303
    %v8162 = vpack.c.b16 %v7307, %v7304
    %v8163 = vpack.c.b16 %v7308, %v7305
    %v8164 = vpack.c.b16 %v7312, %v7309
    %v8165 = vpack.c.b16 %v7313, %v7310
    %v8166 = vpack.c.b16 %v7314, %v7311
    %v8167 = vpack.c.b16 %v7318, %v7315
    %v8168 = vpack.c.b16 %v7319, %v7316
    %v8169 = vpack.c.b16 %v7320, %v7317
    %v8170 = vpack.c.b16 %v7324, %v7321
    %v8171 = vpack.c.b16 %v7325, %v7322
    %v8172 = vpack.c.b16 %v7326, %v7323
    %v8173 = vpack.c.b16 %v7330, %v7327
    %v8174 = vpack.c.b16 %v7331, %v7328
    %v8175 = vpack.c.b16 %v7332, %v7329
    %v8176 = vpack.c.b16 %v7336, %v7333
    %v8177 = vpack.c.b16 %v7337, %v7334
    %v8178 = vpack.c.b16 %v7338, %v7335
    %v8179 = vpack.c.b16 %v7342, %v7339
    %v8180 = vpack.c.b16 %v7343, %v7340
    %v8181 = vpack.c.b16 %v7344, %v7341
    %v8182 = vpack.c.b16 %v7348, %v7345
    %v8183 = vpack.c.b16 %v7349, %v7346
    %v8184 = vpack.c.b16 %v7350, %v7347
    %v8185 = vpack.c.b16 %v7354, %v7351
    %v8186 = vpack.c.b16 %v7355, %v7352
    %v8187 = vpack.c.b16 %v7356, %v7353
    %v8188 = vpack.c.b16 %v7360, %v7357
    %v8189 = vpack.c.b16 %v7361, %v7358
    %v8190 = vpack.c.b16 %v7362, %v7359
    %v8191 = vpack.c.b16 %v7366, %v7363
    %v8192 = vpack.c.b16 %v7367, %v7364
    %v8193 = vpack.c.b16 %v7368, %v7365
    %v8194 = vpack.c.b16 %v7372, %v7369
    %v8195 = vpack.c.b16 %v7373, %v7370
    %v8196 = vpack.c.b16 %v7374, %v7371
    %v8197 = vpack.c.b16 %v7378, %v7375
    %v8198 = vpack.c.b16 %v7379, %v7376
    %v8199 = vpack.c.b16 %v7380, %v7377
    %v8200 = vpack.c.b16 %v7384, %v7381
    %v8201 = vpack.c.b16 %v7385, %v7382
    %v8202 = vpack.c.b16 %v7386, %v7383
    %v8203 = vpack.c.b16 %v7390, %v7387
    %v8204 = vpack.c.b16 %v7391, %v7388
    %v8205 = vpack.c.b16 %v7392, %v7389
    %v8206 = vpack.c.b16 %v7396, %v7393
    %v8207 = vpack.c.b16 %v7397, %v7394
    %v8208 = vpack.c.b16 %v7398, %v7395
    %v8209 = vpack.c.b16 %v7402, %v7399
    %v8210 = vpack.c.b16 %v7403, %v7400
    %v8211 = vpack.c.b16 %v7404, %v7401
    %v8212 = vpack.c.b16 %v7408, %v7405
    %v8213 = vpack.c.b16 %v7409, %v7406
    %v8214 = vpack.c.b16 %v7410, %v7407
    %v8215 = vpack.c.b16 %v7414, %v7411
    %v8216 = vpack.c.b16 %v7415, %v7412
    %v8217 = vpack.c.b16 %v7416, %v7413
    %v8218 = vpack.c.b16 %v7420, %v7417
    %v8219 = vpack.c.b16 %v7421, %v7418
    %v8220 = vpack.c.b16 %v7422, %v7419
    %v8221 = vpack.c.b16 %v7426, %v7423
    %v8222 = vpack.c.b16 %v7427, %v7424
    %v8223 = vpack.c.b16 %v7428, %v7425
    %v8224 = vpack.c.b16 %v7432, %v7429
    %v8225 = vpack.c.b16 %v7433, %v7430
    %v8226 = vpack.c.b16 %v7434, %v7431
    %v8227 = vpack.c.b16 %v7438, %v7435
    %v8228 = vpack.c.b16 %v7439, %v7436
    %v8229 = vpack.c.b16 %v7440, %v7437
    %v8230 = vpack.c.b16 %v7444, %v7441
    %v8231 = vpack.c.b16 %v7445, %v7442
    %v8232 = vpack.c.b16 %v7446, %v7443
    %v8233 = vpack.c.b16 %v7450, %v7447
    %v8234 = vpack.c.b16 %v7451, %v7448
    %v8235 = vpack.c.b16 %v7452, %v7449
    %v8236 = vpack.c.b16 %v7456, %v7453
    %v8237 = vpack.c.b16 %v7457, %v7454
    %v8238 = vpack.c.b16 %v7458, %v7455
    %v8239 = vpack.c.b16 %v7462, %v7459
    %v8240 = vpack.c.b16 %v7463, %v7460
    %v8241 = vpack.c.b16 %v7464, %v7461
    %v8242 = vpack.c.b16 %v7468, %v7465
    %v8243 = vpack.c.b16 %v7469, %v7466
    %v8244 = vpack.c.b16 %v7470, %v7467
    %v8245 = vpack.c.b16 %v7474, %v7471
    %v8246 = vpack.c.b16 %v7475, %v7472
    %v8247 = vpack.c.b16 %v7476, %v7473
    %v8248 = vpack.c.b16 %v7480, %v7477
    %v8249 = vpack.c.b16 %v7481, %v7478
    %v8250 = vpack.c.b16 %v7482, %v7479
    %9019 = vmatprep.subr.bf16.mxu0 %v7484
    %9020 = vmatpush1.bf16.msra.mxu0 %v7483
    %9021 = vmatprep.subr.bf16.mxu0 %v7487
    %9022 = vmatpush1.bf16.msra.mxu0 %v7486
    %9023 = vmatprep.subr.bf16.mxu0 %v7490
    %9024 = vmatpush1.bf16.msra.mxu0 %v7489
    %9025 = vmatprep.subr.bf16.mxu0 %v7493
    %9026 = vmatpush1.bf16.msra.mxu0 %v7492
    %9027 = vmatprep.subr.bf16.mxu0 %v7496
    %9028 = vmatpush1.bf16.msra.mxu0 %v7495
    %9029 = vmatprep.subr.bf16.mxu0 %v7499
    %9030 = vmatpush1.bf16.msra.mxu0 %v7498
    %9031 = vmatprep.subr.bf16.mxu0 %v7502
    %9032 = vmatpush1.bf16.msra.mxu0 %v7501
    %9033 = vmatprep.subr.bf16.mxu0 %v7505
    %9034 = vmatpush1.bf16.msra.mxu0 %v7504
    %9035 = vmatprep.subr.bf16.mxu0 %v7508
    %9036 = vmatpush1.bf16.msra.mxu0 %v7507
    %9037 = vmatprep.subr.bf16.mxu0 %v7511
    %9038 = vmatpush1.bf16.msra.mxu0 %v7510
    %9039 = vmatprep.subr.bf16.mxu0 %v7514
    %9040 = vmatpush1.bf16.msra.mxu0 %v7513
    %9041 = vmatprep.subr.bf16.mxu0 %v7517
    %9042 = vmatpush1.bf16.msra.mxu0 %v7516
    %9043 = vmatprep.subr.bf16.mxu0 %v7520
    %9044 = vmatpush1.bf16.msra.mxu0 %v7519
    %9045 = vmatprep.subr.bf16.mxu0 %v7523
    %9046 = vmatpush1.bf16.msra.mxu0 %v7522
    %9047 = vmatprep.subr.bf16.mxu0 %v7526
    %9048 = vmatpush1.bf16.msra.mxu0 %v7525
    %9049 = vmatprep.subr.bf16.mxu0 %v7529
    %9050 = vmatpush1.bf16.msra.mxu0 %v7528
    %9051 = vmatprep.mubr.bf16.mxu0 %v3851
    %9052 = vmatmul.mubr.bf16.gmra.mrb[0].mxu0 %v3850
    %v9053 = vpop.f32.mrb[0].mxu0
    %v9054 = vadd.f32 %v4911, %v9053
    %v9055 = vpop.f32.mrb[0].mxu0
    %v9056 = vadd.f32 %v4915, %v9055
    %v9057 = vpop.f32.mrb[0].mxu0
    %v9058 = vpop.f32.mrb[0].mxu0
    %9059 = vdwg.mxu0
    %9060 = vmatprep.subr.bf16.mxu0 %v7532
    %9061 = vmatpush1.bf16.msra.mxu0 %v7531
    %9062 = vmatprep.subr.bf16.mxu0 %v7535
    %9063 = vmatpush1.bf16.msra.mxu0 %v7534
    %9064 = vmatprep.subr.bf16.mxu0 %v7538
    %9065 = vmatpush1.bf16.msra.mxu0 %v7537
    %9066 = vmatprep.subr.bf16.mxu0 %v7541
    %9067 = vmatpush1.bf16.msra.mxu0 %v7540
    %9068 = vmatprep.subr.bf16.mxu0 %v7544
    %9069 = vmatpush1.bf16.msra.mxu0 %v7543
    %9070 = vmatprep.subr.bf16.mxu0 %v7547
    %9071 = vmatpush1.bf16.msra.mxu0 %v7546
    %9072 = vmatprep.subr.bf16.mxu0 %v7550
    %9073 = vmatpush1.bf16.msra.mxu0 %v7549
    %9074 = vmatprep.subr.bf16.mxu0 %v7553
    %9075 = vmatpush1.bf16.msra.mxu0 %v7552
    %9076 = vmatprep.subr.bf16.mxu0 %v7556
    %9077 = vmatpush1.bf16.msra.mxu0 %v7555
    %9078 = vmatprep.subr.bf16.mxu0 %v7559
    %9079 = vmatpush1.bf16.msra.mxu0 %v7558
    %9080 = vmatprep.subr.bf16.mxu0 %v7562
    %9081 = vmatpush1.bf16.msra.mxu0 %v7561
    %9082 = vmatprep.subr.bf16.mxu0 %v7565
    %9083 = vmatpush1.bf16.msra.mxu0 %v7564
    %9084 = vmatprep.subr.bf16.mxu0 %v7568
    %9085 = vmatpush1.bf16.msra.mxu0 %v7567
    %9086 = vmatprep.subr.bf16.mxu0 %v7571
    %9087 = vmatpush1.bf16.msra.mxu0 %v7570
    %9088 = vmatprep.subr.bf16.mxu0 %v7574
    %9089 = vmatpush1.bf16.msra.mxu0 %v7573
    %9090 = vmatprep.subr.bf16.mxu0 %v7577
    %9091 = vmatpush1.bf16.msra.mxu0 %v7576
    %9092 = vmatprep.mubr.bf16.mxu0 %v3853
    %9093 = vmatmul.mubr.bf16.gmra.mrb[0].mxu0 %v3852
    %v9094 = vpop.f32.mrb[0].mxu0
    %v9095 = vadd.f32 %v9054, %v9094
    %v9096 = vpop.f32.mrb[0].mxu0
    %v9097 = vadd.f32 %v9056, %v9096
    %v9098 = vpop.f32.mrb[0].mxu0
    %v9099 = vpop.f32.mrb[0].mxu0
    %9100 = vdwg.mxu0
    %9101 = vmatprep.subr.bf16.mxu0 %v7580
    %9102 = vmatpush1.bf16.msra.mxu0 %v7579
    %9103 = vmatprep.subr.bf16.mxu0 %v7583
    %9104 = vmatpush1.bf16.msra.mxu0 %v7582
    %9105 = vmatprep.subr.bf16.mxu0 %v7586
    %9106 = vmatpush1.bf16.msra.mxu0 %v7585
    %9107 = vmatprep.subr.bf16.mxu0 %v7589
    %9108 = vmatpush1.bf16.msra.mxu0 %v7588
    %9109 = vmatprep.subr.bf16.mxu0 %v7592
    %9110 = vmatpush1.bf16.msra.mxu0 %v7591
    %9111 = vmatprep.subr.bf16.mxu0 %v7595
    %9112 = vmatpush1.bf16.msra.mxu0 %v7594
    %9113 = vmatprep.subr.bf16.mxu0 %v7598
    %9114 = vmatpush1.bf16.msra.mxu0 %v7597
    %9115 = vmatprep.subr.bf16.mxu0 %v7601
    %9116 = vmatpush1.bf16.msra.mxu0 %v7600
    %9117 = vmatprep.subr.bf16.mxu0 %v7604
    %9118 = vmatpush1.bf16.msra.mxu0 %v7603
    %9119 = vmatprep.subr.bf16.mxu0 %v7607
    %9120 = vmatpush1.bf16.msra.mxu0 %v7606
    %9121 = vmatprep.subr.bf16.mxu0 %v7610
    %9122 = vmatpush1.bf16.msra.mxu0 %v7609
    %9123 = vmatprep.subr.bf16.mxu0 %v7613
    %9124 = vmatpush1.bf16.msra.mxu0 %v7612
    %9125 = vmatprep.subr.bf16.mxu0 %v7616
    %9126 = vmatpush1.bf16.msra.mxu0 %v7615
    %9127 = vmatprep.subr.bf16.mxu0 %v7619
    %9128 = vmatpush1.bf16.msra.mxu0 %v7618
    %9129 = vmatprep.subr.bf16.mxu0 %v7622
    %9130 = vmatpush1.bf16.msra.mxu0 %v7621
    %9131 = vmatprep.subr.bf16.mxu0 %v7625
    %9132 = vmatpush1.bf16.msra.mxu0 %v7624
    %9133 = vmatprep.mubr.bf16.mxu0 %v3855
    %9134 = vmatmul.mubr.bf16.gmra.mrb[0].mxu0 %v3854
    %v9135 = vpop.f32.mrb[0].mxu0
    %v9136 = vadd.f32 %v9095, %v9135
    %v9137 = vpop.f32.mrb[0].mxu0
    %v9138 = vadd.f32 %v9097, %v9137
    %v9139 = vpop.f32.mrb[0].mxu0
    %v9140 = vpop.f32.mrb[0].mxu0
    %9141 = vdwg.mxu0
    %9142 = vmatprep.subr.bf16.mxu0 %v7628
    %9143 = vmatpush1.bf16.msra.mxu0 %v7627
    %9144 = vmatprep.subr.bf16.mxu0 %v7631
    %9145 = vmatpush1.bf16.msra.mxu0 %v7630
    %9146 = vmatprep.subr.bf16.mxu0 %v7634
    %9147 = vmatpush1.bf16.msra.mxu0 %v7633
    %9148 = vmatprep.subr.bf16.mxu0 %v7637
    %9149 = vmatpush1.bf16.msra.mxu0 %v7636
    %9150 = vmatprep.subr.bf16.mxu0 %v7640
    %9151 = vmatpush1.bf16.msra.mxu0 %v7639
    %9152 = vmatprep.subr.bf16.mxu0 %v7643
    %9153 = vmatpush1.bf16.msra.mxu0 %v7642
    %9154 = vmatprep.subr.bf16.mxu0 %v7646
    %9155 = vmatpush1.bf16.msra.mxu0 %v7645
    %9156 = vmatprep.subr.bf16.mxu0 %v7649
    %9157 = vmatpush1.bf16.msra.mxu0 %v7648
    %9158 = vmatprep.subr.bf16.mxu0 %v7652
    %9159 = vmatpush1.bf16.msra.mxu0 %v7651
    %9160 = vmatprep.subr.bf16.mxu0 %v7655
    %9161 = vmatpush1.bf16.msra.mxu0 %v7654
    %9162 = vmatprep.subr.bf16.mxu0 %v7658
    %9163 = vmatpush1.bf16.msra.mxu0 %v7657
    %9164 = vmatprep.subr.bf16.mxu0 %v7661
    %9165 = vmatpush1.bf16.msra.mxu0 %v7660
    %9166 = vmatprep.subr.bf16.mxu0 %v7664
    %9167 = vmatpush1.bf16.msra.mxu0 %v7663
    %9168 = vmatprep.subr.bf16.mxu0 %v7667
    %9169 = vmatpush1.bf16.msra.mxu0 %v7666
    %9170 = vmatprep.subr.bf16.mxu0 %v7670
    %9171 = vmatpush1.bf16.msra.mxu0 %v7669
    %9172 = vmatprep.subr.bf16.mxu0 %v7673
    %9173 = vmatpush1.bf16.msra.mxu0 %v7672
    %9174 = vmatprep.mubr.bf16.mxu0 %v3857
    %9175 = vmatmul.mubr.bf16.gmra.mrb[0].mxu0 %v3856
    %v9176 = vpop.f32.mrb[0].mxu0
    %v9177 = vadd.f32 %v9136, %v9176
    %v9178 = vpop.f32.mrb[0].mxu0
    %v9179 = vadd.f32 %v9138, %v9178
    %v9180 = vpop.f32.mrb[0].mxu0
    %v9181 = vpop.f32.mrb[0].mxu0
    %9182 = vdwg.mxu0
    %9183 = vmatprep.subr.bf16.mxu0 %v7676
    %9184 = vmatpush1.bf16.msra.mxu0 %v7675
    %9185 = vmatprep.subr.bf16.mxu0 %v7679
    %9186 = vmatpush1.bf16.msra.mxu0 %v7678
    %9187 = vmatprep.subr.bf16.mxu0 %v7682
    %9188 = vmatpush1.bf16.msra.mxu0 %v7681
    %9189 = vmatprep.subr.bf16.mxu0 %v7685
    %9190 = vmatpush1.bf16.msra.mxu0 %v7684
    %9191 = vmatprep.subr.bf16.mxu0 %v7688
    %9192 = vmatpush1.bf16.msra.mxu0 %v7687
    %9193 = vmatprep.subr.bf16.mxu0 %v7691
    %9194 = vmatpush1.bf16.msra.mxu0 %v7690
    %9195 = vmatprep.subr.bf16.mxu0 %v7694
    %9196 = vmatpush1.bf16.msra.mxu0 %v7693
    %9197 = vmatprep.subr.bf16.mxu0 %v7697
    %9198 = vmatpush1.bf16.msra.mxu0 %v7696
    %9199 = vmatprep.subr.bf16.mxu0 %v7700
    %9200 = vmatpush1.bf16.msra.mxu0 %v7699
    %9201 = vmatprep.subr.bf16.mxu0 %v7703
    %9202 = vmatpush1.bf16.msra.mxu0 %v7702
    %9203 = vmatprep.subr.bf16.mxu0 %v7706
    %9204 = vmatpush1.bf16.msra.mxu0 %v7705
    %9205 = vmatprep.subr.bf16.mxu0 %v7709
    %9206 = vmatpush1.bf16.msra.mxu0 %v7708
    %9207 = vmatprep.subr.bf16.mxu0 %v7712
    %9208 = vmatpush1.bf16.msra.mxu0 %v7711
    %9209 = vmatprep.subr.bf16.mxu0 %v7715
    %9210 = vmatpush1.bf16.msra.mxu0 %v7714
    %9211 = vmatprep.subr.bf16.mxu0 %v7718
    %9212 = vmatpush1.bf16.msra.mxu0 %v7717
    %9213 = vmatprep.subr.bf16.mxu0 %v7721
    %9214 = vmatpush1.bf16.msra.mxu0 %v7720
    %9215 = vmatprep.mubr.bf16.mxu0 %v3859
    %9216 = vmatmul.mubr.bf16.gmra.mrb[0].mxu0 %v3858
    %v9217 = vpop.f32.mrb[0].mxu0
    %v9218 = vadd.f32 %v9177, %v9217
    %v9219 = vpop.f32.mrb[0].mxu0
    %v9220 = vadd.f32 %v9179, %v9219
    %v9221 = vpop.f32.mrb[0].mxu0
    %v9222 = vpop.f32.mrb[0].mxu0
    %9223 = vdwg.mxu0
    %9224 = vmatprep.subr.bf16.mxu0 %v7724
    %9225 = vmatpush1.bf16.msra.mxu0 %v7723
    %9226 = vmatprep.subr.bf16.mxu0 %v7727
    %9227 = vmatpush1.bf16.msra.mxu0 %v7726
    %9228 = vmatprep.subr.bf16.mxu0 %v7730
    %9229 = vmatpush1.bf16.msra.mxu0 %v7729
    %9230 = vmatprep.subr.bf16.mxu0 %v7733
    %9231 = vmatpush1.bf16.msra.mxu0 %v7732
    %9232 = vmatprep.subr.bf16.mxu0 %v7736
    %9233 = vmatpush1.bf16.msra.mxu0 %v7735
    %9234 = vmatprep.subr.bf16.mxu0 %v7739
    %9235 = vmatpush1.bf16.msra.mxu0 %v7738
    %9236 = vmatprep.subr.bf16.mxu0 %v7742
    %9237 = vmatpush1.bf16.msra.mxu0 %v7741
    %9238 = vmatprep.subr.bf16.mxu0 %v7745
    %9239 = vmatpush1.bf16.msra.mxu0 %v7744
    %9240 = vmatprep.subr.bf16.mxu0 %v7748
    %9241 = vmatpush1.bf16.msra.mxu0 %v7747
    %9242 = vmatprep.subr.bf16.mxu0 %v7751
    %9243 = vmatpush1.bf16.msra.mxu0 %v7750
    %9244 = vmatprep.subr.bf16.mxu0 %v7754
    %9245 = vmatpush1.bf16.msra.mxu0 %v7753
    %9246 = vmatprep.subr.bf16.mxu0 %v7757
    %9247 = vmatpush1.bf16.msra.mxu0 %v7756
    %9248 = vmatprep.subr.bf16.mxu0 %v7760
    %9249 = vmatpush1.bf16.msra.mxu0 %v7759
    %9250 = vmatprep.subr.bf16.mxu0 %v7763
    %9251 = vmatpush1.bf16.msra.mxu0 %v7762
    %9252 = vmatprep.subr.bf16.mxu0 %v7766
    %9253 = vmatpush1.bf16.msra.mxu0 %v7765
    %9254 = vmatprep.subr.bf16.mxu0 %v7769
    %9255 = vmatpush1.bf16.msra.mxu0 %v7768
    %9256 = vmatprep.mubr.bf16.mxu0 %v3861
    %9257 = vmatmul.mubr.bf16.gmra.mrb[0].mxu0 %v3860
    %v9258 = vpop.f32.mrb[0].mxu0
    %v9259 = vadd.f32 %v9218, %v9258
    %v9260 = vpop.f32.mrb[0].mxu0
    %v9261 = vadd.f32 %v9220, %v9260
    %v9262 = vpop.f32.mrb[0].mxu0
    %v9263 = vpop.f32.mrb[0].mxu0
    %9264 = vdwg.mxu0
    %9265 = vmatprep.subr.bf16.mxu0 %v7772
    %9266 = vmatpush1.bf16.msra.mxu0 %v7771
    %9267 = vmatprep.subr.bf16.mxu0 %v7775
    %9268 = vmatpush1.bf16.msra.mxu0 %v7774
    %9269 = vmatprep.subr.bf16.mxu0 %v7778
    %9270 = vmatpush1.bf16.msra.mxu0 %v7777
    %9271 = vmatprep.subr.bf16.mxu0 %v7781
    %9272 = vmatpush1.bf16.msra.mxu0 %v7780
    %9273 = vmatprep.subr.bf16.mxu0 %v7784
    %9274 = vmatpush1.bf16.msra.mxu0 %v7783
    %9275 = vmatprep.subr.bf16.mxu0 %v7787
    %9276 = vmatpush1.bf16.msra.mxu0 %v7786
    %9277 = vmatprep.subr.bf16.mxu0 %v7790
    %9278 = vmatpush1.bf16.msra.mxu0 %v7789
    %9279 = vmatprep.subr.bf16.mxu0 %v7793
    %9280 = vmatpush1.bf16.msra.mxu0 %v7792
    %9281 = vmatprep.subr.bf16.mxu0 %v7796
    %9282 = vmatpush1.bf16.msra.mxu0 %v7795
    %9283 = vmatprep.subr.bf16.mxu0 %v7799
    %9284 = vmatpush1.bf16.msra.mxu0 %v7798
    %9285 = vmatprep.subr.bf16.mxu0 %v7802
    %9286 = vmatpush1.bf16.msra.mxu0 %v7801
    %9287 = vmatprep.subr.bf16.mxu0 %v7805
    %9288 = vmatpush1.bf16.msra.mxu0 %v7804
    %9289 = vmatprep.subr.bf16.mxu0 %v7808
    %9290 = vmatpush1.bf16.msra.mxu0 %v7807
    %9291 = vmatprep.subr.bf16.mxu0 %v7811
    %9292 = vmatpush1.bf16.msra.mxu0 %v7810
    %9293 = vmatprep.subr.bf16.mxu0 %v7814
    %9294 = vmatpush1.bf16.msra.mxu0 %v7813
    %9295 = vmatprep.subr.bf16.mxu0 %v7817
    %9296 = vmatpush1.bf16.msra.mxu0 %v7816
    %9297 = vmatprep.mubr.bf16.mxu0 %v3863
    %9298 = vmatmul.mubr.bf16.gmra.mrb[0].mxu0 %v3862
    %v9299 = vpop.f32.mrb[0].mxu0
    %v9300 = vadd.f32 %v9259, %v9299
    %v9301 = vpop.f32.mrb[0].mxu0
    %v9302 = vadd.f32 %v9261, %v9301
    %v9303 = vpop.f32.mrb[0].mxu0
    %v9304 = vpop.f32.mrb[0].mxu0
    %9305 = vdwg.mxu0
    %9306 = vmatprep.subr.bf16.mxu0 %v7820
    %9307 = vmatpush1.bf16.msra.mxu0 %v7819
    %9308 = vmatprep.subr.bf16.mxu0 %v7823
    %9309 = vmatpush1.bf16.msra.mxu0 %v7822
    %9310 = vmatprep.subr.bf16.mxu0 %v7826
    %9311 = vmatpush1.bf16.msra.mxu0 %v7825
    %9312 = vmatprep.subr.bf16.mxu0 %v7829
    %9313 = vmatpush1.bf16.msra.mxu0 %v7828
    %9314 = vmatprep.subr.bf16.mxu0 %v7832
    %9315 = vmatpush1.bf16.msra.mxu0 %v7831
    %9316 = vmatprep.subr.bf16.mxu0 %v7835
    %9317 = vmatpush1.bf16.msra.mxu0 %v7834
    %9318 = vmatprep.subr.bf16.mxu0 %v7838
    %9319 = vmatpush1.bf16.msra.mxu0 %v7837
    %9320 = vmatprep.subr.bf16.mxu0 %v7841
    %9321 = vmatpush1.bf16.msra.mxu0 %v7840
    %9322 = vmatprep.subr.bf16.mxu0 %v7844
    %9323 = vmatpush1.bf16.msra.mxu0 %v7843
    %9324 = vmatprep.subr.bf16.mxu0 %v7847
    %9325 = vmatpush1.bf16.msra.mxu0 %v7846
    %9326 = vmatprep.subr.bf16.mxu0 %v7850
    %9327 = vmatpush1.bf16.msra.mxu0 %v7849
    %9328 = vmatprep.subr.bf16.mxu0 %v7853
    %9329 = vmatpush1.bf16.msra.mxu0 %v7852
    %9330 = vmatprep.subr.bf16.mxu0 %v7856
    %9331 = vmatpush1.bf16.msra.mxu0 %v7855
    %9332 = vmatprep.subr.bf16.mxu0 %v7859
    %9333 = vmatpush1.bf16.msra.mxu0 %v7858
    %9334 = vmatprep.subr.bf16.mxu0 %v7862
    %9335 = vmatpush1.bf16.msra.mxu0 %v7861
    %9336 = vmatprep.subr.bf16.mxu0 %v7865
    %9337 = vmatpush1.bf16.msra.mxu0 %v7864
    %9338 = vmatprep.mubr.bf16.mxu0 %v3865
    %9339 = vmatmul.mubr.bf16.gmra.mrb[0].mxu0 %v3864
    %v9340 = vpop.f32.mrb[0].mxu0
    %v9341 = vadd.f32 %v9300, %v9340
    %v9342 = vpop.f32.mrb[0].mxu0
    %v9343 = vadd.f32 %v9302, %v9342
    %v9344 = vpop.f32.mrb[0].mxu0
    %v9345 = vpop.f32.mrb[0].mxu0
    %9346 = vdwg.mxu0
    %9347 = vmatprep.subr.bf16.mxu0 %v7868
    %9348 = vmatpush1.bf16.msra.mxu0 %v7867
    %9349 = vmatprep.subr.bf16.mxu0 %v7871
    %9350 = vmatpush1.bf16.msra.mxu0 %v7870
    %9351 = vmatprep.subr.bf16.mxu0 %v7874
    %9352 = vmatpush1.bf16.msra.mxu0 %v7873
    %9353 = vmatprep.subr.bf16.mxu0 %v7877
    %9354 = vmatpush1.bf16.msra.mxu0 %v7876
    %9355 = vmatprep.subr.bf16.mxu0 %v7880
    %9356 = vmatpush1.bf16.msra.mxu0 %v7879
    %9357 = vmatprep.subr.bf16.mxu0 %v7883
    %9358 = vmatpush1.bf16.msra.mxu0 %v7882
    %9359 = vmatprep.subr.bf16.mxu0 %v7886
    %9360 = vmatpush1.bf16.msra.mxu0 %v7885
    %9361 = vmatprep.subr.bf16.mxu0 %v7889
    %9362 = vmatpush1.bf16.msra.mxu0 %v7888
    %9363 = vmatprep.subr.bf16.mxu0 %v7892
    %9364 = vmatpush1.bf16.msra.mxu0 %v7891
    %9365 = vmatprep.subr.bf16.mxu0 %v7895
    %9366 = vmatpush1.bf16.msra.mxu0 %v7894
    %9367 = vmatprep.subr.bf16.mxu0 %v7898
    %9368 = vmatpush1.bf16.msra.mxu0 %v7897
    %9369 = vmatprep.subr.bf16.mxu0 %v7901
    %9370 = vmatpush1.bf16.msra.mxu0 %v7900
    %9371 = vmatprep.subr.bf16.mxu0 %v7904
    %9372 = vmatpush1.bf16.msra.mxu0 %v7903
    %9373 = vmatprep.subr.bf16.mxu0 %v7907
    %9374 = vmatpush1.bf16.msra.mxu0 %v7906
    %9375 = vmatprep.subr.bf16.mxu0 %v7910
    %9376 = vmatpush1.bf16.msra.mxu0 %v7909
    %9377 = vmatprep.subr.bf16.mxu0 %v7913
    %9378 = vmatpush1.bf16.msra.mxu0 %v7912
    %9379 = vmatprep.mubr.bf16.mxu0 %v3867
    %9380 = vmatmul.mubr.bf16.gmra.mrb[0].mxu0 %v3866
    %v9381 = vpop.f32.mrb[0].mxu0
    %v9382 = vadd.f32 %v9341, %v9381
    %v9383 = vpop.f32.mrb[0].mxu0
    %v9384 = vadd.f32 %v9343, %v9383
    %v9385 = vpop.f32.mrb[0].mxu0
    %v9386 = vpop.f32.mrb[0].mxu0
    %9387 = vdwg.mxu0
    %9388 = vmatprep.subr.bf16.mxu0 %v7916
    %9389 = vmatpush1.bf16.msra.mxu0 %v7915
    %9390 = vmatprep.subr.bf16.mxu0 %v7919
    %9391 = vmatpush1.bf16.msra.mxu0 %v7918
    %9392 = vmatprep.subr.bf16.mxu0 %v7922
    %9393 = vmatpush1.bf16.msra.mxu0 %v7921
    %9394 = vmatprep.subr.bf16.mxu0 %v7925
    %9395 = vmatpush1.bf16.msra.mxu0 %v7924
    %9396 = vmatprep.subr.bf16.mxu0 %v7928
    %9397 = vmatpush1.bf16.msra.mxu0 %v7927
    %9398 = vmatprep.subr.bf16.mxu0 %v7931
    %9399 = vmatpush1.bf16.msra.mxu0 %v7930
    %9400 = vmatprep.subr.bf16.mxu0 %v7934
    %9401 = vmatpush1.bf16.msra.mxu0 %v7933
    %9402 = vmatprep.subr.bf16.mxu0 %v7937
    %9403 = vmatpush1.bf16.msra.mxu0 %v7936
    %9404 = vmatprep.subr.bf16.mxu0 %v7940
    %9405 = vmatpush1.bf16.msra.mxu0 %v7939
    %9406 = vmatprep.subr.bf16.mxu0 %v7943
    %9407 = vmatpush1.bf16.msra.mxu0 %v7942
    %9408 = vmatprep.subr.bf16.mxu0 %v7946
    %9409 = vmatpush1.bf16.msra.mxu0 %v7945
    %9410 = vmatprep.subr.bf16.mxu0 %v7949
    %9411 = vmatpush1.bf16.msra.mxu0 %v7948
    %9412 = vmatprep.subr.bf16.mxu0 %v7952
    %9413 = vmatpush1.bf16.msra.mxu0 %v7951
    %9414 = vmatprep.subr.bf16.mxu0 %v7955
    %9415 = vmatpush1.bf16.msra.mxu0 %v7954
    %9416 = vmatprep.subr.bf16.mxu0 %v7958
    %9417 = vmatpush1.bf16.msra.mxu0 %v7957
    %9418 = vmatprep.subr.bf16.mxu0 %v7961
    %9419 = vmatpush1.bf16.msra.mxu0 %v7960
    %9420 = vmatprep.mubr.bf16.mxu0 %v3869
    %9421 = vmatmul.mubr.bf16.gmra.mrb[0].mxu0 %v3868
    %v9422 = vpop.f32.mrb[0].mxu0
    %v9423 = vadd.f32 %v9382, %v9422
    %v9424 = vpop.f32.mrb[0].mxu0
    %v9425 = vadd.f32 %v9384, %v9424
    %v9426 = vpop.f32.mrb[0].mxu0
    %v9427 = vpop.f32.mrb[0].mxu0
    %9428 = vdwg.mxu0
    %9429 = vmatprep.subr.bf16.mxu0 %v7964
    %9430 = vmatpush1.bf16.msra.mxu0 %v7963
    %9431 = vmatprep.subr.bf16.mxu0 %v7967
    %9432 = vmatpush1.bf16.msra.mxu0 %v7966
    %9433 = vmatprep.subr.bf16.mxu0 %v7970
    %9434 = vmatpush1.bf16.msra.mxu0 %v7969
    %9435 = vmatprep.subr.bf16.mxu0 %v7973
    %9436 = vmatpush1.bf16.msra.mxu0 %v7972
    %9437 = vmatprep.subr.bf16.mxu0 %v7976
    %9438 = vmatpush1.bf16.msra.mxu0 %v7975
    %9439 = vmatprep.subr.bf16.mxu0 %v7979
    %9440 = vmatpush1.bf16.msra.mxu0 %v7978
    %9441 = vmatprep.subr.bf16.mxu0 %v7982
    %9442 = vmatpush1.bf16.msra.mxu0 %v7981
    %9443 = vmatprep.subr.bf16.mxu0 %v7985
    %9444 = vmatpush1.bf16.msra.mxu0 %v7984
    %9445 = vmatprep.subr.bf16.mxu0 %v7988
    %9446 = vmatpush1.bf16.msra.mxu0 %v7987
    %9447 = vmatprep.subr.bf16.mxu0 %v7991
    %9448 = vmatpush1.bf16.msra.mxu0 %v7990
    %9449 = vmatprep.subr.bf16.mxu0 %v7994
    %9450 = vmatpush1.bf16.msra.mxu0 %v7993
    %9451 = vmatprep.subr.bf16.mxu0 %v7997
    %9452 = vmatpush1.bf16.msra.mxu0 %v7996
    %9453 = vmatprep.subr.bf16.mxu0 %v8000
    %9454 = vmatpush1.bf16.msra.mxu0 %v7999
    %9455 = vmatprep.subr.bf16.mxu0 %v8003
    %9456 = vmatpush1.bf16.msra.mxu0 %v8002
    %9457 = vmatprep.subr.bf16.mxu0 %v8006
    %9458 = vmatpush1.bf16.msra.mxu0 %v8005
    %9459 = vmatprep.subr.bf16.mxu0 %v8009
    %9460 = vmatpush1.bf16.msra.mxu0 %v8008
    %9461 = vmatprep.mubr.bf16.mxu0 %v3871
    %9462 = vmatmul.mubr.bf16.gmra.mrb[0].mxu0 %v3870
    %v9463 = vpop.f32.mrb[0].mxu0
    %v9464 = vadd.f32 %v9423, %v9463
    %v9465 = vpop.f32.mrb[0].mxu0
    %v9466 = vadd.f32 %v9425, %v9465
    %v9467 = vpop.f32.mrb[0].mxu0
    %v9468 = vpop.f32.mrb[0].mxu0
    %9469 = vdwg.mxu0
    %9470 = vmatprep.subr.bf16.mxu0 %v8012
    %9471 = vmatpush1.bf16.msra.mxu0 %v8011
    %9472 = vmatprep.subr.bf16.mxu0 %v8015
    %9473 = vmatpush1.bf16.msra.mxu0 %v8014
    %9474 = vmatprep.subr.bf16.mxu0 %v8018
    %9475 = vmatpush1.bf16.msra.mxu0 %v8017
    %9476 = vmatprep.subr.bf16.mxu0 %v8021
    %9477 = vmatpush1.bf16.msra.mxu0 %v8020
    %9478 = vmatprep.subr.bf16.mxu0 %v8024
    %9479 = vmatpush1.bf16.msra.mxu0 %v8023
    %9480 = vmatprep.subr.bf16.mxu0 %v8027
    %9481 = vmatpush1.bf16.msra.mxu0 %v8026
    %9482 = vmatprep.subr.bf16.mxu0 %v8030
    %9483 = vmatpush1.bf16.msra.mxu0 %v8029
    %9484 = vmatprep.subr.bf16.mxu0 %v8033
    %9485 = vmatpush1.bf16.msra.mxu0 %v8032
    %9486 = vmatprep.subr.bf16.mxu0 %v8036
    %9487 = vmatpush1.bf16.msra.mxu0 %v8035
    %9488 = vmatprep.subr.bf16.mxu0 %v8039
    %9489 = vmatpush1.bf16.msra.mxu0 %v8038
    %9490 = vmatprep.subr.bf16.mxu0 %v8042
    %9491 = vmatpush1.bf16.msra.mxu0 %v8041
    %9492 = vmatprep.subr.bf16.mxu0 %v8045
    %9493 = vmatpush1.bf16.msra.mxu0 %v8044
    %9494 = vmatprep.subr.bf16.mxu0 %v8048
    %9495 = vmatpush1.bf16.msra.mxu0 %v8047
    %9496 = vmatprep.subr.bf16.mxu0 %v8051
    %9497 = vmatpush1.bf16.msra.mxu0 %v8050
    %9498 = vmatprep.subr.bf16.mxu0 %v8054
    %9499 = vmatpush1.bf16.msra.mxu0 %v8053
    %9500 = vmatprep.subr.bf16.mxu0 %v8057
    %9501 = vmatpush1.bf16.msra.mxu0 %v8056
    %9502 = vmatprep.mubr.bf16.mxu0 %v3873
    %9503 = vmatmul.mubr.bf16.gmra.mrb[0].mxu0 %v3872
    %v9504 = vpop.f32.mrb[0].mxu0
    %v9505 = vadd.f32 %v9464, %v9504
    %v9506 = vpop.f32.mrb[0].mxu0
    %v9507 = vadd.f32 %v9466, %v9506
    %v9508 = vpop.f32.mrb[0].mxu0
    %v9509 = vpop.f32.mrb[0].mxu0
    %9510 = vdwg.mxu0
    %9511 = vmatprep.subr.bf16.mxu0 %v8060
    %9512 = vmatpush1.bf16.msra.mxu0 %v8059
    %9513 = vmatprep.subr.bf16.mxu0 %v8063
    %9514 = vmatpush1.bf16.msra.mxu0 %v8062
    %9515 = vmatprep.subr.bf16.mxu0 %v8066
    %9516 = vmatpush1.bf16.msra.mxu0 %v8065
    %9517 = vmatprep.subr.bf16.mxu0 %v8069
    %9518 = vmatpush1.bf16.msra.mxu0 %v8068
    %9519 = vmatprep.subr.bf16.mxu0 %v8072
    %9520 = vmatpush1.bf16.msra.mxu0 %v8071
    %9521 = vmatprep.subr.bf16.mxu0 %v8075
    %9522 = vmatpush1.bf16.msra.mxu0 %v8074
    %9523 = vmatprep.subr.bf16.mxu0 %v8078
    %9524 = vmatpush1.bf16.msra.mxu0 %v8077
    %9525 = vmatprep.subr.bf16.mxu0 %v8081
    %9526 = vmatpush1.bf16.msra.mxu0 %v8080
    %9527 = vmatprep.subr.bf16.mxu0 %v8084
    %9528 = vmatpush1.bf16.msra.mxu0 %v8083
    %9529 = vmatprep.subr.bf16.mxu0 %v8087
    %9530 = vmatpush1.bf16.msra.mxu0 %v8086
    %9531 = vmatprep.subr.bf16.mxu0 %v8090
    %9532 = vmatpush1.bf16.msra.mxu0 %v8089
    %9533 = vmatprep.subr.bf16.mxu0 %v8093
    %9534 = vmatpush1.bf16.msra.mxu0 %v8092
    %9535 = vmatprep.subr.bf16.mxu0 %v8096
    %9536 = vmatpush1.bf16.msra.mxu0 %v8095
    %9537 = vmatprep.subr.bf16.mxu0 %v8099
    %9538 = vmatpush1.bf16.msra.mxu0 %v8098
    %9539 = vmatprep.subr.bf16.mxu0 %v8102
    %9540 = vmatpush1.bf16.msra.mxu0 %v8101
    %9541 = vmatprep.subr.bf16.mxu0 %v8105
    %9542 = vmatpush1.bf16.msra.mxu0 %v8104
    %9543 = vmatprep.mubr.bf16.mxu0 %v3875
    %9544 = vmatmul.mubr.bf16.gmra.mrb[0].mxu0 %v3874
    %v9545 = vpop.f32.mrb[0].mxu0
    %v9546 = vadd.f32 %v9505, %v9545
    %v9547 = vpop.f32.mrb[0].mxu0
    %v9548 = vadd.f32 %v9507, %v9547
    %v9549 = vpop.f32.mrb[0].mxu0
    %v9550 = vpop.f32.mrb[0].mxu0
    %9551 = vdwg.mxu0
    %9552 = vmatprep.subr.bf16.mxu0 %v8108
    %9553 = vmatpush1.bf16.msra.mxu0 %v8107
    %9554 = vmatprep.subr.bf16.mxu0 %v8111
    %9555 = vmatpush1.bf16.msra.mxu0 %v8110
    %9556 = vmatprep.subr.bf16.mxu0 %v8114
    %9557 = vmatpush1.bf16.msra.mxu0 %v8113
    %9558 = vmatprep.subr.bf16.mxu0 %v8117
    %9559 = vmatpush1.bf16.msra.mxu0 %v8116
    %9560 = vmatprep.subr.bf16.mxu0 %v8120
    %9561 = vmatpush1.bf16.msra.mxu0 %v8119
    %9562 = vmatprep.subr.bf16.mxu0 %v8123
    %9563 = vmatpush1.bf16.msra.mxu0 %v8122
    %9564 = vmatprep.subr.bf16.mxu0 %v8126
    %9565 = vmatpush1.bf16.msra.mxu0 %v8125
    %9566 = vmatprep.subr.bf16.mxu0 %v8129
    %9567 = vmatpush1.bf16.msra.mxu0 %v8128
    %9568 = vmatprep.subr.bf16.mxu0 %v8132
    %9569 = vmatpush1.bf16.msra.mxu0 %v8131
    %9570 = vmatprep.subr.bf16.mxu0 %v8135
    %9571 = vmatpush1.bf16.msra.mxu0 %v8134
    %9572 = vmatprep.subr.bf16.mxu0 %v8138
    %9573 = vmatpush1.bf16.msra.mxu0 %v8137
    %9574 = vmatprep.subr.bf16.mxu0 %v8141
    %9575 = vmatpush1.bf16.msra.mxu0 %v8140
    %9576 = vmatprep.subr.bf16.mxu0 %v8144
    %9577 = vmatpush1.bf16.msra.mxu0 %v8143
    %9578 = vmatprep.subr.bf16.mxu0 %v8147
    %9579 = vmatpush1.bf16.msra.mxu0 %v8146
    %9580 = vmatprep.subr.bf16.mxu0 %v8150
    %9581 = vmatpush1.bf16.msra.mxu0 %v8149
    %9582 = vmatprep.subr.bf16.mxu0 %v8153
    %9583 = vmatpush1.bf16.msra.mxu0 %v8152
    %9584 = vmatprep.mubr.bf16.mxu0 %v3877
    %9585 = vmatmul.mubr.bf16.gmra.mrb[0].mxu0 %v3876
    %v9586 = vpop.f32.mrb[0].mxu0
    %v9587 = vadd.f32 %v9546, %v9586
    %v9588 = vpop.f32.mrb[0].mxu0
    %v9589 = vadd.f32 %v9548, %v9588
    %v9590 = vpop.f32.mrb[0].mxu0
    %v9591 = vpop.f32.mrb[0].mxu0
    %9592 = vdwg.mxu0
    %9593 = vmatprep.subr.bf16.mxu0 %v8156
    %9594 = vmatpush1.bf16.msra.mxu0 %v8155
    %9595 = vmatprep.subr.bf16.mxu0 %v8159
    %9596 = vmatpush1.bf16.msra.mxu0 %v8158
    %9597 = vmatprep.subr.bf16.mxu0 %v8162
    %9598 = vmatpush1.bf16.msra.mxu0 %v8161
    %9599 = vmatprep.subr.bf16.mxu0 %v8165
    %9600 = vmatpush1.bf16.msra.mxu0 %v8164
    %9601 = vmatprep.subr.bf16.mxu0 %v8168
    %9602 = vmatpush1.bf16.msra.mxu0 %v8167
    %9603 = vmatprep.subr.bf16.mxu0 %v8171
    %9604 = vmatpush1.bf16.msra.mxu0 %v8170
    %9605 = vmatprep.subr.bf16.mxu0 %v8174
    %9606 = vmatpush1.bf16.msra.mxu0 %v8173
    %9607 = vmatprep.subr.bf16.mxu0 %v8177
    %9608 = vmatpush1.bf16.msra.mxu0 %v8176
    %9609 = vmatprep.subr.bf16.mxu0 %v8180
    %9610 = vmatpush1.bf16.msra.mxu0 %v8179
    %9611 = vmatprep.subr.bf16.mxu0 %v8183
    %9612 = vmatpush1.bf16.msra.mxu0 %v8182
    %9613 = vmatprep.subr.bf16.mxu0 %v8186
    %9614 = vmatpush1.bf16.msra.mxu0 %v8185
    %9615 = vmatprep.subr.bf16.mxu0 %v8189
    %9616 = vmatpush1.bf16.msra.mxu0 %v8188
    %9617 = vmatprep.subr.bf16.mxu0 %v8192
    %9618 = vmatpush1.bf16.msra.mxu0 %v8191
    %9619 = vmatprep.subr.bf16.mxu0 %v8195
    %9620 = vmatpush1.bf16.msra.mxu0 %v8194
    %9621 = vmatprep.subr.bf16.mxu0 %v8198
    %9622 = vmatpush1.bf16.msra.mxu0 %v8197
    %9623 = vmatprep.subr.bf16.mxu0 %v8201
    %9624 = vmatpush1.bf16.msra.mxu0 %v8200
    %9625 = vmatprep.mubr.bf16.mxu0 %v3879
    %9626 = vmatmul.mubr.bf16.gmra.mrb[0].mxu0 %v3878
    %v9627 = vpop.f32.mrb[0].mxu0
    %v9628 = vadd.f32 %v9587, %v9627
    %v9629 = vpop.f32.mrb[0].mxu0
    %v9630 = vadd.f32 %v9589, %v9629
    %v9631 = vpop.f32.mrb[0].mxu0
    %v9632 = vpop.f32.mrb[0].mxu0
    %9633 = vdwg.mxu0
    %9634 = vmatprep.subr.bf16.mxu0 %v8204
    %9635 = vmatpush1.bf16.msra.mxu0 %v8203
    %9636 = vmatprep.subr.bf16.mxu0 %v8207
    %9637 = vmatpush1.bf16.msra.mxu0 %v8206
    %9638 = vmatprep.subr.bf16.mxu0 %v8210
    %9639 = vmatpush1.bf16.msra.mxu0 %v8209
    %9640 = vmatprep.subr.bf16.mxu0 %v8213
    %9641 = vmatpush1.bf16.msra.mxu0 %v8212
    %9642 = vmatprep.subr.bf16.mxu0 %v8216
    %9643 = vmatpush1.bf16.msra.mxu0 %v8215
    %9644 = vmatprep.subr.bf16.mxu0 %v8219
    %9645 = vmatpush1.bf16.msra.mxu0 %v8218
    %9646 = vmatprep.subr.bf16.mxu0 %v8222
    %9647 = vmatpush1.bf16.msra.mxu0 %v8221
    %9648 = vmatprep.subr.bf16.mxu0 %v8225
    %9649 = vmatpush1.bf16.msra.mxu0 %v8224
    %9650 = vmatprep.subr.bf16.mxu0 %v8228
    %9651 = vmatpush1.bf16.msra.mxu0 %v8227
    %9652 = vmatprep.subr.bf16.mxu0 %v8231
    %9653 = vmatpush1.bf16.msra.mxu0 %v8230
    %9654 = vmatprep.subr.bf16.mxu0 %v8234
    %9655 = vmatpush1.bf16.msra.mxu0 %v8233
    %9656 = vmatprep.subr.bf16.mxu0 %v8237
    %9657 = vmatpush1.bf16.msra.mxu0 %v8236
    %9658 = vmatprep.subr.bf16.mxu0 %v8240
    %9659 = vmatpush1.bf16.msra.mxu0 %v8239
    %9660 = vmatprep.subr.bf16.mxu0 %v8243
    %9661 = vmatpush1.bf16.msra.mxu0 %v8242
    %9662 = vmatprep.subr.bf16.mxu0 %v8246
    %9663 = vmatpush1.bf16.msra.mxu0 %v8245
    %9664 = vmatprep.subr.bf16.mxu0 %v8249
    %9665 = vmatpush1.bf16.msra.mxu0 %v8248
    %9666 = vmatprep.mubr.bf16.mxu0 %v3881
    %9667 = vmatmul.mubr.bf16.gmra.mrb[0].mxu0 %v3880
    %v9668 = vpop.f32.mrb[0].mxu0
    %v9669 = vadd.f32 %v9628, %v9668
    %v9670 = vpop.f32.mrb[0].mxu0
    %v9671 = vadd.f32 %v9630, %v9670
    %v9672 = vpop.f32.mrb[0].mxu0
    %v9673 = vpop.f32.mrb[0].mxu0
    %9674 = vdwg.mxu0
    %9675 = vmatprep.subr.bf16.mxu0 0
    %9676 = vmatpush1.bf16.msra.mxu0 %v7485
    %9677 = vmatprep.subr.bf16.mxu0 0
    %9678 = vmatpush1.bf16.msra.mxu0 %v7488
    %9679 = vmatprep.subr.bf16.mxu0 0
    %9680 = vmatpush1.bf16.msra.mxu0 %v7491
    %9681 = vmatprep.subr.bf16.mxu0 0
    %9682 = vmatpush1.bf16.msra.mxu0 %v7494
    %9683 = vmatprep.subr.bf16.mxu0 0
    %9684 = vmatpush1.bf16.msra.mxu0 %v7497
    %9685 = vmatprep.subr.bf16.mxu0 0
    %9686 = vmatpush1.bf16.msra.mxu0 %v7500
    %9687 = vmatprep.subr.bf16.mxu0 0
    %9688 = vmatpush1.bf16.msra.mxu0 %v7503
    %9689 = vmatprep.subr.bf16.mxu0 0
    %9690 = vmatpush1.bf16.msra.mxu0 %v7506
    %9691 = vmatprep.subr.bf16.mxu0 0
    %9692 = vmatpush1.bf16.msra.mxu0 %v7509
    %9693 = vmatprep.subr.bf16.mxu0 0
    %9694 = vmatpush1.bf16.msra.mxu0 %v7512
    %9695 = vmatprep.subr.bf16.mxu0 0
    %9696 = vmatpush1.bf16.msra.mxu0 %v7515
    %9697 = vmatprep.subr.bf16.mxu0 0
    %9698 = vmatpush1.bf16.msra.mxu0 %v7518
    %9699 = vmatprep.subr.bf16.mxu0 0
    %9700 = vmatpush1.bf16.msra.mxu0 %v7521
    %9701 = vmatprep.subr.bf16.mxu0 0
    %9702 = vmatpush1.bf16.msra.mxu0 %v7524
    %9703 = vmatprep.subr.bf16.mxu0 0
    %9704 = vmatpush1.bf16.msra.mxu0 %v7527
    %9705 = vmatprep.subr.bf16.mxu0 0
    %9706 = vmatpush1.bf16.msra.mxu0 %v7530
    %9707 = vmatprep.mubr.bf16.mxu0 %v3851
    %9708 = vmatmul.mubr.bf16.gmra.mrb[0].mxu0 %v3850
    %v9709 = vpop.f32.mrb[0].mxu0
    %v9710 = vadd.f32 %v4919, %v9709
    %v9711 = vpop.f32.mrb[0].mxu0
    %v9712 = vpop.f32.mrb[0].mxu0
    %v9713 = vpop.f32.mrb[0].mxu0
    %9714 = vdwg.mxu0
    %9715 = vmatprep.subr.bf16.mxu0 0
    %9716 = vmatpush1.bf16.msra.mxu0 %v7533
    %9717 = vmatprep.subr.bf16.mxu0 0
    %9718 = vmatpush1.bf16.msra.mxu0 %v7536
    %9719 = vmatprep.subr.bf16.mxu0 0
    %9720 = vmatpush1.bf16.msra.mxu0 %v7539
    %9721 = vmatprep.subr.bf16.mxu0 0
    %9722 = vmatpush1.bf16.msra.mxu0 %v7542
    %9723 = vmatprep.subr.bf16.mxu0 0
    %9724 = vmatpush1.bf16.msra.mxu0 %v7545
    %9725 = vmatprep.subr.bf16.mxu0 0
    %9726 = vmatpush1.bf16.msra.mxu0 %v7548
    %9727 = vmatprep.subr.bf16.mxu0 0
    %9728 = vmatpush1.bf16.msra.mxu0 %v7551
    %9729 = vmatprep.subr.bf16.mxu0 0
    %9730 = vmatpush1.bf16.msra.mxu0 %v7554
    %9731 = vmatprep.subr.bf16.mxu0 0
    %9732 = vmatpush1.bf16.msra.mxu0 %v7557
    %9733 = vmatprep.subr.bf16.mxu0 0
    %9734 = vmatpush1.bf16.msra.mxu0 %v7560
    %9735 = vmatprep.subr.bf16.mxu0 0
    %9736 = vmatpush1.bf16.msra.mxu0 %v7563
    %9737 = vmatprep.subr.bf16.mxu0 0
    %9738 = vmatpush1.bf16.msra.mxu0 %v7566
    %9739 = vmatprep.subr.bf16.mxu0 0
    %9740 = vmatpush1.bf16.msra.mxu0 %v7569
    %9741 = vmatprep.subr.bf16.mxu0 0
    %9742 = vmatpush1.bf16.msra.mxu0 %v7572
    %9743 = vmatprep.subr.bf16.mxu0 0
    %9744 = vmatpush1.bf16.msra.mxu0 %v7575
    %9745 = vmatprep.subr.bf16.mxu0 0
    %9746 = vmatpush1.bf16.msra.mxu0 %v7578
    %9747 = vmatprep.mubr.bf16.mxu0 %v3853
    %9748 = vmatmul.mubr.bf16.gmra.mrb[0].mxu0 %v3852
    %v9749 = vpop.f32.mrb[0].mxu0
    %v9750 = vadd.f32 %v9710, %v9749
    %v9751 = vpop.f32.mrb[0].mxu0
    %v9752 = vpop.f32.mrb[0].mxu0
    %v9753 = vpop.f32.mrb[0].mxu0
    %9754 = vdwg.mxu0
    %9755 = vmatprep.subr.bf16.mxu0 0
    %9756 = vmatpush1.bf16.msra.mxu0 %v7581
    %9757 = vmatprep.subr.bf16.mxu0 0
    %9758 = vmatpush1.bf16.msra.mxu0 %v7584
    %9759 = vmatprep.subr.bf16.mxu0 0
    %9760 = vmatpush1.bf16.msra.mxu0 %v7587
    %9761 = vmatprep.subr.bf16.mxu0 0
    %9762 = vmatpush1.bf16.msra.mxu0 %v7590
    %9763 = vmatprep.subr.bf16.mxu0 0
    %9764 = vmatpush1.bf16.msra.mxu0 %v7593
    %9765 = vmatprep.subr.bf16.mxu0 0
    %9766 = vmatpush1.bf16.msra.mxu0 %v7596
    %9767 = vmatprep.subr.bf16.mxu0 0
    %9768 = vmatpush1.bf16.msra.mxu0 %v7599
    %9769 = vmatprep.subr.bf16.mxu0 0
    %9770 = vmatpush1.bf16.msra.mxu0 %v7602
    %9771 = vmatprep.subr.bf16.mxu0 0
    %9772 = vmatpush1.bf16.msra.mxu0 %v7605
    %9773 = vmatprep.subr.bf16.mxu0 0
    %9774 = vmatpush1.bf16.msra.mxu0 %v7608
    %9775 = vmatprep.subr.bf16.mxu0 0
    %9776 = vmatpush1.bf16.msra.mxu0 %v7611
    %9777 = vmatprep.subr.bf16.mxu0 0
    %9778 = vmatpush1.bf16.msra.mxu0 %v7614
    %9779 = vmatprep.subr.bf16.mxu0 0
    %9780 = vmatpush1.bf16.msra.mxu0 %v7617
    %9781 = vmatprep.subr.bf16.mxu0 0
    %9782 = vmatpush1.bf16.msra.mxu0 %v7620
    %9783 = vmatprep.subr.bf16.mxu0 0
    %9784 = vmatpush1.bf16.msra.mxu0 %v7623
    %9785 = vmatprep.subr.bf16.mxu0 0
    %9786 = vmatpush1.bf16.msra.mxu0 %v7626
    %9787 = vmatprep.mubr.bf16.mxu0 %v3855
    %9788 = vmatmul.mubr.bf16.gmra.mrb[0].mxu0 %v3854
    %v9789 = vpop.f32.mrb[0].mxu0
    %v9790 = vadd.f32 %v9750, %v9789
    %v9791 = vpop.f32.mrb[0].mxu0
    %v9792 = vpop.f32.mrb[0].mxu0
    %v9793 = vpop.f32.mrb[0].mxu0
    %9794 = vdwg.mxu0
    %9795 = vmatprep.subr.bf16.mxu0 0
    %9796 = vmatpush1.bf16.msra.mxu0 %v7629
    %9797 = vmatprep.subr.bf16.mxu0 0
    %9798 = vmatpush1.bf16.msra.mxu0 %v7632
    %9799 = vmatprep.subr.bf16.mxu0 0
    %9800 = vmatpush1.bf16.msra.mxu0 %v7635
    %9801 = vmatprep.subr.bf16.mxu0 0
    %9802 = vmatpush1.bf16.msra.mxu0 %v7638
    %9803 = vmatprep.subr.bf16.mxu0 0
    %9804 = vmatpush1.bf16.msra.mxu0 %v7641
    %9805 = vmatprep.subr.bf16.mxu0 0
    %9806 = vmatpush1.bf16.msra.mxu0 %v7644
    %9807 = vmatprep.subr.bf16.mxu0 0
    %9808 = vmatpush1.bf16.msra.mxu0 %v7647
    %9809 = vmatprep.subr.bf16.mxu0 0
    %9810 = vmatpush1.bf16.msra.mxu0 %v7650
    %9811 = vmatprep.subr.bf16.mxu0 0
    %9812 = vmatpush1.bf16.msra.mxu0 %v7653
    %9813 = vmatprep.subr.bf16.mxu0 0
    %9814 = vmatpush1.bf16.msra.mxu0 %v7656
    %9815 = vmatprep.subr.bf16.mxu0 0
    %9816 = vmatpush1.bf16.msra.mxu0 %v7659
    %9817 = vmatprep.subr.bf16.mxu0 0
    %9818 = vmatpush1.bf16.msra.mxu0 %v7662
    %9819 = vmatprep.subr.bf16.mxu0 0
    %9820 = vmatpush1.bf16.msra.mxu0 %v7665
    %9821 = vmatprep.subr.bf16.mxu0 0
    %9822 = vmatpush1.bf16.msra.mxu0 %v7668
    %9823 = vmatprep.subr.bf16.mxu0 0
    %9824 = vmatpush1.bf16.msra.mxu0 %v7671
    %9825 = vmatprep.subr.bf16.mxu0 0
    %9826 = vmatpush1.bf16.msra.mxu0 %v7674
    %9827 = vmatprep.mubr.bf16.mxu0 %v3857
    %9828 = vmatmul.mubr.bf16.gmra.mrb[0].mxu0 %v3856
    %v9829 = vpop.f32.mrb[0].mxu0
    %v9830 = vadd.f32 %v9790, %v9829
    %v9831 = vpop.f32.mrb[0].mxu0
    %v9832 = vpop.f32.mrb[0].mxu0
    %v9833 = vpop.f32.mrb[0].mxu0
    %9834 = vdwg.mxu0
    %9835 = vmatprep.subr.bf16.mxu0 0
    %9836 = vmatpush1.bf16.msra.mxu0 %v7677
    %9837 = vmatprep.subr.bf16.mxu0 0
    %9838 = vmatpush1.bf16.msra.mxu0 %v7680
    %9839 = vmatprep.subr.bf16.mxu0 0
    %9840 = vmatpush1.bf16.msra.mxu0 %v7683
    %9841 = vmatprep.subr.bf16.mxu0 0
    %9842 = vmatpush1.bf16.msra.mxu0 %v7686
    %9843 = vmatprep.subr.bf16.mxu0 0
    %9844 = vmatpush1.bf16.msra.mxu0 %v7689
    %9845 = vmatprep.subr.bf16.mxu0 0
    %9846 = vmatpush1.bf16.msra.mxu0 %v7692
    %9847 = vmatprep.subr.bf16.mxu0 0
    %9848 = vmatpush1.bf16.msra.mxu0 %v7695
    %9849 = vmatprep.subr.bf16.mxu0 0
    %9850 = vmatpush1.bf16.msra.mxu0 %v7698
    %9851 = vmatprep.subr.bf16.mxu0 0
    %9852 = vmatpush1.bf16.msra.mxu0 %v7701
    %9853 = vmatprep.subr.bf16.mxu0 0
    %9854 = vmatpush1.bf16.msra.mxu0 %v7704
    %9855 = vmatprep.subr.bf16.mxu0 0
    %9856 = vmatpush1.bf16.msra.mxu0 %v7707
    %9857 = vmatprep.subr.bf16.mxu0 0
    %9858 = vmatpush1.bf16.msra.mxu0 %v7710
    %9859 = vmatprep.subr.bf16.mxu0 0
    %9860 = vmatpush1.bf16.msra.mxu0 %v7713
    %9861 = vmatprep.subr.bf16.mxu0 0
    %9862 = vmatpush1.bf16.msra.mxu0 %v7716
    %9863 = vmatprep.subr.bf16.mxu0 0
    %9864 = vmatpush1.bf16.msra.mxu0 %v7719
    %9865 = vmatprep.subr.bf16.mxu0 0
    %9866 = vmatpush1.bf16.msra.mxu0 %v7722
    %9867 = vmatprep.mubr.bf16.mxu0 %v3859
    %9868 = vmatmul.mubr.bf16.gmra.mrb[0].mxu0 %v3858
    %v9869 = vpop.f32.mrb[0].mxu0
    %v9870 = vadd.f32 %v9830, %v9869
    %v9871 = vpop.f32.mrb[0].mxu0
    %v9872 = vpop.f32.mrb[0].mxu0
    %v9873 = vpop.f32.mrb[0].mxu0
    %9874 = vdwg.mxu0
    %9875 = vmatprep.subr.bf16.mxu0 0
    %9876 = vmatpush1.bf16.msra.mxu0 %v7725
    %9877 = vmatprep.subr.bf16.mxu0 0
    %9878 = vmatpush1.bf16.msra.mxu0 %v7728
    %9879 = vmatprep.subr.bf16.mxu0 0
    %9880 = vmatpush1.bf16.msra.mxu0 %v7731
    %9881 = vmatprep.subr.bf16.mxu0 0
    %9882 = vmatpush1.bf16.msra.mxu0 %v7734
    %9883 = vmatprep.subr.bf16.mxu0 0
    %9884 = vmatpush1.bf16.msra.mxu0 %v7737
    %9885 = vmatprep.subr.bf16.mxu0 0
    %9886 = vmatpush1.bf16.msra.mxu0 %v7740
    %9887 = vmatprep.subr.bf16.mxu0 0
    %9888 = vmatpush1.bf16.msra.mxu0 %v7743
    %9889 = vmatprep.subr.bf16.mxu0 0
    %9890 = vmatpush1.bf16.msra.mxu0 %v7746
    %9891 = vmatprep.subr.bf16.mxu0 0
    %9892 = vmatpush1.bf16.msra.mxu0 %v7749
    %9893 = vmatprep.subr.bf16.mxu0 0
    %9894 = vmatpush1.bf16.msra.mxu0 %v7752
    %9895 = vmatprep.subr.bf16.mxu0 0
    %9896 = vmatpush1.bf16.msra.mxu0 %v7755
    %9897 = vmatprep.subr.bf16.mxu0 0
    %9898 = vmatpush1.bf16.msra.mxu0 %v7758
    %9899 = vmatprep.subr.bf16.mxu0 0
    %9900 = vmatpush1.bf16.msra.mxu0 %v7761
    %9901 = vmatprep.subr.bf16.mxu0 0
    %9902 = vmatpush1.bf16.msra.mxu0 %v7764
    %9903 = vmatprep.subr.bf16.mxu0 0
    %9904 = vmatpush1.bf16.msra.mxu0 %v7767
    %9905 = vmatprep.subr.bf16.mxu0 0
    %9906 = vmatpush1.bf16.msra.mxu0 %v7770
    %9907 = vmatprep.mubr.bf16.mxu0 %v3861
    %9908 = vmatmul.mubr.bf16.gmra.mrb[0].mxu0 %v3860
    %v9909 = vpop.f32.mrb[0].mxu0
    %v9910 = vadd.f32 %v9870, %v9909
    %v9911 = vpop.f32.mrb[0].mxu0
    %v9912 = vpop.f32.mrb[0].mxu0
    %v9913 = vpop.f32.mrb[0].mxu0
    %9914 = vdwg.mxu0
    %9915 = vmatprep.subr.bf16.mxu0 0
    %9916 = vmatpush1.bf16.msra.mxu0 %v7773
    %9917 = vmatprep.subr.bf16.mxu0 0
    %9918 = vmatpush1.bf16.msra.mxu0 %v7776
    %9919 = vmatprep.subr.bf16.mxu0 0
    %9920 = vmatpush1.bf16.msra.mxu0 %v7779
    %9921 = vmatprep.subr.bf16.mxu0 0
    %9922 = vmatpush1.bf16.msra.mxu0 %v7782
    %9923 = vmatprep.subr.bf16.mxu0 0
    %9924 = vmatpush1.bf16.msra.mxu0 %v7785
    %9925 = vmatprep.subr.bf16.mxu0 0
    %9926 = vmatpush1.bf16.msra.mxu0 %v7788
    %9927 = vmatprep.subr.bf16.mxu0 0
    %9928 = vmatpush1.bf16.msra.mxu0 %v7791
    %9929 = vmatprep.subr.bf16.mxu0 0
    %9930 = vmatpush1.bf16.msra.mxu0 %v7794
    %9931 = vmatprep.subr.bf16.mxu0 0
    %9932 = vmatpush1.bf16.msra.mxu0 %v7797
    %9933 = vmatprep.subr.bf16.mxu0 0
    %9934 = vmatpush1.bf16.msra.mxu0 %v7800
    %9935 = vmatprep.subr.bf16.mxu0 0
    %9936 = vmatpush1.bf16.msra.mxu0 %v7803
    %9937 = vmatprep.subr.bf16.mxu0 0
    %9938 = vmatpush1.bf16.msra.mxu0 %v7806
    %9939 = vmatprep.subr.bf16.mxu0 0
    %9940 = vmatpush1.bf16.msra.mxu0 %v7809
    %9941 = vmatprep.subr.bf16.mxu0 0
    %9942 = vmatpush1.bf16.msra.mxu0 %v7812
    %9943 = vmatprep.subr.bf16.mxu0 0
    %9944 = vmatpush1.bf16.msra.mxu0 %v7815
    %9945 = vmatprep.subr.bf16.mxu0 0
    %9946 = vmatpush1.bf16.msra.mxu0 %v7818
    %9947 = vmatprep.mubr.bf16.mxu0 %v3863
    %9948 = vmatmul.mubr.bf16.gmra.mrb[0].mxu0 %v3862
    %v9949 = vpop.f32.mrb[0].mxu0
    %v9950 = vadd.f32 %v9910, %v9949
    %v9951 = vpop.f32.mrb[0].mxu0
    %v9952 = vpop.f32.mrb[0].mxu0
    %v9953 = vpop.f32.mrb[0].mxu0
    %9954 = vdwg.mxu0
    %9955 = vmatprep.subr.bf16.mxu0 0
    %9956 = vmatpush1.bf16.msra.mxu0 %v7821
    %9957 = vmatprep.subr.bf16.mxu0 0
    %9958 = vmatpush1.bf16.msra.mxu0 %v7824
    %9959 = vmatprep.subr.bf16.mxu0 0
    %9960 = vmatpush1.bf16.msra.mxu0 %v7827
    %9961 = vmatprep.subr.bf16.mxu0 0
    %9962 = vmatpush1.bf16.msra.mxu0 %v7830
    %9963 = vmatprep.subr.bf16.mxu0 0
    %9964 = vmatpush1.bf16.msra.mxu0 %v7833
    %9965 = vmatprep.subr.bf16.mxu0 0
    %9966 = vmatpush1.bf16.msra.mxu0 %v7836
    %9967 = vmatprep.subr.bf16.mxu0 0
    %9968 = vmatpush1.bf16.msra.mxu0 %v7839
    %9969 = vmatprep.subr.bf16.mxu0 0
    %9970 = vmatpush1.bf16.msra.mxu0 %v7842
    %9971 = vmatprep.subr.bf16.mxu0 0
    %9972 = vmatpush1.bf16.msra.mxu0 %v7845
    %9973 = vmatprep.subr.bf16.mxu0 0
    %9974 = vmatpush1.bf16.msra.mxu0 %v7848
    %9975 = vmatprep.subr.bf16.mxu0 0
    %9976 = vmatpush1.bf16.msra.mxu0 %v7851
    %9977 = vmatprep.subr.bf16.mxu0 0
    %9978 = vmatpush1.bf16.msra.mxu0 %v7854
    %9979 = vmatprep.subr.bf16.mxu0 0
    %9980 = vmatpush1.bf16.msra.mxu0 %v7857
    %9981 = vmatprep.subr.bf16.mxu0 0
    %9982 = vmatpush1.bf16.msra.mxu0 %v7860
    %9983 = vmatprep.subr.bf16.mxu0 0
    %9984 = vmatpush1.bf16.msra.mxu0 %v7863
    %9985 = vmatprep.subr.bf16.mxu0 0
    %9986 = vmatpush1.bf16.msra.mxu0 %v7866
    %9987 = vmatprep.mubr.bf16.mxu0 %v3865
    %9988 = vmatmul.mubr.bf16.gmra.mrb[0].mxu0 %v3864
    %v9989 = vpop.f32.mrb[0].mxu0
    %v9990 = vadd.f32 %v9950, %v9989
    %v9991 = vpop.f32.mrb[0].mxu0
    %v9992 = vpop.f32.mrb[0].mxu0
    %v9993 = vpop.f32.mrb[0].mxu0
    %9994 = vdwg.mxu0
    %9995 = vmatprep.subr.bf16.mxu0 0
    %9996 = vmatpush1.bf16.msra.mxu0 %v7869
    %9997 = vmatprep.subr.bf16.mxu0 0
    %9998 = vmatpush1.bf16.msra.mxu0 %v7872
    %9999 = vmatprep.subr.bf16.mxu0 0
    %10000 = vmatpush1.bf16.msra.mxu0 %v7875
    %10001 = vmatprep.subr.bf16.mxu0 0
    %10002 = vmatpush1.bf16.msra.mxu0 %v7878
    %10003 = vmatprep.subr.bf16.mxu0 0
    %10004 = vmatpush1.bf16.msra.mxu0 %v7881
    %10005 = vmatprep.subr.bf16.mxu0 0
    %10006 = vmatpush1.bf16.msra.mxu0 %v7884
    %10007 = vmatprep.subr.bf16.mxu0 0
    %10008 = vmatpush1.bf16.msra.mxu0 %v7887
    %10009 = vmatprep.subr.bf16.mxu0 0
    %10010 = vmatpush1.bf16.msra.mxu0 %v7890
    %10011 = vmatprep.subr.bf16.mxu0 0
    %10012 = vmatpush1.bf16.msra.mxu0 %v7893
    %10013 = vmatprep.subr.bf16.mxu0 0
    %10014 = vmatpush1.bf16.msra.mxu0 %v7896
    %10015 = vmatprep.subr.bf16.mxu0 0
    %10016 = vmatpush1.bf16.msra.mxu0 %v7899
    %10017 = vmatprep.subr.bf16.mxu0 0
    %10018 = vmatpush1.bf16.msra.mxu0 %v7902
    %10019 = vmatprep.subr.bf16.mxu0 0
    %10020 = vmatpush1.bf16.msra.mxu0 %v7905
    %10021 = vmatprep.subr.bf16.mxu0 0
    %10022 = vmatpush1.bf16.msra.mxu0 %v7908
    %10023 = vmatprep.subr.bf16.mxu0 0
    %10024 = vmatpush1.bf16.msra.mxu0 %v7911
    %10025 = vmatprep.subr.bf16.mxu0 0
    %10026 = vmatpush1.bf16.msra.mxu0 %v7914
    %10027 = vmatprep.mubr.bf16.mxu0 %v3867
    %10028 = vmatmul.mubr.bf16.gmra.mrb[0].mxu0 %v3866
    %v10029 = vpop.f32.mrb[0].mxu0
    %v10030 = vadd.f32 %v9990, %v10029
    %v10031 = vpop.f32.mrb[0].mxu0
    %v10032 = vpop.f32.mrb[0].mxu0
    %v10033 = vpop.f32.mrb[0].mxu0
    %10034 = vdwg.mxu0
    %10035 = vmatprep.subr.bf16.mxu0 0
    %10036 = vmatpush1.bf16.msra.mxu0 %v7917
    %10037 = vmatprep.subr.bf16.mxu0 0
    %10038 = vmatpush1.bf16.msra.mxu0 %v7920
    %10039 = vmatprep.subr.bf16.mxu0 0
    %10040 = vmatpush1.bf16.msra.mxu0 %v7923
    %10041 = vmatprep.subr.bf16.mxu0 0
    %10042 = vmatpush1.bf16.msra.mxu0 %v7926
    %10043 = vmatprep.subr.bf16.mxu0 0
    %10044 = vmatpush1.bf16.msra.mxu0 %v7929
    %10045 = vmatprep.subr.bf16.mxu0 0
    %10046 = vmatpush1.bf16.msra.mxu0 %v7932
    %10047 = vmatprep.subr.bf16.mxu0 0
    %10048 = vmatpush1.bf16.msra.mxu0 %v7935
    %10049 = vmatprep.subr.bf16.mxu0 0
    %10050 = vmatpush1.bf16.msra.mxu0 %v7938
    %10051 = vmatprep.subr.bf16.mxu0 0
    %10052 = vmatpush1.bf16.msra.mxu0 %v7941
    %10053 = vmatprep.subr.bf16.mxu0 0
    %10054 = vmatpush1.bf16.msra.mxu0 %v7944
    %10055 = vmatprep.subr.bf16.mxu0 0
    %10056 = vmatpush1.bf16.msra.mxu0 %v7947
    %10057 = vmatprep.subr.bf16.mxu0 0
    %10058 = vmatpush1.bf16.msra.mxu0 %v7950
    %10059 = vmatprep.subr.bf16.mxu0 0
    %10060 = vmatpush1.bf16.msra.mxu0 %v7953
    %10061 = vmatprep.subr.bf16.mxu0 0
    %10062 = vmatpush1.bf16.msra.mxu0 %v7956
    %10063 = vmatprep.subr.bf16.mxu0 0
    %10064 = vmatpush1.bf16.msra.mxu0 %v7959
    %10065 = vmatprep.subr.bf16.mxu0 0
    %10066 = vmatpush1.bf16.msra.mxu0 %v7962
    %10067 = vmatprep.mubr.bf16.mxu0 %v3869
    %10068 = vmatmul.mubr.bf16.gmra.mrb[0].mxu0 %v3868
    %v10069 = vpop.f32.mrb[0].mxu0
    %v10070 = vadd.f32 %v10030, %v10069
    %v10071 = vpop.f32.mrb[0].mxu0
    %v10072 = vpop.f32.mrb[0].mxu0
    %v10073 = vpop.f32.mrb[0].mxu0
    %10074 = vdwg.mxu0
    %10075 = vmatprep.subr.bf16.mxu0 0
    %10076 = vmatpush1.bf16.msra.mxu0 %v7965
    %10077 = vmatprep.subr.bf16.mxu0 0
    %10078 = vmatpush1.bf16.msra.mxu0 %v7968
    %10079 = vmatprep.subr.bf16.mxu0 0
    %10080 = vmatpush1.bf16.msra.mxu0 %v7971
    %10081 = vmatprep.subr.bf16.mxu0 0
    %10082 = vmatpush1.bf16.msra.mxu0 %v7974
    %10083 = vmatprep.subr.bf16.mxu0 0
    %10084 = vmatpush1.bf16.msra.mxu0 %v7977
    %10085 = vmatprep.subr.bf16.mxu0 0
    %10086 = vmatpush1.bf16.msra.mxu0 %v7980
    %10087 = vmatprep.subr.bf16.mxu0 0
    %10088 = vmatpush1.bf16.msra.mxu0 %v7983
    %10089 = vmatprep.subr.bf16.mxu0 0
    %10090 = vmatpush1.bf16.msra.mxu0 %v7986
    %10091 = vmatprep.subr.bf16.mxu0 0
    %10092 = vmatpush1.bf16.msra.mxu0 %v7989
    %10093 = vmatprep.subr.bf16.mxu0 0
    %10094 = vmatpush1.bf16.msra.mxu0 %v7992
    %10095 = vmatprep.subr.bf16.mxu0 0
    %10096 = vmatpush1.bf16.msra.mxu0 %v7995
    %10097 = vmatprep.subr.bf16.mxu0 0
    %10098 = vmatpush1.bf16.msra.mxu0 %v7998
    %10099 = vmatprep.subr.bf16.mxu0 0
    %10100 = vmatpush1.bf16.msra.mxu0 %v8001
    %10101 = vmatprep.subr.bf16.mxu0 0
    %10102 = vmatpush1.bf16.msra.mxu0 %v8004
    %10103 = vmatprep.subr.bf16.mxu0 0
    %10104 = vmatpush1.bf16.msra.mxu0 %v8007
    %10105 = vmatprep.subr.bf16.mxu0 0
    %10106 = vmatpush1.bf16.msra.mxu0 %v8010
    %10107 = vmatprep.mubr.bf16.mxu0 %v3871
    %10108 = vmatmul.mubr.bf16.gmra.mrb[0].mxu0 %v3870
    %v10109 = vpop.f32.mrb[0].mxu0
    %v10110 = vadd.f32 %v10070, %v10109
    %v10111 = vpop.f32.mrb[0].mxu0
    %v10112 = vpop.f32.mrb[0].mxu0
    %v10113 = vpop.f32.mrb[0].mxu0
    %10114 = vdwg.mxu0
    %10115 = vmatprep.subr.bf16.mxu0 0
    %10116 = vmatpush1.bf16.msra.mxu0 %v8013
    %10117 = vmatprep.subr.bf16.mxu0 0
    %10118 = vmatpush1.bf16.msra.mxu0 %v8016
    %10119 = vmatprep.subr.bf16.mxu0 0
    %10120 = vmatpush1.bf16.msra.mxu0 %v8019
    %10121 = vmatprep.subr.bf16.mxu0 0
    %10122 = vmatpush1.bf16.msra.mxu0 %v8022
    %10123 = vmatprep.subr.bf16.mxu0 0
    %10124 = vmatpush1.bf16.msra.mxu0 %v8025
    %10125 = vmatprep.subr.bf16.mxu0 0
    %10126 = vmatpush1.bf16.msra.mxu0 %v8028
    %10127 = vmatprep.subr.bf16.mxu0 0
    %10128 = vmatpush1.bf16.msra.mxu0 %v8031
    %10129 = vmatprep.subr.bf16.mxu0 0
    %10130 = vmatpush1.bf16.msra.mxu0 %v8034
    %10131 = vmatprep.subr.bf16.mxu0 0
    %10132 = vmatpush1.bf16.msra.mxu0 %v8037
    %10133 = vmatprep.subr.bf16.mxu0 0
    %10134 = vmatpush1.bf16.msra.mxu0 %v8040
    %10135 = vmatprep.subr.bf16.mxu0 0
    %10136 = vmatpush1.bf16.msra.mxu0 %v8043
    %10137 = vmatprep.subr.bf16.mxu0 0
    %10138 = vmatpush1.bf16.msra.mxu0 %v8046
    %10139 = vmatprep.subr.bf16.mxu0 0
    %10140 = vmatpush1.bf16.msra.mxu0 %v8049
    %10141 = vmatprep.subr.bf16.mxu0 0
    %10142 = vmatpush1.bf16.msra.mxu0 %v8052
    %10143 = vmatprep.subr.bf16.mxu0 0
    %10144 = vmatpush1.bf16.msra.mxu0 %v8055
    %10145 = vmatprep.subr.bf16.mxu0 0
    %10146 = vmatpush1.bf16.msra.mxu0 %v8058
    %10147 = vmatprep.mubr.bf16.mxu0 %v3873
    %10148 = vmatmul.mubr.bf16.gmra.mrb[0].mxu0 %v3872
    %v10149 = vpop.f32.mrb[0].mxu0
    %v10150 = vadd.f32 %v10110, %v10149
    %v10151 = vpop.f32.mrb[0].mxu0
    %v10152 = vpop.f32.mrb[0].mxu0
    %v10153 = vpop.f32.mrb[0].mxu0
    %10154 = vdwg.mxu0
    %10155 = vmatprep.subr.bf16.mxu0 0
    %10156 = vmatpush1.bf16.msra.mxu0 %v8061
    %10157 = vmatprep.subr.bf16.mxu0 0
    %10158 = vmatpush1.bf16.msra.mxu0 %v8064
    %10159 = vmatprep.subr.bf16.mxu0 0
    %10160 = vmatpush1.bf16.msra.mxu0 %v8067
    %10161 = vmatprep.subr.bf16.mxu0 0
    %10162 = vmatpush1.bf16.msra.mxu0 %v8070
    %10163 = vmatprep.subr.bf16.mxu0 0
    %10164 = vmatpush1.bf16.msra.mxu0 %v8073
    %10165 = vmatprep.subr.bf16.mxu0 0
    %10166 = vmatpush1.bf16.msra.mxu0 %v8076
    %10167 = vmatprep.subr.bf16.mxu0 0
    %10168 = vmatpush1.bf16.msra.mxu0 %v8079
    %10169 = vmatprep.subr.bf16.mxu0 0
    %10170 = vmatpush1.bf16.msra.mxu0 %v8082
    %10171 = vmatprep.subr.bf16.mxu0 0
    %10172 = vmatpush1.bf16.msra.mxu0 %v8085
    %10173 = vmatprep.subr.bf16.mxu0 0
    %10174 = vmatpush1.bf16.msra.mxu0 %v8088
    %10175 = vmatprep.subr.bf16.mxu0 0
    %10176 = vmatpush1.bf16.msra.mxu0 %v8091
    %10177 = vmatprep.subr.bf16.mxu0 0
    %10178 = vmatpush1.bf16.msra.mxu0 %v8094
    %10179 = vmatprep.subr.bf16.mxu0 0
    %10180 = vmatpush1.bf16.msra.mxu0 %v8097
    %10181 = vmatprep.subr.bf16.mxu0 0
    %10182 = vmatpush1.bf16.msra.mxu0 %v8100
    %10183 = vmatprep.subr.bf16.mxu0 0
    %10184 = vmatpush1.bf16.msra.mxu0 %v8103
    %10185 = vmatprep.subr.bf16.mxu0 0
    %10186 = vmatpush1.bf16.msra.mxu0 %v8106
    %10187 = vmatprep.mubr.bf16.mxu0 %v3875
    %10188 = vmatmul.mubr.bf16.gmra.mrb[0].mxu0 %v3874
    %v10189 = vpop.f32.mrb[0].mxu0
    %v10190 = vadd.f32 %v10150, %v10189
    %v10191 = vpop.f32.mrb[0].mxu0
    %v10192 = vpop.f32.mrb[0].mxu0
    %v10193 = vpop.f32.mrb[0].mxu0
    %10194 = vdwg.mxu0
    %10195 = vmatprep.subr.bf16.mxu0 0
    %10196 = vmatpush1.bf16.msra.mxu0 %v8109
    %10197 = vmatprep.subr.bf16.mxu0 0
    %10198 = vmatpush1.bf16.msra.mxu0 %v8112
    %10199 = vmatprep.subr.bf16.mxu0 0
    %10200 = vmatpush1.bf16.msra.mxu0 %v8115
    %10201 = vmatprep.subr.bf16.mxu0 0
    %10202 = vmatpush1.bf16.msra.mxu0 %v8118
    %10203 = vmatprep.subr.bf16.mxu0 0
    %10204 = vmatpush1.bf16.msra.mxu0 %v8121
    %10205 = vmatprep.subr.bf16.mxu0 0
    %10206 = vmatpush1.bf16.msra.mxu0 %v8124
    %10207 = vmatprep.subr.bf16.mxu0 0
    %10208 = vmatpush1.bf16.msra.mxu0 %v8127
    %10209 = vmatprep.subr.bf16.mxu0 0
    %10210 = vmatpush1.bf16.msra.mxu0 %v8130
    %10211 = vmatprep.subr.bf16.mxu0 0
    %10212 = vmatpush1.bf16.msra.mxu0 %v8133
    %10213 = vmatprep.subr.bf16.mxu0 0
    %10214 = vmatpush1.bf16.msra.mxu0 %v8136
    %10215 = vmatprep.subr.bf16.mxu0 0
    %10216 = vmatpush1.bf16.msra.mxu0 %v8139
    %10217 = vmatprep.subr.bf16.mxu0 0
    %10218 = vmatpush1.bf16.msra.mxu0 %v8142
    %10219 = vmatprep.subr.bf16.mxu0 0
    %10220 = vmatpush1.bf16.msra.mxu0 %v8145
    %10221 = vmatprep.subr.bf16.mxu0 0
    %10222 = vmatpush1.bf16.msra.mxu0 %v8148
    %10223 = vmatprep.subr.bf16.mxu0 0
    %10224 = vmatpush1.bf16.msra.mxu0 %v8151
    %10225 = vmatprep.subr.bf16.mxu0 0
    %10226 = vmatpush1.bf16.msra.mxu0 %v8154
    %10227 = vmatprep.mubr.bf16.mxu0 %v3877
    %10228 = vmatmul.mubr.bf16.gmra.mrb[0].mxu0 %v3876
    %v10229 = vpop.f32.mrb[0].mxu0
    %v10230 = vadd.f32 %v10190, %v10229
    %v10231 = vpop.f32.mrb[0].mxu0
    %v10232 = vpop.f32.mrb[0].mxu0
    %v10233 = vpop.f32.mrb[0].mxu0
    %10234 = vdwg.mxu0
    %10235 = vmatprep.subr.bf16.mxu0 0
    %10236 = vmatpush1.bf16.msra.mxu0 %v8157
    %10237 = vmatprep.subr.bf16.mxu0 0
    %10238 = vmatpush1.bf16.msra.mxu0 %v8160
    %10239 = vmatprep.subr.bf16.mxu0 0
    %10240 = vmatpush1.bf16.msra.mxu0 %v8163
    %10241 = vmatprep.subr.bf16.mxu0 0
    %10242 = vmatpush1.bf16.msra.mxu0 %v8166
    %10243 = vmatprep.subr.bf16.mxu0 0
    %10244 = vmatpush1.bf16.msra.mxu0 %v8169
    %10245 = vmatprep.subr.bf16.mxu0 0
    %10246 = vmatpush1.bf16.msra.mxu0 %v8172
    %10247 = vmatprep.subr.bf16.mxu0 0
    %10248 = vmatpush1.bf16.msra.mxu0 %v8175
    %10249 = vmatprep.subr.bf16.mxu0 0
    %10250 = vmatpush1.bf16.msra.mxu0 %v8178
    %10251 = vmatprep.subr.bf16.mxu0 0
    %10252 = vmatpush1.bf16.msra.mxu0 %v8181
    %10253 = vmatprep.subr.bf16.mxu0 0
    %10254 = vmatpush1.bf16.msra.mxu0 %v8184
    %10255 = vmatprep.subr.bf16.mxu0 0
    %10256 = vmatpush1.bf16.msra.mxu0 %v8187
    %10257 = vmatprep.subr.bf16.mxu0 0
    %10258 = vmatpush1.bf16.msra.mxu0 %v8190
    %10259 = vmatprep.subr.bf16.mxu0 0
    %10260 = vmatpush1.bf16.msra.mxu0 %v8193
    %10261 = vmatprep.subr.bf16.mxu0 0
    %10262 = vmatpush1.bf16.msra.mxu0 %v8196
    %10263 = vmatprep.subr.bf16.mxu0 0
    %10264 = vmatpush1.bf16.msra.mxu0 %v8199
    %10265 = vmatprep.subr.bf16.mxu0 0
    %10266 = vmatpush1.bf16.msra.mxu0 %v8202
    %10267 = vmatprep.mubr.bf16.mxu0 %v3879
    %10268 = vmatmul.mubr.bf16.gmra.mrb[0].mxu0 %v3878
    %v10269 = vpop.f32.mrb[0].mxu0
    %v10270 = vadd.f32 %v10230, %v10269
    %v10271 = vpop.f32.mrb[0].mxu0
    %v10272 = vpop.f32.mrb[0].mxu0
    %v10273 = vpop.f32.mrb[0].mxu0
    %10274 = vdwg.mxu0
    %10275 = vmatprep.subr.bf16.mxu0 0
    %10276 = vmatpush1.bf16.msra.mxu0 %v8205
    %10277 = vmatprep.subr.bf16.mxu0 0
    %10278 = vmatpush1.bf16.msra.mxu0 %v8208
    %10279 = vmatprep.subr.bf16.mxu0 0
    %10280 = vmatpush1.bf16.msra.mxu0 %v8211
    %10281 = vmatprep.subr.bf16.mxu0 0
    %10282 = vmatpush1.bf16.msra.mxu0 %v8214
    %10283 = vmatprep.subr.bf16.mxu0 0
    %10284 = vmatpush1.bf16.msra.mxu0 %v8217
    %10285 = vmatprep.subr.bf16.mxu0 0
    %10286 = vmatpush1.bf16.msra.mxu0 %v8220
    %10287 = vmatprep.subr.bf16.mxu0 0
    %10288 = vmatpush1.bf16.msra.mxu0 %v8223
    %10289 = vmatprep.subr.bf16.mxu0 0
    %10290 = vmatpush1.bf16.msra.mxu0 %v8226
    %10291 = vmatprep.subr.bf16.mxu0 0
    %10292 = vmatpush1.bf16.msra.mxu0 %v8229
    %10293 = vmatprep.subr.bf16.mxu0 0
    %10294 = vmatpush1.bf16.msra.mxu0 %v8232
    %10295 = vmatprep.subr.bf16.mxu0 0
    %10296 = vmatpush1.bf16.msra.mxu0 %v8235
    %10297 = vmatprep.subr.bf16.mxu0 0
    %10298 = vmatpush1.bf16.msra.mxu0 %v8238
    %10299 = vmatprep.subr.bf16.mxu0 0
    %10300 = vmatpush1.bf16.msra.mxu0 %v8241
    %10301 = vmatprep.subr.bf16.mxu0 0
    %10302 = vmatpush1.bf16.msra.mxu0 %v8244
    %10303 = vmatprep.subr.bf16.mxu0 0
    %10304 = vmatpush1.bf16.msra.mxu0 %v8247
    %10305 = vmatprep.subr.bf16.mxu0 0
    %10306 = vmatpush1.bf16.msra.mxu0 %v8250
    %10307 = vmatprep.mubr.bf16.mxu0 %v3881
    %10308 = vmatmul.mubr.bf16.gmra.mrb[0].mxu0 %v3880
    %v10309 = vpop.f32.mrb[0].mxu0
    %v10310 = vadd.f32 %v10270, %v10309
    %v10311 = vpop.f32.mrb[0].mxu0
    %v10312 = vpop.f32.mrb[0].mxu0
    %v10313 = vpop.f32.mrb[0].mxu0
    %10314 = vdwg.mxu0
    %v10315 = vld [vmem:[%s1] sm:$0xff]
    %v10316 = vld [vmem:[%s1 + $0x8] sm:$0xff]
    %v10317 = vld [vmem:[%s1 + $0x10] sm:$0xff]
    %v10318 = vld [vmem:[%s1 + $0x18] sm:$0xff]
    %v10319 = vld [vmem:[%s1 + $0x20] sm:$0xff]
    %v10320 = vld [vmem:[%s1 + $0x28] sm:$0xff]
    %v10321 = vld [vmem:[%s1 + $0x30] sm:$0xff]
    %v10322 = vld [vmem:[%s1 + $0x38] sm:$0xff]
    %v10323 = vld [vmem:[%s1 + $0x40] sm:$0xff]
    %v10324 = vld [vmem:[%s1 + $0x48] sm:$0xff]
    %v10325 = vld [vmem:[%s1 + $0x50] sm:$0xff]
    %v10326 = vld [vmem:[%s1 + $0x58] sm:$0xff]
    %v10327 = vld [vmem:[%s1 + $0x60] sm:$0xff]
    %v10328 = vld [vmem:[%s1 + $0x68] sm:$0xff]
    %v10329 = vld [vmem:[%s1 + $0x70] sm:$0xff]
    %v10330 = vld [vmem:[%s1 + $0x78] sm:$0xff]
    %v10331 = vld [vmem:[%s1 + $0x80] sm:$0xff]
    %v10332 = vld [vmem:[%s1 + $0x88] sm:$0xff]
    %v10333 = vld [vmem:[%s1 + $0x90] sm:$0xff]
    %v10334 = vld [vmem:[%s1 + $0x98] sm:$0xff]
    %v10335 = vld [vmem:[%s1 + $0xa0] sm:$0xff]
    %v10336 = vld [vmem:[%s1 + $0xa8] sm:$0xff]
    %v10337 = vld [vmem:[%s1 + $0xb0] sm:$0xff]
    %v10338 = vld [vmem:[%s1 + $0xb8] sm:$0xff]
    %10339 = vmatprep.subr.mxu0 %v9671
    %10340 = vmatpush1.xpose.msra.mxu0 %v9669
    %10341 = vmatprep.subr.mxu0 0.0
    %10342 = vmatpush1.xpose.msra.mxu0 0.0
    %10343 = vmatprep.subr.mxu0 0.0
    %10344 = vmatpush1.xpose.msra.mxu0 0.0
    %10345 = vmatprep.subr.mxu0 0.0
    %10346 = vmatpush1.xpose.msra.mxu0 0.0
    %10347 = vmatprep.subr.mxu0 0.0
    %10348 = vmatpush1.xpose.msra.mxu0 0.0
    %10349 = vmatprep.subr.mxu0 0.0
    %10350 = vmatpush1.xpose.msra.mxu0 0.0
    %10351 = vmatprep.subr.mxu0 0.0
    %10352 = vmatpush1.xpose.msra.mxu0 0.0
    %10353 = vmatprep.subr.mxu0 0.0
    %10354 = vmatpush1.xpose.msra.mxu0 0.0
    %10355 = vmatprep.subr.mxu0 0.0
    %10356 = vmatpush1.xpose.msra.mxu0 0.0
    %10357 = vmatprep.subr.mxu0 0.0
    %10358 = vmatpush1.xpose.msra.mxu0 0.0
    %10359 = vmatprep.subr.mxu0 0.0
    %10360 = vmatpush1.xpose.msra.mxu0 0.0
    %10361 = vmatprep.subr.mxu0 0.0
    %10362 = vmatpush1.xpose.msra.mxu0 0.0
    %10363 = vmatprep.subr.mxu0 0.0
    %10364 = vmatpush1.xpose.msra.mxu0 0.0
    %10365 = vmatprep.subr.mxu0 0.0
    %10366 = vmatpush1.xpose.msra.mxu0 0.0
    %10367 = vmatprep.subr.mxu0 0.0
    %10368 = vmatpush1.xpose.msra.mxu0 0.0
    %10369 = vmatprep.subr.mxu0 0.0
    %10370 = vmatpush1.xpose.msra.mxu0 0.0
    %10371 = vmatprep.subr.mxu0 0.0
    %10372 = vmatpush1.xpose.msra.mxu0 0.0
    %10373 = vmatprep.subr.mxu0 0.0
    %10374 = vmatpush1.xpose.msra.mxu0 0.0
    %10375 = vmatprep.subr.mxu0 0.0
    %10376 = vmatpush1.xpose.msra.mxu0 0.0
    %10377 = vmatprep.subr.mxu0 0.0
    %10378 = vmatpush1.xpose.msra.mxu0 0.0
    %10379 = vmatprep.subr.mxu0 0.0
    %10380 = vmatpush1.xpose.msra.mxu0 0.0
    %10381 = vmatprep.subr.mxu0 0.0
    %10382 = vmatpush1.xpose.msra.mxu0 0.0
    %10383 = vmatprep.subr.mxu0 0.0
    %10384 = vmatpush1.xpose.msra.mxu0 0.0
    %10385 = vmatprep.subr.mxu0 0.0
    %10386 = vmatpush1.xpose.msra.mxu0 0.0
    %10387 = vmatprep.subr.mxu0 0.0
    %10388 = vmatpush1.xpose.msra.mxu0 0.0
    %10389 = vmatprep.subr.mxu0 0.0
    %10390 = vmatpush1.xpose.msra.mxu0 0.0
    %10391 = vmatprep.subr.mxu0 0.0
    %10392 = vmatpush1.xpose.msra.mxu0 0.0
    %10393 = vmatprep.subr.mxu0 0.0
    %10394 = vmatpush1.xpose.msra.mxu0 0.0
    %10395 = vmatprep.subr.mxu0 0.0
    %10396 = vmatpush1.xpose.msra.mxu0 0.0
    %10397 = vmatprep.subr.mxu0 0.0
    %10398 = vmatpush1.xpose.msra.mxu0 0.0
    %10399 = vmatprep.subr.mxu0 0.0
    %10400 = vmatpush1.xpose.msra.mxu0 0.0
    %10401 = vmatprep.subr.mxu0 0.0
    %10402 = vmatpush1.xpose.msra.mxu0 0.0
    %10403 = vmatprep.mubr.f32.mxu0 %v10316
    %10404 = vmatmul.mubr.f32.gmra.mrb[0].mxu0 %v10315
    %v10405 = vpop.f32.mrb[0].mxu0
    %v10406 = vadd.f32 0.0, %v10405
    %v10407 = vpop.f32.mrb[0].mxu0
    %10408 = vmatprep.mubr.f32.mxu0 %v10319
    %10409 = vmatmul.mubr.f32.gmra.mrb[0].mxu0 %v10318
    %v10410 = vpop.f32.mrb[0].mxu0
    %v10411 = vadd.f32 0.0, %v10410
    %v10412 = vpop.f32.mrb[0].mxu0
    %10413 = vmatprep.mubr.f32.mxu0 %v10322
    %10414 = vmatmul.mubr.f32.gmra.mrb[0].mxu0 %v10321
    %v10415 = vpop.f32.mrb[0].mxu0
    %v10416 = vadd.f32 0.0, %v10415
    %v10417 = vpop.f32.mrb[0].mxu0
    %10418 = vmatprep.mubr.f32.mxu0 %v10325
    %10419 = vmatmul.mubr.f32.gmra.mrb[0].mxu0 %v10324
    %v10420 = vpop.f32.mrb[0].mxu0
    %v10421 = vadd.f32 0.0, %v10420
    %v10422 = vpop.f32.mrb[0].mxu0
    %10423 = vmatprep.mubr.f32.mxu0 %v10328
    %10424 = vmatmul.mubr.f32.gmra.mrb[0].mxu0 %v10327
    %v10425 = vpop.f32.mrb[0].mxu0
    %v10426 = vadd.f32 0.0, %v10425
    %v10427 = vpop.f32.mrb[0].mxu0
    %10428 = vmatprep.mubr.f32.mxu0 %v10331
    %10429 = vmatmul.mubr.f32.gmra.mrb[0].mxu0 %v10330
    %v10430 = vpop.f32.mrb[0].mxu0
    %v10431 = vadd.f32 0.0, %v10430
    %v10432 = vpop.f32.mrb[0].mxu0
    %10433 = vmatprep.mubr.f32.mxu0 %v10334
    %10434 = vmatmul.mubr.f32.gmra.mrb[0].mxu0 %v10333
    %v10435 = vpop.f32.mrb[0].mxu0
    %v10436 = vadd.f32 0.0, %v10435
    %v10437 = vpop.f32.mrb[0].mxu0
    %10438 = vmatprep.mubr.f32.mxu0 %v10337
    %10439 = vmatmul.mubr.f32.gmra.mrb[0].mxu0 %v10336
    %v10440 = vpop.f32.mrb[0].mxu0
    %v10441 = vadd.f32 0.0, %v10440
    %v10442 = vpop.f32.mrb[0].mxu0
    %10443 = vdwg.mxu0
    %10444 = vmatprep.subr.mxu0 0.0
    %10445 = vmatpush1.xpose.msra.mxu0 %v10310
    %10446 = vmatprep.subr.mxu0 0.0
    %10447 = vmatpush1.xpose.msra.mxu0 0.0
    %10448 = vmatprep.subr.mxu0 0.0
    %10449 = vmatpush1.xpose.msra.mxu0 0.0
    %10450 = vmatprep.subr.mxu0 0.0
    %10451 = vmatpush1.xpose.msra.mxu0 0.0
    %10452 = vmatprep.subr.mxu0 0.0
    %10453 = vmatpush1.xpose.msra.mxu0 0.0
    %10454 = vmatprep.subr.mxu0 0.0
    %10455 = vmatpush1.xpose.msra.mxu0 0.0
    %10456 = vmatprep.subr.mxu0 0.0
    %10457 = vmatpush1.xpose.msra.mxu0 0.0
    %10458 = vmatprep.subr.mxu0 0.0
    %10459 = vmatpush1.xpose.msra.mxu0 0.0
    %10460 = vmatprep.subr.mxu0 0.0
    %10461 = vmatpush1.xpose.msra.mxu0 0.0
    %10462 = vmatprep.subr.mxu0 0.0
    %10463 = vmatpush1.xpose.msra.mxu0 0.0
    %10464 = vmatprep.subr.mxu0 0.0
    %10465 = vmatpush1.xpose.msra.mxu0 0.0
    %10466 = vmatprep.subr.mxu0 0.0
    %10467 = vmatpush1.xpose.msra.mxu0 0.0
    %10468 = vmatprep.subr.mxu0 0.0
    %10469 = vmatpush1.xpose.msra.mxu0 0.0
    %10470 = vmatprep.subr.mxu0 0.0
    %10471 = vmatpush1.xpose.msra.mxu0 0.0
    %10472 = vmatprep.subr.mxu0 0.0
    %10473 = vmatpush1.xpose.msra.mxu0 0.0
    %10474 = vmatprep.subr.mxu0 0.0
    %10475 = vmatpush1.xpose.msra.mxu0 0.0
    %10476 = vmatprep.subr.mxu0 0.0
    %10477 = vmatpush1.xpose.msra.mxu0 0.0
    %10478 = vmatprep.subr.mxu0 0.0
    %10479 = vmatpush1.xpose.msra.mxu0 0.0
    %10480 = vmatprep.subr.mxu0 0.0
    %10481 = vmatpush1.xpose.msra.mxu0 0.0
    %10482 = vmatprep.subr.mxu0 0.0
    %10483 = vmatpush1.xpose.msra.mxu0 0.0
    %10484 = vmatprep.subr.mxu0 0.0
    %10485 = vmatpush1.xpose.msra.mxu0 0.0
    %10486 = vmatprep.subr.mxu0 0.0
    %10487 = vmatpush1.xpose.msra.mxu0 0.0
    %10488 = vmatprep.subr.mxu0 0.0
    %10489 = vmatpush1.xpose.msra.mxu0 0.0
    %10490 = vmatprep.subr.mxu0 0.0
    %10491 = vmatpush1.xpose.msra.mxu0 0.0
    %10492 = vmatprep.subr.mxu0 0.0
    %10493 = vmatpush1.xpose.msra.mxu0 0.0
    %10494 = vmatprep.subr.mxu0 0.0
    %10495 = vmatpush1.xpose.msra.mxu0 0.0
    %10496 = vmatprep.subr.mxu0 0.0
    %10497 = vmatpush1.xpose.msra.mxu0 0.0
    %10498 = vmatprep.subr.mxu0 0.0
    %10499 = vmatpush1.xpose.msra.mxu0 0.0
    %10500 = vmatprep.subr.mxu0 0.0
    %10501 = vmatpush1.xpose.msra.mxu0 0.0
    %10502 = vmatprep.subr.mxu0 0.0
    %10503 = vmatpush1.xpose.msra.mxu0 0.0
    %10504 = vmatprep.subr.mxu0 0.0
    %10505 = vmatpush1.xpose.msra.mxu0 0.0
    %10506 = vmatprep.subr.mxu0 0.0
    %10507 = vmatpush1.xpose.msra.mxu0 0.0
    %10508 = vmatprep.mubr.f32.mxu0 0.0
    %10509 = vmatmul.mubr.f32.gmra.mrb[0].mxu0 %v10317
    %v10510 = vpop.f32.mrb[0].mxu0
    %v10511 = vadd.f32 %v10406, %v10510
    %v10512 = vpop.f32.mrb[0].mxu0
    %10513 = vmatprep.mubr.f32.mxu0 0.0
    %10514 = vmatmul.mubr.f32.gmra.mrb[0].mxu0 %v10320
    %v10515 = vpop.f32.mrb[0].mxu0
    %v10516 = vadd.f32 %v10411, %v10515
    %v10517 = vpop.f32.mrb[0].mxu0
    %10518 = vmatprep.mubr.f32.mxu0 0.0
    %10519 = vmatmul.mubr.f32.gmra.mrb[0].mxu0 %v10323
    %v10520 = vpop.f32.mrb[0].mxu0
    %v10521 = vadd.f32 %v10416, %v10520
    %v10522 = vpop.f32.mrb[0].mxu0
    %10523 = vmatprep.mubr.f32.mxu0 0.0
    %10524 = vmatmul.mubr.f32.gmra.mrb[0].mxu0 %v10326
    %v10525 = vpop.f32.mrb[0].mxu0
    %v10526 = vadd.f32 %v10421, %v10525
    %v10527 = vpop.f32.mrb[0].mxu0
    %10528 = vmatprep.mubr.f32.mxu0 0.0
    %10529 = vmatmul.mubr.f32.gmra.mrb[0].mxu0 %v10329
    %v10530 = vpop.f32.mrb[0].mxu0
    %v10531 = vadd.f32 %v10426, %v10530
    %v10532 = vpop.f32.mrb[0].mxu0
    %10533 = vmatprep.mubr.f32.mxu0 0.0
    %10534 = vmatmul.mubr.f32.gmra.mrb[0].mxu0 %v10332
    %v10535 = vpop.f32.mrb[0].mxu0
    %v10536 = vadd.f32 %v10431, %v10535
    %v10537 = vpop.f32.mrb[0].mxu0
    %10538 = vmatprep.mubr.f32.mxu0 0.0
    %10539 = vmatmul.mubr.f32.gmra.mrb[0].mxu0 %v10335
    %v10540 = vpop.f32.mrb[0].mxu0
    %v10541 = vadd.f32 %v10436, %v10540
    %v10542 = vpop.f32.mrb[0].mxu0
    %10543 = vmatprep.mubr.f32.mxu0 0.0
    %10544 = vmatmul.mubr.f32.gmra.mrb[0].mxu0 %v10338
    %v10545 = vpop.f32.mrb[0].mxu0
    %v10546 = vadd.f32 %v10441, %v10545
    %v10547 = vpop.f32.mrb[0].mxu0
    %10548 = vdwg.mxu0
    %vm10549 = vcmask 64512
    %v10550 = vsel %vm10549, %v10511, -inf
    %10551 = vmax.xlane.f32.xlu0 %v10550
    %v10552 = vpop.xlane.xlu0 %10551
    %v10553 = vsel %vm10549, %v10516, -inf
    %10554 = vmax.xlane.f32.xlu0 %v10553
    %v10555 = vpop.xlane.xlu0 %10554
    %v10556 = vsel %vm10549, %v10521, -inf
    %10557 = vmax.xlane.f32.xlu0 %v10556
    %v10558 = vpop.xlane.xlu0 %10557
    %v10559 = vsel %vm10549, %v10526, -inf
    %10560 = vmax.xlane.f32.xlu0 %v10559
    %v10561 = vpop.xlane.xlu0 %10560
    %v10562 = vsel %vm10549, %v10531, -inf
    %10563 = vmax.xlane.f32.xlu0 %v10562
    %v10564 = vpop.xlane.xlu0 %10563
    %v10565 = vsel %vm10549, %v10536, -inf
    %10566 = vmax.xlane.f32.xlu0 %v10565
    %v10567 = vpop.xlane.xlu0 %10566
    %v10568 = vsel %vm10549, %v10541, -inf
    %10569 = vmax.xlane.f32.xlu0 %v10568
    %v10570 = vpop.xlane.xlu0 %10569
    %v10571 = vsel %vm10549, %v10546, -inf
    %10572 = vmax.xlane.f32.xlu0 %v10571
    %v10573 = vpop.xlane.xlu0 %10572
    %v10574 = vsub.f32 %v10511, %v10552
    %v10575 = vsub.f32 %v10516, %v10555
    %v10576 = vsub.f32 %v10521, %v10558
    %v10577 = vsub.f32 %v10526, %v10561
    %v10578 = vsub.f32 %v10531, %v10564
    %v10579 = vsub.f32 %v10536, %v10567
    %v10580 = vsub.f32 %v10541, %v10570
    %v10581 = vsub.f32 %v10546, %v10573
    %v10582 = vmul.f32 %v10574, 1.442695
    %v10583 = vpow.pop %v10582
    %v10584 = vmul.f32 %v10575, 1.442695
    %v10585 = vpow.pop %v10584
    %v10586 = vmul.f32 %v10576, 1.442695
    %v10587 = vpow.pop %v10586
    %v10588 = vmul.f32 %v10577, 1.442695
    %v10589 = vpow.pop %v10588
    %v10590 = vmul.f32 %v10578, 1.442695
    %v10591 = vpow.pop %v10590
    %v10592 = vmul.f32 %v10579, 1.442695
    %v10593 = vpow.pop %v10592
    %v10594 = vmul.f32 %v10580, 1.442695
    %v10595 = vpow.pop %v10594
    %v10596 = vmul.f32 %v10581, 1.442695
    %v10597 = vpow.pop %v10596
    %v10598 = vsel %vm10549, %v10583, 0.0
    %10599 = vadd.xlane.f32.xlu0 %v10598
    %v10600 = vpop.xlane.xlu0 %10599
    %v10601 = vsel %vm10549, %v10585, 0.0
    %10602 = vadd.xlane.f32.xlu0 %v10601
    %v10603 = vpop.xlane.xlu0 %10602
    %v10604 = vsel %vm10549, %v10587, 0.0
    %10605 = vadd.xlane.f32.xlu0 %v10604
    %v10606 = vpop.xlane.xlu0 %10605
    %v10607 = vsel %vm10549, %v10589, 0.0
    %10608 = vadd.xlane.f32.xlu0 %v10607
    %v10609 = vpop.xlane.xlu0 %10608
    %v10610 = vsel %vm10549, %v10591, 0.0
    %10611 = vadd.xlane.f32.xlu0 %v10610
    %v10612 = vpop.xlane.xlu0 %10611
    %v10613 = vsel %vm10549, %v10593, 0.0
    %10614 = vadd.xlane.f32.xlu0 %v10613
    %v10615 = vpop.xlane.xlu0 %10614
    %v10616 = vsel %vm10549, %v10595, 0.0
    %10617 = vadd.xlane.f32.xlu0 %v10616
    %v10618 = vpop.xlane.xlu0 %10617
    %v10619 = vsel %vm10549, %v10597, 0.0
    %10620 = vadd.xlane.f32.xlu0 %v10619
    %v10621 = vpop.xlane.xlu0 %10620
    %v10622 = vlog2.pop %v10600
    %v10623 = vmul.f32 %v10622, 0.6931472
    %v10624 = vlog2.pop %v10603
    %v10625 = vmul.f32 %v10624, 0.6931472
    %v10626 = vlog2.pop %v10606
    %v10627 = vmul.f32 %v10626, 0.6931472
    %v10628 = vlog2.pop %v10609
    %v10629 = vmul.f32 %v10628, 0.6931472
    %v10630 = vlog2.pop %v10612
    %v10631 = vmul.f32 %v10630, 0.6931472
    %v10632 = vlog2.pop %v10615
    %v10633 = vmul.f32 %v10632, 0.6931472
    %v10634 = vlog2.pop %v10618
    %v10635 = vmul.f32 %v10634, 0.6931472
    %v10636 = vlog2.pop %v10621
    %v10637 = vmul.f32 %v10636, 0.6931472
    %v10638 = vadd.f32 %v10552, %v10623
    %v10639 = vadd.f32 %v10555, %v10625
    %v10640 = vadd.f32 %v10558, %v10627
    %v10641 = vadd.f32 %v10561, %v10629
    %v10642 = vadd.f32 %v10564, %v10631
    %v10643 = vadd.f32 %v10567, %v10633
    %v10644 = vadd.f32 %v10570, %v10635
    %v10645 = vadd.f32 %v10573, %v10637
    %v10646 = vld [vmem:[%s2] sm:$0xff]
    %v10647 = vld [vmem:[%s2 + $0x8] sm:$0xff]
    %v10648 = vld [vmem:[%s2 + $0x10] sm:$0xff]
    %v10649 = vld [vmem:[%s2 + $0x18] sm:$0xff]
    %v10650 = vld [vmem:[%s2 + $0x20] sm:$0xff]
    %v10651 = vld [vmem:[%s2 + $0x28] sm:$0xff]
    %v10652 = vld [vmem:[%s2 + $0x30] sm:$0xff]
    %v10653 = vld [vmem:[%s2 + $0x38] sm:$0xff]
    %v10654 = vmul.f32 %v10511, %v10646
    %v10655 = vmul.f32 %v10516, %v10647
    %v10656 = vmul.f32 %v10521, %v10648
    %v10657 = vmul.f32 %v10526, %v10649
    %v10658 = vmul.f32 %v10531, %v10650
    %v10659 = vmul.f32 %v10536, %v10651
    %v10660 = vmul.f32 %v10541, %v10652
    %v10661 = vmul.f32 %v10546, %v10653
    %v10662 = vsel %vm10549, %v10654, 0.0
    %10663 = vadd.xlane.f32.xlu0 %v10662
    %v10664 = vpop.xlane.xlu0 %10663
    %v10665 = vsel %vm10549, %v10655, 0.0
    %10666 = vadd.xlane.f32.xlu0 %v10665
    %v10667 = vpop.xlane.xlu0 %10666
    %v10668 = vsel %vm10549, %v10656, 0.0
    %10669 = vadd.xlane.f32.xlu0 %v10668
    %v10670 = vpop.xlane.xlu0 %10669
    %v10671 = vsel %vm10549, %v10657, 0.0
    %10672 = vadd.xlane.f32.xlu0 %v10671
    %v10673 = vpop.xlane.xlu0 %10672
    %v10674 = vsel %vm10549, %v10658, 0.0
    %10675 = vadd.xlane.f32.xlu0 %v10674
    %v10676 = vpop.xlane.xlu0 %10675
    %v10677 = vsel %vm10549, %v10659, 0.0
    %10678 = vadd.xlane.f32.xlu0 %v10677
    %v10679 = vpop.xlane.xlu0 %10678
    %v10680 = vsel %vm10549, %v10660, 0.0
    %10681 = vadd.xlane.f32.xlu0 %v10680
    %v10682 = vpop.xlane.xlu0 %10681
    %v10683 = vsel %vm10549, %v10661, 0.0
    %10684 = vadd.xlane.f32.xlu0 %v10683
    %v10685 = vpop.xlane.xlu0 %10684
    %v10686 = vsub.f32 %v10664, %v10638
    %v10687 = vsub.f32 %v10667, %v10639
    %v10688 = vsub.f32 %v10670, %v10640
    %v10689 = vsub.f32 %v10673, %v10641
    %v10690 = vsub.f32 %v10676, %v10642
    %v10691 = vsub.f32 %v10679, %v10643
    %v10692 = vsub.f32 %v10682, %v10644
    %v10693 = vsub.f32 %v10685, %v10645
    %v10694 = vadd.f32 %v10686, %v10687
    %v10695 = vadd.f32 %v10694, %v10688
    %v10696 = vadd.f32 %v10695, %v10689
    %v10697 = vadd.f32 %v10696, %v10690
    %v10698 = vadd.f32 %v10697, %v10691
    %v10699 = vadd.f32 %v10698, %v10692
    %v10700 = vadd.f32 %v10699, %v10693
    %v10701 = vrot.slane %v10700, 4
    %v10702 = vadd.f32 %v10700, %v10701
    %v10703 = vrot.slane %v10702, 2
    %v10704 = vadd.f32 %v10702, %v10703
    %v10705 = vrot.slane %v10704, 1
    %v10706 = vadd.f32 %v10704, %v10705
    %vm10707 = vcmask 0
    %10708 = vst.msk [vmem:[#allocation13] sm:$0x1] %vm10707, %v10706
    %vm10709 = vcmask 261120
    %v10710 = vsel %vm10709, %v10310, 0.0
    %v10711 = vrot.slane %v10710, 4
    %v10712 = vadd.f32 %v10710, %v10711
    %v10713 = vrot.slane %v10712, 2
    %v10714 = vadd.f32 %v10712, %v10713
    %v10715 = vrot.slane %v10714, 1
    %v10716 = vadd.f32 %v10714, %v10715
    %v10717 = vrcp.pop 8.0
    %v10718 = vmul.f32 %v10716, %v10717
    %v10719 = vsub.f32 %v10310, %v10718
    %v10720 = vmul.f32 %v10719, %v10719
    %v10721 = vsel %vm10709, %v10720, 0.0
    %v10722 = vrot.slane %v10721, 4
    %v10723 = vadd.f32 %v10721, %v10722
    %v10724 = vrot.slane %v10723, 2
    %v10725 = vadd.f32 %v10723, %v10724
    %v10726 = vrot.slane %v10725, 1
    %v10727 = vadd.f32 %v10725, %v10726
    %v10728 = vmul.f32 %v10727, %v10717
    %v10729 = vadd.f32 %v10728, 1e-05
    %v10730 = vrsqrt.pop %v10729
    %v10731 = vmul.f32 %v10719, %v10730
    %v10732 = vld [vmem:[#allocation8] sm:$0x1]
    %v10734 = vlaneseq
    %v10735 = vshrl.u32 %v10734, 7
    %v10736 = vsub.s32 0, %v10735
    %v10737 = vrot.slane %v10732, %v10736
    %v10739 = vmul.f32 %v10737, %v10731
    %v10740 = vld [vmem:[#allocation10] sm:$0x1]
    %v10742 = vlaneseq
    %v10743 = vshrl.u32 %v10742, 7
    %v10744 = vsub.s32 0, %v10743
    %v10745 = vrot.slane %v10740, %v10744
    %v10747 = vadd.f32 %v10739, %v10745
    %vm10748 = vcmp.ge.f32.partialorder %v10747, 0.0
    %v10749 = vmul.f32 %v10747, 0.01
    %v10750 = vsel %vm10748, %v10747, %v10749
    %v10751 = vld [vmem:[%s8] sm:$0xff]
    %v10752 = vld [vmem:[%s8 + $0x8] sm:$0xff]
    %v10753 = vld [vmem:[%s8 + $0x10] sm:$0xff]
    %v10754 = vld [vmem:[%s8 + $0x18] sm:$0xff]
    %v10755 = vld [vmem:[#allocation11] sm:$0x1]
    %v10757 = vlaneseq
    %v10758 = vshrl.u32 %v10757, 7
    %v10759 = vsub.s32 0, %v10758
    %v10760 = vrot.slane %v10755, %v10759
    %v10763 = vsel %vm10709, %v10750, 0
    %10765 = vmatprep.subr.mxu0 0.0
    %10766 = vmatpush1.msra.mxu0 %v10751
    %10767 = vmatprep.subr.mxu0 0.0
    %10768 = vmatpush1.msra.mxu0 %v10752
    %10769 = vmatprep.subr.mxu0 0.0
    %10770 = vmatpush1.msra.mxu0 %v10753
    %10771 = vmatprep.subr.mxu0 0.0
    %10772 = vmatpush1.msra.mxu0 %v10754
    %10773 = vmatprep.subr.mxu0 0.0
    %10774 = vmatpush1.msra.mxu0 0.0
    %10775 = vmatprep.subr.mxu0 0.0
    %10776 = vmatpush1.msra.mxu0 0.0
    %10777 = vmatprep.subr.mxu0 0.0
    %10778 = vmatpush1.msra.mxu0 0.0
    %10779 = vmatprep.subr.mxu0 0.0
    %10780 = vmatpush1.msra.mxu0 0.0
    %10781 = vmatprep.subr.mxu0 0.0
    %10782 = vmatpush1.msra.mxu0 0.0
    %10783 = vmatprep.subr.mxu0 0.0
    %10784 = vmatpush1.msra.mxu0 0.0
    %10785 = vmatprep.subr.mxu0 0.0
    %10786 = vmatpush1.msra.mxu0 0.0
    %10787 = vmatprep.subr.mxu0 0.0
    %10788 = vmatpush1.msra.mxu0 0.0
    %10789 = vmatprep.subr.mxu0 0.0
    %10790 = vmatpush1.msra.mxu0 0.0
    %10791 = vmatprep.subr.mxu0 0.0
    %10792 = vmatpush1.msra.mxu0 0.0
    %10793 = vmatprep.subr.mxu0 0.0
    %10794 = vmatpush1.msra.mxu0 0.0
    %10795 = vmatprep.subr.mxu0 0.0
    %10796 = vmatpush1.msra.mxu0 0.0
    %10797 = vmatprep.subr.mxu0 0.0
    %10798 = vmatpush1.msra.mxu0 0.0
    %10799 = vmatprep.subr.mxu0 0.0
    %10800 = vmatpush1.msra.mxu0 0.0
    %10801 = vmatprep.subr.mxu0 0.0
    %10802 = vmatpush1.msra.mxu0 0.0
    %10803 = vmatprep.subr.mxu0 0.0
    %10804 = vmatpush1.msra.mxu0 0.0
    %10805 = vmatprep.subr.mxu0 0.0
    %10806 = vmatpush1.msra.mxu0 0.0
    %10807 = vmatprep.subr.mxu0 0.0
    %10808 = vmatpush1.msra.mxu0 0.0
    %10809 = vmatprep.subr.mxu0 0.0
    %10810 = vmatpush1.msra.mxu0 0.0
    %10811 = vmatprep.subr.mxu0 0.0
    %10812 = vmatpush1.msra.mxu0 0.0
    %10813 = vmatprep.subr.mxu0 0.0
    %10814 = vmatpush1.msra.mxu0 0.0
    %10815 = vmatprep.subr.mxu0 0.0
    %10816 = vmatpush1.msra.mxu0 0.0
    %10817 = vmatprep.subr.mxu0 0.0
    %10818 = vmatpush1.msra.mxu0 0.0
    %10819 = vmatprep.subr.mxu0 0.0
    %10820 = vmatpush1.msra.mxu0 0.0
    %10821 = vmatprep.subr.mxu0 0.0
    %10822 = vmatpush1.msra.mxu0 0.0
    %10823 = vmatprep.subr.mxu0 0.0
    %10824 = vmatpush1.msra.mxu0 0.0
    %10825 = vmatprep.subr.mxu0 0.0
    %10826 = vmatpush1.msra.mxu0 0.0
    %10827 = vmatprep.subr.mxu0 0.0
    %10828 = vmatpush1.msra.mxu0 0.0
    %10829 = vmatprep.mubr.f32.mxu0 0.0
    %10830 = vmatmul.mubr.f32.gmra.mrb[0].mxu0 %v10763
    %v10831 = vpop.f32.mrb[0].mxu0
    %v10832 = vadd.f32 %v10760, %v10831
    %v10833 = vpop.f32.mrb[0].mxu0
    %10834 = vdwg.mxu0
    %10835 = vst.msk [vmem:[#allocation14] sm:$0xff] %vm10549, %v10832
    // Predicated region
    $region66: #{td_forward.1} parent=1 // pred_check
      _
    $region67: #{td_forward.1} parent=1 // pred_check_branch
      %10837 = sbr.rel (0) target = $region69
    $region68: #{td_forward.1} parent=1 // pred_region
      %s10839 = ssub.s32 16, 16
      %10840 = vsyncadd [#allocation4], %s10839
      %s10842 = sshll.u32 [#allocation13], 4
      %s10843 = int_to_ptr.vmem [resolvable:$true] %s10842
      %10845 = dma.vmem_to_hbm [thread:$0]  %s10843, 16, %s10, [#allocation4]
    $region69: #{td_forward.1} parent=1 // pred_fallthru
      _
    // Predicated region
    $region70: #{td_forward.1} parent=1 // pred_check
      _
    $region71: #{td_forward.1} parent=1 // pred_check_branch
      %10847 = sbr.rel (0) target = $region73
    $region72: #{td_forward.1} parent=1 // pred_region
      %s10849 = ssub.s32 128, 128
      %10850 = vsyncadd [#allocation15], %s10849
      %s10852 = sshll.u32 [#allocation14], 4
      %s10853 = int_to_ptr.vmem [resolvable:$true] %s10852
      %10855 = dma.vmem_to_hbm [thread:$0]  %s10853, 128, %s11, [#allocation15]
    $region73: #{td_forward.1} parent=1 // pred_fallthru
      _
    // Predicated region
    $region74: #{td_forward.1} parent=1 // pred_check
      _
    $region75: #{td_forward.1} parent=1 // pred_check_branch
      %10857 = sbr.rel (0) target = $region77
    $region76: #{td_forward.1} parent=1 // pred_region
      %10858 = dma.done [#allocation4], 16
    $region77: #{td_forward.1} parent=1 // pred_fallthru
      _
    // Predicated region
    $region78: #{td_forward.1} parent=1 // pred_check
      _
    $region79: #{td_forward.1} parent=1 // pred_check_branch
      %10860 = sbr.rel (0) target = $region81
    $region80: #{td_forward.1} parent=1 // pred_region
      %10861 = dma.done [#allocation15], 128
    $region81: #{td_forward.1} parent=1 // pred_fallthru
      _
    %10862 = vsyncpa [#allocation3], 1
    %10863 = vsyncpa [#allocation6], 1
    %10864 = vsyncpa [#allocation9], 1
    %10865 = vsyncpa [#allocation12], 1
    %10866 = vsyncpa [#allocation4], 1
    %10867 = vsyncpa [#allocation15], 1

</llo_original>
